<compile_context>
chip_gen: v5e
topology: v5e:2x2
jax: 0.10.0
libtpu: 0.0.40
codegen_flags: <defaults>
</compile_context>

<pallas_src>
import jax
import jax.numpy as jnp
from jax import lax
from jax.experimental import pallas as pl
from jax.experimental.pallas import tpu as pltpu

IMG = 32
NCLASS = 10


def dct_matrix(n):
    """Orthonormal DCT-II matrix D, so dct(X) along last axis == X @ D.T."""
    k = jnp.arange(n, dtype=jnp.float32)[:, None]
    m = jnp.arange(n, dtype=jnp.float32)[None, :]
    d = jnp.sqrt(2.0 / n) * jnp.cos(jnp.pi * (2.0 * m + 1.0) * k / (2.0 * n))
    d = d.at[0].set(1.0 / jnp.sqrt(float(n)))
    return d.astype(jnp.float32)


# --------------------------------------------------------------------------
# Kernel A: 2D DCT -> sign permutation -> inverse 2D DCT -> per-plane norm
# One grid step == one group of G "channel network" permutations.
# The forward DCT is computed once per step and shared across the group.
# --------------------------------------------------------------------------
def _dct_perm_kernel(x_ref, d_ref, dt_ref, p_ref, out_ref):
    # x_ref  : (BC, IMG, IMG)     all image planes (constant block)
    # d_ref  : (IMG, IMG)         orthonormal DCT matrix D
    # dt_ref : (IMG, IMG)         D^T
    # p_ref  : (G, IMG, IMG)      this step's sign permutations (pre-transposed)
    # out_ref: (B, G, C, IMG, IMG)
    x = x_ref[...]
    bc = x.shape[0]
    b = out_ref.shape[0]
    c = out_ref.shape[2]
    g = p_ref.shape[0]

    # broadcast D / D^T once per grid step (hoisted out of the per-channel loop)
    d = jnp.broadcast_to(d_ref[...][None], (bc, IMG, IMG))
    dt = jnp.broadcast_to(dt_ref[...][None], (bc, IMG, IMG))

    # Forward 2D DCT per plane: Y = D @ X @ D^T  -- permutation-independent,
    # computed ONCE and reused for all G permutations of this step.
    t = jnp.einsum('bij,bjk->bik', d, x, preferred_element_type=jnp.float32)
    y = jnp.einsum('bij,bjk->bik', t, dt, preferred_element_type=jnp.float32)

    for gi in range(g):          # static unroll; G is small, all data in VMEM
        # The reference permutes dct(dct(X).T) = (D X D^T)^T with P; applying
        # the *transposed* permutation to D X D^T is mathematically identical.
        z = y * p_ref[gi]                                        # (BC,IMG,IMG)

        # Inverse 2D DCT: R = D^T @ Z @ D
        t2 = jnp.einsum('bij,bjk->bik', dt, z,
                        preferred_element_type=jnp.float32)
        r = jnp.einsum('bij,bjk->bik', t2, d,
                       preferred_element_type=jnp.float32)

        # Per-plane Frobenius normalization (rsqrt -> EUP slot)
        ss = jnp.sum(r * r, axis=2, keepdims=True)
        ss = jnp.sum(ss, axis=1, keepdims=True)                  # (BC,1,1)
        rn = r * lax.rsqrt(ss)

        # (B, 1, C, IMG, IMG) slice of the (B, N, C, IMG, IMG) output so the
        # wrapper-side flatten to (B, N*F) is a plain row-major reshape.
        out_ref[:, gi:gi + 1, :, :, :] = rn.reshape(b, 1, c, IMG, IMG)


# --------------------------------------------------------------------------
# Kernel B: one stacked head matmul + vote + argmax -> one-hot.
# Single grid step; weights stay lane-dense as (NCLASS, N*F) and are
# contracted with an NT dot (same pattern as q @ k^T in attention kernels).
# --------------------------------------------------------------------------
def _vote_kernel(feat_ref, wt_ref, bsum_ref, out_ref):
    # feat_ref: (B, N*F)        stacked per-channel features
    # wt_ref  : (NCLASS, N*F)   all heads stacked & transposed (lane-dense)
    # bsum_ref: (1, NCLASS)     sum of all biases (hoisted)
    # out_ref : (B, NCLASS)
    logits = bsum_ref[...] + jnp.einsum(
        'bk,ck->bc', feat_ref[...], wt_ref[...],
        preferred_element_type=jnp.float32)

    b, ncls = out_ref.shape
    col = lax.broadcasted_iota(jnp.int32, (b, ncls), 1)
    mx = jnp.max(logits, axis=1, keepdims=True)
    # first-index argmax per row (numpy argmax tie-breaking)
    cl = jnp.min(jnp.where(logits == mx, col, ncls), axis=1, keepdims=True)
    per_row = (col == cl).astype(jnp.float32)                    # (B, NCLASS)
    # reproduce `pred_labels[:, cl] = 1` (numpy fancy indexing: every row gets
    # a 1 in every column that is *some* row's argmax)
    union = jnp.max(per_row, axis=0, keepdims=True)              # (1, NCLASS)
    out_ref[...] = jnp.broadcast_to(union, (b, ncls))


# --------------------------------------------------------------------------
# Parameter preprocessing (hoisted out of the forward path; call ONCE)
# --------------------------------------------------------------------------
def prepare_params(dct_mat, perms, w, b):
    """perms: (N, IMG*IMG) +/-1; w: (N, F, NCLASS); b: (N, NCLASS)."""
    N, F, ncls = w.shape
    dmat = jnp.asarray(dct_mat, jnp.float32)
    dmatT = jnp.asarray(dmat.T)
    perms_T = jnp.swapaxes(
        jnp.asarray(perms, jnp.float32).reshape(N, IMG, IMG), 1, 2)
    # stacked, transposed heads: W_t[c, n*F + f] = w[n, f, c]  (lane-dense)
    w_t = jnp.transpose(jnp.asarray(w, jnp.float32), (2, 0, 1)).reshape(ncls, N * F)
    bsum = jnp.sum(jnp.asarray(b, jnp.float32), axis=0).reshape(1, ncls)
    return dmat, dmatT, perms_T, w_t, bsum


# --------------------------------------------------------------------------
# Forward wrapper
# --------------------------------------------------------------------------
def multichannel_forward(x, dmat, dmatT, perms_T, w_t, bsum):
    """x: (B, C, IMG, IMG) float32; remaining args from prepare_params()."""
    B, C, H, W = x.shape
    assert H == IMG and W == IMG
    N = perms_T.shape[0]
    BC = B * C
    F = C * H * W

    # grid: a few parallel steps (>=2 keeps both v7x TensorCores busy) while
    # amortizing per-step overhead on single-TC v5e/v6e (9 -> 3 steps).
    if N % 3 == 0:
        n_steps = 3
    elif N % 2 == 0:
        n_steps = 2
    else:
        n_steps = 1
    G = N // n_steps

    planes = x.reshape(BC, H, W).astype(jnp.float32)

    # ---- kernel A: DCT -> sign permutation -> IDCT -> per-plane normalize ----
    a = pl.pallas_call(
        _dct_perm_kernel,
        out_shape=jax.ShapeDtypeStruct((B, N, C, H, W), jnp.float32),
        grid_spec=pltpu.PrefetchScalarGridSpec(
            num_scalar_prefetch=0,
            grid=(n_steps,),
            in_specs=[
                pl.BlockSpec((BC, H, W), lambda i: (0, 0, 0)),
                pl.BlockSpec((H, W), lambda i: (0, 0)),
                pl.BlockSpec((H, W), lambda i: (0, 0)),
                pl.BlockSpec((G, H, W), lambda i: (i, 0, 0)),
            ],
            out_specs=pl.BlockSpec((B, G, C, H, W), lambda i: (0, i, 0, 0, 0)),
        ),
        compiler_params=pltpu.CompilerParams(
            dimension_semantics=("parallel",)),
    )(planes, dmat, dmatT, perms_T)

    # glue: row-major flatten to stacked per-sample features (B, N*F).
    feats = a.reshape(B, N * F)

    # ---- kernel B: stacked head matmul + vote + argmax one-hot ----
    out = pl.pallas_call(
        _vote_kernel,
        out_shape=jax.ShapeDtypeStruct((B, NCLASS), jnp.float32),
        grid_spec=pltpu.PrefetchScalarGridSpec(
            num_scalar_prefetch=0,
            grid=(1,),
            in_specs=[
                pl.BlockSpec((B, N * F), lambda i: (0, 0)),
                pl.BlockSpec((NCLASS, N * F), lambda i: (0, 0)),
                pl.BlockSpec((1, NCLASS), lambda i: (0, 0)),
            ],
            out_specs=pl.BlockSpec((B, NCLASS), lambda i: (0, 0)),
        ),
        compiler_params=pltpu.CompilerParams(
            dimension_semantics=("arbitrary",)),
    )(feats, w_t, bsum)
    return out


# --------------------------------------------------------------------------
# Pure-JAX reference (follows the original code literally, orthonormal DCT)
# --------------------------------------------------------------------------
def reference_forward(x, dct_mat, perms, w, b):
    B, C, H, W = x.shape
    N = perms.shape[0]
    D = dct_mat
    planes = x.reshape(B * C, H, W)
    logits = jnp.zeros((B, NCLASS), jnp.float32)
    for i in range(N):
        P = perms[i].reshape(H, W)

        def per_plane(xp):
            xdct = jnp.dot(jnp.dot(xp, D.T).T, D.T)    # dct(dct(X).T)
            xdct = xdct * P                            # sign permutation
            rec = jnp.dot(jnp.dot(xdct, D).T, D)       # idct(idct(.).T)
            return rec / jnp.sqrt(jnp.sum(rec ** 2))

        a = jax.vmap(per_plane)(planes)
        feat = a.reshape(B, C * H * W)
        logits = logits + feat @ w[i] + b[i][None, :]
    cl = jnp.argmax(logits, axis=1)
    out = jnp.zeros((B, NCLASS), jnp.float32)
    out = out.at[:, cl].set(1.0)                       # same fancy-indexing as numpy
    return out


if __name__ == "__main__":
    key = jax.random.PRNGKey(0)
    B, C = 2, 3
    P_list = [1, 2, 3]
    SUBBANDS = ['d', 'h', 'v']
    N = len(P_list) * len(SUBBANDS)                    # 9 channel networks
    F = C * IMG * IMG

    kx, kp, kw, kb = jax.random.split(key, 4)
    x = jax.random.normal(kx, (B, C, IMG, IMG), dtype=jnp.float32)
    # deterministic +/-1 sign permutations (stand-in for the .npy files)
    perms = jnp.where(jax.random.bernoulli(kp, 0.5, (N, IMG * IMG)),
                      1.0, -1.0).astype(jnp.float32)
    # deterministic random linear heads (stand-in for the VGG16 checkpoints)
    w = (0.02 * jax.random.normal(kw, (N, F, NCLASS))).astype(jnp.float32)
    b = (0.1 * jax.random.normal(kb, (N, NCLASS))).astype(jnp.float32)
    dct_mat = dct_matrix(IMG)

    # parameter preprocessing hoisted out of the forward path (done once)
    params = prepare_params(dct_mat, perms, w, b)

    fwd = jax.jit(multichannel_forward)
    out = jax.block_until_ready(fwd(x, *params))

    ref = reference_forward(x, dct_mat, perms, w, b)
    assert out.shape == (B, NCLASS)
    assert jnp.allclose(out, ref), (out, ref)
    print("KERNEL_OK")
</pallas_src>

<mosaic_0001>
module attributes {stable_mosaic.version = 11 : i64} {
  func.func @_vote_kernel(%arg0: i32, %arg1: memref<2x27648xf32, #tpu.memory_space<vmem>>, %arg2: memref<10x27648xf32, #tpu.memory_space<vmem>>, %arg3: memref<1x10xf32, #tpu.memory_space<vmem>>, %arg4: memref<2x10xf32, #tpu.memory_space<vmem>>) attributes {dimension_semantics = [#tpu.dimension_semantics<arbitrary>], iteration_bounds = array<i64: 1>, scalar_prefetch = 0 : i64, scratch_operands = 0 : i64, tpu.core_type = #tpu.core_type<tc>, window_params = [{pipeline_mode = #tpu.pipeline_mode<synchronous>, transform_indices = @transform_0, window_bounds = array<i64: 2, 27648>}, {pipeline_mode = #tpu.pipeline_mode<synchronous>, transform_indices = @transform_1, window_bounds = array<i64: 10, 27648>}, {pipeline_mode = #tpu.pipeline_mode<synchronous>, transform_indices = @transform_2, window_bounds = array<i64: 1, 10>}, {pipeline_mode = #tpu.pipeline_mode<synchronous>, transform_indices = @transform_3, window_bounds = array<i64: 2, 10>}]} {
    %c0 = arith.constant 0 : index
    %c0_0 = arith.constant 0 : index
    %0 = vector.load %arg3[%c0, %c0_0] : memref<1x10xf32, #tpu.memory_space<vmem>>, vector<1x10xf32>
    %c0_1 = arith.constant 0 : index
    %c0_2 = arith.constant 0 : index
    %1 = vector.load %arg1[%c0_1, %c0_2] : memref<2x27648xf32, #tpu.memory_space<vmem>>, vector<2x27648xf32>
    %c0_3 = arith.constant 0 : index
    %c0_4 = arith.constant 0 : index
    %2 = vector.load %arg2[%c0_3, %c0_4] : memref<10x27648xf32, #tpu.memory_space<vmem>>, vector<10x27648xf32>
    "tpu.trace_start"() <{level = 10 : i32, message = "bk,ck->bc"}> : () -> ()
    %cst = arith.constant dense<0.000000e+00> : vector<2x10xf32>
    %3 = tpu.matmul %1, %2, %cst {dimension_numbers = #tpu.dot_dimension_numbers<[1], [1], [0], [0], [0, 0, 1, 0], [], []>} : vector<2x27648xf32>, vector<10x27648xf32>, vector<2x10xf32> -> vector<2x10xf32>
    "tpu.trace_stop"() : () -> ()
    %4 = vector.broadcast %0 : vector<1x10xf32> to vector<2x10xf32>
    %5 = arith.addf %4, %3 : vector<2x10xf32>
    %6 = tpu.iota {dimensions = array<i32: 1>} : vector<2x10xi32>
    %cst_5 = arith.constant dense<0xFF800000> : vector<2xf32>
    %7 = vector.multi_reduction <maximumf>, %5, %cst_5 [1] : vector<2x10xf32> to vector<2xf32>
    %8 = vector.shape_cast %7 : vector<2xf32> to vector<2x1xf32>
    %9 = vector.broadcast %8 : vector<2x1xf32> to vector<2x10xf32>
    %10 = arith.cmpf oeq, %5, %9 : vector<2x10xf32>
    %c10_i32 = arith.constant 10 : i32
    %11 = vector.broadcast %c10_i32 : i32 to vector<2x10xi32>
    %12 = arith.select %10, %6, %11 : vector<2x10xi1>, vector<2x10xi32>
    %cst_6 = arith.constant dense<2147483647> : vector<2xi32>
    %13 = vector.multi_reduction <minsi>, %12, %cst_6 [1] : vector<2x10xi32> to vector<2xi32>
    %14 = vector.shape_cast %13 : vector<2xi32> to vector<2x1xi32>
    %15 = vector.broadcast %14 : vector<2x1xi32> to vector<2x10xi32>
    %16 = arith.cmpi eq, %6, %15 : vector<2x10xi32>
    %17 = arith.extui %16 : vector<2x10xi1> to vector<2x10xi32>
    %18 = arith.sitofp %17 : vector<2x10xi32> to vector<2x10xf32>
    %cst_7 = arith.constant dense<0xFF800000> : vector<10xf32>
    %19 = vector.multi_reduction <maximumf>, %18, %cst_7 [0] : vector<2x10xf32> to vector<10xf32>
    %20 = vector.shape_cast %19 : vector<10xf32> to vector<1x10xf32>
    %21 = vector.shape_cast %20 : vector<1x10xf32> to vector<1x10xf32>
    %22 = vector.broadcast %21 : vector<1x10xf32> to vector<2x10xf32>
    %c0_8 = arith.constant 0 : index
    %c0_9 = arith.constant 0 : index
    %23 = vector.load %arg4[%c0_8, %c0_9] : memref<2x10xf32, #tpu.memory_space<vmem>>, vector<2x10xf32>
    tpu.vector_store %arg4[%c0_8, %c0_9], %22 {strides = array<i32>} : memref<2x10xf32, #tpu.memory_space<vmem>>, vector<2x10xf32>,
    return
  }
  func.func @transform_0(%arg0: i32) -> (i32, i32) {
    %c0_i32 = arith.constant 0 : i32
    %c0_i32_0 = arith.constant 0 : i32
    %c0_i32_1 = arith.constant 0 : i32
    return %c0_i32, %c0_i32_0 : i32, i32
  }
  func.func @transform_1(%arg0: i32) -> (i32, i32) {
    %c0_i32 = arith.constant 0 : i32
    %c0_i32_0 = arith.constant 0 : i32
    %c0_i32_1 = arith.constant 0 : i32
    return %c0_i32, %c0_i32_0 : i32, i32
  }
  func.func @transform_2(%arg0: i32) -> (i32, i32) {
    %c0_i32 = arith.constant 0 : i32
    %c0_i32_0 = arith.constant 0 : i32
    %c0_i32_1 = arith.constant 0 : i32
    return %c0_i32, %c0_i32_0 : i32, i32
  }
  func.func @transform_3(%arg0: i32) -> (i32, i32) {
    %c0_i32 = arith.constant 0 : i32
    %c0_i32_0 = arith.constant 0 : i32
    %c0_i32_1 = arith.constant 0 : i32
    return %c0_i32, %c0_i32_0 : i32, i32
  }
}

module attributes {stable_mosaic.version = 11 : i64} {
  func.func @_dct_perm_kernel(%arg0: i32, %arg1: memref<6x32x32xf32, #tpu.memory_space<vmem>>, %arg2: memref<32x32xf32, #tpu.memory_space<vmem>>, %arg3: memref<32x32xf32, #tpu.memory_space<vmem>>, %arg4: memref<3x32x32xf32, #tpu.memory_space<vmem>>, %arg5: memref<2x3x3x32x32xf32, #tpu.memory_space<vmem>>) attributes {dimension_semantics = [#tpu.dimension_semantics<parallel>], iteration_bounds = array<i64: 3>, scalar_prefetch = 0 : i64, scratch_operands = 0 : i64, tpu.core_type = #tpu.core_type<tc>, window_params = [{pipeline_mode = #tpu.pipeline_mode<synchronous>, transform_indices = @transform_0, window_bounds = array<i64: 6, 32, 32>}, {pipeline_mode = #tpu.pipeline_mode<synchronous>, transform_indices = @transform_1, window_bounds = array<i64: 32, 32>}, {pipeline_mode = #tpu.pipeline_mode<synchronous>, transform_indices = @transform_2, window_bounds = array<i64: 32, 32>}, {transform_indices = @transform_3, window_bounds = array<i64: 3, 32, 32>}, {transform_indices = @transform_4, window_bounds = array<i64: 2, 3, 3, 32, 32>}]} {
    %c0 = arith.constant 0 : index
    %c0_0 = arith.constant 0 : index
    %c0_1 = arith.constant 0 : index
    %0 = vector.load %arg1[%c0, %c0_0, %c0_1] : memref<6x32x32xf32, #tpu.memory_space<vmem>>, vector<6x32x32xf32>
    %c0_2 = arith.constant 0 : index
    %c0_3 = arith.constant 0 : index
    %1 = vector.load %arg2[%c0_2, %c0_3] : memref<32x32xf32, #tpu.memory_space<vmem>>, vector<32x32xf32>
    %2 = vector.shape_cast %1 : vector<32x32xf32> to vector<1x32x32xf32>
    %3 = vector.shape_cast %2 : vector<1x32x32xf32> to vector<1x32x32xf32>
    %4 = vector.broadcast %3 : vector<1x32x32xf32> to vector<6x32x32xf32>
    %c0_4 = arith.constant 0 : index
    %c0_5 = arith.constant 0 : index
    %5 = vector.load %arg3[%c0_4, %c0_5] : memref<32x32xf32, #tpu.memory_space<vmem>>, vector<32x32xf32>
    %6 = vector.shape_cast %5 : vector<32x32xf32> to vector<1x32x32xf32>
    %7 = vector.shape_cast %6 : vector<1x32x32xf32> to vector<1x32x32xf32>
    %8 = vector.broadcast %7 : vector<1x32x32xf32> to vector<6x32x32xf32>
    "tpu.trace_start"() <{level = 10 : i32, message = "bij,bjk->bik"}> : () -> ()
    %cst = arith.constant dense<0.000000e+00> : vector<6x32x32xf32>
    %9 = tpu.matmul %4, %0, %cst {dimension_numbers = #tpu.dot_dimension_numbers<[2], [1], [1], [2], [0, 0, 0, 1, 1, 2], [0], [0]>} : vector<6x32x32xf32>, vector<6x32x32xf32>, vector<6x32x32xf32> -> vector<6x32x32xf32>
    %cst_6 = arith.constant dense<0.000000e+00> : vector<6x32x32xf32>
    %10 = tpu.matmul %9, %8, %cst_6 {dimension_numbers = #tpu.dot_dimension_numbers<[2], [1], [1], [2], [0, 0, 0, 1, 1, 2], [0], [0]>} : vector<6x32x32xf32>, vector<6x32x32xf32>, vector<6x32x32xf32> -> vector<6x32x32xf32>
    "tpu.trace_stop"() : () -> ()
    %c0_7 = arith.constant 0 : index
    %c0_8 = arith.constant 0 : index
    %c0_9 = arith.constant 0 : index
    %11 = vector.load %arg4[%c0_7, %c0_8, %c0_9] : memref<3x32x32xf32, #tpu.memory_space<vmem>>, vector<1x32x32xf32>
    %12 = vector.shape_cast %11 : vector<1x32x32xf32> to vector<32x32xf32>
    %13 = vector.shape_cast %12 : vector<32x32xf32> to vector<1x32x32xf32>
    %14 = vector.broadcast %13 : vector<1x32x32xf32> to vector<6x32x32xf32>
    %15 = arith.mulf %10, %14 : vector<6x32x32xf32>
    "tpu.trace_start"() <{level = 10 : i32, message = "bij,bjk->bik"}> : () -> ()
    %cst_10 = arith.constant dense<0.000000e+00> : vector<6x32x32xf32>
    %16 = tpu.matmul %8, %15, %cst_10 {dimension_numbers = #tpu.dot_dimension_numbers<[2], [1], [1], [2], [0, 0, 0, 1, 1, 2], [0], [0]>} : vector<6x32x32xf32>, vector<6x32x32xf32>, vector<6x32x32xf32> -> vector<6x32x32xf32>
    %cst_11 = arith.constant dense<0.000000e+00> : vector<6x32x32xf32>
    %17 = tpu.matmul %16, %4, %cst_11 {dimension_numbers = #tpu.dot_dimension_numbers<[2], [1], [1], [2], [0, 0, 0, 1, 1, 2], [0], [0]>} : vector<6x32x32xf32>, vector<6x32x32xf32>, vector<6x32x32xf32> -> vector<6x32x32xf32>
    "tpu.trace_stop"() : () -> ()
    %18 = arith.mulf %17, %17 : vector<6x32x32xf32>
    %cst_12 = arith.constant dense<0.000000e+00> : vector<6x32xf32>
    %19 = vector.multi_reduction <add>, %18, %cst_12 [2] : vector<6x32x32xf32> to vector<6x32xf32>
    %20 = vector.shape_cast %19 : vector<6x32xf32> to vector<6x32x1xf32>
    %cst_13 = arith.constant dense<0.000000e+00> : vector<6x1xf32>
    %21 = vector.multi_reduction <add>, %20, %cst_13 [1] : vector<6x32x1xf32> to vector<6x1xf32>
    %22 = vector.shape_cast %21 : vector<6x1xf32> to vector<6x1x1xf32>
    %23 = math.rsqrt %22 : vector<6x1x1xf32>
    %24 = vector.broadcast %23 : vector<6x1x1xf32> to vector<6x32x32xf32>
    %25 = arith.mulf %17, %24 : vector<6x32x32xf32>
    %26 = vector.shape_cast %25 : vector<6x32x32xf32> to vector<2x1x3x32x32xf32>
    %c0_14 = arith.constant 0 : index
    %c0_15 = arith.constant 0 : index
    %c0_16 = arith.constant 0 : index
    %c0_17 = arith.constant 0 : index
    %c0_18 = arith.constant 0 : index
    %27 = vector.load %arg5[%c0_14, %c0_15, %c0_16, %c0_17, %c0_18] : memref<2x3x3x32x32xf32, #tpu.memory_space<vmem>>, vector<2x1x3x32x32xf32>
    tpu.vector_store %arg5[%c0_14, %c0_15, %c0_16, %c0_17, %c0_18], %26 {strides = array<i32>} : memref<2x3x3x32x32xf32, #tpu.memory_space<vmem>>, vector<2x1x3x32x32xf32>,
    %c1 = arith.constant 1 : index
    %c0_19 = arith.constant 0 : index
    %c0_20 = arith.constant 0 : index
    %28 = vector.load %arg4[%c1, %c0_19, %c0_20] : memref<3x32x32xf32, #tpu.memory_space<vmem>>, vector<1x32x32xf32>
    %29 = vector.shape_cast %28 : vector<1x32x32xf32> to vector<32x32xf32>
    %30 = vector.shape_cast %29 : vector<32x32xf32> to vector<1x32x32xf32>
    %31 = vector.broadcast %30 : vector<1x32x32xf32> to vector<6x32x32xf32>
    %32 = arith.mulf %10, %31 : vector<6x32x32xf32>
    "tpu.trace_start"() <{level = 10 : i32, message = "bij,bjk->bik"}> : () -> ()
    %cst_21 = arith.constant dense<0.000000e+00> : vector<6x32x32xf32>
    %33 = tpu.matmul %8, %32, %cst_21 {dimension_numbers = #tpu.dot_dimension_numbers<[2], [1], [1], [2], [0, 0, 0, 1, 1, 2], [0], [0]>} : vector<6x32x32xf32>, vector<6x32x32xf32>, vector<6x32x32xf32> -> vector<6x32x32xf32>
    %cst_22 = arith.constant dense<0.000000e+00> : vector<6x32x32xf32>
    %34 = tpu.matmul %33, %4, %cst_22 {dimension_numbers = #tpu.dot_dimension_numbers<[2], [1], [1], [2], [0, 0, 0, 1, 1, 2], [0], [0]>} : vector<6x32x32xf32>, vector<6x32x32xf32>, vector<6x32x32xf32> -> vector<6x32x32xf32>
    "tpu.trace_stop"() : () -> ()
    %35 = arith.mulf %34, %34 : vector<6x32x32xf32>
    %cst_23 = arith.constant dense<0.000000e+00> : vector<6x32xf32>
    %36 = vector.multi_reduction <add>, %35, %cst_23 [2] : vector<6x32x32xf32> to vector<6x32xf32>
    %37 = vector.shape_cast %36 : vector<6x32xf32> to vector<6x32x1xf32>
    %cst_24 = arith.constant dense<0.000000e+00> : vector<6x1xf32>
    %38 = vector.multi_reduction <add>, %37, %cst_24 [1] : vector<6x32x1xf32> to vector<6x1xf32>
    %39 = vector.shape_cast %38 : vector<6x1xf32> to vector<6x1x1xf32>
    %40 = math.rsqrt %39 : vector<6x1x1xf32>
    %41 = vector.broadcast %40 : vector<6x1x1xf32> to vector<6x32x32xf32>
    %42 = arith.mulf %34, %41 : vector<6x32x32xf32>
    %43 = vector.shape_cast %42 : vector<6x32x32xf32> to vector<2x1x3x32x32xf32>
    %c0_25 = arith.constant 0 : index
    %c1_26 = arith.constant 1 : index
    %c0_27 = arith.constant 0 : index
    %c0_28 = arith.constant 0 : index
    %c0_29 = arith.constant 0 : index
    %44 = vector.load %arg5[%c0_25, %c1_26, %c0_27, %c0_28, %c0_29] : memref<2x3x3x32x32xf32, #tpu.memory_space<vmem>>, vector<2x1x3x32x32xf32>
    tpu.vector_store %arg5[%c0_25, %c1_26, %c0_27, %c0_28, %c0_29], %43 {strides = array<i32>} : memref<2x3x3x32x32xf32, #tpu.memory_space<vmem>>, vector<2x1x3x32x32xf32>,
    %c2 = arith.constant 2 : index
    %c0_30 = arith.constant 0 : index
    %c0_31 = arith.constant 0 : index
    %45 = vector.load %arg4[%c2, %c0_30, %c0_31] : memref<3x32x32xf32, #tpu.memory_space<vmem>>, vector<1x32x32xf32>
    %46 = vector.shape_cast %45 : vector<1x32x32xf32> to vector<32x32xf32>
    %47 = vector.shape_cast %46 : vector<32x32xf32> to vector<1x32x32xf32>
    %48 = vector.broadcast %47 : vector<1x32x32xf32> to vector<6x32x32xf32>
    %49 = arith.mulf %10, %48 : vector<6x32x32xf32>
    "tpu.trace_start"() <{level = 10 : i32, message = "bij,bjk->bik"}> : () -> ()
    %cst_32 = arith.constant dense<0.000000e+00> : vector<6x32x32xf32>
    %50 = tpu.matmul %8, %49, %cst_32 {dimension_numbers = #tpu.dot_dimension_numbers<[2], [1], [1], [2], [0, 0, 0, 1, 1, 2], [0], [0]>} : vector<6x32x32xf32>, vector<6x32x32xf32>, vector<6x32x32xf32> -> vector<6x32x32xf32>
    %cst_33 = arith.constant dense<0.000000e+00> : vector<6x32x32xf32>
    %51 = tpu.matmul %50, %4, %cst_33 {dimension_numbers = #tpu.dot_dimension_numbers<[2], [1], [1], [2], [0, 0, 0, 1, 1, 2], [0], [0]>} : vector<6x32x32xf32>, vector<6x32x32xf32>, vector<6x32x32xf32> -> vector<6x32x32xf32>
    "tpu.trace_stop"() : () -> ()
    %52 = arith.mulf %51, %51 : vector<6x32x32xf32>
    %cst_34 = arith.constant dense<0.000000e+00> : vector<6x32xf32>
    %53 = vector.multi_reduction <add>, %52, %cst_34 [2] : vector<6x32x32xf32> to vector<6x32xf32>
    %54 = vector.shape_cast %53 : vector<6x32xf32> to vector<6x32x1xf32>
    %cst_35 = arith.constant dense<0.000000e+00> : vector<6x1xf32>
    %55 = vector.multi_reduction <add>, %54, %cst_35 [1] : vector<6x32x1xf32> to vector<6x1xf32>
    %56 = vector.shape_cast %55 : vector<6x1xf32> to vector<6x1x1xf32>
    %57 = math.rsqrt %56 : vector<6x1x1xf32>
    %58 = vector.broadcast %57 : vector<6x1x1xf32> to vector<6x32x32xf32>
    %59 = arith.mulf %51, %58 : vector<6x32x32xf32>
    %60 = vector.shape_cast %59 : vector<6x32x32xf32> to vector<2x1x3x32x32xf32>
    %c0_36 = arith.constant 0 : index
    %c2_37 = arith.constant 2 : index
    %c0_38 = arith.constant 0 : index
    %c0_39 = arith.constant 0 : index
    %c0_40 = arith.constant 0 : index
    %61 = vector.load %arg5[%c0_36, %c2_37, %c0_38, %c0_39, %c0_40] : memref<2x3x3x32x32xf32, #tpu.memory_space<vmem>>, vector<2x1x3x32x32xf32>
    tpu.vector_store %arg5[%c0_36, %c2_37, %c0_38, %c0_39, %c0_40], %60 {strides = array<i32>} : memref<2x3x3x32x32xf32, #tpu.memory_space<vmem>>, vector<2x1x3x32x32xf32>,
    return
  }
  func.func @transform_0(%arg0: i32) -> (i32, i32, i32) {
    %c0_i32 = arith.constant 0 : i32
    %c0_i32_0 = arith.constant 0 : i32
    %c0_i32_1 = arith.constant 0 : i32
    %c0_i32_2 = arith.constant 0 : i32
    return %c0_i32, %c0_i32_0, %c0_i32_1 : i32, i32, i32
  }
  func.func @transform_1(%arg0: i32) -> (i32, i32) {
    %c0_i32 = arith.constant 0 : i32
    %c0_i32_0 = arith.constant 0 : i32
    %c0_i32_1 = arith.constant 0 : i32
    return %c0_i32, %c0_i32_0 : i32, i32
  }
  func.func @transform_2(%arg0: i32) -> (i32, i32) {
    %c0_i32 = arith.constant 0 : i32
    %c0_i32_0 = arith.constant 0 : i32
    %c0_i32_1 = arith.constant 0 : i32
    return %c0_i32, %c0_i32_0 : i32, i32
  }
  func.func @transform_3(%arg0: i32) -> (i32, i32, i32) {
    %c0_i32 = arith.constant 0 : i32
    %c0_i32_0 = arith.constant 0 : i32
    %c0_i32_1 = arith.constant 0 : i32
    return %arg0, %c0_i32, %c0_i32_0 : i32, i32, i32
  }
  func.func @transform_4(%arg0: i32) -> (i32, i32, i32, i32, i32) {
    %c0_i32 = arith.constant 0 : i32
    %c0_i32_0 = arith.constant 0 : i32
    %c0_i32_1 = arith.constant 0 : i32
    %c0_i32_2 = arith.constant 0 : i32
    %c0_i32_3 = arith.constant 0 : i32
    return %c0_i32, %arg0, %c0_i32_0, %c0_i32_1, %c0_i32_2 : i32, i32, i32, i32, i32
  }
}

</mosaic_0001>

<llo_original>
// kernel: multichannel_forward.2
$region0: #{multichannel_forward.2}
  #allocation0 [shape = 'u32[]', space=smem, size = 0x4, offset = 0x4, fixed_abs, tag = 'smem constant byte address 0x4 - core index']
  #allocation1 [shape = 'u32[72,128]{1,0:T(1,128)}', space=vmem, size = 0x9000, scoped, tag = 'internal scratch']
  %s0 = inlined_call_operand.hbm [shape: f32[6,32,32], index: 0, kind: input, shape index: {}]
  %s1 = inlined_call_operand.hbm [shape: f32[32,32], index: 1, kind: input, shape index: {}]
  %s2 = inlined_call_operand.hbm [shape: f32[32,32], index: 2, kind: input, shape index: {}]
  %s3 = inlined_call_operand.hbm [shape: f32[9,32,32], index: 3, kind: input, shape index: {}]
  %s4 = inlined_call_operand.vmem [shape: f32[2,9,3,32,32], index: 4, kind: output, shape index: {}]
  %s5 = sld [smem:[#allocation0]]
  $region99: #{multichannel_forward.2} parent=0
    _
  %s7 = ssub.s32 1, %s5
  %s8 = scalar_select 0, %s7, %s5
  $region1: #{multichannel_forward.2} parent=0
    #allocation2 [shape = 'u8[98304]{0}', space=vmem, size = 0x18000, scoped, tag = 'input window, operand 0, single buffered']
    #allocation3 [shape = 's32[2]{0}', space=sflag, size = 0x8, scoped, tag = 'scoped memory for multichannel_forward.2']
    #allocation4 [shape = 'u8[16384]{0}', space=vmem, size = 0x4000, scoped, tag = 'input window, operand 1, single buffered']
    #allocation5 [shape = 's32[1]{0}', space=sflag, size = 0x4, scoped, tag = 'scoped memory for multichannel_forward.2']
    #allocation6 [shape = 'u8[16384]{0}', space=vmem, size = 0x4000, scoped, tag = 'input window, operand 2, single buffered']
    #allocation7 [shape = 'u8[98304]{0}', space=vmem, size = 0x18000, scoped, tag = 'input window, operand 3']
    #allocation8 [shape = 's32[2]{0}', space=sflag, size = 0x8, scoped, tag = 'scoped memory for multichannel_forward.2']
    #allocation9 [shape = 'u8[589824]{0}', space=vmem, size = 0x90000, scoped, tag = 'output window, operand 0']
    %9 = vsyncpa [#allocation3], 0
    %10 = vsyncpa [#allocation5], 0
    %11 = vsyncpa [#allocation8], 0
    %s12 = scalar_lea.sflag [#allocation8], 1
    %13 = vsyncpa %s12, 0
    loop: start=0, step=1, limit=5
    $region2: #{multichannel_forward.2} parent=1 // loop_pre_header
      _
    $region3: #{multichannel_forward.2} parent=1 // loop_header
      %s15 = sphi 0, %s19
      %p16 = scmp.ge.s32.totalorder %s15, 5
      %s23 = sphi 0, %s23
      %s25 = sphi 0, %s23
      %s26 = sphi 0, %s25
      %s40 = sphi 0, %s26
      %s44 = sphi 0, %s44
      %s46 = sphi 0, %s44
      %s47 = sphi 0, %s46
      %s61 = sphi 0, %s47
      %s65 = sphi 0, %s65
      %s67 = sphi 0, %s65
      %s68 = sphi 0, %s67
      %s82 = sphi 0, %s68
      %s88 = sphi 0, %s90
      %s91 = sphi 0, %s88
      %s92 = sphi 0, %s91
      %s108 = sphi 0, %s92
      %s114 = sphi 0, %s116
      %s117 = sphi 0, %s114
      %s118 = sphi 0, %s117
      %s134 = sphi 0, %s118
    $region4: #{multichannel_forward.2} parent=1 // loop_header_branch
      %18 = sbr.rel (%p16) target = $region8
    $region5: #{multichannel_forward.2} parent=1 // loop_body
      %s20 = ssub.s32 %s15, 1
      %s21 = ssub.s32 %s15, 2
      %s22 = sadd.s32 %s15, 1
      %s24 = sadd.s32 %s23, 1
      %p27 = scmp.eq.s32.totalorder %s15, 2
      %p28 = scmp.ne.s32.totalorder %s23, %s25
      %p29 = scmp.eq.s32.totalorder %s15, 0
      %p30 = por %p28, %p29
      %p31 = scmp.ne.s32.totalorder %s23, %s25
      %p32 = scmp.eq.s32.totalorder %s20, 2
      %p33 = por %p31, %p32
      %p34 = scmp.ne.s32.totalorder %s25, %s26
      %p35 = scmp.eq.s32.totalorder %s20, 0
      %p36 = por %p34, %p35
      %p37 = scmp.ne.s32.totalorder %s25, %s26
      %p38 = scmp.eq.s32.totalorder %s21, 2
      %p39 = por %p37, %p38
      %p41 = scmp.ne.s32.totalorder %s26, %s40
      %p42 = scmp.eq.s32.totalorder %s21, 0
      %p43 = por %p41, %p42
      %s45 = sadd.s32 %s44, 1
      %p48 = scmp.eq.s32.totalorder %s15, 2
      %p49 = scmp.ne.s32.totalorder %s44, %s46
      %p50 = scmp.eq.s32.totalorder %s15, 0
      %p51 = por %p49, %p50
      %p52 = scmp.ne.s32.totalorder %s44, %s46
      %p53 = scmp.eq.s32.totalorder %s20, 2
      %p54 = por %p52, %p53
      %p55 = scmp.ne.s32.totalorder %s46, %s47
      %p56 = scmp.eq.s32.totalorder %s20, 0
      %p57 = por %p55, %p56
      %p58 = scmp.ne.s32.totalorder %s46, %s47
      %p59 = scmp.eq.s32.totalorder %s21, 2
      %p60 = por %p58, %p59
      %p62 = scmp.ne.s32.totalorder %s47, %s61
      %p63 = scmp.eq.s32.totalorder %s21, 0
      %p64 = por %p62, %p63
      %s66 = sadd.s32 %s65, 1
      %p69 = scmp.eq.s32.totalorder %s15, 2
      %p70 = scmp.ne.s32.totalorder %s65, %s67
      %p71 = scmp.eq.s32.totalorder %s15, 0
      %p72 = por %p70, %p71
      %p73 = scmp.ne.s32.totalorder %s65, %s67
      %p74 = scmp.eq.s32.totalorder %s20, 2
      %p75 = por %p73, %p74
      %p76 = scmp.ne.s32.totalorder %s67, %s68
      %p77 = scmp.eq.s32.totalorder %s20, 0
      %p78 = por %p76, %p77
      %p79 = scmp.ne.s32.totalorder %s67, %s68
      %p80 = scmp.eq.s32.totalorder %s21, 2
      %p81 = por %p79, %p80
      %p83 = scmp.ne.s32.totalorder %s68, %s82
      %p84 = scmp.eq.s32.totalorder %s21, 0
      %p85 = por %p83, %p84
      %s86 = ssub.s32 %s15, %s22
      %p87 = scmp.eq.s32.totalorder %s86, 0
      %s89 = sadd.s32 %s88, 1
      %s90 = scalar_select %p87, %s88, %s89
      %p93 = pneg %p87
      %p94 = scmp.eq.s32.totalorder %s15, 2
      %p95 = por %p93, %p94
      %p96 = scmp.ne.s32.totalorder %s88, %s91
      %p97 = scmp.eq.s32.totalorder %s15, 0
      %p98 = por %p96, %p97
      %p99 = scmp.ne.s32.totalorder %s88, %s91
      %p100 = scmp.eq.s32.totalorder %s20, 2
      %p101 = por %p99, %p100
      %p102 = scmp.ne.s32.totalorder %s91, %s92
      %p103 = scmp.eq.s32.totalorder %s20, 0
      %p104 = por %p102, %p103
      %p105 = scmp.ne.s32.totalorder %s91, %s92
      %p106 = scmp.eq.s32.totalorder %s21, 2
      %p107 = por %p105, %p106
      %p109 = scmp.ne.s32.totalorder %s92, %s108
      %p110 = scmp.eq.s32.totalorder %s21, 0
      %p111 = por %p109, %p110
      %s112 = ssub.s32 %s15, %s22
      %p113 = scmp.eq.s32.totalorder %s112, 0
      %s115 = sadd.s32 %s114, 1
      %s116 = scalar_select %p113, %s114, %s115
      %p119 = pneg %p113
      %p120 = scmp.eq.s32.totalorder %s15, 2
      %p121 = por %p119, %p120
      %p122 = scmp.ne.s32.totalorder %s114, %s117
      %p123 = scmp.eq.s32.totalorder %s15, 0
      %p124 = por %p122, %p123
      %p125 = scmp.ne.s32.totalorder %s114, %s117
      %p126 = scmp.eq.s32.totalorder %s20, 2
      %p127 = por %p125, %p126
      %p128 = scmp.ne.s32.totalorder %s117, %s118
      %p129 = scmp.eq.s32.totalorder %s20, 0
      %p130 = por %p128, %p129
      %p131 = scmp.ne.s32.totalorder %s117, %s118
      %p132 = scmp.eq.s32.totalorder %s21, 2
      %p133 = por %p131, %p132
      %p135 = scmp.ne.s32.totalorder %s118, %s134
      %p136 = scmp.eq.s32.totalorder %s21, 0
      %p137 = por %p135, %p136
      %p138 = scmp.le.s32.totalorder 1, %s15
      %p139 = scmp.lt.s32.totalorder %s15, 4
      %p140 = pnand %p138, %p139
      %p141 = pneg %p140
      // Predicated region
      $region9: #{multichannel_forward.2} parent=5 // pred_check
        _
      $region10: #{multichannel_forward.2} parent=5 // pred_check_branch
        %143 = sbr.rel (%p140) target = $region12
      $region11: #{multichannel_forward.2} parent=5 // pred_region
        %s144 = ssub.s32 %s15, 1
        // Predicated region
        $region13: #{multichannel_forward.2} parent=11 // pred_check
          %p145 = pneg %p36
        $region14: #{multichannel_forward.2} parent=11 // pred_check_branch
          %147 = sbr.rel (%p145) target = $region16
        $region15: #{multichannel_forward.2} parent=11 // pred_region
          %149 = vsyncadd [#allocation3], 0
          %s150 = sshll.u32 %s0, 4
          %s151 = int_to_ptr.hbm [resolvable:$true] %s150
          %s152 = sshll.u32 [#allocation2], 4
          %s153 = int_to_ptr.vmem [resolvable:$true] %s152
          %158 = dma.hbm_to_vmem [thread:$0]  %s151, 3072, %s153, [#allocation3], 128, 128, 8
        $region16: #{multichannel_forward.2} parent=11 // pred_fallthru
          _
        // Predicated region
        $region17: #{multichannel_forward.2} parent=11 // pred_check
          %p159 = pneg %p57
        $region18: #{multichannel_forward.2} parent=11 // pred_check_branch
          %161 = sbr.rel (%p159) target = $region20
        $region19: #{multichannel_forward.2} parent=11 // pred_region
          %163 = vsyncadd [#allocation5], 0
          %s164 = sshll.u32 %s1, 4
          %s165 = int_to_ptr.hbm [resolvable:$true] %s164
          %s166 = sshll.u32 [#allocation4], 4
          %s167 = int_to_ptr.vmem [resolvable:$true] %s166
          %172 = dma.hbm_to_vmem [thread:$0]  %s165, 512, %s167, [#allocation5], 128, 128, 8
        $region20: #{multichannel_forward.2} parent=11 // pred_fallthru
          _
        // Predicated region
        $region21: #{multichannel_forward.2} parent=11 // pred_check
          %p173 = pneg %p78
        $region22: #{multichannel_forward.2} parent=11 // pred_check_branch
          %175 = sbr.rel (%p173) target = $region24
        $region23: #{multichannel_forward.2} parent=11 // pred_region
          %177 = vsyncadd [#allocation5], 0
          %s178 = sshll.u32 %s2, 4
          %s179 = int_to_ptr.hbm [resolvable:$true] %s178
          %s180 = sshll.u32 [#allocation6], 4
          %s181 = int_to_ptr.vmem [resolvable:$true] %s180
          %186 = dma.hbm_to_vmem [thread:$0]  %s179, 512, %s181, [#allocation5], 128, 128, 8
        $region24: #{multichannel_forward.2} parent=11 // pred_fallthru
          _
      $region12: #{multichannel_forward.2} parent=5 // pred_fallthru
        _
      %p187 = scmp.lt.s32.totalorder %s15, 3
      // Predicated region
      $region25: #{multichannel_forward.2} parent=5 // pred_check
        %p188 = pneg %p187
      $region26: #{multichannel_forward.2} parent=5 // pred_check_branch
        %190 = sbr.rel (%p188) target = $region28
      $region27: #{multichannel_forward.2} parent=5 // pred_region
        // Predicated region
        $region29: #{multichannel_forward.2} parent=27 // pred_check
          %p191 = pneg %p98
        $region30: #{multichannel_forward.2} parent=27 // pred_check_branch
          %193 = sbr.rel (%p191) target = $region32
        $region31: #{multichannel_forward.2} parent=27 // pred_region
          %s194 = sand.u32 %s88, 1
          %s195 = scalar_lea.sflag [#allocation8], %s194
          %s196 = sand.u32 %s88, 1
          %s197 = smul.addr %s196, 96
          %s198 = scalar_lea.vmem [#allocation7], %s197
          %s199 = smul.u32 3, %s15
          %201 = vsyncadd %s195, 0
          %s202 = smul.addr %s199, 4
          %s203 = smul.addr %s202, 8
          %s204 = scalar_lea.hbm %s3, %s203
          %s205 = sshll.u32 %s204, 4
          %s206 = int_to_ptr.hbm [resolvable:$true] %s205
          %s207 = sshll.u32 %s198, 4
          %s208 = int_to_ptr.vmem [resolvable:$true] %s207
          %213 = dma.hbm_to_vmem [thread:$0]  %s206, 1536, %s208, %s195, 128, 128, 8
        $region32: #{multichannel_forward.2} parent=27 // pred_fallthru
          _
      $region28: #{multichannel_forward.2} parent=5 // pred_fallthru
        _
      %p214 = scmp.le.s32.totalorder 1, %s15
      %p215 = scmp.lt.s32.totalorder %s15, 4
      %p216 = pnand %p214, %p215
      %p217 = pneg %p216
      // Predicated region
      $region33: #{multichannel_forward.2} parent=5 // pred_check
        _
      $region34: #{multichannel_forward.2} parent=5 // pred_check_branch
        %219 = sbr.rel (%p216) target = $region36
      $region35: #{multichannel_forward.2} parent=5 // pred_region
        %s220 = ssub.s32 %s15, 1
        // Predicated region
        $region37: #{multichannel_forward.2} parent=35 // pred_check
          %p221 = pneg %p36
        $region38: #{multichannel_forward.2} parent=35 // pred_check_branch
          %223 = sbr.rel (%p221) target = $region40
        $region39: #{multichannel_forward.2} parent=35 // pred_region
          %225 = dma.done [#allocation3], 3072
        $region40: #{multichannel_forward.2} parent=35 // pred_fallthru
          _
        // Predicated region
        $region41: #{multichannel_forward.2} parent=35 // pred_check
          %p226 = pneg %p57
        $region42: #{multichannel_forward.2} parent=35 // pred_check_branch
          %228 = sbr.rel (%p226) target = $region44
        $region43: #{multichannel_forward.2} parent=35 // pred_region
          %230 = dma.done [#allocation5], 512
        $region44: #{multichannel_forward.2} parent=35 // pred_fallthru
          _
        // Predicated region
        $region45: #{multichannel_forward.2} parent=35 // pred_check
          %p231 = pneg %p78
        $region46: #{multichannel_forward.2} parent=35 // pred_check_branch
          %233 = sbr.rel (%p231) target = $region48
        $region47: #{multichannel_forward.2} parent=35 // pred_region
          %235 = dma.done [#allocation5], 512
        $region48: #{multichannel_forward.2} parent=35 // pred_fallthru
          _
        %s236 = sand.u32 %s91, 1
        %s237 = scalar_lea.sflag [#allocation8], %s236
        %s238 = sand.u32 %s91, 1
        %s239 = smul.addr %s238, 96
        %s240 = scalar_lea.vmem [#allocation7], %s239
        // Predicated region
        $region49: #{multichannel_forward.2} parent=35 // pred_check
          %p241 = pneg %p104
        $region50: #{multichannel_forward.2} parent=35 // pred_check_branch
          %243 = sbr.rel (%p241) target = $region52
        $region51: #{multichannel_forward.2} parent=35 // pred_region
          %245 = dma.done %s237, 1536
        $region52: #{multichannel_forward.2} parent=35 // pred_fallthru
          _
        %p246 = pneg %p36
        %p247 = pneg %p33
        %p248 = pneg %p57
        %p249 = pneg %p54
        %p250 = pneg %p78
        %p251 = pneg %p75
        %s252 = sand.u32 %s91, 1
        %s253 = scalar_lea.sflag [#allocation8], %s252
        %s254 = sand.u32 %s91, 1
        %s255 = smul.addr %s254, 96
        %s256 = scalar_lea.vmem [#allocation7], %s255
        %p257 = pneg %p104
        %p258 = pneg %p101
        %p259 = pneg %p130
        %p260 = pneg %p127
        %s261 = sand.u32 %s117, 1
        %s262 = sand.u32 %s117, 1
        %s263 = smul.addr %s262, 576
        %s264 = scalar_lea.vmem [#allocation9], %s263
        %s265 = smul.u32 3, %s20
        %s266 = smul.u32 3, %s20
        %v267 = vld [vmem:[#allocation2] sm:$0xff]
        %v268 = vld [vmem:[#allocation2 + $0x8] sm:$0xff]
        %v269 = vld [vmem:[#allocation2 + $0x10] sm:$0xff]
        %v270 = vld [vmem:[#allocation2 + $0x18] sm:$0xff]
        %v271 = vld [vmem:[#allocation2 + $0x20] sm:$0xff]
        %v272 = vld [vmem:[#allocation2 + $0x28] sm:$0xff]
        %v273 = vld [vmem:[#allocation2 + $0x30] sm:$0xff]
        %v274 = vld [vmem:[#allocation2 + $0x38] sm:$0xff]
        %v275 = vld [vmem:[#allocation2 + $0x40] sm:$0xff]
        %v276 = vld [vmem:[#allocation2 + $0x48] sm:$0xff]
        %v277 = vld [vmem:[#allocation2 + $0x50] sm:$0xff]
        %v278 = vld [vmem:[#allocation2 + $0x58] sm:$0xff]
        %v279 = vld [vmem:[#allocation2 + $0x60] sm:$0xff]
        %v280 = vld [vmem:[#allocation2 + $0x68] sm:$0xff]
        %v281 = vld [vmem:[#allocation2 + $0x70] sm:$0xff]
        %v282 = vld [vmem:[#allocation2 + $0x78] sm:$0xff]
        %v283 = vld [vmem:[#allocation2 + $0x80] sm:$0xff]
        %v284 = vld [vmem:[#allocation2 + $0x88] sm:$0xff]
        %v285 = vld [vmem:[#allocation2 + $0x90] sm:$0xff]
        %v286 = vld [vmem:[#allocation2 + $0x98] sm:$0xff]
        %v287 = vld [vmem:[#allocation2 + $0xa0] sm:$0xff]
        %v288 = vld [vmem:[#allocation2 + $0xa8] sm:$0xff]
        %v289 = vld [vmem:[#allocation2 + $0xb0] sm:$0xff]
        %v290 = vld [vmem:[#allocation2 + $0xb8] sm:$0xff]
        %v291 = vld [vmem:[#allocation4] sm:$0xff]
        %v292 = vld [vmem:[#allocation4 + $0x8] sm:$0xff]
        %v293 = vld [vmem:[#allocation4 + $0x10] sm:$0xff]
        %v294 = vld [vmem:[#allocation4 + $0x18] sm:$0xff]
        %v295 = vld [vmem:[#allocation6] sm:$0xff]
        %v296 = vld [vmem:[#allocation6 + $0x8] sm:$0xff]
        %v297 = vld [vmem:[#allocation6 + $0x10] sm:$0xff]
        %v298 = vld [vmem:[#allocation6 + $0x18] sm:$0xff]
        %vm299 = vcmask 261120
        %v301 = vsel %vm299, %v291, 0
        %v304 = vsel %vm299, %v292, 0
        %v307 = vsel %vm299, %v293, 0
        %v310 = vsel %vm299, %v294, 0
        %312 = vmatpush.msra.mxu0 0.0
        %313 = vmatpush.msra.mxu0 0.0
        %314 = vmatpush.msra.mxu0 0.0
        %315 = vmatpush.msra.mxu0 0.0
        %316 = vmatpush.msra.mxu0 0.0
        %317 = vmatpush.msra.mxu0 0.0
        %318 = vmatpush.msra.mxu0 0.0
        %319 = vmatpush.msra.mxu0 0.0
        %320 = vmatpush.msra.mxu0 0.0
        %321 = vmatpush.msra.mxu0 0.0
        %322 = vmatpush.msra.mxu0 0.0
        %323 = vmatpush.msra.mxu0 0.0
        %324 = vmatpush.msra.mxu0 %v270
        %325 = vmatpush.msra.mxu0 %v269
        %326 = vmatpush.msra.mxu0 %v268
        %327 = vmatpush.msra.mxu0 %v267
        %328 = vmatmul.f32.gmra.mxu0 %v301
        %v329 = vpop.f32.mrf.mxu0
        %v330 = vadd.f32 0.0, %v329
        %331 = vmatmul.f32.gmra.mxu0 %v304
        %v332 = vpop.f32.mrf.mxu0
        %v333 = vadd.f32 0.0, %v332
        %334 = vmatmul.f32.gmra.mxu0 %v307
        %v335 = vpop.f32.mrf.mxu0
        %v336 = vadd.f32 0.0, %v335
        %337 = vmatmul.f32.gmra.mxu0 %v310
        %v338 = vpop.f32.mrf.mxu0
        %v339 = vadd.f32 0.0, %v338
        %340 = vdwg.mxu0
        %341 = vmatpush.msra.mxu0 0.0
        %342 = vmatpush.msra.mxu0 0.0
        %343 = vmatpush.msra.mxu0 0.0
        %344 = vmatpush.msra.mxu0 0.0
        %345 = vmatpush.msra.mxu0 0.0
        %346 = vmatpush.msra.mxu0 0.0
        %347 = vmatpush.msra.mxu0 0.0
        %348 = vmatpush.msra.mxu0 0.0
        %349 = vmatpush.msra.mxu0 0.0
        %350 = vmatpush.msra.mxu0 0.0
        %351 = vmatpush.msra.mxu0 0.0
        %352 = vmatpush.msra.mxu0 0.0
        %353 = vmatpush.msra.mxu0 %v274
        %354 = vmatpush.msra.mxu0 %v273
        %355 = vmatpush.msra.mxu0 %v272
        %356 = vmatpush.msra.mxu0 %v271
        %357 = vmatmul.f32.gmra.mxu0 %v301
        %v358 = vpop.f32.mrf.mxu0
        %v359 = vadd.f32 0.0, %v358
        %360 = vmatmul.f32.gmra.mxu0 %v304
        %v361 = vpop.f32.mrf.mxu0
        %v362 = vadd.f32 0.0, %v361
        %363 = vmatmul.f32.gmra.mxu0 %v307
        %v364 = vpop.f32.mrf.mxu0
        %v365 = vadd.f32 0.0, %v364
        %366 = vmatmul.f32.gmra.mxu0 %v310
        %v367 = vpop.f32.mrf.mxu0
        %v368 = vadd.f32 0.0, %v367
        %369 = vdwg.mxu0
        %370 = vmatpush.msra.mxu0 0.0
        %371 = vmatpush.msra.mxu0 0.0
        %372 = vmatpush.msra.mxu0 0.0
        %373 = vmatpush.msra.mxu0 0.0
        %374 = vmatpush.msra.mxu0 0.0
        %375 = vmatpush.msra.mxu0 0.0
        %376 = vmatpush.msra.mxu0 0.0
        %377 = vmatpush.msra.mxu0 0.0
        %378 = vmatpush.msra.mxu0 0.0
        %379 = vmatpush.msra.mxu0 0.0
        %380 = vmatpush.msra.mxu0 0.0
        %381 = vmatpush.msra.mxu0 0.0
        %382 = vmatpush.msra.mxu0 %v278
        %383 = vmatpush.msra.mxu0 %v277
        %384 = vmatpush.msra.mxu0 %v276
        %385 = vmatpush.msra.mxu0 %v275
        %386 = vmatmul.f32.gmra.mxu0 %v301
        %v387 = vpop.f32.mrf.mxu0
        %v388 = vadd.f32 0.0, %v387
        %389 = vmatmul.f32.gmra.mxu0 %v304
        %v390 = vpop.f32.mrf.mxu0
        %v391 = vadd.f32 0.0, %v390
        %392 = vmatmul.f32.gmra.mxu0 %v307
        %v393 = vpop.f32.mrf.mxu0
        %v394 = vadd.f32 0.0, %v393
        %395 = vmatmul.f32.gmra.mxu0 %v310
        %v396 = vpop.f32.mrf.mxu0
        %v397 = vadd.f32 0.0, %v396
        %398 = vdwg.mxu0
        %399 = vmatpush.msra.mxu0 0.0
        %400 = vmatpush.msra.mxu0 0.0
        %401 = vmatpush.msra.mxu0 0.0
        %402 = vmatpush.msra.mxu0 0.0
        %403 = vmatpush.msra.mxu0 0.0
        %404 = vmatpush.msra.mxu0 0.0
        %405 = vmatpush.msra.mxu0 0.0
        %406 = vmatpush.msra.mxu0 0.0
        %407 = vmatpush.msra.mxu0 0.0
        %408 = vmatpush.msra.mxu0 0.0
        %409 = vmatpush.msra.mxu0 0.0
        %410 = vmatpush.msra.mxu0 0.0
        %411 = vmatpush.msra.mxu0 %v282
        %412 = vmatpush.msra.mxu0 %v281
        %413 = vmatpush.msra.mxu0 %v280
        %414 = vmatpush.msra.mxu0 %v279
        %415 = vmatmul.f32.gmra.mxu0 %v301
        %v416 = vpop.f32.mrf.mxu0
        %v417 = vadd.f32 0.0, %v416
        %418 = vmatmul.f32.gmra.mxu0 %v304
        %v419 = vpop.f32.mrf.mxu0
        %v420 = vadd.f32 0.0, %v419
        %421 = vmatmul.f32.gmra.mxu0 %v307
        %v422 = vpop.f32.mrf.mxu0
        %v423 = vadd.f32 0.0, %v422
        %424 = vmatmul.f32.gmra.mxu0 %v310
        %v425 = vpop.f32.mrf.mxu0
        %v426 = vadd.f32 0.0, %v425
        %427 = vdwg.mxu0
        %428 = vmatpush.msra.mxu0 0.0
        %429 = vmatpush.msra.mxu0 0.0
        %430 = vmatpush.msra.mxu0 0.0
        %431 = vmatpush.msra.mxu0 0.0
        %432 = vmatpush.msra.mxu0 0.0
        %433 = vmatpush.msra.mxu0 0.0
        %434 = vmatpush.msra.mxu0 0.0
        %435 = vmatpush.msra.mxu0 0.0
        %436 = vmatpush.msra.mxu0 0.0
        %437 = vmatpush.msra.mxu0 0.0
        %438 = vmatpush.msra.mxu0 0.0
        %439 = vmatpush.msra.mxu0 0.0
        %440 = vmatpush.msra.mxu0 %v286
        %441 = vmatpush.msra.mxu0 %v285
        %442 = vmatpush.msra.mxu0 %v284
        %443 = vmatpush.msra.mxu0 %v283
        %444 = vmatmul.f32.gmra.mxu0 %v301
        %v445 = vpop.f32.mrf.mxu0
        %v446 = vadd.f32 0.0, %v445
        %447 = vmatmul.f32.gmra.mxu0 %v304
        %v448 = vpop.f32.mrf.mxu0
        %v449 = vadd.f32 0.0, %v448
        %450 = vmatmul.f32.gmra.mxu0 %v307
        %v451 = vpop.f32.mrf.mxu0
        %v452 = vadd.f32 0.0, %v451
        %453 = vmatmul.f32.gmra.mxu0 %v310
        %v454 = vpop.f32.mrf.mxu0
        %v455 = vadd.f32 0.0, %v454
        %456 = vdwg.mxu0
        %457 = vmatpush.msra.mxu0 0.0
        %458 = vmatpush.msra.mxu0 0.0
        %459 = vmatpush.msra.mxu0 0.0
        %460 = vmatpush.msra.mxu0 0.0
        %461 = vmatpush.msra.mxu0 0.0
        %462 = vmatpush.msra.mxu0 0.0
        %463 = vmatpush.msra.mxu0 0.0
        %464 = vmatpush.msra.mxu0 0.0
        %465 = vmatpush.msra.mxu0 0.0
        %466 = vmatpush.msra.mxu0 0.0
        %467 = vmatpush.msra.mxu0 0.0
        %468 = vmatpush.msra.mxu0 0.0
        %469 = vmatpush.msra.mxu0 %v290
        %470 = vmatpush.msra.mxu0 %v289
        %471 = vmatpush.msra.mxu0 %v288
        %472 = vmatpush.msra.mxu0 %v287
        %473 = vmatmul.f32.gmra.mxu0 %v301
        %v474 = vpop.f32.mrf.mxu0
        %v475 = vadd.f32 0.0, %v474
        %476 = vmatmul.f32.gmra.mxu0 %v304
        %v477 = vpop.f32.mrf.mxu0
        %v478 = vadd.f32 0.0, %v477
        %479 = vmatmul.f32.gmra.mxu0 %v307
        %v480 = vpop.f32.mrf.mxu0
        %v481 = vadd.f32 0.0, %v480
        %482 = vmatmul.f32.gmra.mxu0 %v310
        %v483 = vpop.f32.mrf.mxu0
        %v484 = vadd.f32 0.0, %v483
        %485 = vdwg.mxu0
        %v487 = vsel %vm299, %v330, 0
        %v490 = vsel %vm299, %v333, 0
        %v493 = vsel %vm299, %v336, 0
        %v496 = vsel %vm299, %v339, 0
        %498 = vmatpush.msra.mxu0 0.0
        %499 = vmatpush.msra.mxu0 0.0
        %500 = vmatpush.msra.mxu0 0.0
        %501 = vmatpush.msra.mxu0 0.0
        %502 = vmatpush.msra.mxu0 0.0
        %503 = vmatpush.msra.mxu0 0.0
        %504 = vmatpush.msra.mxu0 0.0
        %505 = vmatpush.msra.mxu0 0.0
        %506 = vmatpush.msra.mxu0 0.0
        %507 = vmatpush.msra.mxu0 0.0
        %508 = vmatpush.msra.mxu0 0.0
        %509 = vmatpush.msra.mxu0 0.0
        %510 = vmatpush.msra.mxu0 %v298
        %511 = vmatpush.msra.mxu0 %v297
        %512 = vmatpush.msra.mxu0 %v296
        %513 = vmatpush.msra.mxu0 %v295
        %514 = vmatmul.f32.gmra.mxu0 %v487
        %v515 = vpop.f32.mrf.mxu0
        %v516 = vadd.f32 0.0, %v515
        %517 = vmatmul.f32.gmra.mxu0 %v490
        %v518 = vpop.f32.mrf.mxu0
        %v519 = vadd.f32 0.0, %v518
        %520 = vmatmul.f32.gmra.mxu0 %v493
        %v521 = vpop.f32.mrf.mxu0
        %v522 = vadd.f32 0.0, %v521
        %523 = vmatmul.f32.gmra.mxu0 %v496
        %v524 = vpop.f32.mrf.mxu0
        %v525 = vadd.f32 0.0, %v524
        %526 = vdwg.mxu0
        %v528 = vsel %vm299, %v359, 0
        %v531 = vsel %vm299, %v362, 0
        %v534 = vsel %vm299, %v365, 0
        %v537 = vsel %vm299, %v368, 0
        %539 = vmatpush.msra.mxu0 0.0
        %540 = vmatpush.msra.mxu0 0.0
        %541 = vmatpush.msra.mxu0 0.0
        %542 = vmatpush.msra.mxu0 0.0
        %543 = vmatpush.msra.mxu0 0.0
        %544 = vmatpush.msra.mxu0 0.0
        %545 = vmatpush.msra.mxu0 0.0
        %546 = vmatpush.msra.mxu0 0.0
        %547 = vmatpush.msra.mxu0 0.0
        %548 = vmatpush.msra.mxu0 0.0
        %549 = vmatpush.msra.mxu0 0.0
        %550 = vmatpush.msra.mxu0 0.0
        %551 = vmatpush.msra.mxu0 %v298
        %552 = vmatpush.msra.mxu0 %v297
        %553 = vmatpush.msra.mxu0 %v296
        %554 = vmatpush.msra.mxu0 %v295
        %555 = vmatmul.f32.gmra.mxu0 %v528
        %v556 = vpop.f32.mrf.mxu0
        %v557 = vadd.f32 0.0, %v556
        %558 = vmatmul.f32.gmra.mxu0 %v531
        %v559 = vpop.f32.mrf.mxu0
        %v560 = vadd.f32 0.0, %v559
        %561 = vmatmul.f32.gmra.mxu0 %v534
        %v562 = vpop.f32.mrf.mxu0
        %v563 = vadd.f32 0.0, %v562
        %564 = vmatmul.f32.gmra.mxu0 %v537
        %v565 = vpop.f32.mrf.mxu0
        %v566 = vadd.f32 0.0, %v565
        %567 = vdwg.mxu0
        %v569 = vsel %vm299, %v388, 0
        %v572 = vsel %vm299, %v391, 0
        %v575 = vsel %vm299, %v394, 0
        %v578 = vsel %vm299, %v397, 0
        %580 = vmatpush.msra.mxu0 0.0
        %581 = vmatpush.msra.mxu0 0.0
        %582 = vmatpush.msra.mxu0 0.0
        %583 = vmatpush.msra.mxu0 0.0
        %584 = vmatpush.msra.mxu0 0.0
        %585 = vmatpush.msra.mxu0 0.0
        %586 = vmatpush.msra.mxu0 0.0
        %587 = vmatpush.msra.mxu0 0.0
        %588 = vmatpush.msra.mxu0 0.0
        %589 = vmatpush.msra.mxu0 0.0
        %590 = vmatpush.msra.mxu0 0.0
        %591 = vmatpush.msra.mxu0 0.0
        %592 = vmatpush.msra.mxu0 %v298
        %593 = vmatpush.msra.mxu0 %v297
        %594 = vmatpush.msra.mxu0 %v296
        %595 = vmatpush.msra.mxu0 %v295
        %596 = vmatmul.f32.gmra.mxu0 %v569
        %v597 = vpop.f32.mrf.mxu0
        %v598 = vadd.f32 0.0, %v597
        %599 = vmatmul.f32.gmra.mxu0 %v572
        %v600 = vpop.f32.mrf.mxu0
        %v601 = vadd.f32 0.0, %v600
        %602 = vmatmul.f32.gmra.mxu0 %v575
        %v603 = vpop.f32.mrf.mxu0
        %v604 = vadd.f32 0.0, %v603
        %605 = vmatmul.f32.gmra.mxu0 %v578
        %v606 = vpop.f32.mrf.mxu0
        %v607 = vadd.f32 0.0, %v606
        %608 = vdwg.mxu0
        %v610 = vsel %vm299, %v417, 0
        %v613 = vsel %vm299, %v420, 0
        %v616 = vsel %vm299, %v423, 0
        %v619 = vsel %vm299, %v426, 0
        %621 = vmatpush.msra.mxu0 0.0
        %622 = vmatpush.msra.mxu0 0.0
        %623 = vmatpush.msra.mxu0 0.0
        %624 = vmatpush.msra.mxu0 0.0
        %625 = vmatpush.msra.mxu0 0.0
        %626 = vmatpush.msra.mxu0 0.0
        %627 = vmatpush.msra.mxu0 0.0
        %628 = vmatpush.msra.mxu0 0.0
        %629 = vmatpush.msra.mxu0 0.0
        %630 = vmatpush.msra.mxu0 0.0
        %631 = vmatpush.msra.mxu0 0.0
        %632 = vmatpush.msra.mxu0 0.0
        %633 = vmatpush.msra.mxu0 %v298
        %634 = vmatpush.msra.mxu0 %v297
        %635 = vmatpush.msra.mxu0 %v296
        %636 = vmatpush.msra.mxu0 %v295
        %637 = vmatmul.f32.gmra.mxu0 %v610
        %v638 = vpop.f32.mrf.mxu0
        %v639 = vadd.f32 0.0, %v638
        %640 = vmatmul.f32.gmra.mxu0 %v613
        %v641 = vpop.f32.mrf.mxu0
        %v642 = vadd.f32 0.0, %v641
        %643 = vmatmul.f32.gmra.mxu0 %v616
        %v644 = vpop.f32.mrf.mxu0
        %v645 = vadd.f32 0.0, %v644
        %646 = vmatmul.f32.gmra.mxu0 %v619
        %v647 = vpop.f32.mrf.mxu0
        %v648 = vadd.f32 0.0, %v647
        %649 = vdwg.mxu0
        %v651 = vsel %vm299, %v446, 0
        %v654 = vsel %vm299, %v449, 0
        %v657 = vsel %vm299, %v452, 0
        %v660 = vsel %vm299, %v455, 0
        %662 = vmatpush.msra.mxu0 0.0
        %663 = vmatpush.msra.mxu0 0.0
        %664 = vmatpush.msra.mxu0 0.0
        %665 = vmatpush.msra.mxu0 0.0
        %666 = vmatpush.msra.mxu0 0.0
        %667 = vmatpush.msra.mxu0 0.0
        %668 = vmatpush.msra.mxu0 0.0
        %669 = vmatpush.msra.mxu0 0.0
        %670 = vmatpush.msra.mxu0 0.0
        %671 = vmatpush.msra.mxu0 0.0
        %672 = vmatpush.msra.mxu0 0.0
        %673 = vmatpush.msra.mxu0 0.0
        %674 = vmatpush.msra.mxu0 %v298
        %675 = vmatpush.msra.mxu0 %v297
        %676 = vmatpush.msra.mxu0 %v296
        %677 = vmatpush.msra.mxu0 %v295
        %678 = vmatmul.f32.gmra.mxu0 %v651
        %v679 = vpop.f32.mrf.mxu0
        %v680 = vadd.f32 0.0, %v679
        %681 = vmatmul.f32.gmra.mxu0 %v654
        %v682 = vpop.f32.mrf.mxu0
        %v683 = vadd.f32 0.0, %v682
        %684 = vmatmul.f32.gmra.mxu0 %v657
        %v685 = vpop.f32.mrf.mxu0
        %v686 = vadd.f32 0.0, %v685
        %687 = vmatmul.f32.gmra.mxu0 %v660
        %v688 = vpop.f32.mrf.mxu0
        %v689 = vadd.f32 0.0, %v688
        %690 = vdwg.mxu0
        %v692 = vsel %vm299, %v475, 0
        %v695 = vsel %vm299, %v478, 0
        %v698 = vsel %vm299, %v481, 0
        %v701 = vsel %vm299, %v484, 0
        %703 = vmatpush.msra.mxu0 0.0
        %704 = vmatpush.msra.mxu0 0.0
        %705 = vmatpush.msra.mxu0 0.0
        %706 = vmatpush.msra.mxu0 0.0
        %707 = vmatpush.msra.mxu0 0.0
        %708 = vmatpush.msra.mxu0 0.0
        %709 = vmatpush.msra.mxu0 0.0
        %710 = vmatpush.msra.mxu0 0.0
        %711 = vmatpush.msra.mxu0 0.0
        %712 = vmatpush.msra.mxu0 0.0
        %713 = vmatpush.msra.mxu0 0.0
        %714 = vmatpush.msra.mxu0 0.0
        %715 = vmatpush.msra.mxu0 %v298
        %716 = vmatpush.msra.mxu0 %v297
        %717 = vmatpush.msra.mxu0 %v296
        %718 = vmatpush.msra.mxu0 %v295
        %719 = vmatmul.f32.gmra.mxu0 %v692
        %v720 = vpop.f32.mrf.mxu0
        %v721 = vadd.f32 0.0, %v720
        %722 = vmatmul.f32.gmra.mxu0 %v695
        %v723 = vpop.f32.mrf.mxu0
        %v724 = vadd.f32 0.0, %v723
        %725 = vmatmul.f32.gmra.mxu0 %v698
        %v726 = vpop.f32.mrf.mxu0
        %v727 = vadd.f32 0.0, %v726
        %728 = vmatmul.f32.gmra.mxu0 %v701
        %v729 = vpop.f32.mrf.mxu0
        %v730 = vadd.f32 0.0, %v729
        %731 = vdwg.mxu0
        %v732 = vld [vmem:[%s240] sm:$0xff]
        %v733 = vld [vmem:[%s240 + $0x8] sm:$0xff]
        %v734 = vld [vmem:[%s240 + $0x10] sm:$0xff]
        %v735 = vld [vmem:[%s240 + $0x18] sm:$0xff]
        %v736 = vmul.f32 %v516, %v732
        %v737 = vmul.f32 %v519, %v733
        %v738 = vmul.f32 %v522, %v734
        %v739 = vmul.f32 %v525, %v735
        %v740 = vmul.f32 %v557, %v732
        %v741 = vmul.f32 %v560, %v733
        %v742 = vmul.f32 %v563, %v734
        %v743 = vmul.f32 %v566, %v735
        %v744 = vmul.f32 %v598, %v732
        %v745 = vmul.f32 %v601, %v733
        %v746 = vmul.f32 %v604, %v734
        %v747 = vmul.f32 %v607, %v735
        %v748 = vmul.f32 %v639, %v732
        %v749 = vmul.f32 %v642, %v733
        %v750 = vmul.f32 %v645, %v734
        %v751 = vmul.f32 %v648, %v735
        %v752 = vmul.f32 %v680, %v732
        %v753 = vmul.f32 %v683, %v733
        %v754 = vmul.f32 %v686, %v734
        %v755 = vmul.f32 %v689, %v735
        %v756 = vmul.f32 %v721, %v732
        %v757 = vmul.f32 %v724, %v733
        %v758 = vmul.f32 %v727, %v734
        %v759 = vmul.f32 %v730, %v735
        %v761 = vsel %vm299, %v295, 0
        %v764 = vsel %vm299, %v296, 0
        %v767 = vsel %vm299, %v297, 0
        %v770 = vsel %vm299, %v298, 0
        %772 = vmatpush.msra.mxu0 0.0
        %773 = vmatpush.msra.mxu0 0.0
        %774 = vmatpush.msra.mxu0 0.0
        %775 = vmatpush.msra.mxu0 0.0
        %776 = vmatpush.msra.mxu0 0.0
        %777 = vmatpush.msra.mxu0 0.0
        %778 = vmatpush.msra.mxu0 0.0
        %779 = vmatpush.msra.mxu0 0.0
        %780 = vmatpush.msra.mxu0 0.0
        %781 = vmatpush.msra.mxu0 0.0
        %782 = vmatpush.msra.mxu0 0.0
        %783 = vmatpush.msra.mxu0 0.0
        %784 = vmatpush.msra.mxu0 %v739
        %785 = vmatpush.msra.mxu0 %v738
        %786 = vmatpush.msra.mxu0 %v737
        %787 = vmatpush.msra.mxu0 %v736
        %788 = vmatmul.f32.gmra.mxu0 %v761
        %v789 = vpop.f32.mrf.mxu0
        %v790 = vadd.f32 0.0, %v789
        %791 = vmatmul.f32.gmra.mxu0 %v764
        %v792 = vpop.f32.mrf.mxu0
        %v793 = vadd.f32 0.0, %v792
        %794 = vmatmul.f32.gmra.mxu0 %v767
        %v795 = vpop.f32.mrf.mxu0
        %v796 = vadd.f32 0.0, %v795
        %797 = vmatmul.f32.gmra.mxu0 %v770
        %v798 = vpop.f32.mrf.mxu0
        %v799 = vadd.f32 0.0, %v798
        %800 = vdwg.mxu0
        %801 = vmatpush.msra.mxu0 0.0
        %802 = vmatpush.msra.mxu0 0.0
        %803 = vmatpush.msra.mxu0 0.0
        %804 = vmatpush.msra.mxu0 0.0
        %805 = vmatpush.msra.mxu0 0.0
        %806 = vmatpush.msra.mxu0 0.0
        %807 = vmatpush.msra.mxu0 0.0
        %808 = vmatpush.msra.mxu0 0.0
        %809 = vmatpush.msra.mxu0 0.0
        %810 = vmatpush.msra.mxu0 0.0
        %811 = vmatpush.msra.mxu0 0.0
        %812 = vmatpush.msra.mxu0 0.0
        %813 = vmatpush.msra.mxu0 %v743
        %814 = vmatpush.msra.mxu0 %v742
        %815 = vmatpush.msra.mxu0 %v741
        %816 = vmatpush.msra.mxu0 %v740
        %817 = vmatmul.f32.gmra.mxu0 %v761
        %v818 = vpop.f32.mrf.mxu0
        %v819 = vadd.f32 0.0, %v818
        %820 = vmatmul.f32.gmra.mxu0 %v764
        %v821 = vpop.f32.mrf.mxu0
        %v822 = vadd.f32 0.0, %v821
        %823 = vmatmul.f32.gmra.mxu0 %v767
        %v824 = vpop.f32.mrf.mxu0
        %v825 = vadd.f32 0.0, %v824
        %826 = vmatmul.f32.gmra.mxu0 %v770
        %v827 = vpop.f32.mrf.mxu0
        %v828 = vadd.f32 0.0, %v827
        %829 = vdwg.mxu0
        %830 = vmatpush.msra.mxu0 0.0
        %831 = vmatpush.msra.mxu0 0.0
        %832 = vmatpush.msra.mxu0 0.0
        %833 = vmatpush.msra.mxu0 0.0
        %834 = vmatpush.msra.mxu0 0.0
        %835 = vmatpush.msra.mxu0 0.0
        %836 = vmatpush.msra.mxu0 0.0
        %837 = vmatpush.msra.mxu0 0.0
        %838 = vmatpush.msra.mxu0 0.0
        %839 = vmatpush.msra.mxu0 0.0
        %840 = vmatpush.msra.mxu0 0.0
        %841 = vmatpush.msra.mxu0 0.0
        %842 = vmatpush.msra.mxu0 %v747
        %843 = vmatpush.msra.mxu0 %v746
        %844 = vmatpush.msra.mxu0 %v745
        %845 = vmatpush.msra.mxu0 %v744
        %846 = vmatmul.f32.gmra.mxu0 %v761
        %v847 = vpop.f32.mrf.mxu0
        %v848 = vadd.f32 0.0, %v847
        %849 = vmatmul.f32.gmra.mxu0 %v764
        %v850 = vpop.f32.mrf.mxu0
        %v851 = vadd.f32 0.0, %v850
        %852 = vmatmul.f32.gmra.mxu0 %v767
        %v853 = vpop.f32.mrf.mxu0
        %v854 = vadd.f32 0.0, %v853
        %855 = vmatmul.f32.gmra.mxu0 %v770
        %v856 = vpop.f32.mrf.mxu0
        %v857 = vadd.f32 0.0, %v856
        %858 = vdwg.mxu0
        %859 = vmatpush.msra.mxu0 0.0
        %860 = vmatpush.msra.mxu0 0.0
        %861 = vmatpush.msra.mxu0 0.0
        %862 = vmatpush.msra.mxu0 0.0
        %863 = vmatpush.msra.mxu0 0.0
        %864 = vmatpush.msra.mxu0 0.0
        %865 = vmatpush.msra.mxu0 0.0
        %866 = vmatpush.msra.mxu0 0.0
        %867 = vmatpush.msra.mxu0 0.0
        %868 = vmatpush.msra.mxu0 0.0
        %869 = vmatpush.msra.mxu0 0.0
        %870 = vmatpush.msra.mxu0 0.0
        %871 = vmatpush.msra.mxu0 %v751
        %872 = vmatpush.msra.mxu0 %v750
        %873 = vmatpush.msra.mxu0 %v749
        %874 = vmatpush.msra.mxu0 %v748
        %875 = vmatmul.f32.gmra.mxu0 %v761
        %v876 = vpop.f32.mrf.mxu0
        %v877 = vadd.f32 0.0, %v876
        %878 = vmatmul.f32.gmra.mxu0 %v764
        %v879 = vpop.f32.mrf.mxu0
        %v880 = vadd.f32 0.0, %v879
        %881 = vmatmul.f32.gmra.mxu0 %v767
        %v882 = vpop.f32.mrf.mxu0
        %v883 = vadd.f32 0.0, %v882
        %884 = vmatmul.f32.gmra.mxu0 %v770
        %v885 = vpop.f32.mrf.mxu0
        %v886 = vadd.f32 0.0, %v885
        %887 = vdwg.mxu0
        %888 = vmatpush.msra.mxu0 0.0
        %889 = vmatpush.msra.mxu0 0.0
        %890 = vmatpush.msra.mxu0 0.0
        %891 = vmatpush.msra.mxu0 0.0
        %892 = vmatpush.msra.mxu0 0.0
        %893 = vmatpush.msra.mxu0 0.0
        %894 = vmatpush.msra.mxu0 0.0
        %895 = vmatpush.msra.mxu0 0.0
        %896 = vmatpush.msra.mxu0 0.0
        %897 = vmatpush.msra.mxu0 0.0
        %898 = vmatpush.msra.mxu0 0.0
        %899 = vmatpush.msra.mxu0 0.0
        %900 = vmatpush.msra.mxu0 %v755
        %901 = vmatpush.msra.mxu0 %v754
        %902 = vmatpush.msra.mxu0 %v753
        %903 = vmatpush.msra.mxu0 %v752
        %904 = vmatmul.f32.gmra.mxu0 %v761
        %v905 = vpop.f32.mrf.mxu0
        %v906 = vadd.f32 0.0, %v905
        %907 = vmatmul.f32.gmra.mxu0 %v764
        %v908 = vpop.f32.mrf.mxu0
        %v909 = vadd.f32 0.0, %v908
        %910 = vmatmul.f32.gmra.mxu0 %v767
        %v911 = vpop.f32.mrf.mxu0
        %v912 = vadd.f32 0.0, %v911
        %913 = vmatmul.f32.gmra.mxu0 %v770
        %v914 = vpop.f32.mrf.mxu0
        %v915 = vadd.f32 0.0, %v914
        %916 = vdwg.mxu0
        %917 = vmatpush.msra.mxu0 0.0
        %918 = vmatpush.msra.mxu0 0.0
        %919 = vmatpush.msra.mxu0 0.0
        %920 = vmatpush.msra.mxu0 0.0
        %921 = vmatpush.msra.mxu0 0.0
        %922 = vmatpush.msra.mxu0 0.0
        %923 = vmatpush.msra.mxu0 0.0
        %924 = vmatpush.msra.mxu0 0.0
        %925 = vmatpush.msra.mxu0 0.0
        %926 = vmatpush.msra.mxu0 0.0
        %927 = vmatpush.msra.mxu0 0.0
        %928 = vmatpush.msra.mxu0 0.0
        %929 = vmatpush.msra.mxu0 %v759
        %930 = vmatpush.msra.mxu0 %v758
        %931 = vmatpush.msra.mxu0 %v757
        %932 = vmatpush.msra.mxu0 %v756
        %933 = vmatmul.f32.gmra.mxu0 %v761
        %v934 = vpop.f32.mrf.mxu0
        %v935 = vadd.f32 0.0, %v934
        %936 = vmatmul.f32.gmra.mxu0 %v764
        %v937 = vpop.f32.mrf.mxu0
        %v938 = vadd.f32 0.0, %v937
        %939 = vmatmul.f32.gmra.mxu0 %v767
        %v940 = vpop.f32.mrf.mxu0
        %v941 = vadd.f32 0.0, %v940
        %942 = vmatmul.f32.gmra.mxu0 %v770
        %v943 = vpop.f32.mrf.mxu0
        %v944 = vadd.f32 0.0, %v943
        %945 = vdwg.mxu0
        %v947 = vsel %vm299, %v790, 0
        %v950 = vsel %vm299, %v793, 0
        %v953 = vsel %vm299, %v796, 0
        %v956 = vsel %vm299, %v799, 0
        %958 = vmatpush.msra.mxu0 0.0
        %959 = vmatpush.msra.mxu0 0.0
        %960 = vmatpush.msra.mxu0 0.0
        %961 = vmatpush.msra.mxu0 0.0
        %962 = vmatpush.msra.mxu0 0.0
        %963 = vmatpush.msra.mxu0 0.0
        %964 = vmatpush.msra.mxu0 0.0
        %965 = vmatpush.msra.mxu0 0.0
        %966 = vmatpush.msra.mxu0 0.0
        %967 = vmatpush.msra.mxu0 0.0
        %968 = vmatpush.msra.mxu0 0.0
        %969 = vmatpush.msra.mxu0 0.0
        %970 = vmatpush.msra.mxu0 %v294
        %971 = vmatpush.msra.mxu0 %v293
        %972 = vmatpush.msra.mxu0 %v292
        %973 = vmatpush.msra.mxu0 %v291
        %974 = vmatmul.f32.gmra.mxu0 %v947
        %v975 = vpop.f32.mrf.mxu0
        %v976 = vadd.f32 0.0, %v975
        %977 = vmatmul.f32.gmra.mxu0 %v950
        %v978 = vpop.f32.mrf.mxu0
        %v979 = vadd.f32 0.0, %v978
        %980 = vmatmul.f32.gmra.mxu0 %v953
        %v981 = vpop.f32.mrf.mxu0
        %v982 = vadd.f32 0.0, %v981
        %983 = vmatmul.f32.gmra.mxu0 %v956
        %v984 = vpop.f32.mrf.mxu0
        %v985 = vadd.f32 0.0, %v984
        %986 = vdwg.mxu0
        %v988 = vsel %vm299, %v819, 0
        %v991 = vsel %vm299, %v822, 0
        %v994 = vsel %vm299, %v825, 0
        %v997 = vsel %vm299, %v828, 0
        %999 = vmatpush.msra.mxu0 0.0
        %1000 = vmatpush.msra.mxu0 0.0
        %1001 = vmatpush.msra.mxu0 0.0
        %1002 = vmatpush.msra.mxu0 0.0
        %1003 = vmatpush.msra.mxu0 0.0
        %1004 = vmatpush.msra.mxu0 0.0
        %1005 = vmatpush.msra.mxu0 0.0
        %1006 = vmatpush.msra.mxu0 0.0
        %1007 = vmatpush.msra.mxu0 0.0
        %1008 = vmatpush.msra.mxu0 0.0
        %1009 = vmatpush.msra.mxu0 0.0
        %1010 = vmatpush.msra.mxu0 0.0
        %1011 = vmatpush.msra.mxu0 %v294
        %1012 = vmatpush.msra.mxu0 %v293
        %1013 = vmatpush.msra.mxu0 %v292
        %1014 = vmatpush.msra.mxu0 %v291
        %1015 = vmatmul.f32.gmra.mxu0 %v988
        %v1016 = vpop.f32.mrf.mxu0
        %v1017 = vadd.f32 0.0, %v1016
        %1018 = vmatmul.f32.gmra.mxu0 %v991
        %v1019 = vpop.f32.mrf.mxu0
        %v1020 = vadd.f32 0.0, %v1019
        %1021 = vmatmul.f32.gmra.mxu0 %v994
        %v1022 = vpop.f32.mrf.mxu0
        %v1023 = vadd.f32 0.0, %v1022
        %1024 = vmatmul.f32.gmra.mxu0 %v997
        %v1025 = vpop.f32.mrf.mxu0
        %v1026 = vadd.f32 0.0, %v1025
        %1027 = vdwg.mxu0
        %v1029 = vsel %vm299, %v848, 0
        %v1032 = vsel %vm299, %v851, 0
        %v1035 = vsel %vm299, %v854, 0
        %v1038 = vsel %vm299, %v857, 0
        %1040 = vmatpush.msra.mxu0 0.0
        %1041 = vmatpush.msra.mxu0 0.0
        %1042 = vmatpush.msra.mxu0 0.0
        %1043 = vmatpush.msra.mxu0 0.0
        %1044 = vmatpush.msra.mxu0 0.0
        %1045 = vmatpush.msra.mxu0 0.0
        %1046 = vmatpush.msra.mxu0 0.0
        %1047 = vmatpush.msra.mxu0 0.0
        %1048 = vmatpush.msra.mxu0 0.0
        %1049 = vmatpush.msra.mxu0 0.0
        %1050 = vmatpush.msra.mxu0 0.0
        %1051 = vmatpush.msra.mxu0 0.0
        %1052 = vmatpush.msra.mxu0 %v294
        %1053 = vmatpush.msra.mxu0 %v293
        %1054 = vmatpush.msra.mxu0 %v292
        %1055 = vmatpush.msra.mxu0 %v291
        %1056 = vmatmul.f32.gmra.mxu0 %v1029
        %v1057 = vpop.f32.mrf.mxu0
        %v1058 = vadd.f32 0.0, %v1057
        %1059 = vmatmul.f32.gmra.mxu0 %v1032
        %v1060 = vpop.f32.mrf.mxu0
        %v1061 = vadd.f32 0.0, %v1060
        %1062 = vmatmul.f32.gmra.mxu0 %v1035
        %v1063 = vpop.f32.mrf.mxu0
        %v1064 = vadd.f32 0.0, %v1063
        %1065 = vmatmul.f32.gmra.mxu0 %v1038
        %v1066 = vpop.f32.mrf.mxu0
        %v1067 = vadd.f32 0.0, %v1066
        %1068 = vdwg.mxu0
        %v1070 = vsel %vm299, %v877, 0
        %v1073 = vsel %vm299, %v880, 0
        %v1076 = vsel %vm299, %v883, 0
        %v1079 = vsel %vm299, %v886, 0
        %1081 = vmatpush.msra.mxu0 0.0
        %1082 = vmatpush.msra.mxu0 0.0
        %1083 = vmatpush.msra.mxu0 0.0
        %1084 = vmatpush.msra.mxu0 0.0
        %1085 = vmatpush.msra.mxu0 0.0
        %1086 = vmatpush.msra.mxu0 0.0
        %1087 = vmatpush.msra.mxu0 0.0
        %1088 = vmatpush.msra.mxu0 0.0
        %1089 = vmatpush.msra.mxu0 0.0
        %1090 = vmatpush.msra.mxu0 0.0
        %1091 = vmatpush.msra.mxu0 0.0
        %1092 = vmatpush.msra.mxu0 0.0
        %1093 = vmatpush.msra.mxu0 %v294
        %1094 = vmatpush.msra.mxu0 %v293
        %1095 = vmatpush.msra.mxu0 %v292
        %1096 = vmatpush.msra.mxu0 %v291
        %1097 = vmatmul.f32.gmra.mxu0 %v1070
        %v1098 = vpop.f32.mrf.mxu0
        %v1099 = vadd.f32 0.0, %v1098
        %1100 = vmatmul.f32.gmra.mxu0 %v1073
        %v1101 = vpop.f32.mrf.mxu0
        %v1102 = vadd.f32 0.0, %v1101
        %1103 = vmatmul.f32.gmra.mxu0 %v1076
        %v1104 = vpop.f32.mrf.mxu0
        %v1105 = vadd.f32 0.0, %v1104
        %1106 = vmatmul.f32.gmra.mxu0 %v1079
        %v1107 = vpop.f32.mrf.mxu0
        %v1108 = vadd.f32 0.0, %v1107
        %1109 = vdwg.mxu0
        %v1111 = vsel %vm299, %v906, 0
        %v1114 = vsel %vm299, %v909, 0
        %v1117 = vsel %vm299, %v912, 0
        %v1120 = vsel %vm299, %v915, 0
        %1122 = vmatpush.msra.mxu0 0.0
        %1123 = vmatpush.msra.mxu0 0.0
        %1124 = vmatpush.msra.mxu0 0.0
        %1125 = vmatpush.msra.mxu0 0.0
        %1126 = vmatpush.msra.mxu0 0.0
        %1127 = vmatpush.msra.mxu0 0.0
        %1128 = vmatpush.msra.mxu0 0.0
        %1129 = vmatpush.msra.mxu0 0.0
        %1130 = vmatpush.msra.mxu0 0.0
        %1131 = vmatpush.msra.mxu0 0.0
        %1132 = vmatpush.msra.mxu0 0.0
        %1133 = vmatpush.msra.mxu0 0.0
        %1134 = vmatpush.msra.mxu0 %v294
        %1135 = vmatpush.msra.mxu0 %v293
        %1136 = vmatpush.msra.mxu0 %v292
        %1137 = vmatpush.msra.mxu0 %v291
        %1138 = vmatmul.f32.gmra.mxu0 %v1111
        %v1139 = vpop.f32.mrf.mxu0
        %v1140 = vadd.f32 0.0, %v1139
        %1141 = vmatmul.f32.gmra.mxu0 %v1114
        %v1142 = vpop.f32.mrf.mxu0
        %v1143 = vadd.f32 0.0, %v1142
        %1144 = vmatmul.f32.gmra.mxu0 %v1117
        %v1145 = vpop.f32.mrf.mxu0
        %v1146 = vadd.f32 0.0, %v1145
        %1147 = vmatmul.f32.gmra.mxu0 %v1120
        %v1148 = vpop.f32.mrf.mxu0
        %v1149 = vadd.f32 0.0, %v1148
        %1150 = vdwg.mxu0
        %v1152 = vsel %vm299, %v935, 0
        %v1155 = vsel %vm299, %v938, 0
        %v1158 = vsel %vm299, %v941, 0
        %v1161 = vsel %vm299, %v944, 0
        %1163 = vmatpush.msra.mxu0 0.0
        %1164 = vmatpush.msra.mxu0 0.0
        %1165 = vmatpush.msra.mxu0 0.0
        %1166 = vmatpush.msra.mxu0 0.0
        %1167 = vmatpush.msra.mxu0 0.0
        %1168 = vmatpush.msra.mxu0 0.0
        %1169 = vmatpush.msra.mxu0 0.0
        %1170 = vmatpush.msra.mxu0 0.0
        %1171 = vmatpush.msra.mxu0 0.0
        %1172 = vmatpush.msra.mxu0 0.0
        %1173 = vmatpush.msra.mxu0 0.0
        %1174 = vmatpush.msra.mxu0 0.0
        %1175 = vmatpush.msra.mxu0 %v294
        %1176 = vmatpush.msra.mxu0 %v293
        %1177 = vmatpush.msra.mxu0 %v292
        %1178 = vmatpush.msra.mxu0 %v291
        %1179 = vmatmul.f32.gmra.mxu0 %v1152
        %v1180 = vpop.f32.mrf.mxu0
        %v1181 = vadd.f32 0.0, %v1180
        %1182 = vmatmul.f32.gmra.mxu0 %v1155
        %v1183 = vpop.f32.mrf.mxu0
        %v1184 = vadd.f32 0.0, %v1183
        %1185 = vmatmul.f32.gmra.mxu0 %v1158
        %v1186 = vpop.f32.mrf.mxu0
        %v1187 = vadd.f32 0.0, %v1186
        %1188 = vmatmul.f32.gmra.mxu0 %v1161
        %v1189 = vpop.f32.mrf.mxu0
        %v1190 = vadd.f32 0.0, %v1189
        %1191 = vdwg.mxu0
        %v1192 = vmul.f32 %v976, %v976
        %v1193 = vmul.f32 %v979, %v979
        %v1194 = vmul.f32 %v982, %v982
        %v1195 = vmul.f32 %v985, %v985
        %v1196 = vmul.f32 %v1017, %v1017
        %v1197 = vmul.f32 %v1020, %v1020
        %v1198 = vmul.f32 %v1023, %v1023
        %v1199 = vmul.f32 %v1026, %v1026
        %v1200 = vmul.f32 %v1058, %v1058
        %v1201 = vmul.f32 %v1061, %v1061
        %v1202 = vmul.f32 %v1064, %v1064
        %v1203 = vmul.f32 %v1067, %v1067
        %v1204 = vmul.f32 %v1099, %v1099
        %v1205 = vmul.f32 %v1102, %v1102
        %v1206 = vmul.f32 %v1105, %v1105
        %v1207 = vmul.f32 %v1108, %v1108
        %v1208 = vmul.f32 %v1140, %v1140
        %v1209 = vmul.f32 %v1143, %v1143
        %v1210 = vmul.f32 %v1146, %v1146
        %v1211 = vmul.f32 %v1149, %v1149
        %v1212 = vmul.f32 %v1181, %v1181
        %v1213 = vmul.f32 %v1184, %v1184
        %v1214 = vmul.f32 %v1187, %v1187
        %v1215 = vmul.f32 %v1190, %v1190
        %v1216 = vsel %vm299, %v1192, 0.0
        %1217 = vadd.xlane.f32.xlu0 %v1216
        %v1218 = vpop.xlane.xlu0 %1217
        %v1219 = vsel %vm299, %v1193, 0.0
        %1220 = vadd.xlane.f32.xlu0 %v1219
        %v1221 = vpop.xlane.xlu0 %1220
        %v1222 = vsel %vm299, %v1194, 0.0
        %1223 = vadd.xlane.f32.xlu0 %v1222
        %v1224 = vpop.xlane.xlu0 %1223
        %v1225 = vsel %vm299, %v1195, 0.0
        %1226 = vadd.xlane.f32.xlu0 %v1225
        %v1227 = vpop.xlane.xlu0 %1226
        %v1228 = vsel %vm299, %v1196, 0.0
        %1229 = vadd.xlane.f32.xlu0 %v1228
        %v1230 = vpop.xlane.xlu0 %1229
        %v1231 = vsel %vm299, %v1197, 0.0
        %1232 = vadd.xlane.f32.xlu0 %v1231
        %v1233 = vpop.xlane.xlu0 %1232
        %v1234 = vsel %vm299, %v1198, 0.0
        %1235 = vadd.xlane.f32.xlu0 %v1234
        %v1236 = vpop.xlane.xlu0 %1235
        %v1237 = vsel %vm299, %v1199, 0.0
        %1238 = vadd.xlane.f32.xlu0 %v1237
        %v1239 = vpop.xlane.xlu0 %1238
        %v1240 = vsel %vm299, %v1200, 0.0
        %1241 = vadd.xlane.f32.xlu0 %v1240
        %v1242 = vpop.xlane.xlu0 %1241
        %v1243 = vsel %vm299, %v1201, 0.0
        %1244 = vadd.xlane.f32.xlu0 %v1243
        %v1245 = vpop.xlane.xlu0 %1244
        %v1246 = vsel %vm299, %v1202, 0.0
        %1247 = vadd.xlane.f32.xlu0 %v1246
        %v1248 = vpop.xlane.xlu0 %1247
        %v1249 = vsel %vm299, %v1203, 0.0
        %1250 = vadd.xlane.f32.xlu0 %v1249
        %v1251 = vpop.xlane.xlu0 %1250
        %v1252 = vsel %vm299, %v1204, 0.0
        %1253 = vadd.xlane.f32.xlu0 %v1252
        %v1254 = vpop.xlane.xlu0 %1253
        %v1255 = vsel %vm299, %v1205, 0.0
        %1256 = vadd.xlane.f32.xlu0 %v1255
        %v1257 = vpop.xlane.xlu0 %1256
        %v1258 = vsel %vm299, %v1206, 0.0
        %1259 = vadd.xlane.f32.xlu0 %v1258
        %v1260 = vpop.xlane.xlu0 %1259
        %v1261 = vsel %vm299, %v1207, 0.0
        %1262 = vadd.xlane.f32.xlu0 %v1261
        %v1263 = vpop.xlane.xlu0 %1262
        %v1264 = vsel %vm299, %v1208, 0.0
        %1265 = vadd.xlane.f32.xlu0 %v1264
        %v1266 = vpop.xlane.xlu0 %1265
        %v1267 = vsel %vm299, %v1209, 0.0
        %1268 = vadd.xlane.f32.xlu0 %v1267
        %v1269 = vpop.xlane.xlu0 %1268
        %v1270 = vsel %vm299, %v1210, 0.0
        %1271 = vadd.xlane.f32.xlu0 %v1270
        %v1272 = vpop.xlane.xlu0 %1271
        %v1273 = vsel %vm299, %v1211, 0.0
        %1274 = vadd.xlane.f32.xlu0 %v1273
        %v1275 = vpop.xlane.xlu0 %1274
        %v1276 = vsel %vm299, %v1212, 0.0
        %1277 = vadd.xlane.f32.xlu0 %v1276
        %v1278 = vpop.xlane.xlu0 %1277
        %v1279 = vsel %vm299, %v1213, 0.0
        %1280 = vadd.xlane.f32.xlu0 %v1279
        %v1281 = vpop.xlane.xlu0 %1280
        %v1282 = vsel %vm299, %v1214, 0.0
        %1283 = vadd.xlane.f32.xlu0 %v1282
        %v1284 = vpop.xlane.xlu0 %1283
        %v1285 = vsel %vm299, %v1215, 0.0
        %1286 = vadd.xlane.f32.xlu0 %v1285
        %v1287 = vpop.xlane.xlu0 %1286
        %v1288 = vadd.f32 %v1218, %v1221
        %v1289 = vadd.f32 %v1288, %v1224
        %v1290 = vadd.f32 %v1289, %v1227
        %v1291 = vrot.slane %v1290, 4
        %v1292 = vadd.f32 %v1290, %v1291
        %v1293 = vrot.slane %v1292, 2
        %v1294 = vadd.f32 %v1292, %v1293
        %v1295 = vrot.slane %v1294, 1
        %v1296 = vadd.f32 %v1294, %v1295
        %v1297 = vadd.f32 %v1230, %v1233
        %v1298 = vadd.f32 %v1297, %v1236
        %v1299 = vadd.f32 %v1298, %v1239
        %v1300 = vrot.slane %v1299, 4
        %v1301 = vadd.f32 %v1299, %v1300
        %v1302 = vrot.slane %v1301, 2
        %v1303 = vadd.f32 %v1301, %v1302
        %v1304 = vrot.slane %v1303, 1
        %v1305 = vadd.f32 %v1303, %v1304
        %v1306 = vadd.f32 %v1242, %v1245
        %v1307 = vadd.f32 %v1306, %v1248
        %v1308 = vadd.f32 %v1307, %v1251
        %v1309 = vrot.slane %v1308, 4
        %v1310 = vadd.f32 %v1308, %v1309
        %v1311 = vrot.slane %v1310, 2
        %v1312 = vadd.f32 %v1310, %v1311
        %v1313 = vrot.slane %v1312, 1
        %v1314 = vadd.f32 %v1312, %v1313
        %v1315 = vadd.f32 %v1254, %v1257
        %v1316 = vadd.f32 %v1315, %v1260
        %v1317 = vadd.f32 %v1316, %v1263
        %v1318 = vrot.slane %v1317, 4
        %v1319 = vadd.f32 %v1317, %v1318
        %v1320 = vrot.slane %v1319, 2
        %v1321 = vadd.f32 %v1319, %v1320
        %v1322 = vrot.slane %v1321, 1
        %v1323 = vadd.f32 %v1321, %v1322
        %v1324 = vadd.f32 %v1266, %v1269
        %v1325 = vadd.f32 %v1324, %v1272
        %v1326 = vadd.f32 %v1325, %v1275
        %v1327 = vrot.slane %v1326, 4
        %v1328 = vadd.f32 %v1326, %v1327
        %v1329 = vrot.slane %v1328, 2
        %v1330 = vadd.f32 %v1328, %v1329
        %v1331 = vrot.slane %v1330, 1
        %v1332 = vadd.f32 %v1330, %v1331
        %v1333 = vadd.f32 %v1278, %v1281
        %v1334 = vadd.f32 %v1333, %v1284
        %v1335 = vadd.f32 %v1334, %v1287
        %v1336 = vrot.slane %v1335, 4
        %v1337 = vadd.f32 %v1335, %v1336
        %v1338 = vrot.slane %v1337, 2
        %v1339 = vadd.f32 %v1337, %v1338
        %v1340 = vrot.slane %v1339, 1
        %v1341 = vadd.f32 %v1339, %v1340
        %v1342 = vrsqrt.pop %v1296
        %v1343 = vmul.f32 %v1342, %v1296
        %v1344 = vmul.f32 %v1343, %v1342
        %v1345 = vmul.f32 0.5, %v1344
        %v1346 = vsub.f32 1.5, %v1345
        %v1347 = vmul.f32 %v1342, %v1346
        %vm1348 = vweird.f32 %v1296
        %vm1349 = vweird.f32 %v1342
        %vm1350 = vmor %vm1348, %vm1349
        %v1351 = vsel %vm1350, %v1342, %v1347
        %v1352 = vrsqrt.pop %v1305
        %v1353 = vmul.f32 %v1352, %v1305
        %v1354 = vmul.f32 %v1353, %v1352
        %v1355 = vmul.f32 0.5, %v1354
        %v1356 = vsub.f32 1.5, %v1355
        %v1357 = vmul.f32 %v1352, %v1356
        %vm1358 = vweird.f32 %v1305
        %vm1359 = vweird.f32 %v1352
        %vm1360 = vmor %vm1358, %vm1359
        %v1361 = vsel %vm1360, %v1352, %v1357
        %v1362 = vrsqrt.pop %v1314
        %v1363 = vmul.f32 %v1362, %v1314
        %v1364 = vmul.f32 %v1363, %v1362
        %v1365 = vmul.f32 0.5, %v1364
        %v1366 = vsub.f32 1.5, %v1365
        %v1367 = vmul.f32 %v1362, %v1366
        %vm1368 = vweird.f32 %v1314
        %vm1369 = vweird.f32 %v1362
        %vm1370 = vmor %vm1368, %vm1369
        %v1371 = vsel %vm1370, %v1362, %v1367
        %v1372 = vrsqrt.pop %v1323
        %v1373 = vmul.f32 %v1372, %v1323
        %v1374 = vmul.f32 %v1373, %v1372
        %v1375 = vmul.f32 0.5, %v1374
        %v1376 = vsub.f32 1.5, %v1375
        %v1377 = vmul.f32 %v1372, %v1376
        %vm1378 = vweird.f32 %v1323
        %vm1379 = vweird.f32 %v1372
        %vm1380 = vmor %vm1378, %vm1379
        %v1381 = vsel %vm1380, %v1372, %v1377
        %v1382 = vrsqrt.pop %v1332
        %v1383 = vmul.f32 %v1382, %v1332
        %v1384 = vmul.f32 %v1383, %v1382
        %v1385 = vmul.f32 0.5, %v1384
        %v1386 = vsub.f32 1.5, %v1385
        %v1387 = vmul.f32 %v1382, %v1386
        %vm1388 = vweird.f32 %v1332
        %vm1389 = vweird.f32 %v1382
        %vm1390 = vmor %vm1388, %vm1389
        %v1391 = vsel %vm1390, %v1382, %v1387
        %v1392 = vrsqrt.pop %v1341
        %v1393 = vmul.f32 %v1392, %v1341
        %v1394 = vmul.f32 %v1393, %v1392
        %v1395 = vmul.f32 0.5, %v1394
        %v1396 = vsub.f32 1.5, %v1395
        %v1397 = vmul.f32 %v1392, %v1396
        %vm1398 = vweird.f32 %v1341
        %vm1399 = vweird.f32 %v1392
        %vm1400 = vmor %vm1398, %vm1399
        %v1401 = vsel %vm1400, %v1392, %v1397
        %v1402 = vmul.f32 %v976, %v1351
        %v1403 = vmul.f32 %v979, %v1351
        %v1404 = vmul.f32 %v982, %v1351
        %v1405 = vmul.f32 %v985, %v1351
        %v1406 = vmul.f32 %v1017, %v1361
        %v1407 = vmul.f32 %v1020, %v1361
        %v1408 = vmul.f32 %v1023, %v1361
        %v1409 = vmul.f32 %v1026, %v1361
        %v1410 = vmul.f32 %v1058, %v1371
        %v1411 = vmul.f32 %v1061, %v1371
        %v1412 = vmul.f32 %v1064, %v1371
        %v1413 = vmul.f32 %v1067, %v1371
        %v1414 = vmul.f32 %v1099, %v1381
        %v1415 = vmul.f32 %v1102, %v1381
        %v1416 = vmul.f32 %v1105, %v1381
        %v1417 = vmul.f32 %v1108, %v1381
        %v1418 = vmul.f32 %v1140, %v1391
        %v1419 = vmul.f32 %v1143, %v1391
        %v1420 = vmul.f32 %v1146, %v1391
        %v1421 = vmul.f32 %v1149, %v1391
        %v1422 = vmul.f32 %v1181, %v1401
        %v1423 = vmul.f32 %v1184, %v1401
        %v1424 = vmul.f32 %v1187, %v1401
        %v1425 = vmul.f32 %v1190, %v1401
        %1426 = vst.msk [vmem:[%s264] sm:$0xff] %vm299, %v1402
        %1427 = vst.msk [vmem:[%s264 + $0x8] sm:$0xff] %vm299, %v1403
        %1428 = vst.msk [vmem:[%s264 + $0x10] sm:$0xff] %vm299, %v1404
        %1429 = vst.msk [vmem:[%s264 + $0x18] sm:$0xff] %vm299, %v1405
        %1430 = vst.msk [vmem:[%s264 + $0x20] sm:$0xff] %vm299, %v1406
        %1431 = vst.msk [vmem:[%s264 + $0x28] sm:$0xff] %vm299, %v1407
        %1432 = vst.msk [vmem:[%s264 + $0x30] sm:$0xff] %vm299, %v1408
        %1433 = vst.msk [vmem:[%s264 + $0x38] sm:$0xff] %vm299, %v1409
        %1434 = vst.msk [vmem:[%s264 + $0x40] sm:$0xff] %vm299, %v1410
        %1435 = vst.msk [vmem:[%s264 + $0x48] sm:$0xff] %vm299, %v1411
        %1436 = vst.msk [vmem:[%s264 + $0x50] sm:$0xff] %vm299, %v1412
        %1437 = vst.msk [vmem:[%s264 + $0x58] sm:$0xff] %vm299, %v1413
        %1438 = vst.msk [vmem:[%s264 + $0x120] sm:$0xff] %vm299, %v1414
        %1439 = vst.msk [vmem:[%s264 + $0x128] sm:$0xff] %vm299, %v1415
        %1440 = vst.msk [vmem:[%s264 + $0x130] sm:$0xff] %vm299, %v1416
        %1441 = vst.msk [vmem:[%s264 + $0x138] sm:$0xff] %vm299, %v1417
        %1442 = vst.msk [vmem:[%s264 + $0x140] sm:$0xff] %vm299, %v1418
        %1443 = vst.msk [vmem:[%s264 + $0x148] sm:$0xff] %vm299, %v1419
        %1444 = vst.msk [vmem:[%s264 + $0x150] sm:$0xff] %vm299, %v1420
        %1445 = vst.msk [vmem:[%s264 + $0x158] sm:$0xff] %vm299, %v1421
        %1446 = vst.msk [vmem:[%s264 + $0x160] sm:$0xff] %vm299, %v1422
        %1447 = vst.msk [vmem:[%s264 + $0x168] sm:$0xff] %vm299, %v1423
        %1448 = vst.msk [vmem:[%s264 + $0x170] sm:$0xff] %vm299, %v1424
        %1449 = vst.msk [vmem:[%s264 + $0x178] sm:$0xff] %vm299, %v1425
        %s1450 = scalar_lea.vmem %s240, 32 [#allocation7]
        %v1451 = vld [vmem:[%s1450] sm:$0xff]
        %v1452 = vld [vmem:[%s1450 + $0x8] sm:$0xff]
        %v1453 = vld [vmem:[%s1450 + $0x10] sm:$0xff]
        %v1454 = vld [vmem:[%s1450 + $0x18] sm:$0xff]
        %v1455 = vmul.f32 %v516, %v1451
        %v1456 = vmul.f32 %v519, %v1452
        %v1457 = vmul.f32 %v522, %v1453
        %v1458 = vmul.f32 %v525, %v1454
        %v1459 = vmul.f32 %v557, %v1451
        %v1460 = vmul.f32 %v560, %v1452
        %v1461 = vmul.f32 %v563, %v1453
        %v1462 = vmul.f32 %v566, %v1454
        %v1463 = vmul.f32 %v598, %v1451
        %v1464 = vmul.f32 %v601, %v1452
        %v1465 = vmul.f32 %v604, %v1453
        %v1466 = vmul.f32 %v607, %v1454
        %v1467 = vmul.f32 %v639, %v1451
        %v1468 = vmul.f32 %v642, %v1452
        %v1469 = vmul.f32 %v645, %v1453
        %v1470 = vmul.f32 %v648, %v1454
        %v1471 = vmul.f32 %v680, %v1451
        %v1472 = vmul.f32 %v683, %v1452
        %v1473 = vmul.f32 %v686, %v1453
        %v1474 = vmul.f32 %v689, %v1454
        %v1475 = vmul.f32 %v721, %v1451
        %v1476 = vmul.f32 %v724, %v1452
        %v1477 = vmul.f32 %v727, %v1453
        %v1478 = vmul.f32 %v730, %v1454
        %1479 = vmatpush.msra.mxu0 0.0
        %1480 = vmatpush.msra.mxu0 0.0
        %1481 = vmatpush.msra.mxu0 0.0
        %1482 = vmatpush.msra.mxu0 0.0
        %1483 = vmatpush.msra.mxu0 0.0
        %1484 = vmatpush.msra.mxu0 0.0
        %1485 = vmatpush.msra.mxu0 0.0
        %1486 = vmatpush.msra.mxu0 0.0
        %1487 = vmatpush.msra.mxu0 0.0
        %1488 = vmatpush.msra.mxu0 0.0
        %1489 = vmatpush.msra.mxu0 0.0
        %1490 = vmatpush.msra.mxu0 0.0
        %1491 = vmatpush.msra.mxu0 %v1458
        %1492 = vmatpush.msra.mxu0 %v1457
        %1493 = vmatpush.msra.mxu0 %v1456
        %1494 = vmatpush.msra.mxu0 %v1455
        %1495 = vmatmul.f32.gmra.mxu0 %v761
        %v1496 = vpop.f32.mrf.mxu0
        %v1497 = vadd.f32 0.0, %v1496
        %1498 = vmatmul.f32.gmra.mxu0 %v764
        %v1499 = vpop.f32.mrf.mxu0
        %v1500 = vadd.f32 0.0, %v1499
        %1501 = vmatmul.f32.gmra.mxu0 %v767
        %v1502 = vpop.f32.mrf.mxu0
        %v1503 = vadd.f32 0.0, %v1502
        %1504 = vmatmul.f32.gmra.mxu0 %v770
        %v1505 = vpop.f32.mrf.mxu0
        %v1506 = vadd.f32 0.0, %v1505
        %1507 = vdwg.mxu0
        %1508 = vmatpush.msra.mxu0 0.0
        %1509 = vmatpush.msra.mxu0 0.0
        %1510 = vmatpush.msra.mxu0 0.0
        %1511 = vmatpush.msra.mxu0 0.0
        %1512 = vmatpush.msra.mxu0 0.0
        %1513 = vmatpush.msra.mxu0 0.0
        %1514 = vmatpush.msra.mxu0 0.0
        %1515 = vmatpush.msra.mxu0 0.0
        %1516 = vmatpush.msra.mxu0 0.0
        %1517 = vmatpush.msra.mxu0 0.0
        %1518 = vmatpush.msra.mxu0 0.0
        %1519 = vmatpush.msra.mxu0 0.0
        %1520 = vmatpush.msra.mxu0 %v1462
        %1521 = vmatpush.msra.mxu0 %v1461
        %1522 = vmatpush.msra.mxu0 %v1460
        %1523 = vmatpush.msra.mxu0 %v1459
        %1524 = vmatmul.f32.gmra.mxu0 %v761
        %v1525 = vpop.f32.mrf.mxu0
        %v1526 = vadd.f32 0.0, %v1525
        %1527 = vmatmul.f32.gmra.mxu0 %v764
        %v1528 = vpop.f32.mrf.mxu0
        %v1529 = vadd.f32 0.0, %v1528
        %1530 = vmatmul.f32.gmra.mxu0 %v767
        %v1531 = vpop.f32.mrf.mxu0
        %v1532 = vadd.f32 0.0, %v1531
        %1533 = vmatmul.f32.gmra.mxu0 %v770
        %v1534 = vpop.f32.mrf.mxu0
        %v1535 = vadd.f32 0.0, %v1534
        %1536 = vdwg.mxu0
        %1537 = vmatpush.msra.mxu0 0.0
        %1538 = vmatpush.msra.mxu0 0.0
        %1539 = vmatpush.msra.mxu0 0.0
        %1540 = vmatpush.msra.mxu0 0.0
        %1541 = vmatpush.msra.mxu0 0.0
        %1542 = vmatpush.msra.mxu0 0.0
        %1543 = vmatpush.msra.mxu0 0.0
        %1544 = vmatpush.msra.mxu0 0.0
        %1545 = vmatpush.msra.mxu0 0.0
        %1546 = vmatpush.msra.mxu0 0.0
        %1547 = vmatpush.msra.mxu0 0.0
        %1548 = vmatpush.msra.mxu0 0.0
        %1549 = vmatpush.msra.mxu0 %v1466
        %1550 = vmatpush.msra.mxu0 %v1465
        %1551 = vmatpush.msra.mxu0 %v1464
        %1552 = vmatpush.msra.mxu0 %v1463
        %1553 = vmatmul.f32.gmra.mxu0 %v761
        %v1554 = vpop.f32.mrf.mxu0
        %v1555 = vadd.f32 0.0, %v1554
        %1556 = vmatmul.f32.gmra.mxu0 %v764
        %v1557 = vpop.f32.mrf.mxu0
        %v1558 = vadd.f32 0.0, %v1557
        %1559 = vmatmul.f32.gmra.mxu0 %v767
        %v1560 = vpop.f32.mrf.mxu0
        %v1561 = vadd.f32 0.0, %v1560
        %1562 = vmatmul.f32.gmra.mxu0 %v770
        %v1563 = vpop.f32.mrf.mxu0
        %v1564 = vadd.f32 0.0, %v1563
        %1565 = vdwg.mxu0
        %1566 = vmatpush.msra.mxu0 0.0
        %1567 = vmatpush.msra.mxu0 0.0
        %1568 = vmatpush.msra.mxu0 0.0
        %1569 = vmatpush.msra.mxu0 0.0
        %1570 = vmatpush.msra.mxu0 0.0
        %1571 = vmatpush.msra.mxu0 0.0
        %1572 = vmatpush.msra.mxu0 0.0
        %1573 = vmatpush.msra.mxu0 0.0
        %1574 = vmatpush.msra.mxu0 0.0
        %1575 = vmatpush.msra.mxu0 0.0
        %1576 = vmatpush.msra.mxu0 0.0
        %1577 = vmatpush.msra.mxu0 0.0
        %1578 = vmatpush.msra.mxu0 %v1470
        %1579 = vmatpush.msra.mxu0 %v1469
        %1580 = vmatpush.msra.mxu0 %v1468
        %1581 = vmatpush.msra.mxu0 %v1467
        %1582 = vmatmul.f32.gmra.mxu0 %v761
        %v1583 = vpop.f32.mrf.mxu0
        %v1584 = vadd.f32 0.0, %v1583
        %1585 = vmatmul.f32.gmra.mxu0 %v764
        %v1586 = vpop.f32.mrf.mxu0
        %v1587 = vadd.f32 0.0, %v1586
        %1588 = vmatmul.f32.gmra.mxu0 %v767
        %v1589 = vpop.f32.mrf.mxu0
        %v1590 = vadd.f32 0.0, %v1589
        %1591 = vmatmul.f32.gmra.mxu0 %v770
        %v1592 = vpop.f32.mrf.mxu0
        %v1593 = vadd.f32 0.0, %v1592
        %1594 = vdwg.mxu0
        %1595 = vmatpush.msra.mxu0 0.0
        %1596 = vmatpush.msra.mxu0 0.0
        %1597 = vmatpush.msra.mxu0 0.0
        %1598 = vmatpush.msra.mxu0 0.0
        %1599 = vmatpush.msra.mxu0 0.0
        %1600 = vmatpush.msra.mxu0 0.0
        %1601 = vmatpush.msra.mxu0 0.0
        %1602 = vmatpush.msra.mxu0 0.0
        %1603 = vmatpush.msra.mxu0 0.0
        %1604 = vmatpush.msra.mxu0 0.0
        %1605 = vmatpush.msra.mxu0 0.0
        %1606 = vmatpush.msra.mxu0 0.0
        %1607 = vmatpush.msra.mxu0 %v1474
        %1608 = vmatpush.msra.mxu0 %v1473
        %1609 = vmatpush.msra.mxu0 %v1472
        %1610 = vmatpush.msra.mxu0 %v1471
        %1611 = vmatmul.f32.gmra.mxu0 %v761
        %v1612 = vpop.f32.mrf.mxu0
        %v1613 = vadd.f32 0.0, %v1612
        %1614 = vmatmul.f32.gmra.mxu0 %v764
        %v1615 = vpop.f32.mrf.mxu0
        %v1616 = vadd.f32 0.0, %v1615
        %1617 = vmatmul.f32.gmra.mxu0 %v767
        %v1618 = vpop.f32.mrf.mxu0
        %v1619 = vadd.f32 0.0, %v1618
        %1620 = vmatmul.f32.gmra.mxu0 %v770
        %v1621 = vpop.f32.mrf.mxu0
        %v1622 = vadd.f32 0.0, %v1621
        %1623 = vdwg.mxu0
        %1624 = vmatpush.msra.mxu0 0.0
        %1625 = vmatpush.msra.mxu0 0.0
        %1626 = vmatpush.msra.mxu0 0.0
        %1627 = vmatpush.msra.mxu0 0.0
        %1628 = vmatpush.msra.mxu0 0.0
        %1629 = vmatpush.msra.mxu0 0.0
        %1630 = vmatpush.msra.mxu0 0.0
        %1631 = vmatpush.msra.mxu0 0.0
        %1632 = vmatpush.msra.mxu0 0.0
        %1633 = vmatpush.msra.mxu0 0.0
        %1634 = vmatpush.msra.mxu0 0.0
        %1635 = vmatpush.msra.mxu0 0.0
        %1636 = vmatpush.msra.mxu0 %v1478
        %1637 = vmatpush.msra.mxu0 %v1477
        %1638 = vmatpush.msra.mxu0 %v1476
        %1639 = vmatpush.msra.mxu0 %v1475
        %1640 = vmatmul.f32.gmra.mxu0 %v761
        %v1641 = vpop.f32.mrf.mxu0
        %v1642 = vadd.f32 0.0, %v1641
        %1643 = vmatmul.f32.gmra.mxu0 %v764
        %v1644 = vpop.f32.mrf.mxu0
        %v1645 = vadd.f32 0.0, %v1644
        %1646 = vmatmul.f32.gmra.mxu0 %v767
        %v1647 = vpop.f32.mrf.mxu0
        %v1648 = vadd.f32 0.0, %v1647
        %1649 = vmatmul.f32.gmra.mxu0 %v770
        %v1650 = vpop.f32.mrf.mxu0
        %v1651 = vadd.f32 0.0, %v1650
        %1652 = vdwg.mxu0
        %v1654 = vsel %vm299, %v1497, 0
        %v1657 = vsel %vm299, %v1500, 0
        %v1660 = vsel %vm299, %v1503, 0
        %v1663 = vsel %vm299, %v1506, 0
        %1665 = vmatpush.msra.mxu0 0.0
        %1666 = vmatpush.msra.mxu0 0.0
        %1667 = vmatpush.msra.mxu0 0.0
        %1668 = vmatpush.msra.mxu0 0.0
        %1669 = vmatpush.msra.mxu0 0.0
        %1670 = vmatpush.msra.mxu0 0.0
        %1671 = vmatpush.msra.mxu0 0.0
        %1672 = vmatpush.msra.mxu0 0.0
        %1673 = vmatpush.msra.mxu0 0.0
        %1674 = vmatpush.msra.mxu0 0.0
        %1675 = vmatpush.msra.mxu0 0.0
        %1676 = vmatpush.msra.mxu0 0.0
        %1677 = vmatpush.msra.mxu0 %v294
        %1678 = vmatpush.msra.mxu0 %v293
        %1679 = vmatpush.msra.mxu0 %v292
        %1680 = vmatpush.msra.mxu0 %v291
        %1681 = vmatmul.f32.gmra.mxu0 %v1654
        %v1682 = vpop.f32.mrf.mxu0
        %v1683 = vadd.f32 0.0, %v1682
        %1684 = vmatmul.f32.gmra.mxu0 %v1657
        %v1685 = vpop.f32.mrf.mxu0
        %v1686 = vadd.f32 0.0, %v1685
        %1687 = vmatmul.f32.gmra.mxu0 %v1660
        %v1688 = vpop.f32.mrf.mxu0
        %v1689 = vadd.f32 0.0, %v1688
        %1690 = vmatmul.f32.gmra.mxu0 %v1663
        %v1691 = vpop.f32.mrf.mxu0
        %v1692 = vadd.f32 0.0, %v1691
        %1693 = vdwg.mxu0
        %v1695 = vsel %vm299, %v1526, 0
        %v1698 = vsel %vm299, %v1529, 0
        %v1701 = vsel %vm299, %v1532, 0
        %v1704 = vsel %vm299, %v1535, 0
        %1706 = vmatpush.msra.mxu0 0.0
        %1707 = vmatpush.msra.mxu0 0.0
        %1708 = vmatpush.msra.mxu0 0.0
        %1709 = vmatpush.msra.mxu0 0.0
        %1710 = vmatpush.msra.mxu0 0.0
        %1711 = vmatpush.msra.mxu0 0.0
        %1712 = vmatpush.msra.mxu0 0.0
        %1713 = vmatpush.msra.mxu0 0.0
        %1714 = vmatpush.msra.mxu0 0.0
        %1715 = vmatpush.msra.mxu0 0.0
        %1716 = vmatpush.msra.mxu0 0.0
        %1717 = vmatpush.msra.mxu0 0.0
        %1718 = vmatpush.msra.mxu0 %v294
        %1719 = vmatpush.msra.mxu0 %v293
        %1720 = vmatpush.msra.mxu0 %v292
        %1721 = vmatpush.msra.mxu0 %v291
        %1722 = vmatmul.f32.gmra.mxu0 %v1695
        %v1723 = vpop.f32.mrf.mxu0
        %v1724 = vadd.f32 0.0, %v1723
        %1725 = vmatmul.f32.gmra.mxu0 %v1698
        %v1726 = vpop.f32.mrf.mxu0
        %v1727 = vadd.f32 0.0, %v1726
        %1728 = vmatmul.f32.gmra.mxu0 %v1701
        %v1729 = vpop.f32.mrf.mxu0
        %v1730 = vadd.f32 0.0, %v1729
        %1731 = vmatmul.f32.gmra.mxu0 %v1704
        %v1732 = vpop.f32.mrf.mxu0
        %v1733 = vadd.f32 0.0, %v1732
        %1734 = vdwg.mxu0
        %v1736 = vsel %vm299, %v1555, 0
        %v1739 = vsel %vm299, %v1558, 0
        %v1742 = vsel %vm299, %v1561, 0
        %v1745 = vsel %vm299, %v1564, 0
        %1747 = vmatpush.msra.mxu0 0.0
        %1748 = vmatpush.msra.mxu0 0.0
        %1749 = vmatpush.msra.mxu0 0.0
        %1750 = vmatpush.msra.mxu0 0.0
        %1751 = vmatpush.msra.mxu0 0.0
        %1752 = vmatpush.msra.mxu0 0.0
        %1753 = vmatpush.msra.mxu0 0.0
        %1754 = vmatpush.msra.mxu0 0.0
        %1755 = vmatpush.msra.mxu0 0.0
        %1756 = vmatpush.msra.mxu0 0.0
        %1757 = vmatpush.msra.mxu0 0.0
        %1758 = vmatpush.msra.mxu0 0.0
        %1759 = vmatpush.msra.mxu0 %v294
        %1760 = vmatpush.msra.mxu0 %v293
        %1761 = vmatpush.msra.mxu0 %v292
        %1762 = vmatpush.msra.mxu0 %v291
        %1763 = vmatmul.f32.gmra.mxu0 %v1736
        %v1764 = vpop.f32.mrf.mxu0
        %v1765 = vadd.f32 0.0, %v1764
        %1766 = vmatmul.f32.gmra.mxu0 %v1739
        %v1767 = vpop.f32.mrf.mxu0
        %v1768 = vadd.f32 0.0, %v1767
        %1769 = vmatmul.f32.gmra.mxu0 %v1742
        %v1770 = vpop.f32.mrf.mxu0
        %v1771 = vadd.f32 0.0, %v1770
        %1772 = vmatmul.f32.gmra.mxu0 %v1745
        %v1773 = vpop.f32.mrf.mxu0
        %v1774 = vadd.f32 0.0, %v1773
        %1775 = vdwg.mxu0
        %v1777 = vsel %vm299, %v1584, 0
        %v1780 = vsel %vm299, %v1587, 0
        %v1783 = vsel %vm299, %v1590, 0
        %v1786 = vsel %vm299, %v1593, 0
        %1788 = vmatpush.msra.mxu0 0.0
        %1789 = vmatpush.msra.mxu0 0.0
        %1790 = vmatpush.msra.mxu0 0.0
        %1791 = vmatpush.msra.mxu0 0.0
        %1792 = vmatpush.msra.mxu0 0.0
        %1793 = vmatpush.msra.mxu0 0.0
        %1794 = vmatpush.msra.mxu0 0.0
        %1795 = vmatpush.msra.mxu0 0.0
        %1796 = vmatpush.msra.mxu0 0.0
        %1797 = vmatpush.msra.mxu0 0.0
        %1798 = vmatpush.msra.mxu0 0.0
        %1799 = vmatpush.msra.mxu0 0.0
        %1800 = vmatpush.msra.mxu0 %v294
        %1801 = vmatpush.msra.mxu0 %v293
        %1802 = vmatpush.msra.mxu0 %v292
        %1803 = vmatpush.msra.mxu0 %v291
        %1804 = vmatmul.f32.gmra.mxu0 %v1777
        %v1805 = vpop.f32.mrf.mxu0
        %v1806 = vadd.f32 0.0, %v1805
        %1807 = vmatmul.f32.gmra.mxu0 %v1780
        %v1808 = vpop.f32.mrf.mxu0
        %v1809 = vadd.f32 0.0, %v1808
        %1810 = vmatmul.f32.gmra.mxu0 %v1783
        %v1811 = vpop.f32.mrf.mxu0
        %v1812 = vadd.f32 0.0, %v1811
        %1813 = vmatmul.f32.gmra.mxu0 %v1786
        %v1814 = vpop.f32.mrf.mxu0
        %v1815 = vadd.f32 0.0, %v1814
        %1816 = vdwg.mxu0
        %v1818 = vsel %vm299, %v1613, 0
        %v1821 = vsel %vm299, %v1616, 0
        %v1824 = vsel %vm299, %v1619, 0
        %v1827 = vsel %vm299, %v1622, 0
        %1829 = vmatpush.msra.mxu0 0.0
        %1830 = vmatpush.msra.mxu0 0.0
        %1831 = vmatpush.msra.mxu0 0.0
        %1832 = vmatpush.msra.mxu0 0.0
        %1833 = vmatpush.msra.mxu0 0.0
        %1834 = vmatpush.msra.mxu0 0.0
        %1835 = vmatpush.msra.mxu0 0.0
        %1836 = vmatpush.msra.mxu0 0.0
        %1837 = vmatpush.msra.mxu0 0.0
        %1838 = vmatpush.msra.mxu0 0.0
        %1839 = vmatpush.msra.mxu0 0.0
        %1840 = vmatpush.msra.mxu0 0.0
        %1841 = vmatpush.msra.mxu0 %v294
        %1842 = vmatpush.msra.mxu0 %v293
        %1843 = vmatpush.msra.mxu0 %v292
        %1844 = vmatpush.msra.mxu0 %v291
        %1845 = vmatmul.f32.gmra.mxu0 %v1818
        %v1846 = vpop.f32.mrf.mxu0
        %v1847 = vadd.f32 0.0, %v1846
        %1848 = vmatmul.f32.gmra.mxu0 %v1821
        %v1849 = vpop.f32.mrf.mxu0
        %v1850 = vadd.f32 0.0, %v1849
        %1851 = vmatmul.f32.gmra.mxu0 %v1824
        %v1852 = vpop.f32.mrf.mxu0
        %v1853 = vadd.f32 0.0, %v1852
        %1854 = vmatmul.f32.gmra.mxu0 %v1827
        %v1855 = vpop.f32.mrf.mxu0
        %v1856 = vadd.f32 0.0, %v1855
        %1857 = vdwg.mxu0
        %v1859 = vsel %vm299, %v1642, 0
        %v1862 = vsel %vm299, %v1645, 0
        %v1865 = vsel %vm299, %v1648, 0
        %v1868 = vsel %vm299, %v1651, 0
        %1870 = vmatpush.msra.mxu0 0.0
        %1871 = vmatpush.msra.mxu0 0.0
        %1872 = vmatpush.msra.mxu0 0.0
        %1873 = vmatpush.msra.mxu0 0.0
        %1874 = vmatpush.msra.mxu0 0.0
        %1875 = vmatpush.msra.mxu0 0.0
        %1876 = vmatpush.msra.mxu0 0.0
        %1877 = vmatpush.msra.mxu0 0.0
        %1878 = vmatpush.msra.mxu0 0.0
        %1879 = vmatpush.msra.mxu0 0.0
        %1880 = vmatpush.msra.mxu0 0.0
        %1881 = vmatpush.msra.mxu0 0.0
        %1882 = vmatpush.msra.mxu0 %v294
        %1883 = vmatpush.msra.mxu0 %v293
        %1884 = vmatpush.msra.mxu0 %v292
        %1885 = vmatpush.msra.mxu0 %v291
        %1886 = vmatmul.f32.gmra.mxu0 %v1859
        %v1887 = vpop.f32.mrf.mxu0
        %v1888 = vadd.f32 0.0, %v1887
        %1889 = vmatmul.f32.gmra.mxu0 %v1862
        %v1890 = vpop.f32.mrf.mxu0
        %v1891 = vadd.f32 0.0, %v1890
        %1892 = vmatmul.f32.gmra.mxu0 %v1865
        %v1893 = vpop.f32.mrf.mxu0
        %v1894 = vadd.f32 0.0, %v1893
        %1895 = vmatmul.f32.gmra.mxu0 %v1868
        %v1896 = vpop.f32.mrf.mxu0
        %v1897 = vadd.f32 0.0, %v1896
        %1898 = vdwg.mxu0
        %v1899 = vmul.f32 %v1683, %v1683
        %v1900 = vmul.f32 %v1686, %v1686
        %v1901 = vmul.f32 %v1689, %v1689
        %v1902 = vmul.f32 %v1692, %v1692
        %v1903 = vmul.f32 %v1724, %v1724
        %v1904 = vmul.f32 %v1727, %v1727
        %v1905 = vmul.f32 %v1730, %v1730
        %v1906 = vmul.f32 %v1733, %v1733
        %v1907 = vmul.f32 %v1765, %v1765
        %v1908 = vmul.f32 %v1768, %v1768
        %v1909 = vmul.f32 %v1771, %v1771
        %v1910 = vmul.f32 %v1774, %v1774
        %v1911 = vmul.f32 %v1806, %v1806
        %v1912 = vmul.f32 %v1809, %v1809
        %v1913 = vmul.f32 %v1812, %v1812
        %v1914 = vmul.f32 %v1815, %v1815
        %v1915 = vmul.f32 %v1847, %v1847
        %v1916 = vmul.f32 %v1850, %v1850
        %v1917 = vmul.f32 %v1853, %v1853
        %v1918 = vmul.f32 %v1856, %v1856
        %v1919 = vmul.f32 %v1888, %v1888
        %v1920 = vmul.f32 %v1891, %v1891
        %v1921 = vmul.f32 %v1894, %v1894
        %v1922 = vmul.f32 %v1897, %v1897
        %v1923 = vsel %vm299, %v1899, 0.0
        %1924 = vadd.xlane.f32.xlu0 %v1923
        %v1925 = vpop.xlane.xlu0 %1924
        %v1926 = vsel %vm299, %v1900, 0.0
        %1927 = vadd.xlane.f32.xlu0 %v1926
        %v1928 = vpop.xlane.xlu0 %1927
        %v1929 = vsel %vm299, %v1901, 0.0
        %1930 = vadd.xlane.f32.xlu0 %v1929
        %v1931 = vpop.xlane.xlu0 %1930
        %v1932 = vsel %vm299, %v1902, 0.0
        %1933 = vadd.xlane.f32.xlu0 %v1932
        %v1934 = vpop.xlane.xlu0 %1933
        %v1935 = vsel %vm299, %v1903, 0.0
        %1936 = vadd.xlane.f32.xlu0 %v1935
        %v1937 = vpop.xlane.xlu0 %1936
        %v1938 = vsel %vm299, %v1904, 0.0
        %1939 = vadd.xlane.f32.xlu0 %v1938
        %v1940 = vpop.xlane.xlu0 %1939
        %v1941 = vsel %vm299, %v1905, 0.0
        %1942 = vadd.xlane.f32.xlu0 %v1941
        %v1943 = vpop.xlane.xlu0 %1942
        %v1944 = vsel %vm299, %v1906, 0.0
        %1945 = vadd.xlane.f32.xlu0 %v1944
        %v1946 = vpop.xlane.xlu0 %1945
        %v1947 = vsel %vm299, %v1907, 0.0
        %1948 = vadd.xlane.f32.xlu0 %v1947
        %v1949 = vpop.xlane.xlu0 %1948
        %v1950 = vsel %vm299, %v1908, 0.0
        %1951 = vadd.xlane.f32.xlu0 %v1950
        %v1952 = vpop.xlane.xlu0 %1951
        %v1953 = vsel %vm299, %v1909, 0.0
        %1954 = vadd.xlane.f32.xlu0 %v1953
        %v1955 = vpop.xlane.xlu0 %1954
        %v1956 = vsel %vm299, %v1910, 0.0
        %1957 = vadd.xlane.f32.xlu0 %v1956
        %v1958 = vpop.xlane.xlu0 %1957
        %v1959 = vsel %vm299, %v1911, 0.0
        %1960 = vadd.xlane.f32.xlu0 %v1959
        %v1961 = vpop.xlane.xlu0 %1960
        %v1962 = vsel %vm299, %v1912, 0.0
        %1963 = vadd.xlane.f32.xlu0 %v1962
        %v1964 = vpop.xlane.xlu0 %1963
        %v1965 = vsel %vm299, %v1913, 0.0
        %1966 = vadd.xlane.f32.xlu0 %v1965
        %v1967 = vpop.xlane.xlu0 %1966
        %v1968 = vsel %vm299, %v1914, 0.0
        %1969 = vadd.xlane.f32.xlu0 %v1968
        %v1970 = vpop.xlane.xlu0 %1969
        %v1971 = vsel %vm299, %v1915, 0.0
        %1972 = vadd.xlane.f32.xlu0 %v1971
        %v1973 = vpop.xlane.xlu0 %1972
        %v1974 = vsel %vm299, %v1916, 0.0
        %1975 = vadd.xlane.f32.xlu0 %v1974
        %v1976 = vpop.xlane.xlu0 %1975
        %v1977 = vsel %vm299, %v1917, 0.0
        %1978 = vadd.xlane.f32.xlu0 %v1977
        %v1979 = vpop.xlane.xlu0 %1978
        %v1980 = vsel %vm299, %v1918, 0.0
        %1981 = vadd.xlane.f32.xlu0 %v1980
        %v1982 = vpop.xlane.xlu0 %1981
        %v1983 = vsel %vm299, %v1919, 0.0
        %1984 = vadd.xlane.f32.xlu0 %v1983
        %v1985 = vpop.xlane.xlu0 %1984
        %v1986 = vsel %vm299, %v1920, 0.0
        %1987 = vadd.xlane.f32.xlu0 %v1986
        %v1988 = vpop.xlane.xlu0 %1987
        %v1989 = vsel %vm299, %v1921, 0.0
        %1990 = vadd.xlane.f32.xlu0 %v1989
        %v1991 = vpop.xlane.xlu0 %1990
        %v1992 = vsel %vm299, %v1922, 0.0
        %1993 = vadd.xlane.f32.xlu0 %v1992
        %v1994 = vpop.xlane.xlu0 %1993
        %v1995 = vadd.f32 %v1925, %v1928
        %v1996 = vadd.f32 %v1995, %v1931
        %v1997 = vadd.f32 %v1996, %v1934
        %v1998 = vrot.slane %v1997, 4
        %v1999 = vadd.f32 %v1997, %v1998
        %v2000 = vrot.slane %v1999, 2
        %v2001 = vadd.f32 %v1999, %v2000
        %v2002 = vrot.slane %v2001, 1
        %v2003 = vadd.f32 %v2001, %v2002
        %v2004 = vadd.f32 %v1937, %v1940
        %v2005 = vadd.f32 %v2004, %v1943
        %v2006 = vadd.f32 %v2005, %v1946
        %v2007 = vrot.slane %v2006, 4
        %v2008 = vadd.f32 %v2006, %v2007
        %v2009 = vrot.slane %v2008, 2
        %v2010 = vadd.f32 %v2008, %v2009
        %v2011 = vrot.slane %v2010, 1
        %v2012 = vadd.f32 %v2010, %v2011
        %v2013 = vadd.f32 %v1949, %v1952
        %v2014 = vadd.f32 %v2013, %v1955
        %v2015 = vadd.f32 %v2014, %v1958
        %v2016 = vrot.slane %v2015, 4
        %v2017 = vadd.f32 %v2015, %v2016
        %v2018 = vrot.slane %v2017, 2
        %v2019 = vadd.f32 %v2017, %v2018
        %v2020 = vrot.slane %v2019, 1
        %v2021 = vadd.f32 %v2019, %v2020
        %v2022 = vadd.f32 %v1961, %v1964
        %v2023 = vadd.f32 %v2022, %v1967
        %v2024 = vadd.f32 %v2023, %v1970
        %v2025 = vrot.slane %v2024, 4
        %v2026 = vadd.f32 %v2024, %v2025
        %v2027 = vrot.slane %v2026, 2
        %v2028 = vadd.f32 %v2026, %v2027
        %v2029 = vrot.slane %v2028, 1
        %v2030 = vadd.f32 %v2028, %v2029
        %v2031 = vadd.f32 %v1973, %v1976
        %v2032 = vadd.f32 %v2031, %v1979
        %v2033 = vadd.f32 %v2032, %v1982
        %v2034 = vrot.slane %v2033, 4
        %v2035 = vadd.f32 %v2033, %v2034
        %v2036 = vrot.slane %v2035, 2
        %v2037 = vadd.f32 %v2035, %v2036
        %v2038 = vrot.slane %v2037, 1
        %v2039 = vadd.f32 %v2037, %v2038
        %v2040 = vadd.f32 %v1985, %v1988
        %v2041 = vadd.f32 %v2040, %v1991
        %v2042 = vadd.f32 %v2041, %v1994
        %v2043 = vrot.slane %v2042, 4
        %v2044 = vadd.f32 %v2042, %v2043
        %v2045 = vrot.slane %v2044, 2
        %v2046 = vadd.f32 %v2044, %v2045
        %v2047 = vrot.slane %v2046, 1
        %v2048 = vadd.f32 %v2046, %v2047
        %v2049 = vrsqrt.pop %v2003
        %v2050 = vmul.f32 %v2049, %v2003
        %v2051 = vmul.f32 %v2050, %v2049
        %v2052 = vmul.f32 0.5, %v2051
        %v2053 = vsub.f32 1.5, %v2052
        %v2054 = vmul.f32 %v2049, %v2053
        %vm2055 = vweird.f32 %v2003
        %vm2056 = vweird.f32 %v2049
        %vm2057 = vmor %vm2055, %vm2056
        %v2058 = vsel %vm2057, %v2049, %v2054
        %v2059 = vrsqrt.pop %v2012
        %v2060 = vmul.f32 %v2059, %v2012
        %v2061 = vmul.f32 %v2060, %v2059
        %v2062 = vmul.f32 0.5, %v2061
        %v2063 = vsub.f32 1.5, %v2062
        %v2064 = vmul.f32 %v2059, %v2063
        %vm2065 = vweird.f32 %v2012
        %vm2066 = vweird.f32 %v2059
        %vm2067 = vmor %vm2065, %vm2066
        %v2068 = vsel %vm2067, %v2059, %v2064
        %v2069 = vrsqrt.pop %v2021
        %v2070 = vmul.f32 %v2069, %v2021
        %v2071 = vmul.f32 %v2070, %v2069
        %v2072 = vmul.f32 0.5, %v2071
        %v2073 = vsub.f32 1.5, %v2072
        %v2074 = vmul.f32 %v2069, %v2073
        %vm2075 = vweird.f32 %v2021
        %vm2076 = vweird.f32 %v2069
        %vm2077 = vmor %vm2075, %vm2076
        %v2078 = vsel %vm2077, %v2069, %v2074
        %v2079 = vrsqrt.pop %v2030
        %v2080 = vmul.f32 %v2079, %v2030
        %v2081 = vmul.f32 %v2080, %v2079
        %v2082 = vmul.f32 0.5, %v2081
        %v2083 = vsub.f32 1.5, %v2082
        %v2084 = vmul.f32 %v2079, %v2083
        %vm2085 = vweird.f32 %v2030
        %vm2086 = vweird.f32 %v2079
        %vm2087 = vmor %vm2085, %vm2086
        %v2088 = vsel %vm2087, %v2079, %v2084
        %v2089 = vrsqrt.pop %v2039
        %v2090 = vmul.f32 %v2089, %v2039
        %v2091 = vmul.f32 %v2090, %v2089
        %v2092 = vmul.f32 0.5, %v2091
        %v2093 = vsub.f32 1.5, %v2092
        %v2094 = vmul.f32 %v2089, %v2093
        %vm2095 = vweird.f32 %v2039
        %vm2096 = vweird.f32 %v2089
        %vm2097 = vmor %vm2095, %vm2096
        %v2098 = vsel %vm2097, %v2089, %v2094
        %v2099 = vrsqrt.pop %v2048
        %v2100 = vmul.f32 %v2099, %v2048
        %v2101 = vmul.f32 %v2100, %v2099
        %v2102 = vmul.f32 0.5, %v2101
        %v2103 = vsub.f32 1.5, %v2102
        %v2104 = vmul.f32 %v2099, %v2103
        %vm2105 = vweird.f32 %v2048
        %vm2106 = vweird.f32 %v2099
        %vm2107 = vmor %vm2105, %vm2106
        %v2108 = vsel %vm2107, %v2099, %v2104
        %v2109 = vmul.f32 %v1683, %v2058
        %v2110 = vmul.f32 %v1686, %v2058
        %v2111 = vmul.f32 %v1689, %v2058
        %v2112 = vmul.f32 %v1692, %v2058
        %v2113 = vmul.f32 %v1724, %v2068
        %v2114 = vmul.f32 %v1727, %v2068
        %v2115 = vmul.f32 %v1730, %v2068
        %v2116 = vmul.f32 %v1733, %v2068
        %v2117 = vmul.f32 %v1765, %v2078
        %v2118 = vmul.f32 %v1768, %v2078
        %v2119 = vmul.f32 %v1771, %v2078
        %v2120 = vmul.f32 %v1774, %v2078
        %v2121 = vmul.f32 %v1806, %v2088
        %v2122 = vmul.f32 %v1809, %v2088
        %v2123 = vmul.f32 %v1812, %v2088
        %v2124 = vmul.f32 %v1815, %v2088
        %v2125 = vmul.f32 %v1847, %v2098
        %v2126 = vmul.f32 %v1850, %v2098
        %v2127 = vmul.f32 %v1853, %v2098
        %v2128 = vmul.f32 %v1856, %v2098
        %v2129 = vmul.f32 %v1888, %v2108
        %v2130 = vmul.f32 %v1891, %v2108
        %v2131 = vmul.f32 %v1894, %v2108
        %v2132 = vmul.f32 %v1897, %v2108
        %s2133 = scalar_lea.vmem %s264, 96 [#allocation9]
        %2134 = vst.msk [vmem:[%s2133] sm:$0xff] %vm299, %v2109
        %2135 = vst.msk [vmem:[%s2133 + $0x8] sm:$0xff] %vm299, %v2110
        %2136 = vst.msk [vmem:[%s2133 + $0x10] sm:$0xff] %vm299, %v2111
        %2137 = vst.msk [vmem:[%s2133 + $0x18] sm:$0xff] %vm299, %v2112
        %2138 = vst.msk [vmem:[%s2133 + $0x20] sm:$0xff] %vm299, %v2113
        %2139 = vst.msk [vmem:[%s2133 + $0x28] sm:$0xff] %vm299, %v2114
        %2140 = vst.msk [vmem:[%s2133 + $0x30] sm:$0xff] %vm299, %v2115
        %2141 = vst.msk [vmem:[%s2133 + $0x38] sm:$0xff] %vm299, %v2116
        %2142 = vst.msk [vmem:[%s2133 + $0x40] sm:$0xff] %vm299, %v2117
        %2143 = vst.msk [vmem:[%s2133 + $0x48] sm:$0xff] %vm299, %v2118
        %2144 = vst.msk [vmem:[%s2133 + $0x50] sm:$0xff] %vm299, %v2119
        %2145 = vst.msk [vmem:[%s2133 + $0x58] sm:$0xff] %vm299, %v2120
        %2146 = vst.msk [vmem:[%s2133 + $0x120] sm:$0xff] %vm299, %v2121
        %2147 = vst.msk [vmem:[%s2133 + $0x128] sm:$0xff] %vm299, %v2122
        %2148 = vst.msk [vmem:[%s2133 + $0x130] sm:$0xff] %vm299, %v2123
        %2149 = vst.msk [vmem:[%s2133 + $0x138] sm:$0xff] %vm299, %v2124
        %2150 = vst.msk [vmem:[%s2133 + $0x140] sm:$0xff] %vm299, %v2125
        %2151 = vst.msk [vmem:[%s2133 + $0x148] sm:$0xff] %vm299, %v2126
        %2152 = vst.msk [vmem:[%s2133 + $0x150] sm:$0xff] %vm299, %v2127
        %2153 = vst.msk [vmem:[%s2133 + $0x158] sm:$0xff] %vm299, %v2128
        %2154 = vst.msk [vmem:[%s2133 + $0x160] sm:$0xff] %vm299, %v2129
        %2155 = vst.msk [vmem:[%s2133 + $0x168] sm:$0xff] %vm299, %v2130
        %2156 = vst.msk [vmem:[%s2133 + $0x170] sm:$0xff] %vm299, %v2131
        %2157 = vst.msk [vmem:[%s2133 + $0x178] sm:$0xff] %vm299, %v2132
        %s2158 = scalar_lea.vmem %s240, 64 [#allocation7]
        %v2159 = vld [vmem:[%s2158] sm:$0xff]
        %v2160 = vld [vmem:[%s2158 + $0x8] sm:$0xff]
        %v2161 = vld [vmem:[%s2158 + $0x10] sm:$0xff]
        %v2162 = vld [vmem:[%s2158 + $0x18] sm:$0xff]
        %v2163 = vmul.f32 %v516, %v2159
        %v2164 = vmul.f32 %v519, %v2160
        %v2165 = vmul.f32 %v522, %v2161
        %v2166 = vmul.f32 %v525, %v2162
        %v2167 = vmul.f32 %v557, %v2159
        %v2168 = vmul.f32 %v560, %v2160
        %v2169 = vmul.f32 %v563, %v2161
        %v2170 = vmul.f32 %v566, %v2162
        %v2171 = vmul.f32 %v598, %v2159
        %v2172 = vmul.f32 %v601, %v2160
        %v2173 = vmul.f32 %v604, %v2161
        %v2174 = vmul.f32 %v607, %v2162
        %v2175 = vmul.f32 %v639, %v2159
        %v2176 = vmul.f32 %v642, %v2160
        %v2177 = vmul.f32 %v645, %v2161
        %v2178 = vmul.f32 %v648, %v2162
        %v2179 = vmul.f32 %v680, %v2159
        %v2180 = vmul.f32 %v683, %v2160
        %v2181 = vmul.f32 %v686, %v2161
        %v2182 = vmul.f32 %v689, %v2162
        %v2183 = vmul.f32 %v721, %v2159
        %v2184 = vmul.f32 %v724, %v2160
        %v2185 = vmul.f32 %v727, %v2161
        %v2186 = vmul.f32 %v730, %v2162
        %2187 = vmatpush.msra.mxu0 0.0
        %2188 = vmatpush.msra.mxu0 0.0
        %2189 = vmatpush.msra.mxu0 0.0
        %2190 = vmatpush.msra.mxu0 0.0
        %2191 = vmatpush.msra.mxu0 0.0
        %2192 = vmatpush.msra.mxu0 0.0
        %2193 = vmatpush.msra.mxu0 0.0
        %2194 = vmatpush.msra.mxu0 0.0
        %2195 = vmatpush.msra.mxu0 0.0
        %2196 = vmatpush.msra.mxu0 0.0
        %2197 = vmatpush.msra.mxu0 0.0
        %2198 = vmatpush.msra.mxu0 0.0
        %2199 = vmatpush.msra.mxu0 %v2166
        %2200 = vmatpush.msra.mxu0 %v2165
        %2201 = vmatpush.msra.mxu0 %v2164
        %2202 = vmatpush.msra.mxu0 %v2163
        %2203 = vmatmul.f32.gmra.mxu0 %v761
        %v2204 = vpop.f32.mrf.mxu0
        %v2205 = vadd.f32 0.0, %v2204
        %2206 = vmatmul.f32.gmra.mxu0 %v764
        %v2207 = vpop.f32.mrf.mxu0
        %v2208 = vadd.f32 0.0, %v2207
        %2209 = vmatmul.f32.gmra.mxu0 %v767
        %v2210 = vpop.f32.mrf.mxu0
        %v2211 = vadd.f32 0.0, %v2210
        %2212 = vmatmul.f32.gmra.mxu0 %v770
        %v2213 = vpop.f32.mrf.mxu0
        %v2214 = vadd.f32 0.0, %v2213
        %2215 = vdwg.mxu0
        %2216 = vmatpush.msra.mxu0 0.0
        %2217 = vmatpush.msra.mxu0 0.0
        %2218 = vmatpush.msra.mxu0 0.0
        %2219 = vmatpush.msra.mxu0 0.0
        %2220 = vmatpush.msra.mxu0 0.0
        %2221 = vmatpush.msra.mxu0 0.0
        %2222 = vmatpush.msra.mxu0 0.0
        %2223 = vmatpush.msra.mxu0 0.0
        %2224 = vmatpush.msra.mxu0 0.0
        %2225 = vmatpush.msra.mxu0 0.0
        %2226 = vmatpush.msra.mxu0 0.0
        %2227 = vmatpush.msra.mxu0 0.0
        %2228 = vmatpush.msra.mxu0 %v2170
        %2229 = vmatpush.msra.mxu0 %v2169
        %2230 = vmatpush.msra.mxu0 %v2168
        %2231 = vmatpush.msra.mxu0 %v2167
        %2232 = vmatmul.f32.gmra.mxu0 %v761
        %v2233 = vpop.f32.mrf.mxu0
        %v2234 = vadd.f32 0.0, %v2233
        %2235 = vmatmul.f32.gmra.mxu0 %v764
        %v2236 = vpop.f32.mrf.mxu0
        %v2237 = vadd.f32 0.0, %v2236
        %2238 = vmatmul.f32.gmra.mxu0 %v767
        %v2239 = vpop.f32.mrf.mxu0
        %v2240 = vadd.f32 0.0, %v2239
        %2241 = vmatmul.f32.gmra.mxu0 %v770
        %v2242 = vpop.f32.mrf.mxu0
        %v2243 = vadd.f32 0.0, %v2242
        %2244 = vdwg.mxu0
        %2245 = vmatpush.msra.mxu0 0.0
        %2246 = vmatpush.msra.mxu0 0.0
        %2247 = vmatpush.msra.mxu0 0.0
        %2248 = vmatpush.msra.mxu0 0.0
        %2249 = vmatpush.msra.mxu0 0.0
        %2250 = vmatpush.msra.mxu0 0.0
        %2251 = vmatpush.msra.mxu0 0.0
        %2252 = vmatpush.msra.mxu0 0.0
        %2253 = vmatpush.msra.mxu0 0.0
        %2254 = vmatpush.msra.mxu0 0.0
        %2255 = vmatpush.msra.mxu0 0.0
        %2256 = vmatpush.msra.mxu0 0.0
        %2257 = vmatpush.msra.mxu0 %v2174
        %2258 = vmatpush.msra.mxu0 %v2173
        %2259 = vmatpush.msra.mxu0 %v2172
        %2260 = vmatpush.msra.mxu0 %v2171
        %2261 = vmatmul.f32.gmra.mxu0 %v761
        %v2262 = vpop.f32.mrf.mxu0
        %v2263 = vadd.f32 0.0, %v2262
        %2264 = vmatmul.f32.gmra.mxu0 %v764
        %v2265 = vpop.f32.mrf.mxu0
        %v2266 = vadd.f32 0.0, %v2265
        %2267 = vmatmul.f32.gmra.mxu0 %v767
        %v2268 = vpop.f32.mrf.mxu0
        %v2269 = vadd.f32 0.0, %v2268
        %2270 = vmatmul.f32.gmra.mxu0 %v770
        %v2271 = vpop.f32.mrf.mxu0
        %v2272 = vadd.f32 0.0, %v2271
        %2273 = vdwg.mxu0
        %2274 = vmatpush.msra.mxu0 0.0
        %2275 = vmatpush.msra.mxu0 0.0
        %2276 = vmatpush.msra.mxu0 0.0
        %2277 = vmatpush.msra.mxu0 0.0
        %2278 = vmatpush.msra.mxu0 0.0
        %2279 = vmatpush.msra.mxu0 0.0
        %2280 = vmatpush.msra.mxu0 0.0
        %2281 = vmatpush.msra.mxu0 0.0
        %2282 = vmatpush.msra.mxu0 0.0
        %2283 = vmatpush.msra.mxu0 0.0
        %2284 = vmatpush.msra.mxu0 0.0
        %2285 = vmatpush.msra.mxu0 0.0
        %2286 = vmatpush.msra.mxu0 %v2178
        %2287 = vmatpush.msra.mxu0 %v2177
        %2288 = vmatpush.msra.mxu0 %v2176
        %2289 = vmatpush.msra.mxu0 %v2175
        %2290 = vmatmul.f32.gmra.mxu0 %v761
        %v2291 = vpop.f32.mrf.mxu0
        %v2292 = vadd.f32 0.0, %v2291
        %2293 = vmatmul.f32.gmra.mxu0 %v764
        %v2294 = vpop.f32.mrf.mxu0
        %v2295 = vadd.f32 0.0, %v2294
        %2296 = vmatmul.f32.gmra.mxu0 %v767
        %v2297 = vpop.f32.mrf.mxu0
        %v2298 = vadd.f32 0.0, %v2297
        %2299 = vmatmul.f32.gmra.mxu0 %v770
        %v2300 = vpop.f32.mrf.mxu0
        %v2301 = vadd.f32 0.0, %v2300
        %2302 = vdwg.mxu0
        %2303 = vmatpush.msra.mxu0 0.0
        %2304 = vmatpush.msra.mxu0 0.0
        %2305 = vmatpush.msra.mxu0 0.0
        %2306 = vmatpush.msra.mxu0 0.0
        %2307 = vmatpush.msra.mxu0 0.0
        %2308 = vmatpush.msra.mxu0 0.0
        %2309 = vmatpush.msra.mxu0 0.0
        %2310 = vmatpush.msra.mxu0 0.0
        %2311 = vmatpush.msra.mxu0 0.0
        %2312 = vmatpush.msra.mxu0 0.0
        %2313 = vmatpush.msra.mxu0 0.0
        %2314 = vmatpush.msra.mxu0 0.0
        %2315 = vmatpush.msra.mxu0 %v2182
        %2316 = vmatpush.msra.mxu0 %v2181
        %2317 = vmatpush.msra.mxu0 %v2180
        %2318 = vmatpush.msra.mxu0 %v2179
        %2319 = vmatmul.f32.gmra.mxu0 %v761
        %v2320 = vpop.f32.mrf.mxu0
        %v2321 = vadd.f32 0.0, %v2320
        %2322 = vmatmul.f32.gmra.mxu0 %v764
        %v2323 = vpop.f32.mrf.mxu0
        %v2324 = vadd.f32 0.0, %v2323
        %2325 = vmatmul.f32.gmra.mxu0 %v767
        %v2326 = vpop.f32.mrf.mxu0
        %v2327 = vadd.f32 0.0, %v2326
        %2328 = vmatmul.f32.gmra.mxu0 %v770
        %v2329 = vpop.f32.mrf.mxu0
        %v2330 = vadd.f32 0.0, %v2329
        %2331 = vdwg.mxu0
        %2332 = vmatpush.msra.mxu0 0.0
        %2333 = vmatpush.msra.mxu0 0.0
        %2334 = vmatpush.msra.mxu0 0.0
        %2335 = vmatpush.msra.mxu0 0.0
        %2336 = vmatpush.msra.mxu0 0.0
        %2337 = vmatpush.msra.mxu0 0.0
        %2338 = vmatpush.msra.mxu0 0.0
        %2339 = vmatpush.msra.mxu0 0.0
        %2340 = vmatpush.msra.mxu0 0.0
        %2341 = vmatpush.msra.mxu0 0.0
        %2342 = vmatpush.msra.mxu0 0.0
        %2343 = vmatpush.msra.mxu0 0.0
        %2344 = vmatpush.msra.mxu0 %v2186
        %2345 = vmatpush.msra.mxu0 %v2185
        %2346 = vmatpush.msra.mxu0 %v2184
        %2347 = vmatpush.msra.mxu0 %v2183
        %2348 = vmatmul.f32.gmra.mxu0 %v761
        %v2349 = vpop.f32.mrf.mxu0
        %v2350 = vadd.f32 0.0, %v2349
        %2351 = vmatmul.f32.gmra.mxu0 %v764
        %v2352 = vpop.f32.mrf.mxu0
        %v2353 = vadd.f32 0.0, %v2352
        %2354 = vmatmul.f32.gmra.mxu0 %v767
        %v2355 = vpop.f32.mrf.mxu0
        %v2356 = vadd.f32 0.0, %v2355
        %2357 = vmatmul.f32.gmra.mxu0 %v770
        %v2358 = vpop.f32.mrf.mxu0
        %v2359 = vadd.f32 0.0, %v2358
        %2360 = vdwg.mxu0
        %v2362 = vsel %vm299, %v2205, 0
        %v2365 = vsel %vm299, %v2208, 0
        %v2368 = vsel %vm299, %v2211, 0
        %v2371 = vsel %vm299, %v2214, 0
        %2373 = vmatpush.msra.mxu0 0.0
        %2374 = vmatpush.msra.mxu0 0.0
        %2375 = vmatpush.msra.mxu0 0.0
        %2376 = vmatpush.msra.mxu0 0.0
        %2377 = vmatpush.msra.mxu0 0.0
        %2378 = vmatpush.msra.mxu0 0.0
        %2379 = vmatpush.msra.mxu0 0.0
        %2380 = vmatpush.msra.mxu0 0.0
        %2381 = vmatpush.msra.mxu0 0.0
        %2382 = vmatpush.msra.mxu0 0.0
        %2383 = vmatpush.msra.mxu0 0.0
        %2384 = vmatpush.msra.mxu0 0.0
        %2385 = vmatpush.msra.mxu0 %v294
        %2386 = vmatpush.msra.mxu0 %v293
        %2387 = vmatpush.msra.mxu0 %v292
        %2388 = vmatpush.msra.mxu0 %v291
        %2389 = vmatmul.f32.gmra.mxu0 %v2362
        %v2390 = vpop.f32.mrf.mxu0
        %v2391 = vadd.f32 0.0, %v2390
        %2392 = vmatmul.f32.gmra.mxu0 %v2365
        %v2393 = vpop.f32.mrf.mxu0
        %v2394 = vadd.f32 0.0, %v2393
        %2395 = vmatmul.f32.gmra.mxu0 %v2368
        %v2396 = vpop.f32.mrf.mxu0
        %v2397 = vadd.f32 0.0, %v2396
        %2398 = vmatmul.f32.gmra.mxu0 %v2371
        %v2399 = vpop.f32.mrf.mxu0
        %v2400 = vadd.f32 0.0, %v2399
        %2401 = vdwg.mxu0
        %v2403 = vsel %vm299, %v2234, 0
        %v2406 = vsel %vm299, %v2237, 0
        %v2409 = vsel %vm299, %v2240, 0
        %v2412 = vsel %vm299, %v2243, 0
        %2414 = vmatpush.msra.mxu0 0.0
        %2415 = vmatpush.msra.mxu0 0.0
        %2416 = vmatpush.msra.mxu0 0.0
        %2417 = vmatpush.msra.mxu0 0.0
        %2418 = vmatpush.msra.mxu0 0.0
        %2419 = vmatpush.msra.mxu0 0.0
        %2420 = vmatpush.msra.mxu0 0.0
        %2421 = vmatpush.msra.mxu0 0.0
        %2422 = vmatpush.msra.mxu0 0.0
        %2423 = vmatpush.msra.mxu0 0.0
        %2424 = vmatpush.msra.mxu0 0.0
        %2425 = vmatpush.msra.mxu0 0.0
        %2426 = vmatpush.msra.mxu0 %v294
        %2427 = vmatpush.msra.mxu0 %v293
        %2428 = vmatpush.msra.mxu0 %v292
        %2429 = vmatpush.msra.mxu0 %v291
        %2430 = vmatmul.f32.gmra.mxu0 %v2403
        %v2431 = vpop.f32.mrf.mxu0
        %v2432 = vadd.f32 0.0, %v2431
        %2433 = vmatmul.f32.gmra.mxu0 %v2406
        %v2434 = vpop.f32.mrf.mxu0
        %v2435 = vadd.f32 0.0, %v2434
        %2436 = vmatmul.f32.gmra.mxu0 %v2409
        %v2437 = vpop.f32.mrf.mxu0
        %v2438 = vadd.f32 0.0, %v2437
        %2439 = vmatmul.f32.gmra.mxu0 %v2412
        %v2440 = vpop.f32.mrf.mxu0
        %v2441 = vadd.f32 0.0, %v2440
        %2442 = vdwg.mxu0
        %v2444 = vsel %vm299, %v2263, 0
        %v2447 = vsel %vm299, %v2266, 0
        %v2450 = vsel %vm299, %v2269, 0
        %v2453 = vsel %vm299, %v2272, 0
        %2455 = vmatpush.msra.mxu0 0.0
        %2456 = vmatpush.msra.mxu0 0.0
        %2457 = vmatpush.msra.mxu0 0.0
        %2458 = vmatpush.msra.mxu0 0.0
        %2459 = vmatpush.msra.mxu0 0.0
        %2460 = vmatpush.msra.mxu0 0.0
        %2461 = vmatpush.msra.mxu0 0.0
        %2462 = vmatpush.msra.mxu0 0.0
        %2463 = vmatpush.msra.mxu0 0.0
        %2464 = vmatpush.msra.mxu0 0.0
        %2465 = vmatpush.msra.mxu0 0.0
        %2466 = vmatpush.msra.mxu0 0.0
        %2467 = vmatpush.msra.mxu0 %v294
        %2468 = vmatpush.msra.mxu0 %v293
        %2469 = vmatpush.msra.mxu0 %v292
        %2470 = vmatpush.msra.mxu0 %v291
        %2471 = vmatmul.f32.gmra.mxu0 %v2444
        %v2472 = vpop.f32.mrf.mxu0
        %v2473 = vadd.f32 0.0, %v2472
        %2474 = vmatmul.f32.gmra.mxu0 %v2447
        %v2475 = vpop.f32.mrf.mxu0
        %v2476 = vadd.f32 0.0, %v2475
        %2477 = vmatmul.f32.gmra.mxu0 %v2450
        %v2478 = vpop.f32.mrf.mxu0
        %v2479 = vadd.f32 0.0, %v2478
        %2480 = vmatmul.f32.gmra.mxu0 %v2453
        %v2481 = vpop.f32.mrf.mxu0
        %v2482 = vadd.f32 0.0, %v2481
        %2483 = vdwg.mxu0
        %v2485 = vsel %vm299, %v2292, 0
        %v2488 = vsel %vm299, %v2295, 0
        %v2491 = vsel %vm299, %v2298, 0
        %v2494 = vsel %vm299, %v2301, 0
        %2496 = vmatpush.msra.mxu0 0.0
        %2497 = vmatpush.msra.mxu0 0.0
        %2498 = vmatpush.msra.mxu0 0.0
        %2499 = vmatpush.msra.mxu0 0.0
        %2500 = vmatpush.msra.mxu0 0.0
        %2501 = vmatpush.msra.mxu0 0.0
        %2502 = vmatpush.msra.mxu0 0.0
        %2503 = vmatpush.msra.mxu0 0.0
        %2504 = vmatpush.msra.mxu0 0.0
        %2505 = vmatpush.msra.mxu0 0.0
        %2506 = vmatpush.msra.mxu0 0.0
        %2507 = vmatpush.msra.mxu0 0.0
        %2508 = vmatpush.msra.mxu0 %v294
        %2509 = vmatpush.msra.mxu0 %v293
        %2510 = vmatpush.msra.mxu0 %v292
        %2511 = vmatpush.msra.mxu0 %v291
        %2512 = vmatmul.f32.gmra.mxu0 %v2485
        %v2513 = vpop.f32.mrf.mxu0
        %v2514 = vadd.f32 0.0, %v2513
        %2515 = vmatmul.f32.gmra.mxu0 %v2488
        %v2516 = vpop.f32.mrf.mxu0
        %v2517 = vadd.f32 0.0, %v2516
        %2518 = vmatmul.f32.gmra.mxu0 %v2491
        %v2519 = vpop.f32.mrf.mxu0
        %v2520 = vadd.f32 0.0, %v2519
        %2521 = vmatmul.f32.gmra.mxu0 %v2494
        %v2522 = vpop.f32.mrf.mxu0
        %v2523 = vadd.f32 0.0, %v2522
        %2524 = vdwg.mxu0
        %v2526 = vsel %vm299, %v2321, 0
        %v2529 = vsel %vm299, %v2324, 0
        %v2532 = vsel %vm299, %v2327, 0
        %v2535 = vsel %vm299, %v2330, 0
        %2537 = vmatpush.msra.mxu0 0.0
        %2538 = vmatpush.msra.mxu0 0.0
        %2539 = vmatpush.msra.mxu0 0.0
        %2540 = vmatpush.msra.mxu0 0.0
        %2541 = vmatpush.msra.mxu0 0.0
        %2542 = vmatpush.msra.mxu0 0.0
        %2543 = vmatpush.msra.mxu0 0.0
        %2544 = vmatpush.msra.mxu0 0.0
        %2545 = vmatpush.msra.mxu0 0.0
        %2546 = vmatpush.msra.mxu0 0.0
        %2547 = vmatpush.msra.mxu0 0.0
        %2548 = vmatpush.msra.mxu0 0.0
        %2549 = vmatpush.msra.mxu0 %v294
        %2550 = vmatpush.msra.mxu0 %v293
        %2551 = vmatpush.msra.mxu0 %v292
        %2552 = vmatpush.msra.mxu0 %v291
        %2553 = vmatmul.f32.gmra.mxu0 %v2526
        %v2554 = vpop.f32.mrf.mxu0
        %v2555 = vadd.f32 0.0, %v2554
        %2556 = vmatmul.f32.gmra.mxu0 %v2529
        %v2557 = vpop.f32.mrf.mxu0
        %v2558 = vadd.f32 0.0, %v2557
        %2559 = vmatmul.f32.gmra.mxu0 %v2532
        %v2560 = vpop.f32.mrf.mxu0
        %v2561 = vadd.f32 0.0, %v2560
        %2562 = vmatmul.f32.gmra.mxu0 %v2535
        %v2563 = vpop.f32.mrf.mxu0
        %v2564 = vadd.f32 0.0, %v2563
        %2565 = vdwg.mxu0
        %v2567 = vsel %vm299, %v2350, 0
        %v2570 = vsel %vm299, %v2353, 0
        %v2573 = vsel %vm299, %v2356, 0
        %v2576 = vsel %vm299, %v2359, 0
        %2578 = vmatpush.msra.mxu0 0.0
        %2579 = vmatpush.msra.mxu0 0.0
        %2580 = vmatpush.msra.mxu0 0.0
        %2581 = vmatpush.msra.mxu0 0.0
        %2582 = vmatpush.msra.mxu0 0.0
        %2583 = vmatpush.msra.mxu0 0.0
        %2584 = vmatpush.msra.mxu0 0.0
        %2585 = vmatpush.msra.mxu0 0.0
        %2586 = vmatpush.msra.mxu0 0.0
        %2587 = vmatpush.msra.mxu0 0.0
        %2588 = vmatpush.msra.mxu0 0.0
        %2589 = vmatpush.msra.mxu0 0.0
        %2590 = vmatpush.msra.mxu0 %v294
        %2591 = vmatpush.msra.mxu0 %v293
        %2592 = vmatpush.msra.mxu0 %v292
        %2593 = vmatpush.msra.mxu0 %v291
        %2594 = vmatmul.f32.gmra.mxu0 %v2567
        %v2595 = vpop.f32.mrf.mxu0
        %v2596 = vadd.f32 0.0, %v2595
        %2597 = vmatmul.f32.gmra.mxu0 %v2570
        %v2598 = vpop.f32.mrf.mxu0
        %v2599 = vadd.f32 0.0, %v2598
        %2600 = vmatmul.f32.gmra.mxu0 %v2573
        %v2601 = vpop.f32.mrf.mxu0
        %v2602 = vadd.f32 0.0, %v2601
        %2603 = vmatmul.f32.gmra.mxu0 %v2576
        %v2604 = vpop.f32.mrf.mxu0
        %v2605 = vadd.f32 0.0, %v2604
        %2606 = vdwg.mxu0
        %v2607 = vmul.f32 %v2391, %v2391
        %v2608 = vmul.f32 %v2394, %v2394
        %v2609 = vmul.f32 %v2397, %v2397
        %v2610 = vmul.f32 %v2400, %v2400
        %v2611 = vmul.f32 %v2432, %v2432
        %v2612 = vmul.f32 %v2435, %v2435
        %v2613 = vmul.f32 %v2438, %v2438
        %v2614 = vmul.f32 %v2441, %v2441
        %v2615 = vmul.f32 %v2473, %v2473
        %v2616 = vmul.f32 %v2476, %v2476
        %v2617 = vmul.f32 %v2479, %v2479
        %v2618 = vmul.f32 %v2482, %v2482
        %v2619 = vmul.f32 %v2514, %v2514
        %v2620 = vmul.f32 %v2517, %v2517
        %v2621 = vmul.f32 %v2520, %v2520
        %v2622 = vmul.f32 %v2523, %v2523
        %v2623 = vmul.f32 %v2555, %v2555
        %v2624 = vmul.f32 %v2558, %v2558
        %v2625 = vmul.f32 %v2561, %v2561
        %v2626 = vmul.f32 %v2564, %v2564
        %v2627 = vmul.f32 %v2596, %v2596
        %v2628 = vmul.f32 %v2599, %v2599
        %v2629 = vmul.f32 %v2602, %v2602
        %v2630 = vmul.f32 %v2605, %v2605
        %v2631 = vsel %vm299, %v2607, 0.0
        %2632 = vadd.xlane.f32.xlu0 %v2631
        %v2633 = vpop.xlane.xlu0 %2632
        %v2634 = vsel %vm299, %v2608, 0.0
        %2635 = vadd.xlane.f32.xlu0 %v2634
        %v2636 = vpop.xlane.xlu0 %2635
        %v2637 = vsel %vm299, %v2609, 0.0
        %2638 = vadd.xlane.f32.xlu0 %v2637
        %v2639 = vpop.xlane.xlu0 %2638
        %v2640 = vsel %vm299, %v2610, 0.0
        %2641 = vadd.xlane.f32.xlu0 %v2640
        %v2642 = vpop.xlane.xlu0 %2641
        %v2643 = vsel %vm299, %v2611, 0.0
        %2644 = vadd.xlane.f32.xlu0 %v2643
        %v2645 = vpop.xlane.xlu0 %2644
        %v2646 = vsel %vm299, %v2612, 0.0
        %2647 = vadd.xlane.f32.xlu0 %v2646
        %v2648 = vpop.xlane.xlu0 %2647
        %v2649 = vsel %vm299, %v2613, 0.0
        %2650 = vadd.xlane.f32.xlu0 %v2649
        %v2651 = vpop.xlane.xlu0 %2650
        %v2652 = vsel %vm299, %v2614, 0.0
        %2653 = vadd.xlane.f32.xlu0 %v2652
        %v2654 = vpop.xlane.xlu0 %2653
        %v2655 = vsel %vm299, %v2615, 0.0
        %2656 = vadd.xlane.f32.xlu0 %v2655
        %v2657 = vpop.xlane.xlu0 %2656
        %v2658 = vsel %vm299, %v2616, 0.0
        %2659 = vadd.xlane.f32.xlu0 %v2658
        %v2660 = vpop.xlane.xlu0 %2659
        %v2661 = vsel %vm299, %v2617, 0.0
        %2662 = vadd.xlane.f32.xlu0 %v2661
        %v2663 = vpop.xlane.xlu0 %2662
        %v2664 = vsel %vm299, %v2618, 0.0
        %2665 = vadd.xlane.f32.xlu0 %v2664
        %v2666 = vpop.xlane.xlu0 %2665
        %v2667 = vsel %vm299, %v2619, 0.0
        %2668 = vadd.xlane.f32.xlu0 %v2667
        %v2669 = vpop.xlane.xlu0 %2668
        %v2670 = vsel %vm299, %v2620, 0.0
        %2671 = vadd.xlane.f32.xlu0 %v2670
        %v2672 = vpop.xlane.xlu0 %2671
        %v2673 = vsel %vm299, %v2621, 0.0
        %2674 = vadd.xlane.f32.xlu0 %v2673
        %v2675 = vpop.xlane.xlu0 %2674
        %v2676 = vsel %vm299, %v2622, 0.0
        %2677 = vadd.xlane.f32.xlu0 %v2676
        %v2678 = vpop.xlane.xlu0 %2677
        %v2679 = vsel %vm299, %v2623, 0.0
        %2680 = vadd.xlane.f32.xlu0 %v2679
        %v2681 = vpop.xlane.xlu0 %2680
        %v2682 = vsel %vm299, %v2624, 0.0
        %2683 = vadd.xlane.f32.xlu0 %v2682
        %v2684 = vpop.xlane.xlu0 %2683
        %v2685 = vsel %vm299, %v2625, 0.0
        %2686 = vadd.xlane.f32.xlu0 %v2685
        %v2687 = vpop.xlane.xlu0 %2686
        %v2688 = vsel %vm299, %v2626, 0.0
        %2689 = vadd.xlane.f32.xlu0 %v2688
        %v2690 = vpop.xlane.xlu0 %2689
        %v2691 = vsel %vm299, %v2627, 0.0
        %2692 = vadd.xlane.f32.xlu0 %v2691
        %v2693 = vpop.xlane.xlu0 %2692
        %v2694 = vsel %vm299, %v2628, 0.0
        %2695 = vadd.xlane.f32.xlu0 %v2694
        %v2696 = vpop.xlane.xlu0 %2695
        %v2697 = vsel %vm299, %v2629, 0.0
        %2698 = vadd.xlane.f32.xlu0 %v2697
        %v2699 = vpop.xlane.xlu0 %2698
        %v2700 = vsel %vm299, %v2630, 0.0
        %2701 = vadd.xlane.f32.xlu0 %v2700
        %v2702 = vpop.xlane.xlu0 %2701
        %v2703 = vadd.f32 %v2633, %v2636
        %v2704 = vadd.f32 %v2703, %v2639
        %v2705 = vadd.f32 %v2704, %v2642
        %v2706 = vrot.slane %v2705, 4
        %v2707 = vadd.f32 %v2705, %v2706
        %v2708 = vrot.slane %v2707, 2
        %v2709 = vadd.f32 %v2707, %v2708
        %v2710 = vrot.slane %v2709, 1
        %v2711 = vadd.f32 %v2709, %v2710
        %v2712 = vadd.f32 %v2645, %v2648
        %v2713 = vadd.f32 %v2712, %v2651
        %v2714 = vadd.f32 %v2713, %v2654
        %v2715 = vrot.slane %v2714, 4
        %v2716 = vadd.f32 %v2714, %v2715
        %v2717 = vrot.slane %v2716, 2
        %v2718 = vadd.f32 %v2716, %v2717
        %v2719 = vrot.slane %v2718, 1
        %v2720 = vadd.f32 %v2718, %v2719
        %v2721 = vadd.f32 %v2657, %v2660
        %v2722 = vadd.f32 %v2721, %v2663
        %v2723 = vadd.f32 %v2722, %v2666
        %v2724 = vrot.slane %v2723, 4
        %v2725 = vadd.f32 %v2723, %v2724
        %v2726 = vrot.slane %v2725, 2
        %v2727 = vadd.f32 %v2725, %v2726
        %v2728 = vrot.slane %v2727, 1
        %v2729 = vadd.f32 %v2727, %v2728
        %v2730 = vadd.f32 %v2669, %v2672
        %v2731 = vadd.f32 %v2730, %v2675
        %v2732 = vadd.f32 %v2731, %v2678
        %v2733 = vrot.slane %v2732, 4
        %v2734 = vadd.f32 %v2732, %v2733
        %v2735 = vrot.slane %v2734, 2
        %v2736 = vadd.f32 %v2734, %v2735
        %v2737 = vrot.slane %v2736, 1
        %v2738 = vadd.f32 %v2736, %v2737
        %v2739 = vadd.f32 %v2681, %v2684
        %v2740 = vadd.f32 %v2739, %v2687
        %v2741 = vadd.f32 %v2740, %v2690
        %v2742 = vrot.slane %v2741, 4
        %v2743 = vadd.f32 %v2741, %v2742
        %v2744 = vrot.slane %v2743, 2
        %v2745 = vadd.f32 %v2743, %v2744
        %v2746 = vrot.slane %v2745, 1
        %v2747 = vadd.f32 %v2745, %v2746
        %v2748 = vadd.f32 %v2693, %v2696
        %v2749 = vadd.f32 %v2748, %v2699
        %v2750 = vadd.f32 %v2749, %v2702
        %v2751 = vrot.slane %v2750, 4
        %v2752 = vadd.f32 %v2750, %v2751
        %v2753 = vrot.slane %v2752, 2
        %v2754 = vadd.f32 %v2752, %v2753
        %v2755 = vrot.slane %v2754, 1
        %v2756 = vadd.f32 %v2754, %v2755
        %v2757 = vrsqrt.pop %v2711
        %v2758 = vmul.f32 %v2757, %v2711
        %v2759 = vmul.f32 %v2758, %v2757
        %v2760 = vmul.f32 0.5, %v2759
        %v2761 = vsub.f32 1.5, %v2760
        %v2762 = vmul.f32 %v2757, %v2761
        %vm2763 = vweird.f32 %v2711
        %vm2764 = vweird.f32 %v2757
        %vm2765 = vmor %vm2763, %vm2764
        %v2766 = vsel %vm2765, %v2757, %v2762
        %v2767 = vrsqrt.pop %v2720
        %v2768 = vmul.f32 %v2767, %v2720
        %v2769 = vmul.f32 %v2768, %v2767
        %v2770 = vmul.f32 0.5, %v2769
        %v2771 = vsub.f32 1.5, %v2770
        %v2772 = vmul.f32 %v2767, %v2771
        %vm2773 = vweird.f32 %v2720
        %vm2774 = vweird.f32 %v2767
        %vm2775 = vmor %vm2773, %vm2774
        %v2776 = vsel %vm2775, %v2767, %v2772
        %v2777 = vrsqrt.pop %v2729
        %v2778 = vmul.f32 %v2777, %v2729
        %v2779 = vmul.f32 %v2778, %v2777
        %v2780 = vmul.f32 0.5, %v2779
        %v2781 = vsub.f32 1.5, %v2780
        %v2782 = vmul.f32 %v2777, %v2781
        %vm2783 = vweird.f32 %v2729
        %vm2784 = vweird.f32 %v2777
        %vm2785 = vmor %vm2783, %vm2784
        %v2786 = vsel %vm2785, %v2777, %v2782
        %v2787 = vrsqrt.pop %v2738
        %v2788 = vmul.f32 %v2787, %v2738
        %v2789 = vmul.f32 %v2788, %v2787
        %v2790 = vmul.f32 0.5, %v2789
        %v2791 = vsub.f32 1.5, %v2790
        %v2792 = vmul.f32 %v2787, %v2791
        %vm2793 = vweird.f32 %v2738
        %vm2794 = vweird.f32 %v2787
        %vm2795 = vmor %vm2793, %vm2794
        %v2796 = vsel %vm2795, %v2787, %v2792
        %v2797 = vrsqrt.pop %v2747
        %v2798 = vmul.f32 %v2797, %v2747
        %v2799 = vmul.f32 %v2798, %v2797
        %v2800 = vmul.f32 0.5, %v2799
        %v2801 = vsub.f32 1.5, %v2800
        %v2802 = vmul.f32 %v2797, %v2801
        %vm2803 = vweird.f32 %v2747
        %vm2804 = vweird.f32 %v2797
        %vm2805 = vmor %vm2803, %vm2804
        %v2806 = vsel %vm2805, %v2797, %v2802
        %v2807 = vrsqrt.pop %v2756
        %v2808 = vmul.f32 %v2807, %v2756
        %v2809 = vmul.f32 %v2808, %v2807
        %v2810 = vmul.f32 0.5, %v2809
        %v2811 = vsub.f32 1.5, %v2810
        %v2812 = vmul.f32 %v2807, %v2811
        %vm2813 = vweird.f32 %v2756
        %vm2814 = vweird.f32 %v2807
        %vm2815 = vmor %vm2813, %vm2814
        %v2816 = vsel %vm2815, %v2807, %v2812
        %v2817 = vmul.f32 %v2391, %v2766
        %v2818 = vmul.f32 %v2394, %v2766
        %v2819 = vmul.f32 %v2397, %v2766
        %v2820 = vmul.f32 %v2400, %v2766
        %v2821 = vmul.f32 %v2432, %v2776
        %v2822 = vmul.f32 %v2435, %v2776
        %v2823 = vmul.f32 %v2438, %v2776
        %v2824 = vmul.f32 %v2441, %v2776
        %v2825 = vmul.f32 %v2473, %v2786
        %v2826 = vmul.f32 %v2476, %v2786
        %v2827 = vmul.f32 %v2479, %v2786
        %v2828 = vmul.f32 %v2482, %v2786
        %v2829 = vmul.f32 %v2514, %v2796
        %v2830 = vmul.f32 %v2517, %v2796
        %v2831 = vmul.f32 %v2520, %v2796
        %v2832 = vmul.f32 %v2523, %v2796
        %v2833 = vmul.f32 %v2555, %v2806
        %v2834 = vmul.f32 %v2558, %v2806
        %v2835 = vmul.f32 %v2561, %v2806
        %v2836 = vmul.f32 %v2564, %v2806
        %v2837 = vmul.f32 %v2596, %v2816
        %v2838 = vmul.f32 %v2599, %v2816
        %v2839 = vmul.f32 %v2602, %v2816
        %v2840 = vmul.f32 %v2605, %v2816
        %s2841 = scalar_lea.vmem %s264, 192 [#allocation9]
        %2842 = vst.msk [vmem:[%s2841] sm:$0xff] %vm299, %v2817
        %2843 = vst.msk [vmem:[%s2841 + $0x8] sm:$0xff] %vm299, %v2818
        %2844 = vst.msk [vmem:[%s2841 + $0x10] sm:$0xff] %vm299, %v2819
        %2845 = vst.msk [vmem:[%s2841 + $0x18] sm:$0xff] %vm299, %v2820
        %2846 = vst.msk [vmem:[%s2841 + $0x20] sm:$0xff] %vm299, %v2821
        %2847 = vst.msk [vmem:[%s2841 + $0x28] sm:$0xff] %vm299, %v2822
        %2848 = vst.msk [vmem:[%s2841 + $0x30] sm:$0xff] %vm299, %v2823
        %2849 = vst.msk [vmem:[%s2841 + $0x38] sm:$0xff] %vm299, %v2824
        %2850 = vst.msk [vmem:[%s2841 + $0x40] sm:$0xff] %vm299, %v2825
        %2851 = vst.msk [vmem:[%s2841 + $0x48] sm:$0xff] %vm299, %v2826
        %2852 = vst.msk [vmem:[%s2841 + $0x50] sm:$0xff] %vm299, %v2827
        %2853 = vst.msk [vmem:[%s2841 + $0x58] sm:$0xff] %vm299, %v2828
        %2854 = vst.msk [vmem:[%s2841 + $0x120] sm:$0xff] %vm299, %v2829
        %2855 = vst.msk [vmem:[%s2841 + $0x128] sm:$0xff] %vm299, %v2830
        %2856 = vst.msk [vmem:[%s2841 + $0x130] sm:$0xff] %vm299, %v2831
        %2857 = vst.msk [vmem:[%s2841 + $0x138] sm:$0xff] %vm299, %v2832
        %2858 = vst.msk [vmem:[%s2841 + $0x140] sm:$0xff] %vm299, %v2833
        %2859 = vst.msk [vmem:[%s2841 + $0x148] sm:$0xff] %vm299, %v2834
        %2860 = vst.msk [vmem:[%s2841 + $0x150] sm:$0xff] %vm299, %v2835
        %2861 = vst.msk [vmem:[%s2841 + $0x158] sm:$0xff] %vm299, %v2836
        %2862 = vst.msk [vmem:[%s2841 + $0x160] sm:$0xff] %vm299, %v2837
        %2863 = vst.msk [vmem:[%s2841 + $0x168] sm:$0xff] %vm299, %v2838
        %2864 = vst.msk [vmem:[%s2841 + $0x170] sm:$0xff] %vm299, %v2839
        %2865 = vst.msk [vmem:[%s2841 + $0x178] sm:$0xff] %vm299, %v2840
        %s2866 = sand.u32 %s117, 1
        %s2867 = sand.u32 %s117, 1
        %s2868 = smul.addr %s2867, 576
        %s2869 = scalar_lea.vmem [#allocation9], %s2868
        // Predicated region
        $region53: #{multichannel_forward.2} parent=35 // pred_check
          %p2870 = pneg %p127
        $region54: #{multichannel_forward.2} parent=35 // pred_check_branch
          %2872 = sbr.rel (%p2870) target = $region56
        $region55: #{multichannel_forward.2} parent=35 // pred_region
          %s2873 = smul.u32 3, %s20
          %s2874 = smul.addr %s2873, 12
          %s2875 = smul.addr %s2874, 8
          %s2876 = scalar_lea.vmem %s4, %s2875
          // Predicated region
          $region57: #{multichannel_forward.2} parent=55 // pred_check
            _
          $region58: #{multichannel_forward.2} parent=55 // pred_check_branch
            %2878 = sbr.rel (0) target = $region60
          $region59: #{multichannel_forward.2} parent=55 // pred_region
            // Predicated region
            $region61: #{multichannel_forward.2} parent=59 // pred_check
              _
            $region62: #{multichannel_forward.2} parent=59 // pred_check_branch
              %2880 = sbr.rel (0) target = $region64
            $region63: #{multichannel_forward.2} parent=59 // pred_region
              // Predicated region
              $region76: #{multichannel_forward.2} parent=63 // pred_check
                _
              $region77: #{multichannel_forward.2} parent=63 // pred_check_branch
                %3038 = sbr.rel (0) target = $region79
              $region78: #{multichannel_forward.2} parent=63 // pred_region
                loop: start=0, step=1, limit=1
                $region80: #{multichannel_forward.2} parent=78 // loop_pre_header
                  _
                $region81: #{multichannel_forward.2} parent=78 // loop_header
                  %s3040 = sphi 0, %s3044
                  %p3041 = scmp.ge.s32.totalorder %s3040, 1
                  %s3045 = sphi %s2869, %s2869
                  %s3046 = sphi %s2876, %s2876
                $region82: #{multichannel_forward.2} parent=78 // loop_header_branch
                  %3043 = sbr.rel (%p3041) target = $region86
                $region83: #{multichannel_forward.2} parent=78 // loop_body
                  %v3047 = vld [vmem:[%s3045] sm:$0xff]
                  %3048 = vst [vmem:[%s3046] sm:$0xff] %v3047
                  %v3049 = vld [vmem:[%s3045 + $0x8] sm:$0xff]
                  %3050 = vst [vmem:[%s3046 + $0x8] sm:$0xff] %v3049
                  %v3051 = vld [vmem:[%s3045 + $0x10] sm:$0xff]
                  %3052 = vst [vmem:[%s3046 + $0x10] sm:$0xff] %v3051
                  %v3053 = vld [vmem:[%s3045 + $0x18] sm:$0xff]
                  %3054 = vst [vmem:[%s3046 + $0x18] sm:$0xff] %v3053
                  %v3055 = vld [vmem:[%s3045 + $0x20] sm:$0xff]
                  %3056 = vst [vmem:[%s3046 + $0x20] sm:$0xff] %v3055
                  %v3057 = vld [vmem:[%s3045 + $0x28] sm:$0xff]
                  %3058 = vst [vmem:[%s3046 + $0x28] sm:$0xff] %v3057
                  %v3059 = vld [vmem:[%s3045 + $0x30] sm:$0xff]
                  %3060 = vst [vmem:[%s3046 + $0x30] sm:$0xff] %v3059
                  %v3061 = vld [vmem:[%s3045 + $0x38] sm:$0xff]
                  %3062 = vst [vmem:[%s3046 + $0x38] sm:$0xff] %v3061
                  %v3063 = vld [vmem:[%s3045 + $0x40] sm:$0xff]
                  %3064 = vst [vmem:[%s3046 + $0x40] sm:$0xff] %v3063
                  %v3065 = vld [vmem:[%s3045 + $0x48] sm:$0xff]
                  %3066 = vst [vmem:[%s3046 + $0x48] sm:$0xff] %v3065
                  %v3067 = vld [vmem:[%s3045 + $0x50] sm:$0xff]
                  %3068 = vst [vmem:[%s3046 + $0x50] sm:$0xff] %v3067
                  %v3069 = vld [vmem:[%s3045 + $0x58] sm:$0xff]
                  %3070 = vst [vmem:[%s3046 + $0x58] sm:$0xff] %v3069
                  %v3071 = vld [vmem:[%s3045 + $0x60] sm:$0xff]
                  %3072 = vst [vmem:[%s3046 + $0x60] sm:$0xff] %v3071
                  %v3073 = vld [vmem:[%s3045 + $0x68] sm:$0xff]
                  %3074 = vst [vmem:[%s3046 + $0x68] sm:$0xff] %v3073
                  %v3075 = vld [vmem:[%s3045 + $0x70] sm:$0xff]
                  %3076 = vst [vmem:[%s3046 + $0x70] sm:$0xff] %v3075
                  %v3077 = vld [vmem:[%s3045 + $0x78] sm:$0xff]
                  %3078 = vst [vmem:[%s3046 + $0x78] sm:$0xff] %v3077
                  %v3079 = vld [vmem:[%s3045 + $0x80] sm:$0xff]
                  %3080 = vst [vmem:[%s3046 + $0x80] sm:$0xff] %v3079
                  %v3081 = vld [vmem:[%s3045 + $0x88] sm:$0xff]
                  %3082 = vst [vmem:[%s3046 + $0x88] sm:$0xff] %v3081
                  %v3083 = vld [vmem:[%s3045 + $0x90] sm:$0xff]
                  %3084 = vst [vmem:[%s3046 + $0x90] sm:$0xff] %v3083
                  %v3085 = vld [vmem:[%s3045 + $0x98] sm:$0xff]
                  %3086 = vst [vmem:[%s3046 + $0x98] sm:$0xff] %v3085
                  %v3087 = vld [vmem:[%s3045 + $0xa0] sm:$0xff]
                  %3088 = vst [vmem:[%s3046 + $0xa0] sm:$0xff] %v3087
                  %v3089 = vld [vmem:[%s3045 + $0xa8] sm:$0xff]
                  %3090 = vst [vmem:[%s3046 + $0xa8] sm:$0xff] %v3089
                  %v3091 = vld [vmem:[%s3045 + $0xb0] sm:$0xff]
                  %3092 = vst [vmem:[%s3046 + $0xb0] sm:$0xff] %v3091
                  %v3093 = vld [vmem:[%s3045 + $0xb8] sm:$0xff]
                  %3094 = vst [vmem:[%s3046 + $0xb8] sm:$0xff] %v3093
                  %v3095 = vld [vmem:[%s3045 + $0xc0] sm:$0xff]
                  %3096 = vst [vmem:[%s3046 + $0xc0] sm:$0xff] %v3095
                  %v3097 = vld [vmem:[%s3045 + $0xc8] sm:$0xff]
                  %3098 = vst [vmem:[%s3046 + $0xc8] sm:$0xff] %v3097
                  %v3099 = vld [vmem:[%s3045 + $0xd0] sm:$0xff]
                  %3100 = vst [vmem:[%s3046 + $0xd0] sm:$0xff] %v3099
                  %v3101 = vld [vmem:[%s3045 + $0xd8] sm:$0xff]
                  %3102 = vst [vmem:[%s3046 + $0xd8] sm:$0xff] %v3101
                  %v3103 = vld [vmem:[%s3045 + $0xe0] sm:$0xff]
                  %3104 = vst [vmem:[%s3046 + $0xe0] sm:$0xff] %v3103
                  %v3105 = vld [vmem:[%s3045 + $0xe8] sm:$0xff]
                  %3106 = vst [vmem:[%s3046 + $0xe8] sm:$0xff] %v3105
                  %v3107 = vld [vmem:[%s3045 + $0xf0] sm:$0xff]
                  %3108 = vst [vmem:[%s3046 + $0xf0] sm:$0xff] %v3107
                  %v3109 = vld [vmem:[%s3045 + $0xf8] sm:$0xff]
                  %3110 = vst [vmem:[%s3046 + $0xf8] sm:$0xff] %v3109
                  %v3111 = vld [vmem:[%s3045 + $0x100] sm:$0xff]
                  %3112 = vst [vmem:[%s3046 + $0x100] sm:$0xff] %v3111
                  %v3113 = vld [vmem:[%s3045 + $0x108] sm:$0xff]
                  %3114 = vst [vmem:[%s3046 + $0x108] sm:$0xff] %v3113
                  %v3115 = vld [vmem:[%s3045 + $0x110] sm:$0xff]
                  %3116 = vst [vmem:[%s3046 + $0x110] sm:$0xff] %v3115
                  %v3117 = vld [vmem:[%s3045 + $0x118] sm:$0xff]
                  %3118 = vst [vmem:[%s3046 + $0x118] sm:$0xff] %v3117
                  %v3119 = vld [vmem:[%s3045 + $0x120] sm:$0xff]
                  %3120 = vst [vmem:[%s3046 + $0x360] sm:$0xff] %v3119
                  %v3121 = vld [vmem:[%s3045 + $0x128] sm:$0xff]
                  %3122 = vst [vmem:[%s3046 + $0x368] sm:$0xff] %v3121
                  %v3123 = vld [vmem:[%s3045 + $0x130] sm:$0xff]
                  %3124 = vst [vmem:[%s3046 + $0x370] sm:$0xff] %v3123
                  %v3125 = vld [vmem:[%s3045 + $0x138] sm:$0xff]
                  %3126 = vst [vmem:[%s3046 + $0x378] sm:$0xff] %v3125
                  %v3127 = vld [vmem:[%s3045 + $0x140] sm:$0xff]
                  %3128 = vst [vmem:[%s3046 + $0x380] sm:$0xff] %v3127
                  %v3129 = vld [vmem:[%s3045 + $0x148] sm:$0xff]
                  %3130 = vst [vmem:[%s3046 + $0x388] sm:$0xff] %v3129
                  %v3131 = vld [vmem:[%s3045 + $0x150] sm:$0xff]
                  %3132 = vst [vmem:[%s3046 + $0x390] sm:$0xff] %v3131
                  %v3133 = vld [vmem:[%s3045 + $0x158] sm:$0xff]
                  %3134 = vst [vmem:[%s3046 + $0x398] sm:$0xff] %v3133
                  %v3135 = vld [vmem:[%s3045 + $0x160] sm:$0xff]
                  %3136 = vst [vmem:[%s3046 + $0x3a0] sm:$0xff] %v3135
                  %v3137 = vld [vmem:[%s3045 + $0x168] sm:$0xff]
                  %3138 = vst [vmem:[%s3046 + $0x3a8] sm:$0xff] %v3137
                  %v3139 = vld [vmem:[%s3045 + $0x170] sm:$0xff]
                  %3140 = vst [vmem:[%s3046 + $0x3b0] sm:$0xff] %v3139
                  %v3141 = vld [vmem:[%s3045 + $0x178] sm:$0xff]
                  %3142 = vst [vmem:[%s3046 + $0x3b8] sm:$0xff] %v3141
                  %v3143 = vld [vmem:[%s3045 + $0x180] sm:$0xff]
                  %3144 = vst [vmem:[%s3046 + $0x3c0] sm:$0xff] %v3143
                  %v3145 = vld [vmem:[%s3045 + $0x188] sm:$0xff]
                  %3146 = vst [vmem:[%s3046 + $0x3c8] sm:$0xff] %v3145
                  %v3147 = vld [vmem:[%s3045 + $0x190] sm:$0xff]
                  %3148 = vst [vmem:[%s3046 + $0x3d0] sm:$0xff] %v3147
                  %v3149 = vld [vmem:[%s3045 + $0x198] sm:$0xff]
                  %3150 = vst [vmem:[%s3046 + $0x3d8] sm:$0xff] %v3149
                  %v3151 = vld [vmem:[%s3045 + $0x1a0] sm:$0xff]
                  %3152 = vst [vmem:[%s3046 + $0x3e0] sm:$0xff] %v3151
                  %v3153 = vld [vmem:[%s3045 + $0x1a8] sm:$0xff]
                  %3154 = vst [vmem:[%s3046 + $0x3e8] sm:$0xff] %v3153
                  %v3155 = vld [vmem:[%s3045 + $0x1b0] sm:$0xff]
                  %3156 = vst [vmem:[%s3046 + $0x3f0] sm:$0xff] %v3155
                  %v3157 = vld [vmem:[%s3045 + $0x1b8] sm:$0xff]
                  %3158 = vst [vmem:[%s3046 + $0x3f8] sm:$0xff] %v3157
                  %v3159 = vld [vmem:[%s3045 + $0x1c0] sm:$0xff]
                  %3160 = vst [vmem:[%s3046 + $0x400] sm:$0xff] %v3159
                  %v3161 = vld [vmem:[%s3045 + $0x1c8] sm:$0xff]
                  %3162 = vst [vmem:[%s3046 + $0x408] sm:$0xff] %v3161
                  %v3163 = vld [vmem:[%s3045 + $0x1d0] sm:$0xff]
                  %3164 = vst [vmem:[%s3046 + $0x410] sm:$0xff] %v3163
                  %v3165 = vld [vmem:[%s3045 + $0x1d8] sm:$0xff]
                  %3166 = vst [vmem:[%s3046 + $0x418] sm:$0xff] %v3165
                  %v3167 = vld [vmem:[%s3045 + $0x1e0] sm:$0xff]
                  %3168 = vst [vmem:[%s3046 + $0x420] sm:$0xff] %v3167
                  %v3169 = vld [vmem:[%s3045 + $0x1e8] sm:$0xff]
                  %3170 = vst [vmem:[%s3046 + $0x428] sm:$0xff] %v3169
                  %v3171 = vld [vmem:[%s3045 + $0x1f0] sm:$0xff]
                  %3172 = vst [vmem:[%s3046 + $0x430] sm:$0xff] %v3171
                  %v3173 = vld [vmem:[%s3045 + $0x1f8] sm:$0xff]
                  %3174 = vst [vmem:[%s3046 + $0x438] sm:$0xff] %v3173
                  %v3175 = vld [vmem:[%s3045 + $0x200] sm:$0xff]
                  %3176 = vst [vmem:[%s3046 + $0x440] sm:$0xff] %v3175
                  %v3177 = vld [vmem:[%s3045 + $0x208] sm:$0xff]
                  %3178 = vst [vmem:[%s3046 + $0x448] sm:$0xff] %v3177
                  %v3179 = vld [vmem:[%s3045 + $0x210] sm:$0xff]
                  %3180 = vst [vmem:[%s3046 + $0x450] sm:$0xff] %v3179
                  %v3181 = vld [vmem:[%s3045 + $0x218] sm:$0xff]
                  %3182 = vst [vmem:[%s3046 + $0x458] sm:$0xff] %v3181
                  %v3183 = vld [vmem:[%s3045 + $0x220] sm:$0xff]
                  %3184 = vst [vmem:[%s3046 + $0x460] sm:$0xff] %v3183
                  %v3185 = vld [vmem:[%s3045 + $0x228] sm:$0xff]
                  %3186 = vst [vmem:[%s3046 + $0x468] sm:$0xff] %v3185
                  %v3187 = vld [vmem:[%s3045 + $0x230] sm:$0xff]
                  %3188 = vst [vmem:[%s3046 + $0x470] sm:$0xff] %v3187
                  %v3189 = vld [vmem:[%s3045 + $0x238] sm:$0xff]
                  %3190 = vst [vmem:[%s3046 + $0x478] sm:$0xff] %v3189
                $region84: #{multichannel_forward.2} parent=78 // loop_footer
                  %s3044 = sadd.s32 1, %s3040
                $region85: #{multichannel_forward.2} parent=78 // loop_footer_branch
                  %3039 = sbr.rel target = $region81
                $region86: #{multichannel_forward.2} parent=78 // loop_exit
                  _
              $region79: #{multichannel_forward.2} parent=63 // pred_fallthru
                _
              // Predicated region
              $region87: #{multichannel_forward.2} parent=63 // pred_check
                _
              $region88: #{multichannel_forward.2} parent=63 // pred_check_branch
                %3192 = sbr.rel target = $region90
              $region89: #{multichannel_forward.2} parent=63 // pred_region
                _
              $region90: #{multichannel_forward.2} parent=63 // pred_fallthru
                _
            $region64: #{multichannel_forward.2} parent=59 // pred_fallthru
              _
            // Predicated region
            $region65: #{multichannel_forward.2} parent=59 // pred_check
              _
            $region66: #{multichannel_forward.2} parent=59 // pred_check_branch
              %2882 = sbr.rel target = $region68
            $region67: #{multichannel_forward.2} parent=59 // pred_region
              %s2884 = ssub.s32 256, 1
              loop: start=0, step=1, limit=1
              $region69: #{multichannel_forward.2} parent=67 // loop_pre_header
                _
              $region70: #{multichannel_forward.2} parent=67 // loop_header
                %s2886 = sphi 0, %s2890
                %p2887 = scmp.ge.s32.totalorder %s2886, 1
                %s2891 = sphi %s2869, %s2869
                %s2892 = sphi %s2876, %s2876
              $region71: #{multichannel_forward.2} parent=67 // loop_header_branch
                %2889 = sbr.rel (%p2887) target = $region75
              $region72: #{multichannel_forward.2} parent=67 // loop_body
                %v2893 = vld [vmem:[%s2891] sm:%s2884]
                %2894 = vst [vmem:[%s2892] sm:%s2884] %v2893
                %v2895 = vld [vmem:[%s2891 + $0x8] sm:%s2884]
                %2896 = vst [vmem:[%s2892 + $0x8] sm:%s2884] %v2895
                %v2897 = vld [vmem:[%s2891 + $0x10] sm:%s2884]
                %2898 = vst [vmem:[%s2892 + $0x10] sm:%s2884] %v2897
                %v2899 = vld [vmem:[%s2891 + $0x18] sm:%s2884]
                %2900 = vst [vmem:[%s2892 + $0x18] sm:%s2884] %v2899
                %v2901 = vld [vmem:[%s2891 + $0x20] sm:%s2884]
                %2902 = vst [vmem:[%s2892 + $0x20] sm:%s2884] %v2901
                %v2903 = vld [vmem:[%s2891 + $0x28] sm:%s2884]
                %2904 = vst [vmem:[%s2892 + $0x28] sm:%s2884] %v2903
                %v2905 = vld [vmem:[%s2891 + $0x30] sm:%s2884]
                %2906 = vst [vmem:[%s2892 + $0x30] sm:%s2884] %v2905
                %v2907 = vld [vmem:[%s2891 + $0x38] sm:%s2884]
                %2908 = vst [vmem:[%s2892 + $0x38] sm:%s2884] %v2907
                %v2909 = vld [vmem:[%s2891 + $0x40] sm:%s2884]
                %2910 = vst [vmem:[%s2892 + $0x40] sm:%s2884] %v2909
                %v2911 = vld [vmem:[%s2891 + $0x48] sm:%s2884]
                %2912 = vst [vmem:[%s2892 + $0x48] sm:%s2884] %v2911
                %v2913 = vld [vmem:[%s2891 + $0x50] sm:%s2884]
                %2914 = vst [vmem:[%s2892 + $0x50] sm:%s2884] %v2913
                %v2915 = vld [vmem:[%s2891 + $0x58] sm:%s2884]
                %2916 = vst [vmem:[%s2892 + $0x58] sm:%s2884] %v2915
                %v2917 = vld [vmem:[%s2891 + $0x60] sm:%s2884]
                %2918 = vst [vmem:[%s2892 + $0x60] sm:%s2884] %v2917
                %v2919 = vld [vmem:[%s2891 + $0x68] sm:%s2884]
                %2920 = vst [vmem:[%s2892 + $0x68] sm:%s2884] %v2919
                %v2921 = vld [vmem:[%s2891 + $0x70] sm:%s2884]
                %2922 = vst [vmem:[%s2892 + $0x70] sm:%s2884] %v2921
                %v2923 = vld [vmem:[%s2891 + $0x78] sm:%s2884]
                %2924 = vst [vmem:[%s2892 + $0x78] sm:%s2884] %v2923
                %v2925 = vld [vmem:[%s2891 + $0x80] sm:%s2884]
                %2926 = vst [vmem:[%s2892 + $0x80] sm:%s2884] %v2925
                %v2927 = vld [vmem:[%s2891 + $0x88] sm:%s2884]
                %2928 = vst [vmem:[%s2892 + $0x88] sm:%s2884] %v2927
                %v2929 = vld [vmem:[%s2891 + $0x90] sm:%s2884]
                %2930 = vst [vmem:[%s2892 + $0x90] sm:%s2884] %v2929
                %v2931 = vld [vmem:[%s2891 + $0x98] sm:%s2884]
                %2932 = vst [vmem:[%s2892 + $0x98] sm:%s2884] %v2931
                %v2933 = vld [vmem:[%s2891 + $0xa0] sm:%s2884]
                %2934 = vst [vmem:[%s2892 + $0xa0] sm:%s2884] %v2933
                %v2935 = vld [vmem:[%s2891 + $0xa8] sm:%s2884]
                %2936 = vst [vmem:[%s2892 + $0xa8] sm:%s2884] %v2935
                %v2937 = vld [vmem:[%s2891 + $0xb0] sm:%s2884]
                %2938 = vst [vmem:[%s2892 + $0xb0] sm:%s2884] %v2937
                %v2939 = vld [vmem:[%s2891 + $0xb8] sm:%s2884]
                %2940 = vst [vmem:[%s2892 + $0xb8] sm:%s2884] %v2939
                %v2941 = vld [vmem:[%s2891 + $0xc0] sm:%s2884]
                %2942 = vst [vmem:[%s2892 + $0xc0] sm:%s2884] %v2941
                %v2943 = vld [vmem:[%s2891 + $0xc8] sm:%s2884]
                %2944 = vst [vmem:[%s2892 + $0xc8] sm:%s2884] %v2943
                %v2945 = vld [vmem:[%s2891 + $0xd0] sm:%s2884]
                %2946 = vst [vmem:[%s2892 + $0xd0] sm:%s2884] %v2945
                %v2947 = vld [vmem:[%s2891 + $0xd8] sm:%s2884]
                %2948 = vst [vmem:[%s2892 + $0xd8] sm:%s2884] %v2947
                %v2949 = vld [vmem:[%s2891 + $0xe0] sm:%s2884]
                %2950 = vst [vmem:[%s2892 + $0xe0] sm:%s2884] %v2949
                %v2951 = vld [vmem:[%s2891 + $0xe8] sm:%s2884]
                %2952 = vst [vmem:[%s2892 + $0xe8] sm:%s2884] %v2951
                %v2953 = vld [vmem:[%s2891 + $0xf0] sm:%s2884]
                %2954 = vst [vmem:[%s2892 + $0xf0] sm:%s2884] %v2953
                %v2955 = vld [vmem:[%s2891 + $0xf8] sm:%s2884]
                %2956 = vst [vmem:[%s2892 + $0xf8] sm:%s2884] %v2955
                %v2957 = vld [vmem:[%s2891 + $0x100] sm:%s2884]
                %2958 = vst [vmem:[%s2892 + $0x100] sm:%s2884] %v2957
                %v2959 = vld [vmem:[%s2891 + $0x108] sm:%s2884]
                %2960 = vst [vmem:[%s2892 + $0x108] sm:%s2884] %v2959
                %v2961 = vld [vmem:[%s2891 + $0x110] sm:%s2884]
                %2962 = vst [vmem:[%s2892 + $0x110] sm:%s2884] %v2961
                %v2963 = vld [vmem:[%s2891 + $0x118] sm:%s2884]
                %2964 = vst [vmem:[%s2892 + $0x118] sm:%s2884] %v2963
                %v2965 = vld [vmem:[%s2891 + $0x120] sm:%s2884]
                %2966 = vst [vmem:[%s2892 + $0x360] sm:%s2884] %v2965
                %v2967 = vld [vmem:[%s2891 + $0x128] sm:%s2884]
                %2968 = vst [vmem:[%s2892 + $0x368] sm:%s2884] %v2967
                %v2969 = vld [vmem:[%s2891 + $0x130] sm:%s2884]
                %2970 = vst [vmem:[%s2892 + $0x370] sm:%s2884] %v2969
                %v2971 = vld [vmem:[%s2891 + $0x138] sm:%s2884]
                %2972 = vst [vmem:[%s2892 + $0x378] sm:%s2884] %v2971
                %v2973 = vld [vmem:[%s2891 + $0x140] sm:%s2884]
                %2974 = vst [vmem:[%s2892 + $0x380] sm:%s2884] %v2973
                %v2975 = vld [vmem:[%s2891 + $0x148] sm:%s2884]
                %2976 = vst [vmem:[%s2892 + $0x388] sm:%s2884] %v2975
                %v2977 = vld [vmem:[%s2891 + $0x150] sm:%s2884]
                %2978 = vst [vmem:[%s2892 + $0x390] sm:%s2884] %v2977
                %v2979 = vld [vmem:[%s2891 + $0x158] sm:%s2884]
                %2980 = vst [vmem:[%s2892 + $0x398] sm:%s2884] %v2979
                %v2981 = vld [vmem:[%s2891 + $0x160] sm:%s2884]
                %2982 = vst [vmem:[%s2892 + $0x3a0] sm:%s2884] %v2981
                %v2983 = vld [vmem:[%s2891 + $0x168] sm:%s2884]
                %2984 = vst [vmem:[%s2892 + $0x3a8] sm:%s2884] %v2983
                %v2985 = vld [vmem:[%s2891 + $0x170] sm:%s2884]
                %2986 = vst [vmem:[%s2892 + $0x3b0] sm:%s2884] %v2985
                %v2987 = vld [vmem:[%s2891 + $0x178] sm:%s2884]
                %2988 = vst [vmem:[%s2892 + $0x3b8] sm:%s2884] %v2987
                %v2989 = vld [vmem:[%s2891 + $0x180] sm:%s2884]
                %2990 = vst [vmem:[%s2892 + $0x3c0] sm:%s2884] %v2989
                %v2991 = vld [vmem:[%s2891 + $0x188] sm:%s2884]
                %2992 = vst [vmem:[%s2892 + $0x3c8] sm:%s2884] %v2991
                %v2993 = vld [vmem:[%s2891 + $0x190] sm:%s2884]
                %2994 = vst [vmem:[%s2892 + $0x3d0] sm:%s2884] %v2993
                %v2995 = vld [vmem:[%s2891 + $0x198] sm:%s2884]
                %2996 = vst [vmem:[%s2892 + $0x3d8] sm:%s2884] %v2995
                %v2997 = vld [vmem:[%s2891 + $0x1a0] sm:%s2884]
                %2998 = vst [vmem:[%s2892 + $0x3e0] sm:%s2884] %v2997
                %v2999 = vld [vmem:[%s2891 + $0x1a8] sm:%s2884]
                %3000 = vst [vmem:[%s2892 + $0x3e8] sm:%s2884] %v2999
                %v3001 = vld [vmem:[%s2891 + $0x1b0] sm:%s2884]
                %3002 = vst [vmem:[%s2892 + $0x3f0] sm:%s2884] %v3001
                %v3003 = vld [vmem:[%s2891 + $0x1b8] sm:%s2884]
                %3004 = vst [vmem:[%s2892 + $0x3f8] sm:%s2884] %v3003
                %v3005 = vld [vmem:[%s2891 + $0x1c0] sm:%s2884]
                %3006 = vst [vmem:[%s2892 + $0x400] sm:%s2884] %v3005
                %v3007 = vld [vmem:[%s2891 + $0x1c8] sm:%s2884]
                %3008 = vst [vmem:[%s2892 + $0x408] sm:%s2884] %v3007
                %v3009 = vld [vmem:[%s2891 + $0x1d0] sm:%s2884]
                %3010 = vst [vmem:[%s2892 + $0x410] sm:%s2884] %v3009
                %v3011 = vld [vmem:[%s2891 + $0x1d8] sm:%s2884]
                %3012 = vst [vmem:[%s2892 + $0x418] sm:%s2884] %v3011
                %v3013 = vld [vmem:[%s2891 + $0x1e0] sm:%s2884]
                %3014 = vst [vmem:[%s2892 + $0x420] sm:%s2884] %v3013
                %v3015 = vld [vmem:[%s2891 + $0x1e8] sm:%s2884]
                %3016 = vst [vmem:[%s2892 + $0x428] sm:%s2884] %v3015
                %v3017 = vld [vmem:[%s2891 + $0x1f0] sm:%s2884]
                %3018 = vst [vmem:[%s2892 + $0x430] sm:%s2884] %v3017
                %v3019 = vld [vmem:[%s2891 + $0x1f8] sm:%s2884]
                %3020 = vst [vmem:[%s2892 + $0x438] sm:%s2884] %v3019
                %v3021 = vld [vmem:[%s2891 + $0x200] sm:%s2884]
                %3022 = vst [vmem:[%s2892 + $0x440] sm:%s2884] %v3021
                %v3023 = vld [vmem:[%s2891 + $0x208] sm:%s2884]
                %3024 = vst [vmem:[%s2892 + $0x448] sm:%s2884] %v3023
                %v3025 = vld [vmem:[%s2891 + $0x210] sm:%s2884]
                %3026 = vst [vmem:[%s2892 + $0x450] sm:%s2884] %v3025
                %v3027 = vld [vmem:[%s2891 + $0x218] sm:%s2884]
                %3028 = vst [vmem:[%s2892 + $0x458] sm:%s2884] %v3027
                %v3029 = vld [vmem:[%s2891 + $0x220] sm:%s2884]
                %3030 = vst [vmem:[%s2892 + $0x460] sm:%s2884] %v3029
                %v3031 = vld [vmem:[%s2891 + $0x228] sm:%s2884]
                %3032 = vst [vmem:[%s2892 + $0x468] sm:%s2884] %v3031
                %v3033 = vld [vmem:[%s2891 + $0x230] sm:%s2884]
                %3034 = vst [vmem:[%s2892 + $0x470] sm:%s2884] %v3033
                %v3035 = vld [vmem:[%s2891 + $0x238] sm:%s2884]
                %3036 = vst [vmem:[%s2892 + $0x478] sm:%s2884] %v3035
              $region73: #{multichannel_forward.2} parent=67 // loop_footer
                %s2890 = sadd.s32 1, %s2886
              $region74: #{multichannel_forward.2} parent=67 // loop_footer_branch
                %2885 = sbr.rel target = $region70
              $region75: #{multichannel_forward.2} parent=67 // loop_exit
                _
            $region68: #{multichannel_forward.2} parent=59 // pred_fallthru
              _
          $region60: #{multichannel_forward.2} parent=55 // pred_fallthru
            _
          %3193 = vnop
        $region56: #{multichannel_forward.2} parent=35 // pred_fallthru
          _
      $region36: #{multichannel_forward.2} parent=5 // pred_fallthru
        _
      %p3194 = scmp.le.s32.totalorder 2, %s15
      // Predicated region
      $region91: #{multichannel_forward.2} parent=5 // pred_check
        %p3195 = pneg %p3194
      $region92: #{multichannel_forward.2} parent=5 // pred_check_branch
        %3197 = sbr.rel (%p3195) target = $region94
      $region93: #{multichannel_forward.2} parent=5 // pred_region
        %s3198 = ssub.s32 %s15, 2
        // Predicated region
        $region95: #{multichannel_forward.2} parent=93 // pred_check
          %p3199 = pneg %p133
        $region96: #{multichannel_forward.2} parent=93 // pred_check_branch
          %3201 = sbr.rel (%p3199) target = $region98
        $region97: #{multichannel_forward.2} parent=93 // pred_region
          %s3202 = sand.u32 %s118, 1
          %s3203 = sand.u32 %s118, 1
          %s3204 = smul.addr %s3203, 576
          %s3205 = scalar_lea.vmem [#allocation9], %s3204
        $region98: #{multichannel_forward.2} parent=93 // pred_fallthru
          _
      $region94: #{multichannel_forward.2} parent=5 // pred_fallthru
        _
    $region6: #{multichannel_forward.2} parent=1 // loop_footer
      %s19 = sadd.s32 1, %s15
    $region7: #{multichannel_forward.2} parent=1 // loop_footer_branch
      %14 = sbr.rel target = $region3
    $region8: #{multichannel_forward.2} parent=1 // loop_exit
      _
    %3206 = vsyncpa [#allocation3], 1
    %s3207 = scalar_lea.sflag [#allocation3], 1
    %3208 = vsyncpa %s3207, 1
    %3209 = vsyncpa [#allocation5], 1
    %3210 = vsyncpa [#allocation8], 1
    %s3211 = scalar_lea.sflag [#allocation8], 1
    %3212 = vsyncpa %s3211, 1

// kernel: multichannel_forward.3
$region0: #{multichannel_forward.3}
  #allocation0 [shape = 'u32[]', space=smem, size = 0x4, offset = 0x4, fixed_abs, tag = 'smem constant byte address 0x4 - core index']
  #allocation1 [shape = 'u32[72,128]{1,0:T(1,128)}', space=vmem, size = 0x9000, scoped, tag = 'internal scratch']
  %s0 = inlined_call_operand.vmem [shape: f32[2,27648], index: 0, kind: input, shape index: {}]
  %s1 = inlined_call_operand.hbm [shape: f32[10,27648], index: 1, kind: input, shape index: {}]
  %s2 = inlined_call_operand.hbm [shape: f32[1,10], index: 2, kind: input, shape index: {}]
  %s3 = inlined_call_operand.hbm [shape: f32[2,10], index: 3, kind: output, shape index: {}]
  %s4 = sld [smem:[#allocation0]]
  $region30: #{multichannel_forward.3} parent=0
    _
  %s6 = ssub.s32 1, %s4
  %s7 = scalar_select 0, %s6, %s4
  $region1: #{multichannel_forward.3} parent=0
    #allocation2 [shape = 'u8[1769472]{0}', space=vmem, size = 0x1b0000, scoped, tag = 'input window, operand 1, single buffered']
    #allocation3 [shape = 's32[1]{0}', space=sflag, size = 0x4, scoped, tag = 'scoped memory for multichannel_forward.3']
    #allocation4 [shape = 's32[1]{0}', space=sflag, size = 0x4, scoped, tag = 'scoped memory for multichannel_forward.3']
    #allocation5 [shape = 'u8[512]{0}', space=vmem, size = 0x400, scoped, tag = 'input window, operand 2, single buffered']
    #allocation6 [shape = 's32[1]{0}', space=sflag, size = 0x4, scoped, tag = 'scoped memory for multichannel_forward.3']
    #allocation7 [shape = 'u8[1024]{0}', space=vmem, size = 0x400, scoped, tag = 'output window, operand 0, single buffered']
    %8 = vsyncpa [#allocation3], 0
    %9 = vsyncpa [#allocation6], 0
    %10 = vsyncpa [#allocation4], 0
    // Predicated region
    $region2: #{multichannel_forward.3} parent=1 // pred_check
      _
    $region3: #{multichannel_forward.3} parent=1 // pred_check_branch
      %12 = sbr.rel (0) target = $region5
    $region4: #{multichannel_forward.3} parent=1 // pred_region
      _
    $region5: #{multichannel_forward.3} parent=1 // pred_fallthru
      _
    // Predicated region
    $region6: #{multichannel_forward.3} parent=1 // pred_check
      _
    $region7: #{multichannel_forward.3} parent=1 // pred_check_branch
      %14 = sbr.rel (0) target = $region9
    $region8: #{multichannel_forward.3} parent=1 // pred_region
      %16 = vsyncadd [#allocation3], 0
      %s17 = sshll.u32 %s1, 4
      %s18 = int_to_ptr.hbm [resolvable:$true] %s17
      %s19 = sshll.u32 [#allocation2], 4
      %s20 = int_to_ptr.vmem [resolvable:$true] %s19
      %25 = dma.hbm_to_vmem [thread:$0]  %s18, 55296, %s20, [#allocation3], 27648, 27648, 1728
    $region9: #{multichannel_forward.3} parent=1 // pred_fallthru
      _
    // Predicated region
    $region10: #{multichannel_forward.3} parent=1 // pred_check
      _
    $region11: #{multichannel_forward.3} parent=1 // pred_check_branch
      %27 = sbr.rel (0) target = $region13
    $region12: #{multichannel_forward.3} parent=1 // pred_region
      %29 = vsyncadd [#allocation6], 0
      %s31 = sshll.u32 %s2, 4
      %s32 = int_to_ptr.hbm [resolvable:$true] %s31
      %s33 = sshll.u32 [#allocation5], 4
      %s34 = int_to_ptr.vmem [resolvable:$true] %s33
      %36 = dma.hbm_to_vmem [thread:$0]  %s32, 16, %s34, [#allocation6]
    $region13: #{multichannel_forward.3} parent=1 // pred_fallthru
      _
    // Predicated region
    $region14: #{multichannel_forward.3} parent=1 // pred_check
      _
    $region15: #{multichannel_forward.3} parent=1 // pred_check_branch
      %38 = sbr.rel (0) target = $region17
    $region16: #{multichannel_forward.3} parent=1 // pred_region
      %40 = dma.done [#allocation3], 55296
    $region17: #{multichannel_forward.3} parent=1 // pred_fallthru
      _
    // Predicated region
    $region18: #{multichannel_forward.3} parent=1 // pred_check
      _
    $region19: #{multichannel_forward.3} parent=1 // pred_check_branch
      %42 = sbr.rel (0) target = $region21
    $region20: #{multichannel_forward.3} parent=1 // pred_region
      %44 = dma.done [#allocation6], 16
    $region21: #{multichannel_forward.3} parent=1 // pred_fallthru
      _
    %v45 = vld [vmem:[#allocation5] sm:$0x1]
    %v46 = vld [vmem:[%s0] sm:$0xff]
    %v47 = vld [vmem:[%s0 + $0x8] sm:$0xff]
    %v48 = vld [vmem:[%s0 + $0x10] sm:$0xff]
    %v49 = vld [vmem:[%s0 + $0x18] sm:$0xff]
    %v50 = vld [vmem:[%s0 + $0x20] sm:$0xff]
    %v51 = vld [vmem:[%s0 + $0x28] sm:$0xff]
    %v52 = vld [vmem:[%s0 + $0x30] sm:$0xff]
    %v53 = vld [vmem:[%s0 + $0x38] sm:$0xff]
    %v54 = vld [vmem:[%s0 + $0x40] sm:$0xff]
    %v55 = vld [vmem:[%s0 + $0x48] sm:$0xff]
    %v56 = vld [vmem:[%s0 + $0x50] sm:$0xff]
    %v57 = vld [vmem:[%s0 + $0x58] sm:$0xff]
    %v58 = vld [vmem:[%s0 + $0x60] sm:$0xff]
    %v59 = vld [vmem:[%s0 + $0x68] sm:$0xff]
    %v60 = vld [vmem:[%s0 + $0x70] sm:$0xff]
    %v61 = vld [vmem:[%s0 + $0x78] sm:$0xff]
    %v62 = vld [vmem:[%s0 + $0x80] sm:$0xff]
    %v63 = vld [vmem:[%s0 + $0x88] sm:$0xff]
    %v64 = vld [vmem:[%s0 + $0x90] sm:$0xff]
    %v65 = vld [vmem:[%s0 + $0x98] sm:$0xff]
    %v66 = vld [vmem:[%s0 + $0xa0] sm:$0xff]
    %v67 = vld [vmem:[%s0 + $0xa8] sm:$0xff]
    %v68 = vld [vmem:[%s0 + $0xb0] sm:$0xff]
    %v69 = vld [vmem:[%s0 + $0xb8] sm:$0xff]
    %v70 = vld [vmem:[%s0 + $0xc0] sm:$0xff]
    %v71 = vld [vmem:[%s0 + $0xc8] sm:$0xff]
    %v72 = vld [vmem:[%s0 + $0xd0] sm:$0xff]
    %v73 = vld [vmem:[%s0 + $0xd8] sm:$0xff]
    %v74 = vld [vmem:[%s0 + $0xe0] sm:$0xff]
    %v75 = vld [vmem:[%s0 + $0xe8] sm:$0xff]
    %v76 = vld [vmem:[%s0 + $0xf0] sm:$0xff]
    %v77 = vld [vmem:[%s0 + $0xf8] sm:$0xff]
    %v78 = vld [vmem:[%s0 + $0x100] sm:$0xff]
    %v79 = vld [vmem:[%s0 + $0x108] sm:$0xff]
    %v80 = vld [vmem:[%s0 + $0x110] sm:$0xff]
    %v81 = vld [vmem:[%s0 + $0x118] sm:$0xff]
    %v82 = vld [vmem:[%s0 + $0x120] sm:$0xff]
    %v83 = vld [vmem:[%s0 + $0x128] sm:$0xff]
    %v84 = vld [vmem:[%s0 + $0x130] sm:$0xff]
    %v85 = vld [vmem:[%s0 + $0x138] sm:$0xff]
    %v86 = vld [vmem:[%s0 + $0x140] sm:$0xff]
    %v87 = vld [vmem:[%s0 + $0x148] sm:$0xff]
    %v88 = vld [vmem:[%s0 + $0x150] sm:$0xff]
    %v89 = vld [vmem:[%s0 + $0x158] sm:$0xff]
    %v90 = vld [vmem:[%s0 + $0x160] sm:$0xff]
    %v91 = vld [vmem:[%s0 + $0x168] sm:$0xff]
    %v92 = vld [vmem:[%s0 + $0x170] sm:$0xff]
    %v93 = vld [vmem:[%s0 + $0x178] sm:$0xff]
    %v94 = vld [vmem:[%s0 + $0x180] sm:$0xff]
    %v95 = vld [vmem:[%s0 + $0x188] sm:$0xff]
    %v96 = vld [vmem:[%s0 + $0x190] sm:$0xff]
    %v97 = vld [vmem:[%s0 + $0x198] sm:$0xff]
    %v98 = vld [vmem:[%s0 + $0x1a0] sm:$0xff]
    %v99 = vld [vmem:[%s0 + $0x1a8] sm:$0xff]
    %v100 = vld [vmem:[#allocation2] sm:$0xff]
    %v101 = vld [vmem:[#allocation2 + $0x8] sm:$0xff]
    %v102 = vld [vmem:[#allocation2 + $0x10] sm:$0xff]
    %v103 = vld [vmem:[#allocation2 + $0x18] sm:$0xff]
    %v104 = vld [vmem:[#allocation2 + $0x20] sm:$0xff]
    %v105 = vld [vmem:[#allocation2 + $0x28] sm:$0xff]
    %v106 = vld [vmem:[#allocation2 + $0x30] sm:$0xff]
    %v107 = vld [vmem:[#allocation2 + $0x38] sm:$0xff]
    %v108 = vld [vmem:[#allocation2 + $0x40] sm:$0xff]
    %v109 = vld [vmem:[#allocation2 + $0x48] sm:$0xff]
    %v110 = vld [vmem:[#allocation2 + $0x50] sm:$0xff]
    %v111 = vld [vmem:[#allocation2 + $0x58] sm:$0xff]
    %v112 = vld [vmem:[#allocation2 + $0x60] sm:$0xff]
    %v113 = vld [vmem:[#allocation2 + $0x68] sm:$0xff]
    %v114 = vld [vmem:[#allocation2 + $0x70] sm:$0xff]
    %v115 = vld [vmem:[#allocation2 + $0x78] sm:$0xff]
    %v116 = vld [vmem:[#allocation2 + $0x80] sm:$0xff]
    %v117 = vld [vmem:[#allocation2 + $0x88] sm:$0xff]
    %v118 = vld [vmem:[#allocation2 + $0x90] sm:$0xff]
    %v119 = vld [vmem:[#allocation2 + $0x98] sm:$0xff]
    %v120 = vld [vmem:[#allocation2 + $0xa0] sm:$0xff]
    %v121 = vld [vmem:[#allocation2 + $0xa8] sm:$0xff]
    %v122 = vld [vmem:[#allocation2 + $0xb0] sm:$0xff]
    %v123 = vld [vmem:[#allocation2 + $0xb8] sm:$0xff]
    %v124 = vld [vmem:[#allocation2 + $0xc0] sm:$0xff]
    %v125 = vld [vmem:[#allocation2 + $0xc8] sm:$0xff]
    %v126 = vld [vmem:[#allocation2 + $0xd0] sm:$0xff]
    %v127 = vld [vmem:[#allocation2 + $0xd8] sm:$0xff]
    %v128 = vld [vmem:[#allocation2 + $0xe0] sm:$0xff]
    %v129 = vld [vmem:[#allocation2 + $0xe8] sm:$0xff]
    %v130 = vld [vmem:[#allocation2 + $0xf0] sm:$0xff]
    %v131 = vld [vmem:[#allocation2 + $0xf8] sm:$0xff]
    %v132 = vld [vmem:[#allocation2 + $0x100] sm:$0xff]
    %v133 = vld [vmem:[#allocation2 + $0x108] sm:$0xff]
    %v134 = vld [vmem:[#allocation2 + $0x110] sm:$0xff]
    %v135 = vld [vmem:[#allocation2 + $0x118] sm:$0xff]
    %v136 = vld [vmem:[#allocation2 + $0x120] sm:$0xff]
    %v137 = vld [vmem:[#allocation2 + $0x128] sm:$0xff]
    %v138 = vld [vmem:[#allocation2 + $0x130] sm:$0xff]
    %v139 = vld [vmem:[#allocation2 + $0x138] sm:$0xff]
    %v140 = vld [vmem:[#allocation2 + $0x140] sm:$0xff]
    %v141 = vld [vmem:[#allocation2 + $0x148] sm:$0xff]
    %v142 = vld [vmem:[#allocation2 + $0x150] sm:$0xff]
    %v143 = vld [vmem:[#allocation2 + $0x158] sm:$0xff]
    %v144 = vld [vmem:[#allocation2 + $0x160] sm:$0xff]
    %v145 = vld [vmem:[#allocation2 + $0x168] sm:$0xff]
    %v146 = vld [vmem:[#allocation2 + $0x170] sm:$0xff]
    %v147 = vld [vmem:[#allocation2 + $0x178] sm:$0xff]
    %v148 = vld [vmem:[#allocation2 + $0x180] sm:$0xff]
    %v149 = vld [vmem:[#allocation2 + $0x188] sm:$0xff]
    %v150 = vld [vmem:[#allocation2 + $0x190] sm:$0xff]
    %v151 = vld [vmem:[#allocation2 + $0x198] sm:$0xff]
    %v152 = vld [vmem:[#allocation2 + $0x1a0] sm:$0xff]
    %v153 = vld [vmem:[#allocation2 + $0x1a8] sm:$0xff]
    %v154 = vld [vmem:[#allocation2 + $0x1b0] sm:$0xff]
    %v155 = vld [vmem:[#allocation2 + $0x1b8] sm:$0xff]
    %v156 = vld [vmem:[#allocation2 + $0x1c0] sm:$0xff]
    %v157 = vld [vmem:[#allocation2 + $0x1c8] sm:$0xff]
    %v158 = vld [vmem:[#allocation2 + $0x1d0] sm:$0xff]
    %v159 = vld [vmem:[#allocation2 + $0x1d8] sm:$0xff]
    %v160 = vld [vmem:[#allocation2 + $0x1e0] sm:$0xff]
    %v161 = vld [vmem:[#allocation2 + $0x1e8] sm:$0xff]
    %v162 = vld [vmem:[#allocation2 + $0x1f0] sm:$0xff]
    %v163 = vld [vmem:[#allocation2 + $0x1f8] sm:$0xff]
    %v164 = vld [vmem:[#allocation2 + $0x200] sm:$0xff]
    %v165 = vld [vmem:[#allocation2 + $0x208] sm:$0xff]
    %v166 = vld [vmem:[#allocation2 + $0x210] sm:$0xff]
    %v167 = vld [vmem:[#allocation2 + $0x218] sm:$0xff]
    %v168 = vld [vmem:[#allocation2 + $0x220] sm:$0xff]
    %v169 = vld [vmem:[#allocation2 + $0x228] sm:$0xff]
    %v170 = vld [vmem:[#allocation2 + $0x230] sm:$0xff]
    %v171 = vld [vmem:[#allocation2 + $0x238] sm:$0xff]
    %v172 = vld [vmem:[#allocation2 + $0x240] sm:$0xff]
    %v173 = vld [vmem:[#allocation2 + $0x248] sm:$0xff]
    %v174 = vld [vmem:[#allocation2 + $0x250] sm:$0xff]
    %v175 = vld [vmem:[#allocation2 + $0x258] sm:$0xff]
    %v176 = vld [vmem:[#allocation2 + $0x260] sm:$0xff]
    %v177 = vld [vmem:[#allocation2 + $0x268] sm:$0xff]
    %v178 = vld [vmem:[#allocation2 + $0x270] sm:$0xff]
    %v179 = vld [vmem:[#allocation2 + $0x278] sm:$0xff]
    %v180 = vld [vmem:[#allocation2 + $0x280] sm:$0xff]
    %v181 = vld [vmem:[#allocation2 + $0x288] sm:$0xff]
    %v182 = vld [vmem:[#allocation2 + $0x290] sm:$0xff]
    %v183 = vld [vmem:[#allocation2 + $0x298] sm:$0xff]
    %v184 = vld [vmem:[#allocation2 + $0x2a0] sm:$0xff]
    %v185 = vld [vmem:[#allocation2 + $0x2a8] sm:$0xff]
    %v186 = vld [vmem:[#allocation2 + $0x2b0] sm:$0xff]
    %v187 = vld [vmem:[#allocation2 + $0x2b8] sm:$0xff]
    %v188 = vld [vmem:[#allocation2 + $0x2c0] sm:$0xff]
    %v189 = vld [vmem:[#allocation2 + $0x2c8] sm:$0xff]
    %v190 = vld [vmem:[#allocation2 + $0x2d0] sm:$0xff]
    %v191 = vld [vmem:[#allocation2 + $0x2d8] sm:$0xff]
    %v192 = vld [vmem:[#allocation2 + $0x2e0] sm:$0xff]
    %v193 = vld [vmem:[#allocation2 + $0x2e8] sm:$0xff]
    %v194 = vld [vmem:[#allocation2 + $0x2f0] sm:$0xff]
    %v195 = vld [vmem:[#allocation2 + $0x2f8] sm:$0xff]
    %v196 = vld [vmem:[#allocation2 + $0x300] sm:$0xff]
    %v197 = vld [vmem:[#allocation2 + $0x308] sm:$0xff]
    %v198 = vld [vmem:[#allocation2 + $0x310] sm:$0xff]
    %v199 = vld [vmem:[#allocation2 + $0x318] sm:$0xff]
    %v200 = vld [vmem:[#allocation2 + $0x320] sm:$0xff]
    %v201 = vld [vmem:[#allocation2 + $0x328] sm:$0xff]
    %v202 = vld [vmem:[#allocation2 + $0x330] sm:$0xff]
    %v203 = vld [vmem:[#allocation2 + $0x338] sm:$0xff]
    %v204 = vld [vmem:[#allocation2 + $0x340] sm:$0xff]
    %v205 = vld [vmem:[#allocation2 + $0x348] sm:$0xff]
    %v206 = vld [vmem:[#allocation2 + $0x350] sm:$0xff]
    %v207 = vld [vmem:[#allocation2 + $0x358] sm:$0xff]
    %v208 = vld [vmem:[#allocation2 + $0x360] sm:$0xff]
    %v209 = vld [vmem:[#allocation2 + $0x368] sm:$0xff]
    %v210 = vld [vmem:[#allocation2 + $0x370] sm:$0xff]
    %v211 = vld [vmem:[#allocation2 + $0x378] sm:$0xff]
    %v212 = vld [vmem:[#allocation2 + $0x380] sm:$0xff]
    %v213 = vld [vmem:[#allocation2 + $0x388] sm:$0xff]
    %v214 = vld [vmem:[#allocation2 + $0x390] sm:$0xff]
    %v215 = vld [vmem:[#allocation2 + $0x398] sm:$0xff]
    %v216 = vld [vmem:[#allocation2 + $0x3a0] sm:$0xff]
    %v217 = vld [vmem:[#allocation2 + $0x3a8] sm:$0xff]
    %v218 = vld [vmem:[#allocation2 + $0x3b0] sm:$0xff]
    %v219 = vld [vmem:[#allocation2 + $0x3b8] sm:$0xff]
    %v220 = vld [vmem:[#allocation2 + $0x3c0] sm:$0xff]
    %v221 = vld [vmem:[#allocation2 + $0x3c8] sm:$0xff]
    %v222 = vld [vmem:[#allocation2 + $0x3d0] sm:$0xff]
    %v223 = vld [vmem:[#allocation2 + $0x3d8] sm:$0xff]
    %v224 = vld [vmem:[#allocation2 + $0x3e0] sm:$0xff]
    %v225 = vld [vmem:[#allocation2 + $0x3e8] sm:$0xff]
    %v226 = vld [vmem:[#allocation2 + $0x3f0] sm:$0xff]
    %v227 = vld [vmem:[#allocation2 + $0x3f8] sm:$0xff]
    %v228 = vld [vmem:[#allocation2 + $0x400] sm:$0xff]
    %v229 = vld [vmem:[#allocation2 + $0x408] sm:$0xff]
    %v230 = vld [vmem:[#allocation2 + $0x410] sm:$0xff]
    %v231 = vld [vmem:[#allocation2 + $0x418] sm:$0xff]
    %v232 = vld [vmem:[#allocation2 + $0x420] sm:$0xff]
    %v233 = vld [vmem:[#allocation2 + $0x428] sm:$0xff]
    %v234 = vld [vmem:[#allocation2 + $0x430] sm:$0xff]
    %v235 = vld [vmem:[#allocation2 + $0x438] sm:$0xff]
    %v236 = vld [vmem:[#allocation2 + $0x440] sm:$0xff]
    %v237 = vld [vmem:[#allocation2 + $0x448] sm:$0xff]
    %v238 = vld [vmem:[#allocation2 + $0x450] sm:$0xff]
    %v239 = vld [vmem:[#allocation2 + $0x458] sm:$0xff]
    %v240 = vld [vmem:[#allocation2 + $0x460] sm:$0xff]
    %v241 = vld [vmem:[#allocation2 + $0x468] sm:$0xff]
    %v242 = vld [vmem:[#allocation2 + $0x470] sm:$0xff]
    %v243 = vld [vmem:[#allocation2 + $0x478] sm:$0xff]
    %v244 = vld [vmem:[#allocation2 + $0x480] sm:$0xff]
    %v245 = vld [vmem:[#allocation2 + $0x488] sm:$0xff]
    %v246 = vld [vmem:[#allocation2 + $0x490] sm:$0xff]
    %v247 = vld [vmem:[#allocation2 + $0x498] sm:$0xff]
    %v248 = vld [vmem:[#allocation2 + $0x4a0] sm:$0xff]
    %v249 = vld [vmem:[#allocation2 + $0x4a8] sm:$0xff]
    %v250 = vld [vmem:[#allocation2 + $0x4b0] sm:$0xff]
    %v251 = vld [vmem:[#allocation2 + $0x4b8] sm:$0xff]
    %v252 = vld [vmem:[#allocation2 + $0x4c0] sm:$0xff]
    %v253 = vld [vmem:[#allocation2 + $0x4c8] sm:$0xff]
    %v254 = vld [vmem:[#allocation2 + $0x4d0] sm:$0xff]
    %v255 = vld [vmem:[#allocation2 + $0x4d8] sm:$0xff]
    %v256 = vld [vmem:[#allocation2 + $0x4e0] sm:$0xff]
    %v257 = vld [vmem:[#allocation2 + $0x4e8] sm:$0xff]
    %v258 = vld [vmem:[#allocation2 + $0x4f0] sm:$0xff]
    %v259 = vld [vmem:[#allocation2 + $0x4f8] sm:$0xff]
    %v260 = vld [vmem:[#allocation2 + $0x500] sm:$0xff]
    %v261 = vld [vmem:[#allocation2 + $0x508] sm:$0xff]
    %v262 = vld [vmem:[#allocation2 + $0x510] sm:$0xff]
    %v263 = vld [vmem:[#allocation2 + $0x518] sm:$0xff]
    %v264 = vld [vmem:[#allocation2 + $0x520] sm:$0xff]
    %v265 = vld [vmem:[#allocation2 + $0x528] sm:$0xff]
    %v266 = vld [vmem:[#allocation2 + $0x530] sm:$0xff]
    %v267 = vld [vmem:[#allocation2 + $0x538] sm:$0xff]
    %v268 = vld [vmem:[#allocation2 + $0x540] sm:$0xff]
    %v269 = vld [vmem:[#allocation2 + $0x548] sm:$0xff]
    %v270 = vld [vmem:[#allocation2 + $0x550] sm:$0xff]
    %v271 = vld [vmem:[#allocation2 + $0x558] sm:$0xff]
    %v272 = vld [vmem:[#allocation2 + $0x560] sm:$0xff]
    %v273 = vld [vmem:[#allocation2 + $0x568] sm:$0xff]
    %v274 = vld [vmem:[#allocation2 + $0x570] sm:$0xff]
    %v275 = vld [vmem:[#allocation2 + $0x578] sm:$0xff]
    %v276 = vld [vmem:[#allocation2 + $0x580] sm:$0xff]
    %v277 = vld [vmem:[#allocation2 + $0x588] sm:$0xff]
    %v278 = vld [vmem:[#allocation2 + $0x590] sm:$0xff]
    %v279 = vld [vmem:[#allocation2 + $0x598] sm:$0xff]
    %v280 = vld [vmem:[#allocation2 + $0x5a0] sm:$0xff]
    %v281 = vld [vmem:[#allocation2 + $0x5a8] sm:$0xff]
    %v282 = vld [vmem:[#allocation2 + $0x5b0] sm:$0xff]
    %v283 = vld [vmem:[#allocation2 + $0x5b8] sm:$0xff]
    %v284 = vld [vmem:[#allocation2 + $0x5c0] sm:$0xff]
    %v285 = vld [vmem:[#allocation2 + $0x5c8] sm:$0xff]
    %v286 = vld [vmem:[#allocation2 + $0x5d0] sm:$0xff]
    %v287 = vld [vmem:[#allocation2 + $0x5d8] sm:$0xff]
    %v288 = vld [vmem:[#allocation2 + $0x5e0] sm:$0xff]
    %v289 = vld [vmem:[#allocation2 + $0x5e8] sm:$0xff]
    %v290 = vld [vmem:[#allocation2 + $0x5f0] sm:$0xff]
    %v291 = vld [vmem:[#allocation2 + $0x5f8] sm:$0xff]
    %v292 = vld [vmem:[#allocation2 + $0x600] sm:$0xff]
    %v293 = vld [vmem:[#allocation2 + $0x608] sm:$0xff]
    %v294 = vld [vmem:[#allocation2 + $0x610] sm:$0xff]
    %v295 = vld [vmem:[#allocation2 + $0x618] sm:$0xff]
    %v296 = vld [vmem:[#allocation2 + $0x620] sm:$0xff]
    %v297 = vld [vmem:[#allocation2 + $0x628] sm:$0xff]
    %v298 = vld [vmem:[#allocation2 + $0x630] sm:$0xff]
    %v299 = vld [vmem:[#allocation2 + $0x638] sm:$0xff]
    %v300 = vld [vmem:[#allocation2 + $0x640] sm:$0xff]
    %v301 = vld [vmem:[#allocation2 + $0x648] sm:$0xff]
    %v302 = vld [vmem:[#allocation2 + $0x650] sm:$0xff]
    %v303 = vld [vmem:[#allocation2 + $0x658] sm:$0xff]
    %v304 = vld [vmem:[#allocation2 + $0x660] sm:$0xff]
    %v305 = vld [vmem:[#allocation2 + $0x668] sm:$0xff]
    %v306 = vld [vmem:[#allocation2 + $0x670] sm:$0xff]
    %v307 = vld [vmem:[#allocation2 + $0x678] sm:$0xff]
    %v308 = vld [vmem:[#allocation2 + $0x680] sm:$0xff]
    %v309 = vld [vmem:[#allocation2 + $0x688] sm:$0xff]
    %v310 = vld [vmem:[#allocation2 + $0x690] sm:$0xff]
    %v311 = vld [vmem:[#allocation2 + $0x698] sm:$0xff]
    %v312 = vld [vmem:[#allocation2 + $0x6a0] sm:$0xff]
    %v313 = vld [vmem:[#allocation2 + $0x6a8] sm:$0xff]
    %v314 = vld [vmem:[#allocation2 + $0x6b0] sm:$0xff]
    %v315 = vld [vmem:[#allocation2 + $0x6b8] sm:$0xff]
    %v316 = vld [vmem:[#allocation2 + $0x6c0] sm:$0x3]
    %v317 = vld [vmem:[#allocation2 + $0x6c8] sm:$0x3]
    %v318 = vld [vmem:[#allocation2 + $0x6d0] sm:$0x3]
    %v319 = vld [vmem:[#allocation2 + $0x6d8] sm:$0x3]
    %v320 = vld [vmem:[#allocation2 + $0x6e0] sm:$0x3]
    %v321 = vld [vmem:[#allocation2 + $0x6e8] sm:$0x3]
    %v322 = vld [vmem:[#allocation2 + $0x6f0] sm:$0x3]
    %v323 = vld [vmem:[#allocation2 + $0x6f8] sm:$0x3]
    %v324 = vld [vmem:[#allocation2 + $0x700] sm:$0x3]
    %v325 = vld [vmem:[#allocation2 + $0x708] sm:$0x3]
    %v326 = vld [vmem:[#allocation2 + $0x710] sm:$0x3]
    %v327 = vld [vmem:[#allocation2 + $0x718] sm:$0x3]
    %v328 = vld [vmem:[#allocation2 + $0x720] sm:$0x3]
    %v329 = vld [vmem:[#allocation2 + $0x728] sm:$0x3]
    %v330 = vld [vmem:[#allocation2 + $0x730] sm:$0x3]
    %v331 = vld [vmem:[#allocation2 + $0x738] sm:$0x3]
    %v332 = vld [vmem:[#allocation2 + $0x740] sm:$0x3]
    %v333 = vld [vmem:[#allocation2 + $0x748] sm:$0x3]
    %v334 = vld [vmem:[#allocation2 + $0x750] sm:$0x3]
    %v335 = vld [vmem:[#allocation2 + $0x758] sm:$0x3]
    %v336 = vld [vmem:[#allocation2 + $0x760] sm:$0x3]
    %v337 = vld [vmem:[#allocation2 + $0x768] sm:$0x3]
    %v338 = vld [vmem:[#allocation2 + $0x770] sm:$0x3]
    %v339 = vld [vmem:[#allocation2 + $0x778] sm:$0x3]
    %v340 = vld [vmem:[#allocation2 + $0x780] sm:$0x3]
    %v341 = vld [vmem:[#allocation2 + $0x788] sm:$0x3]
    %v342 = vld [vmem:[#allocation2 + $0x790] sm:$0x3]
    %v343 = vld [vmem:[#allocation2 + $0x798] sm:$0x3]
    %v344 = vld [vmem:[#allocation2 + $0x7a0] sm:$0x3]
    %v345 = vld [vmem:[#allocation2 + $0x7a8] sm:$0x3]
    %v346 = vld [vmem:[#allocation2 + $0x7b0] sm:$0x3]
    %v347 = vld [vmem:[#allocation2 + $0x7b8] sm:$0x3]
    %v348 = vld [vmem:[#allocation2 + $0x7c0] sm:$0x3]
    %v349 = vld [vmem:[#allocation2 + $0x7c8] sm:$0x3]
    %v350 = vld [vmem:[#allocation2 + $0x7d0] sm:$0x3]
    %v351 = vld [vmem:[#allocation2 + $0x7d8] sm:$0x3]
    %v352 = vld [vmem:[#allocation2 + $0x7e0] sm:$0x3]
    %v353 = vld [vmem:[#allocation2 + $0x7e8] sm:$0x3]
    %v354 = vld [vmem:[#allocation2 + $0x7f0] sm:$0x3]
    %v355 = vld [vmem:[#allocation2 + $0x7f8] sm:$0x3]
    %v356 = vld [vmem:[#allocation2 + $0x800] sm:$0x3]
    %v357 = vld [vmem:[#allocation2 + $0x808] sm:$0x3]
    %v358 = vld [vmem:[#allocation2 + $0x810] sm:$0x3]
    %v359 = vld [vmem:[#allocation2 + $0x818] sm:$0x3]
    %v360 = vld [vmem:[#allocation2 + $0x820] sm:$0x3]
    %v361 = vld [vmem:[#allocation2 + $0x828] sm:$0x3]
    %v362 = vld [vmem:[#allocation2 + $0x830] sm:$0x3]
    %v363 = vld [vmem:[#allocation2 + $0x838] sm:$0x3]
    %v364 = vld [vmem:[#allocation2 + $0x840] sm:$0x3]
    %v365 = vld [vmem:[#allocation2 + $0x848] sm:$0x3]
    %v366 = vld [vmem:[#allocation2 + $0x850] sm:$0x3]
    %v367 = vld [vmem:[#allocation2 + $0x858] sm:$0x3]
    %v368 = vld [vmem:[#allocation2 + $0x860] sm:$0x3]
    %v369 = vld [vmem:[#allocation2 + $0x868] sm:$0x3]
    %v370 = vld [vmem:[#allocation2 + $0x870] sm:$0x3]
    %v371 = vld [vmem:[#allocation2 + $0x878] sm:$0x3]
    %v372 = vld [vmem:[#allocation2 + $0x880] sm:$0x3]
    %v373 = vld [vmem:[#allocation2 + $0x888] sm:$0x3]
    %v374 = vld [vmem:[#allocation2 + $0x890] sm:$0x3]
    %v375 = vld [vmem:[#allocation2 + $0x898] sm:$0x3]
    %v376 = vld [vmem:[#allocation2 + $0x8a0] sm:$0x3]
    %v377 = vld [vmem:[#allocation2 + $0x8a8] sm:$0x3]
    %v378 = vld [vmem:[#allocation2 + $0x8b0] sm:$0x3]
    %v379 = vld [vmem:[#allocation2 + $0x8b8] sm:$0x3]
    %v380 = vld [vmem:[#allocation2 + $0x8c0] sm:$0x3]
    %v381 = vld [vmem:[#allocation2 + $0x8c8] sm:$0x3]
    %v382 = vld [vmem:[#allocation2 + $0x8d0] sm:$0x3]
    %v383 = vld [vmem:[#allocation2 + $0x8d8] sm:$0x3]
    %v384 = vld [vmem:[#allocation2 + $0x8e0] sm:$0x3]
    %v385 = vld [vmem:[#allocation2 + $0x8e8] sm:$0x3]
    %v386 = vld [vmem:[#allocation2 + $0x8f0] sm:$0x3]
    %v387 = vld [vmem:[#allocation2 + $0x8f8] sm:$0x3]
    %v388 = vld [vmem:[#allocation2 + $0x900] sm:$0x3]
    %v389 = vld [vmem:[#allocation2 + $0x908] sm:$0x3]
    %v390 = vld [vmem:[#allocation2 + $0x910] sm:$0x3]
    %v391 = vld [vmem:[#allocation2 + $0x918] sm:$0x3]
    %v392 = vld [vmem:[#allocation2 + $0x920] sm:$0x3]
    %v393 = vld [vmem:[#allocation2 + $0x928] sm:$0x3]
    %v394 = vld [vmem:[#allocation2 + $0x930] sm:$0x3]
    %v395 = vld [vmem:[#allocation2 + $0x938] sm:$0x3]
    %v396 = vld [vmem:[#allocation2 + $0x940] sm:$0x3]
    %v397 = vld [vmem:[#allocation2 + $0x948] sm:$0x3]
    %v398 = vld [vmem:[#allocation2 + $0x950] sm:$0x3]
    %v399 = vld [vmem:[#allocation2 + $0x958] sm:$0x3]
    %v400 = vld [vmem:[#allocation2 + $0x960] sm:$0x3]
    %v401 = vld [vmem:[#allocation2 + $0x968] sm:$0x3]
    %v402 = vld [vmem:[#allocation2 + $0x970] sm:$0x3]
    %v403 = vld [vmem:[#allocation2 + $0x978] sm:$0x3]
    %v404 = vld [vmem:[#allocation2 + $0x980] sm:$0x3]
    %v405 = vld [vmem:[#allocation2 + $0x988] sm:$0x3]
    %v406 = vld [vmem:[#allocation2 + $0x990] sm:$0x3]
    %v407 = vld [vmem:[#allocation2 + $0x998] sm:$0x3]
    %v408 = vld [vmem:[#allocation2 + $0x9a0] sm:$0x3]
    %v409 = vld [vmem:[#allocation2 + $0x9a8] sm:$0x3]
    %v410 = vld [vmem:[#allocation2 + $0x9b0] sm:$0x3]
    %v411 = vld [vmem:[#allocation2 + $0x9b8] sm:$0x3]
    %v412 = vld [vmem:[#allocation2 + $0x9c0] sm:$0x3]
    %v413 = vld [vmem:[#allocation2 + $0x9c8] sm:$0x3]
    %v414 = vld [vmem:[#allocation2 + $0x9d0] sm:$0x3]
    %v415 = vld [vmem:[#allocation2 + $0x9d8] sm:$0x3]
    %v416 = vld [vmem:[#allocation2 + $0x9e0] sm:$0x3]
    %v417 = vld [vmem:[#allocation2 + $0x9e8] sm:$0x3]
    %v418 = vld [vmem:[#allocation2 + $0x9f0] sm:$0x3]
    %v419 = vld [vmem:[#allocation2 + $0x9f8] sm:$0x3]
    %v420 = vld [vmem:[#allocation2 + $0xa00] sm:$0x3]
    %v421 = vld [vmem:[#allocation2 + $0xa08] sm:$0x3]
    %v422 = vld [vmem:[#allocation2 + $0xa10] sm:$0x3]
    %v423 = vld [vmem:[#allocation2 + $0xa18] sm:$0x3]
    %v424 = vld [vmem:[#allocation2 + $0xa20] sm:$0x3]
    %v425 = vld [vmem:[#allocation2 + $0xa28] sm:$0x3]
    %v426 = vld [vmem:[#allocation2 + $0xa30] sm:$0x3]
    %v427 = vld [vmem:[#allocation2 + $0xa38] sm:$0x3]
    %v428 = vld [vmem:[#allocation2 + $0xa40] sm:$0x3]
    %v429 = vld [vmem:[#allocation2 + $0xa48] sm:$0x3]
    %v430 = vld [vmem:[#allocation2 + $0xa50] sm:$0x3]
    %v431 = vld [vmem:[#allocation2 + $0xa58] sm:$0x3]
    %v432 = vld [vmem:[#allocation2 + $0xa60] sm:$0x3]
    %v433 = vld [vmem:[#allocation2 + $0xa68] sm:$0x3]
    %v434 = vld [vmem:[#allocation2 + $0xa70] sm:$0x3]
    %v435 = vld [vmem:[#allocation2 + $0xa78] sm:$0x3]
    %v436 = vld [vmem:[#allocation2 + $0xa80] sm:$0x3]
    %v437 = vld [vmem:[#allocation2 + $0xa88] sm:$0x3]
    %v438 = vld [vmem:[#allocation2 + $0xa90] sm:$0x3]
    %v439 = vld [vmem:[#allocation2 + $0xa98] sm:$0x3]
    %v440 = vld [vmem:[#allocation2 + $0xaa0] sm:$0x3]
    %v441 = vld [vmem:[#allocation2 + $0xaa8] sm:$0x3]
    %v442 = vld [vmem:[#allocation2 + $0xab0] sm:$0x3]
    %v443 = vld [vmem:[#allocation2 + $0xab8] sm:$0x3]
    %v444 = vld [vmem:[#allocation2 + $0xac0] sm:$0x3]
    %v445 = vld [vmem:[#allocation2 + $0xac8] sm:$0x3]
    %v446 = vld [vmem:[#allocation2 + $0xad0] sm:$0x3]
    %v447 = vld [vmem:[#allocation2 + $0xad8] sm:$0x3]
    %v448 = vld [vmem:[#allocation2 + $0xae0] sm:$0x3]
    %v449 = vld [vmem:[#allocation2 + $0xae8] sm:$0x3]
    %v450 = vld [vmem:[#allocation2 + $0xaf0] sm:$0x3]
    %v451 = vld [vmem:[#allocation2 + $0xaf8] sm:$0x3]
    %v452 = vld [vmem:[#allocation2 + $0xb00] sm:$0x3]
    %v453 = vld [vmem:[#allocation2 + $0xb08] sm:$0x3]
    %v454 = vld [vmem:[#allocation2 + $0xb10] sm:$0x3]
    %v455 = vld [vmem:[#allocation2 + $0xb18] sm:$0x3]
    %v456 = vld [vmem:[#allocation2 + $0xb20] sm:$0x3]
    %v457 = vld [vmem:[#allocation2 + $0xb28] sm:$0x3]
    %v458 = vld [vmem:[#allocation2 + $0xb30] sm:$0x3]
    %v459 = vld [vmem:[#allocation2 + $0xb38] sm:$0x3]
    %v460 = vld [vmem:[#allocation2 + $0xb40] sm:$0x3]
    %v461 = vld [vmem:[#allocation2 + $0xb48] sm:$0x3]
    %v462 = vld [vmem:[#allocation2 + $0xb50] sm:$0x3]
    %v463 = vld [vmem:[#allocation2 + $0xb58] sm:$0x3]
    %v464 = vld [vmem:[#allocation2 + $0xb60] sm:$0x3]
    %v465 = vld [vmem:[#allocation2 + $0xb68] sm:$0x3]
    %v466 = vld [vmem:[#allocation2 + $0xb70] sm:$0x3]
    %v467 = vld [vmem:[#allocation2 + $0xb78] sm:$0x3]
    %v468 = vld [vmem:[#allocation2 + $0xb80] sm:$0x3]
    %v469 = vld [vmem:[#allocation2 + $0xb88] sm:$0x3]
    %v470 = vld [vmem:[#allocation2 + $0xb90] sm:$0x3]
    %v471 = vld [vmem:[#allocation2 + $0xb98] sm:$0x3]
    %v472 = vld [vmem:[#allocation2 + $0xba0] sm:$0x3]
    %v473 = vld [vmem:[#allocation2 + $0xba8] sm:$0x3]
    %v474 = vld [vmem:[#allocation2 + $0xbb0] sm:$0x3]
    %v475 = vld [vmem:[#allocation2 + $0xbb8] sm:$0x3]
    %v476 = vld [vmem:[#allocation2 + $0xbc0] sm:$0x3]
    %v477 = vld [vmem:[#allocation2 + $0xbc8] sm:$0x3]
    %v478 = vld [vmem:[#allocation2 + $0xbd0] sm:$0x3]
    %v479 = vld [vmem:[#allocation2 + $0xbd8] sm:$0x3]
    %v480 = vld [vmem:[#allocation2 + $0xbe0] sm:$0x3]
    %v481 = vld [vmem:[#allocation2 + $0xbe8] sm:$0x3]
    %v482 = vld [vmem:[#allocation2 + $0xbf0] sm:$0x3]
    %v483 = vld [vmem:[#allocation2 + $0xbf8] sm:$0x3]
    %v484 = vld [vmem:[#allocation2 + $0xc00] sm:$0x3]
    %v485 = vld [vmem:[#allocation2 + $0xc08] sm:$0x3]
    %v486 = vld [vmem:[#allocation2 + $0xc10] sm:$0x3]
    %v487 = vld [vmem:[#allocation2 + $0xc18] sm:$0x3]
    %v488 = vld [vmem:[#allocation2 + $0xc20] sm:$0x3]
    %v489 = vld [vmem:[#allocation2 + $0xc28] sm:$0x3]
    %v490 = vld [vmem:[#allocation2 + $0xc30] sm:$0x3]
    %v491 = vld [vmem:[#allocation2 + $0xc38] sm:$0x3]
    %v492 = vld [vmem:[#allocation2 + $0xc40] sm:$0x3]
    %v493 = vld [vmem:[#allocation2 + $0xc48] sm:$0x3]
    %v494 = vld [vmem:[#allocation2 + $0xc50] sm:$0x3]
    %v495 = vld [vmem:[#allocation2 + $0xc58] sm:$0x3]
    %v496 = vld [vmem:[#allocation2 + $0xc60] sm:$0x3]
    %v497 = vld [vmem:[#allocation2 + $0xc68] sm:$0x3]
    %v498 = vld [vmem:[#allocation2 + $0xc70] sm:$0x3]
    %v499 = vld [vmem:[#allocation2 + $0xc78] sm:$0x3]
    %v500 = vld [vmem:[#allocation2 + $0xc80] sm:$0x3]
    %v501 = vld [vmem:[#allocation2 + $0xc88] sm:$0x3]
    %v502 = vld [vmem:[#allocation2 + $0xc90] sm:$0x3]
    %v503 = vld [vmem:[#allocation2 + $0xc98] sm:$0x3]
    %v504 = vld [vmem:[#allocation2 + $0xca0] sm:$0x3]
    %v505 = vld [vmem:[#allocation2 + $0xca8] sm:$0x3]
    %v506 = vld [vmem:[#allocation2 + $0xcb0] sm:$0x3]
    %v507 = vld [vmem:[#allocation2 + $0xcb8] sm:$0x3]
    %v508 = vld [vmem:[#allocation2 + $0xcc0] sm:$0x3]
    %v509 = vld [vmem:[#allocation2 + $0xcc8] sm:$0x3]
    %v510 = vld [vmem:[#allocation2 + $0xcd0] sm:$0x3]
    %v511 = vld [vmem:[#allocation2 + $0xcd8] sm:$0x3]
    %v512 = vld [vmem:[#allocation2 + $0xce0] sm:$0x3]
    %v513 = vld [vmem:[#allocation2 + $0xce8] sm:$0x3]
    %v514 = vld [vmem:[#allocation2 + $0xcf0] sm:$0x3]
    %v515 = vld [vmem:[#allocation2 + $0xcf8] sm:$0x3]
    %v516 = vld [vmem:[#allocation2 + $0xd00] sm:$0x3]
    %v517 = vld [vmem:[#allocation2 + $0xd08] sm:$0x3]
    %v518 = vld [vmem:[#allocation2 + $0xd10] sm:$0x3]
    %v519 = vld [vmem:[#allocation2 + $0xd18] sm:$0x3]
    %v520 = vld [vmem:[#allocation2 + $0xd20] sm:$0x3]
    %v521 = vld [vmem:[#allocation2 + $0xd28] sm:$0x3]
    %v522 = vld [vmem:[#allocation2 + $0xd30] sm:$0x3]
    %v523 = vld [vmem:[#allocation2 + $0xd38] sm:$0x3]
    %v524 = vld [vmem:[#allocation2 + $0xd40] sm:$0x3]
    %v525 = vld [vmem:[#allocation2 + $0xd48] sm:$0x3]
    %v526 = vld [vmem:[#allocation2 + $0xd50] sm:$0x3]
    %v527 = vld [vmem:[#allocation2 + $0xd58] sm:$0x3]
    %v528 = vld [vmem:[#allocation2 + $0xd60] sm:$0x3]
    %v529 = vld [vmem:[#allocation2 + $0xd68] sm:$0x3]
    %v530 = vld [vmem:[#allocation2 + $0xd70] sm:$0x3]
    %v531 = vld [vmem:[#allocation2 + $0xd78] sm:$0x3]
    %586 = vst [vmem:[#allocation1] ss:$4 sm:$0xff] %v46
    %s587 = scalar_lea.vmem [#allocation1], 32
    %588 = vst [vmem:[%s587] ss:$4 sm:$0xff] %v47
    %v589 = vld.sshfl [vmem:[#allocation1] sm:$0xff pattern:$0x73625140]
    %v590 = vld.sshfl [vmem:[#allocation1 + $0x8] sm:$0xff pattern:$0x73625140]
    %v591 = vld.sshfl [vmem:[#allocation1 + $0x10] sm:$0xff pattern:$0x73625140]
    %v592 = vld.sshfl [vmem:[#allocation1 + $0x18] sm:$0xff pattern:$0x73625140]
    %v593 = vld.sshfl [vmem:[#allocation1 + $0x20] sm:$0xff pattern:$0x73625140]
    %v594 = vld.sshfl [vmem:[#allocation1 + $0x28] sm:$0xff pattern:$0x73625140]
    %v595 = vld.sshfl [vmem:[#allocation1 + $0x30] sm:$0xff pattern:$0x73625140]
    %v596 = vld.sshfl [vmem:[#allocation1 + $0x38] sm:$0xff pattern:$0x73625140]
    %597 = vst [vmem:[#allocation1] ss:$4 sm:$0xff] %v48
    %598 = vst [vmem:[%s587] ss:$4 sm:$0xff] %v49
    %v599 = vld.sshfl [vmem:[#allocation1] sm:$0xff pattern:$0x73625140]
    %v600 = vld.sshfl [vmem:[#allocation1 + $0x8] sm:$0xff pattern:$0x73625140]
    %v601 = vld.sshfl [vmem:[#allocation1 + $0x10] sm:$0xff pattern:$0x73625140]
    %v602 = vld.sshfl [vmem:[#allocation1 + $0x18] sm:$0xff pattern:$0x73625140]
    %v603 = vld.sshfl [vmem:[#allocation1 + $0x20] sm:$0xff pattern:$0x73625140]
    %v604 = vld.sshfl [vmem:[#allocation1 + $0x28] sm:$0xff pattern:$0x73625140]
    %v605 = vld.sshfl [vmem:[#allocation1 + $0x30] sm:$0xff pattern:$0x73625140]
    %v606 = vld.sshfl [vmem:[#allocation1 + $0x38] sm:$0xff pattern:$0x73625140]
    %607 = vst [vmem:[#allocation1] ss:$4 sm:$0xff] %v50
    %608 = vst [vmem:[%s587] ss:$4 sm:$0xff] %v51
    %v609 = vld.sshfl [vmem:[#allocation1] sm:$0xff pattern:$0x73625140]
    %v610 = vld.sshfl [vmem:[#allocation1 + $0x8] sm:$0xff pattern:$0x73625140]
    %v611 = vld.sshfl [vmem:[#allocation1 + $0x10] sm:$0xff pattern:$0x73625140]
    %v612 = vld.sshfl [vmem:[#allocation1 + $0x18] sm:$0xff pattern:$0x73625140]
    %v613 = vld.sshfl [vmem:[#allocation1 + $0x20] sm:$0xff pattern:$0x73625140]
    %v614 = vld.sshfl [vmem:[#allocation1 + $0x28] sm:$0xff pattern:$0x73625140]
    %v615 = vld.sshfl [vmem:[#allocation1 + $0x30] sm:$0xff pattern:$0x73625140]
    %v616 = vld.sshfl [vmem:[#allocation1 + $0x38] sm:$0xff pattern:$0x73625140]
    %617 = vst [vmem:[#allocation1] ss:$4 sm:$0xff] %v52
    %618 = vst [vmem:[%s587] ss:$4 sm:$0xff] %v53
    %v619 = vld.sshfl [vmem:[#allocation1] sm:$0xff pattern:$0x73625140]
    %v620 = vld.sshfl [vmem:[#allocation1 + $0x8] sm:$0xff pattern:$0x73625140]
    %v621 = vld.sshfl [vmem:[#allocation1 + $0x10] sm:$0xff pattern:$0x73625140]
    %v622 = vld.sshfl [vmem:[#allocation1 + $0x18] sm:$0xff pattern:$0x73625140]
    %v623 = vld.sshfl [vmem:[#allocation1 + $0x20] sm:$0xff pattern:$0x73625140]
    %v624 = vld.sshfl [vmem:[#allocation1 + $0x28] sm:$0xff pattern:$0x73625140]
    %v625 = vld.sshfl [vmem:[#allocation1 + $0x30] sm:$0xff pattern:$0x73625140]
    %v626 = vld.sshfl [vmem:[#allocation1 + $0x38] sm:$0xff pattern:$0x73625140]
    %627 = vst [vmem:[#allocation1] ss:$4 sm:$0xff] %v54
    %628 = vst [vmem:[%s587] ss:$4 sm:$0xff] %v55
    %v629 = vld.sshfl [vmem:[#allocation1] sm:$0xff pattern:$0x73625140]
    %v630 = vld.sshfl [vmem:[#allocation1 + $0x8] sm:$0xff pattern:$0x73625140]
    %v631 = vld.sshfl [vmem:[#allocation1 + $0x10] sm:$0xff pattern:$0x73625140]
    %v632 = vld.sshfl [vmem:[#allocation1 + $0x18] sm:$0xff pattern:$0x73625140]
    %v633 = vld.sshfl [vmem:[#allocation1 + $0x20] sm:$0xff pattern:$0x73625140]
    %v634 = vld.sshfl [vmem:[#allocation1 + $0x28] sm:$0xff pattern:$0x73625140]
    %v635 = vld.sshfl [vmem:[#allocation1 + $0x30] sm:$0xff pattern:$0x73625140]
    %v636 = vld.sshfl [vmem:[#allocation1 + $0x38] sm:$0xff pattern:$0x73625140]
    %637 = vst [vmem:[#allocation1] ss:$4 sm:$0xff] %v56
    %638 = vst [vmem:[%s587] ss:$4 sm:$0xff] %v57
    %v639 = vld.sshfl [vmem:[#allocation1] sm:$0xff pattern:$0x73625140]
    %v640 = vld.sshfl [vmem:[#allocation1 + $0x8] sm:$0xff pattern:$0x73625140]
    %v641 = vld.sshfl [vmem:[#allocation1 + $0x10] sm:$0xff pattern:$0x73625140]
    %v642 = vld.sshfl [vmem:[#allocation1 + $0x18] sm:$0xff pattern:$0x73625140]
    %v643 = vld.sshfl [vmem:[#allocation1 + $0x20] sm:$0xff pattern:$0x73625140]
    %v644 = vld.sshfl [vmem:[#allocation1 + $0x28] sm:$0xff pattern:$0x73625140]
    %v645 = vld.sshfl [vmem:[#allocation1 + $0x30] sm:$0xff pattern:$0x73625140]
    %v646 = vld.sshfl [vmem:[#allocation1 + $0x38] sm:$0xff pattern:$0x73625140]
    %647 = vst [vmem:[#allocation1] ss:$4 sm:$0xff] %v58
    %648 = vst [vmem:[%s587] ss:$4 sm:$0xff] %v59
    %v649 = vld.sshfl [vmem:[#allocation1] sm:$0xff pattern:$0x73625140]
    %v650 = vld.sshfl [vmem:[#allocation1 + $0x8] sm:$0xff pattern:$0x73625140]
    %v651 = vld.sshfl [vmem:[#allocation1 + $0x10] sm:$0xff pattern:$0x73625140]
    %v652 = vld.sshfl [vmem:[#allocation1 + $0x18] sm:$0xff pattern:$0x73625140]
    %v653 = vld.sshfl [vmem:[#allocation1 + $0x20] sm:$0xff pattern:$0x73625140]
    %v654 = vld.sshfl [vmem:[#allocation1 + $0x28] sm:$0xff pattern:$0x73625140]
    %v655 = vld.sshfl [vmem:[#allocation1 + $0x30] sm:$0xff pattern:$0x73625140]
    %v656 = vld.sshfl [vmem:[#allocation1 + $0x38] sm:$0xff pattern:$0x73625140]
    %657 = vst [vmem:[#allocation1] ss:$4 sm:$0xff] %v60
    %658 = vst [vmem:[%s587] ss:$4 sm:$0xff] %v61
    %v659 = vld.sshfl [vmem:[#allocation1] sm:$0xff pattern:$0x73625140]
    %v660 = vld.sshfl [vmem:[#allocation1 + $0x8] sm:$0xff pattern:$0x73625140]
    %v661 = vld.sshfl [vmem:[#allocation1 + $0x10] sm:$0xff pattern:$0x73625140]
    %v662 = vld.sshfl [vmem:[#allocation1 + $0x18] sm:$0xff pattern:$0x73625140]
    %v663 = vld.sshfl [vmem:[#allocation1 + $0x20] sm:$0xff pattern:$0x73625140]
    %v664 = vld.sshfl [vmem:[#allocation1 + $0x28] sm:$0xff pattern:$0x73625140]
    %v665 = vld.sshfl [vmem:[#allocation1 + $0x30] sm:$0xff pattern:$0x73625140]
    %v666 = vld.sshfl [vmem:[#allocation1 + $0x38] sm:$0xff pattern:$0x73625140]
    %667 = vst [vmem:[#allocation1] ss:$4 sm:$0xff] %v62
    %668 = vst [vmem:[%s587] ss:$4 sm:$0xff] %v63
    %v669 = vld.sshfl [vmem:[#allocation1] sm:$0xff pattern:$0x73625140]
    %v670 = vld.sshfl [vmem:[#allocation1 + $0x8] sm:$0xff pattern:$0x73625140]
    %v671 = vld.sshfl [vmem:[#allocation1 + $0x10] sm:$0xff pattern:$0x73625140]
    %v672 = vld.sshfl [vmem:[#allocation1 + $0x18] sm:$0xff pattern:$0x73625140]
    %v673 = vld.sshfl [vmem:[#allocation1 + $0x20] sm:$0xff pattern:$0x73625140]
    %v674 = vld.sshfl [vmem:[#allocation1 + $0x28] sm:$0xff pattern:$0x73625140]
    %v675 = vld.sshfl [vmem:[#allocation1 + $0x30] sm:$0xff pattern:$0x73625140]
    %v676 = vld.sshfl [vmem:[#allocation1 + $0x38] sm:$0xff pattern:$0x73625140]
    %677 = vst [vmem:[#allocation1] ss:$4 sm:$0xff] %v64
    %678 = vst [vmem:[%s587] ss:$4 sm:$0xff] %v65
    %v679 = vld.sshfl [vmem:[#allocation1] sm:$0xff pattern:$0x73625140]
    %v680 = vld.sshfl [vmem:[#allocation1 + $0x8] sm:$0xff pattern:$0x73625140]
    %v681 = vld.sshfl [vmem:[#allocation1 + $0x10] sm:$0xff pattern:$0x73625140]
    %v682 = vld.sshfl [vmem:[#allocation1 + $0x18] sm:$0xff pattern:$0x73625140]
    %v683 = vld.sshfl [vmem:[#allocation1 + $0x20] sm:$0xff pattern:$0x73625140]
    %v684 = vld.sshfl [vmem:[#allocation1 + $0x28] sm:$0xff pattern:$0x73625140]
    %v685 = vld.sshfl [vmem:[#allocation1 + $0x30] sm:$0xff pattern:$0x73625140]
    %v686 = vld.sshfl [vmem:[#allocation1 + $0x38] sm:$0xff pattern:$0x73625140]
    %687 = vst [vmem:[#allocation1] ss:$4 sm:$0xff] %v66
    %688 = vst [vmem:[%s587] ss:$4 sm:$0xff] %v67
    %v689 = vld.sshfl [vmem:[#allocation1] sm:$0xff pattern:$0x73625140]
    %v690 = vld.sshfl [vmem:[#allocation1 + $0x8] sm:$0xff pattern:$0x73625140]
    %v691 = vld.sshfl [vmem:[#allocation1 + $0x10] sm:$0xff pattern:$0x73625140]
    %v692 = vld.sshfl [vmem:[#allocation1 + $0x18] sm:$0xff pattern:$0x73625140]
    %v693 = vld.sshfl [vmem:[#allocation1 + $0x20] sm:$0xff pattern:$0x73625140]
    %v694 = vld.sshfl [vmem:[#allocation1 + $0x28] sm:$0xff pattern:$0x73625140]
    %v695 = vld.sshfl [vmem:[#allocation1 + $0x30] sm:$0xff pattern:$0x73625140]
    %v696 = vld.sshfl [vmem:[#allocation1 + $0x38] sm:$0xff pattern:$0x73625140]
    %697 = vst [vmem:[#allocation1] ss:$4 sm:$0xff] %v68
    %698 = vst [vmem:[%s587] ss:$4 sm:$0xff] %v69
    %v699 = vld.sshfl [vmem:[#allocation1] sm:$0xff pattern:$0x73625140]
    %v700 = vld.sshfl [vmem:[#allocation1 + $0x8] sm:$0xff pattern:$0x73625140]
    %v701 = vld.sshfl [vmem:[#allocation1 + $0x10] sm:$0xff pattern:$0x73625140]
    %v702 = vld.sshfl [vmem:[#allocation1 + $0x18] sm:$0xff pattern:$0x73625140]
    %v703 = vld.sshfl [vmem:[#allocation1 + $0x20] sm:$0xff pattern:$0x73625140]
    %v704 = vld.sshfl [vmem:[#allocation1 + $0x28] sm:$0xff pattern:$0x73625140]
    %v705 = vld.sshfl [vmem:[#allocation1 + $0x30] sm:$0xff pattern:$0x73625140]
    %v706 = vld.sshfl [vmem:[#allocation1 + $0x38] sm:$0xff pattern:$0x73625140]
    %707 = vst [vmem:[#allocation1] ss:$4 sm:$0xff] %v70
    %708 = vst [vmem:[%s587] ss:$4 sm:$0xff] %v71
    %v709 = vld.sshfl [vmem:[#allocation1] sm:$0xff pattern:$0x73625140]
    %v710 = vld.sshfl [vmem:[#allocation1 + $0x8] sm:$0xff pattern:$0x73625140]
    %v711 = vld.sshfl [vmem:[#allocation1 + $0x10] sm:$0xff pattern:$0x73625140]
    %v712 = vld.sshfl [vmem:[#allocation1 + $0x18] sm:$0xff pattern:$0x73625140]
    %v713 = vld.sshfl [vmem:[#allocation1 + $0x20] sm:$0xff pattern:$0x73625140]
    %v714 = vld.sshfl [vmem:[#allocation1 + $0x28] sm:$0xff pattern:$0x73625140]
    %v715 = vld.sshfl [vmem:[#allocation1 + $0x30] sm:$0xff pattern:$0x73625140]
    %v716 = vld.sshfl [vmem:[#allocation1 + $0x38] sm:$0xff pattern:$0x73625140]
    %717 = vst [vmem:[#allocation1] ss:$4 sm:$0xff] %v72
    %718 = vst [vmem:[%s587] ss:$4 sm:$0xff] %v73
    %v719 = vld.sshfl [vmem:[#allocation1] sm:$0xff pattern:$0x73625140]
    %v720 = vld.sshfl [vmem:[#allocation1 + $0x8] sm:$0xff pattern:$0x73625140]
    %v721 = vld.sshfl [vmem:[#allocation1 + $0x10] sm:$0xff pattern:$0x73625140]
    %v722 = vld.sshfl [vmem:[#allocation1 + $0x18] sm:$0xff pattern:$0x73625140]
    %v723 = vld.sshfl [vmem:[#allocation1 + $0x20] sm:$0xff pattern:$0x73625140]
    %v724 = vld.sshfl [vmem:[#allocation1 + $0x28] sm:$0xff pattern:$0x73625140]
    %v725 = vld.sshfl [vmem:[#allocation1 + $0x30] sm:$0xff pattern:$0x73625140]
    %v726 = vld.sshfl [vmem:[#allocation1 + $0x38] sm:$0xff pattern:$0x73625140]
    %727 = vst [vmem:[#allocation1] ss:$4 sm:$0xff] %v74
    %728 = vst [vmem:[%s587] ss:$4 sm:$0xff] %v75
    %v729 = vld.sshfl [vmem:[#allocation1] sm:$0xff pattern:$0x73625140]
    %v730 = vld.sshfl [vmem:[#allocation1 + $0x8] sm:$0xff pattern:$0x73625140]
    %v731 = vld.sshfl [vmem:[#allocation1 + $0x10] sm:$0xff pattern:$0x73625140]
    %v732 = vld.sshfl [vmem:[#allocation1 + $0x18] sm:$0xff pattern:$0x73625140]
    %v733 = vld.sshfl [vmem:[#allocation1 + $0x20] sm:$0xff pattern:$0x73625140]
    %v734 = vld.sshfl [vmem:[#allocation1 + $0x28] sm:$0xff pattern:$0x73625140]
    %v735 = vld.sshfl [vmem:[#allocation1 + $0x30] sm:$0xff pattern:$0x73625140]
    %v736 = vld.sshfl [vmem:[#allocation1 + $0x38] sm:$0xff pattern:$0x73625140]
    %737 = vst [vmem:[#allocation1] ss:$4 sm:$0xff] %v76
    %738 = vst [vmem:[%s587] ss:$4 sm:$0xff] %v77
    %v739 = vld.sshfl [vmem:[#allocation1] sm:$0xff pattern:$0x73625140]
    %v740 = vld.sshfl [vmem:[#allocation1 + $0x8] sm:$0xff pattern:$0x73625140]
    %v741 = vld.sshfl [vmem:[#allocation1 + $0x10] sm:$0xff pattern:$0x73625140]
    %v742 = vld.sshfl [vmem:[#allocation1 + $0x18] sm:$0xff pattern:$0x73625140]
    %v743 = vld.sshfl [vmem:[#allocation1 + $0x20] sm:$0xff pattern:$0x73625140]
    %v744 = vld.sshfl [vmem:[#allocation1 + $0x28] sm:$0xff pattern:$0x73625140]
    %v745 = vld.sshfl [vmem:[#allocation1 + $0x30] sm:$0xff pattern:$0x73625140]
    %v746 = vld.sshfl [vmem:[#allocation1 + $0x38] sm:$0xff pattern:$0x73625140]
    %747 = vst [vmem:[#allocation1] ss:$4 sm:$0xff] %v78
    %748 = vst [vmem:[%s587] ss:$4 sm:$0xff] %v79
    %v749 = vld.sshfl [vmem:[#allocation1] sm:$0xff pattern:$0x73625140]
    %v750 = vld.sshfl [vmem:[#allocation1 + $0x8] sm:$0xff pattern:$0x73625140]
    %v751 = vld.sshfl [vmem:[#allocation1 + $0x10] sm:$0xff pattern:$0x73625140]
    %v752 = vld.sshfl [vmem:[#allocation1 + $0x18] sm:$0xff pattern:$0x73625140]
    %v753 = vld.sshfl [vmem:[#allocation1 + $0x20] sm:$0xff pattern:$0x73625140]
    %v754 = vld.sshfl [vmem:[#allocation1 + $0x28] sm:$0xff pattern:$0x73625140]
    %v755 = vld.sshfl [vmem:[#allocation1 + $0x30] sm:$0xff pattern:$0x73625140]
    %v756 = vld.sshfl [vmem:[#allocation1 + $0x38] sm:$0xff pattern:$0x73625140]
    %757 = vst [vmem:[#allocation1] ss:$4 sm:$0xff] %v80
    %758 = vst [vmem:[%s587] ss:$4 sm:$0xff] %v81
    %v759 = vld.sshfl [vmem:[#allocation1] sm:$0xff pattern:$0x73625140]
    %v760 = vld.sshfl [vmem:[#allocation1 + $0x8] sm:$0xff pattern:$0x73625140]
    %v761 = vld.sshfl [vmem:[#allocation1 + $0x10] sm:$0xff pattern:$0x73625140]
    %v762 = vld.sshfl [vmem:[#allocation1 + $0x18] sm:$0xff pattern:$0x73625140]
    %v763 = vld.sshfl [vmem:[#allocation1 + $0x20] sm:$0xff pattern:$0x73625140]
    %v764 = vld.sshfl [vmem:[#allocation1 + $0x28] sm:$0xff pattern:$0x73625140]
    %v765 = vld.sshfl [vmem:[#allocation1 + $0x30] sm:$0xff pattern:$0x73625140]
    %v766 = vld.sshfl [vmem:[#allocation1 + $0x38] sm:$0xff pattern:$0x73625140]
    %767 = vst [vmem:[#allocation1] ss:$4 sm:$0xff] %v82
    %768 = vst [vmem:[%s587] ss:$4 sm:$0xff] %v83
    %v769 = vld.sshfl [vmem:[#allocation1] sm:$0xff pattern:$0x73625140]
    %v770 = vld.sshfl [vmem:[#allocation1 + $0x8] sm:$0xff pattern:$0x73625140]
    %v771 = vld.sshfl [vmem:[#allocation1 + $0x10] sm:$0xff pattern:$0x73625140]
    %v772 = vld.sshfl [vmem:[#allocation1 + $0x18] sm:$0xff pattern:$0x73625140]
    %v773 = vld.sshfl [vmem:[#allocation1 + $0x20] sm:$0xff pattern:$0x73625140]
    %v774 = vld.sshfl [vmem:[#allocation1 + $0x28] sm:$0xff pattern:$0x73625140]
    %v775 = vld.sshfl [vmem:[#allocation1 + $0x30] sm:$0xff pattern:$0x73625140]
    %v776 = vld.sshfl [vmem:[#allocation1 + $0x38] sm:$0xff pattern:$0x73625140]
    %777 = vst [vmem:[#allocation1] ss:$4 sm:$0xff] %v84
    %778 = vst [vmem:[%s587] ss:$4 sm:$0xff] %v85
    %v779 = vld.sshfl [vmem:[#allocation1] sm:$0xff pattern:$0x73625140]
    %v780 = vld.sshfl [vmem:[#allocation1 + $0x8] sm:$0xff pattern:$0x73625140]
    %v781 = vld.sshfl [vmem:[#allocation1 + $0x10] sm:$0xff pattern:$0x73625140]
    %v782 = vld.sshfl [vmem:[#allocation1 + $0x18] sm:$0xff pattern:$0x73625140]
    %v783 = vld.sshfl [vmem:[#allocation1 + $0x20] sm:$0xff pattern:$0x73625140]
    %v784 = vld.sshfl [vmem:[#allocation1 + $0x28] sm:$0xff pattern:$0x73625140]
    %v785 = vld.sshfl [vmem:[#allocation1 + $0x30] sm:$0xff pattern:$0x73625140]
    %v786 = vld.sshfl [vmem:[#allocation1 + $0x38] sm:$0xff pattern:$0x73625140]
    %787 = vst [vmem:[#allocation1] ss:$4 sm:$0xff] %v86
    %788 = vst [vmem:[%s587] ss:$4 sm:$0xff] %v87
    %v789 = vld.sshfl [vmem:[#allocation1] sm:$0xff pattern:$0x73625140]
    %v790 = vld.sshfl [vmem:[#allocation1 + $0x8] sm:$0xff pattern:$0x73625140]
    %v791 = vld.sshfl [vmem:[#allocation1 + $0x10] sm:$0xff pattern:$0x73625140]
    %v792 = vld.sshfl [vmem:[#allocation1 + $0x18] sm:$0xff pattern:$0x73625140]
    %v793 = vld.sshfl [vmem:[#allocation1 + $0x20] sm:$0xff pattern:$0x73625140]
    %v794 = vld.sshfl [vmem:[#allocation1 + $0x28] sm:$0xff pattern:$0x73625140]
    %v795 = vld.sshfl [vmem:[#allocation1 + $0x30] sm:$0xff pattern:$0x73625140]
    %v796 = vld.sshfl [vmem:[#allocation1 + $0x38] sm:$0xff pattern:$0x73625140]
    %797 = vst [vmem:[#allocation1] ss:$4 sm:$0xff] %v88
    %798 = vst [vmem:[%s587] ss:$4 sm:$0xff] %v89
    %v799 = vld.sshfl [vmem:[#allocation1] sm:$0xff pattern:$0x73625140]
    %v800 = vld.sshfl [vmem:[#allocation1 + $0x8] sm:$0xff pattern:$0x73625140]
    %v801 = vld.sshfl [vmem:[#allocation1 + $0x10] sm:$0xff pattern:$0x73625140]
    %v802 = vld.sshfl [vmem:[#allocation1 + $0x18] sm:$0xff pattern:$0x73625140]
    %v803 = vld.sshfl [vmem:[#allocation1 + $0x20] sm:$0xff pattern:$0x73625140]
    %v804 = vld.sshfl [vmem:[#allocation1 + $0x28] sm:$0xff pattern:$0x73625140]
    %v805 = vld.sshfl [vmem:[#allocation1 + $0x30] sm:$0xff pattern:$0x73625140]
    %v806 = vld.sshfl [vmem:[#allocation1 + $0x38] sm:$0xff pattern:$0x73625140]
    %807 = vst [vmem:[#allocation1] ss:$4 sm:$0xff] %v90
    %808 = vst [vmem:[%s587] ss:$4 sm:$0xff] %v91
    %v809 = vld.sshfl [vmem:[#allocation1] sm:$0xff pattern:$0x73625140]
    %v810 = vld.sshfl [vmem:[#allocation1 + $0x8] sm:$0xff pattern:$0x73625140]
    %v811 = vld.sshfl [vmem:[#allocation1 + $0x10] sm:$0xff pattern:$0x73625140]
    %v812 = vld.sshfl [vmem:[#allocation1 + $0x18] sm:$0xff pattern:$0x73625140]
    %v813 = vld.sshfl [vmem:[#allocation1 + $0x20] sm:$0xff pattern:$0x73625140]
    %v814 = vld.sshfl [vmem:[#allocation1 + $0x28] sm:$0xff pattern:$0x73625140]
    %v815 = vld.sshfl [vmem:[#allocation1 + $0x30] sm:$0xff pattern:$0x73625140]
    %v816 = vld.sshfl [vmem:[#allocation1 + $0x38] sm:$0xff pattern:$0x73625140]
    %817 = vst [vmem:[#allocation1] ss:$4 sm:$0xff] %v92
    %818 = vst [vmem:[%s587] ss:$4 sm:$0xff] %v93
    %v819 = vld.sshfl [vmem:[#allocation1] sm:$0xff pattern:$0x73625140]
    %v820 = vld.sshfl [vmem:[#allocation1 + $0x8] sm:$0xff pattern:$0x73625140]
    %v821 = vld.sshfl [vmem:[#allocation1 + $0x10] sm:$0xff pattern:$0x73625140]
    %v822 = vld.sshfl [vmem:[#allocation1 + $0x18] sm:$0xff pattern:$0x73625140]
    %v823 = vld.sshfl [vmem:[#allocation1 + $0x20] sm:$0xff pattern:$0x73625140]
    %v824 = vld.sshfl [vmem:[#allocation1 + $0x28] sm:$0xff pattern:$0x73625140]
    %v825 = vld.sshfl [vmem:[#allocation1 + $0x30] sm:$0xff pattern:$0x73625140]
    %v826 = vld.sshfl [vmem:[#allocation1 + $0x38] sm:$0xff pattern:$0x73625140]
    %827 = vst [vmem:[#allocation1] ss:$4 sm:$0xff] %v94
    %828 = vst [vmem:[%s587] ss:$4 sm:$0xff] %v95
    %v829 = vld.sshfl [vmem:[#allocation1] sm:$0xff pattern:$0x73625140]
    %v830 = vld.sshfl [vmem:[#allocation1 + $0x8] sm:$0xff pattern:$0x73625140]
    %v831 = vld.sshfl [vmem:[#allocation1 + $0x10] sm:$0xff pattern:$0x73625140]
    %v832 = vld.sshfl [vmem:[#allocation1 + $0x18] sm:$0xff pattern:$0x73625140]
    %v833 = vld.sshfl [vmem:[#allocation1 + $0x20] sm:$0xff pattern:$0x73625140]
    %v834 = vld.sshfl [vmem:[#allocation1 + $0x28] sm:$0xff pattern:$0x73625140]
    %v835 = vld.sshfl [vmem:[#allocation1 + $0x30] sm:$0xff pattern:$0x73625140]
    %v836 = vld.sshfl [vmem:[#allocation1 + $0x38] sm:$0xff pattern:$0x73625140]
    %837 = vst [vmem:[#allocation1] ss:$4 sm:$0xff] %v96
    %838 = vst [vmem:[%s587] ss:$4 sm:$0xff] %v97
    %v839 = vld.sshfl [vmem:[#allocation1] sm:$0xff pattern:$0x73625140]
    %v840 = vld.sshfl [vmem:[#allocation1 + $0x8] sm:$0xff pattern:$0x73625140]
    %v841 = vld.sshfl [vmem:[#allocation1 + $0x10] sm:$0xff pattern:$0x73625140]
    %v842 = vld.sshfl [vmem:[#allocation1 + $0x18] sm:$0xff pattern:$0x73625140]
    %v843 = vld.sshfl [vmem:[#allocation1 + $0x20] sm:$0xff pattern:$0x73625140]
    %v844 = vld.sshfl [vmem:[#allocation1 + $0x28] sm:$0xff pattern:$0x73625140]
    %v845 = vld.sshfl [vmem:[#allocation1 + $0x30] sm:$0xff pattern:$0x73625140]
    %v846 = vld.sshfl [vmem:[#allocation1 + $0x38] sm:$0xff pattern:$0x73625140]
    %847 = vst [vmem:[#allocation1] ss:$4 sm:$0xff] %v98
    %848 = vst [vmem:[%s587] ss:$4 sm:$0xff] %v99
    %v849 = vld.sshfl [vmem:[#allocation1] sm:$0xff pattern:$0x73625140]
    %v850 = vld.sshfl [vmem:[#allocation1 + $0x8] sm:$0xff pattern:$0x73625140]
    %v851 = vld.sshfl [vmem:[#allocation1 + $0x10] sm:$0xff pattern:$0x73625140]
    %v852 = vld.sshfl [vmem:[#allocation1 + $0x18] sm:$0xff pattern:$0x73625140]
    %v853 = vld.sshfl [vmem:[#allocation1 + $0x20] sm:$0xff pattern:$0x73625140]
    %v854 = vld.sshfl [vmem:[#allocation1 + $0x28] sm:$0xff pattern:$0x73625140]
    %v855 = vld.sshfl [vmem:[#allocation1 + $0x30] sm:$0xff pattern:$0x73625140]
    %v856 = vld.sshfl [vmem:[#allocation1 + $0x38] sm:$0xff pattern:$0x73625140]
    %1073 = vmatpush.xpose.msra.mxu0 0.0
    %1074 = vmatpush.xpose.msra.mxu0 0.0
    %1075 = vmatpush.xpose.msra.mxu0 0.0
    %1076 = vmatpush.xpose.msra.mxu0 0.0
    %1077 = vmatpush.xpose.msra.mxu0 0.0
    %1078 = vmatpush.xpose.msra.mxu0 0.0
    %1079 = vmatpush.xpose.msra.mxu0 0.0
    %1080 = vmatpush.xpose.msra.mxu0 0.0
    %1081 = vmatpush.xpose.msra.mxu0 0.0
    %1082 = vmatpush.xpose.msra.mxu0 0.0
    %1083 = vmatpush.xpose.msra.mxu0 0.0
    %1084 = vmatpush.xpose.msra.mxu0 0.0
    %1085 = vmatpush.xpose.msra.mxu0 0.0
    %1086 = vmatpush.xpose.msra.mxu0 0.0
    %1087 = vmatpush.xpose.msra.mxu0 %v316
    %1088 = vmatpush.xpose.msra.mxu0 %v100
    %1089 = vmatmul.f32.gmra.mxu0 %v589
    %v1090 = vpop.f32.mrf.mxu0
    %v1091 = vadd.f32 0.0, %v1090
    %1092 = vdwg.mxu0
    %1093 = vmatpush.xpose.msra.mxu0 0.0
    %1094 = vmatpush.xpose.msra.mxu0 0.0
    %1095 = vmatpush.xpose.msra.mxu0 0.0
    %1096 = vmatpush.xpose.msra.mxu0 0.0
    %1097 = vmatpush.xpose.msra.mxu0 0.0
    %1098 = vmatpush.xpose.msra.mxu0 0.0
    %1099 = vmatpush.xpose.msra.mxu0 0.0
    %1100 = vmatpush.xpose.msra.mxu0 0.0
    %1101 = vmatpush.xpose.msra.mxu0 0.0
    %1102 = vmatpush.xpose.msra.mxu0 0.0
    %1103 = vmatpush.xpose.msra.mxu0 0.0
    %1104 = vmatpush.xpose.msra.mxu0 0.0
    %1105 = vmatpush.xpose.msra.mxu0 0.0
    %1106 = vmatpush.xpose.msra.mxu0 0.0
    %1107 = vmatpush.xpose.msra.mxu0 %v317
    %1108 = vmatpush.xpose.msra.mxu0 %v101
    %1109 = vmatmul.f32.gmra.mxu0 %v590
    %v1110 = vpop.f32.mrf.mxu0
    %v1111 = vadd.f32 %v1091, %v1110
    %1112 = vdwg.mxu0
    %1113 = vmatpush.xpose.msra.mxu0 0.0
    %1114 = vmatpush.xpose.msra.mxu0 0.0
    %1115 = vmatpush.xpose.msra.mxu0 0.0
    %1116 = vmatpush.xpose.msra.mxu0 0.0
    %1117 = vmatpush.xpose.msra.mxu0 0.0
    %1118 = vmatpush.xpose.msra.mxu0 0.0
    %1119 = vmatpush.xpose.msra.mxu0 0.0
    %1120 = vmatpush.xpose.msra.mxu0 0.0
    %1121 = vmatpush.xpose.msra.mxu0 0.0
    %1122 = vmatpush.xpose.msra.mxu0 0.0
    %1123 = vmatpush.xpose.msra.mxu0 0.0
    %1124 = vmatpush.xpose.msra.mxu0 0.0
    %1125 = vmatpush.xpose.msra.mxu0 0.0
    %1126 = vmatpush.xpose.msra.mxu0 0.0
    %1127 = vmatpush.xpose.msra.mxu0 %v318
    %1128 = vmatpush.xpose.msra.mxu0 %v102
    %1129 = vmatmul.f32.gmra.mxu0 %v591
    %v1130 = vpop.f32.mrf.mxu0
    %v1131 = vadd.f32 %v1111, %v1130
    %1132 = vdwg.mxu0
    %1133 = vmatpush.xpose.msra.mxu0 0.0
    %1134 = vmatpush.xpose.msra.mxu0 0.0
    %1135 = vmatpush.xpose.msra.mxu0 0.0
    %1136 = vmatpush.xpose.msra.mxu0 0.0
    %1137 = vmatpush.xpose.msra.mxu0 0.0
    %1138 = vmatpush.xpose.msra.mxu0 0.0
    %1139 = vmatpush.xpose.msra.mxu0 0.0
    %1140 = vmatpush.xpose.msra.mxu0 0.0
    %1141 = vmatpush.xpose.msra.mxu0 0.0
    %1142 = vmatpush.xpose.msra.mxu0 0.0
    %1143 = vmatpush.xpose.msra.mxu0 0.0
    %1144 = vmatpush.xpose.msra.mxu0 0.0
    %1145 = vmatpush.xpose.msra.mxu0 0.0
    %1146 = vmatpush.xpose.msra.mxu0 0.0
    %1147 = vmatpush.xpose.msra.mxu0 %v319
    %1148 = vmatpush.xpose.msra.mxu0 %v103
    %1149 = vmatmul.f32.gmra.mxu0 %v592
    %v1150 = vpop.f32.mrf.mxu0
    %v1151 = vadd.f32 %v1131, %v1150
    %1152 = vdwg.mxu0
    %1153 = vmatpush.xpose.msra.mxu0 0.0
    %1154 = vmatpush.xpose.msra.mxu0 0.0
    %1155 = vmatpush.xpose.msra.mxu0 0.0
    %1156 = vmatpush.xpose.msra.mxu0 0.0
    %1157 = vmatpush.xpose.msra.mxu0 0.0
    %1158 = vmatpush.xpose.msra.mxu0 0.0
    %1159 = vmatpush.xpose.msra.mxu0 0.0
    %1160 = vmatpush.xpose.msra.mxu0 0.0
    %1161 = vmatpush.xpose.msra.mxu0 0.0
    %1162 = vmatpush.xpose.msra.mxu0 0.0
    %1163 = vmatpush.xpose.msra.mxu0 0.0
    %1164 = vmatpush.xpose.msra.mxu0 0.0
    %1165 = vmatpush.xpose.msra.mxu0 0.0
    %1166 = vmatpush.xpose.msra.mxu0 0.0
    %1167 = vmatpush.xpose.msra.mxu0 %v320
    %1168 = vmatpush.xpose.msra.mxu0 %v104
    %1169 = vmatmul.f32.gmra.mxu0 %v593
    %v1170 = vpop.f32.mrf.mxu0
    %v1171 = vadd.f32 %v1151, %v1170
    %1172 = vdwg.mxu0
    %1173 = vmatpush.xpose.msra.mxu0 0.0
    %1174 = vmatpush.xpose.msra.mxu0 0.0
    %1175 = vmatpush.xpose.msra.mxu0 0.0
    %1176 = vmatpush.xpose.msra.mxu0 0.0
    %1177 = vmatpush.xpose.msra.mxu0 0.0
    %1178 = vmatpush.xpose.msra.mxu0 0.0
    %1179 = vmatpush.xpose.msra.mxu0 0.0
    %1180 = vmatpush.xpose.msra.mxu0 0.0
    %1181 = vmatpush.xpose.msra.mxu0 0.0
    %1182 = vmatpush.xpose.msra.mxu0 0.0
    %1183 = vmatpush.xpose.msra.mxu0 0.0
    %1184 = vmatpush.xpose.msra.mxu0 0.0
    %1185 = vmatpush.xpose.msra.mxu0 0.0
    %1186 = vmatpush.xpose.msra.mxu0 0.0
    %1187 = vmatpush.xpose.msra.mxu0 %v321
    %1188 = vmatpush.xpose.msra.mxu0 %v105
    %1189 = vmatmul.f32.gmra.mxu0 %v594
    %v1190 = vpop.f32.mrf.mxu0
    %v1191 = vadd.f32 %v1171, %v1190
    %1192 = vdwg.mxu0
    %1193 = vmatpush.xpose.msra.mxu0 0.0
    %1194 = vmatpush.xpose.msra.mxu0 0.0
    %1195 = vmatpush.xpose.msra.mxu0 0.0
    %1196 = vmatpush.xpose.msra.mxu0 0.0
    %1197 = vmatpush.xpose.msra.mxu0 0.0
    %1198 = vmatpush.xpose.msra.mxu0 0.0
    %1199 = vmatpush.xpose.msra.mxu0 0.0
    %1200 = vmatpush.xpose.msra.mxu0 0.0
    %1201 = vmatpush.xpose.msra.mxu0 0.0
    %1202 = vmatpush.xpose.msra.mxu0 0.0
    %1203 = vmatpush.xpose.msra.mxu0 0.0
    %1204 = vmatpush.xpose.msra.mxu0 0.0
    %1205 = vmatpush.xpose.msra.mxu0 0.0
    %1206 = vmatpush.xpose.msra.mxu0 0.0
    %1207 = vmatpush.xpose.msra.mxu0 %v322
    %1208 = vmatpush.xpose.msra.mxu0 %v106
    %1209 = vmatmul.f32.gmra.mxu0 %v595
    %v1210 = vpop.f32.mrf.mxu0
    %v1211 = vadd.f32 %v1191, %v1210
    %1212 = vdwg.mxu0
    %1213 = vmatpush.xpose.msra.mxu0 0.0
    %1214 = vmatpush.xpose.msra.mxu0 0.0
    %1215 = vmatpush.xpose.msra.mxu0 0.0
    %1216 = vmatpush.xpose.msra.mxu0 0.0
    %1217 = vmatpush.xpose.msra.mxu0 0.0
    %1218 = vmatpush.xpose.msra.mxu0 0.0
    %1219 = vmatpush.xpose.msra.mxu0 0.0
    %1220 = vmatpush.xpose.msra.mxu0 0.0
    %1221 = vmatpush.xpose.msra.mxu0 0.0
    %1222 = vmatpush.xpose.msra.mxu0 0.0
    %1223 = vmatpush.xpose.msra.mxu0 0.0
    %1224 = vmatpush.xpose.msra.mxu0 0.0
    %1225 = vmatpush.xpose.msra.mxu0 0.0
    %1226 = vmatpush.xpose.msra.mxu0 0.0
    %1227 = vmatpush.xpose.msra.mxu0 %v323
    %1228 = vmatpush.xpose.msra.mxu0 %v107
    %1229 = vmatmul.f32.gmra.mxu0 %v596
    %v1230 = vpop.f32.mrf.mxu0
    %v1231 = vadd.f32 %v1211, %v1230
    %1232 = vdwg.mxu0
    %1233 = vmatpush.xpose.msra.mxu0 0.0
    %1234 = vmatpush.xpose.msra.mxu0 0.0
    %1235 = vmatpush.xpose.msra.mxu0 0.0
    %1236 = vmatpush.xpose.msra.mxu0 0.0
    %1237 = vmatpush.xpose.msra.mxu0 0.0
    %1238 = vmatpush.xpose.msra.mxu0 0.0
    %1239 = vmatpush.xpose.msra.mxu0 0.0
    %1240 = vmatpush.xpose.msra.mxu0 0.0
    %1241 = vmatpush.xpose.msra.mxu0 0.0
    %1242 = vmatpush.xpose.msra.mxu0 0.0
    %1243 = vmatpush.xpose.msra.mxu0 0.0
    %1244 = vmatpush.xpose.msra.mxu0 0.0
    %1245 = vmatpush.xpose.msra.mxu0 0.0
    %1246 = vmatpush.xpose.msra.mxu0 0.0
    %1247 = vmatpush.xpose.msra.mxu0 %v324
    %1248 = vmatpush.xpose.msra.mxu0 %v108
    %1249 = vmatmul.f32.gmra.mxu0 %v599
    %v1250 = vpop.f32.mrf.mxu0
    %v1251 = vadd.f32 %v1231, %v1250
    %1252 = vdwg.mxu0
    %1253 = vmatpush.xpose.msra.mxu0 0.0
    %1254 = vmatpush.xpose.msra.mxu0 0.0
    %1255 = vmatpush.xpose.msra.mxu0 0.0
    %1256 = vmatpush.xpose.msra.mxu0 0.0
    %1257 = vmatpush.xpose.msra.mxu0 0.0
    %1258 = vmatpush.xpose.msra.mxu0 0.0
    %1259 = vmatpush.xpose.msra.mxu0 0.0
    %1260 = vmatpush.xpose.msra.mxu0 0.0
    %1261 = vmatpush.xpose.msra.mxu0 0.0
    %1262 = vmatpush.xpose.msra.mxu0 0.0
    %1263 = vmatpush.xpose.msra.mxu0 0.0
    %1264 = vmatpush.xpose.msra.mxu0 0.0
    %1265 = vmatpush.xpose.msra.mxu0 0.0
    %1266 = vmatpush.xpose.msra.mxu0 0.0
    %1267 = vmatpush.xpose.msra.mxu0 %v325
    %1268 = vmatpush.xpose.msra.mxu0 %v109
    %1269 = vmatmul.f32.gmra.mxu0 %v600
    %v1270 = vpop.f32.mrf.mxu0
    %v1271 = vadd.f32 %v1251, %v1270
    %1272 = vdwg.mxu0
    %1273 = vmatpush.xpose.msra.mxu0 0.0
    %1274 = vmatpush.xpose.msra.mxu0 0.0
    %1275 = vmatpush.xpose.msra.mxu0 0.0
    %1276 = vmatpush.xpose.msra.mxu0 0.0
    %1277 = vmatpush.xpose.msra.mxu0 0.0
    %1278 = vmatpush.xpose.msra.mxu0 0.0
    %1279 = vmatpush.xpose.msra.mxu0 0.0
    %1280 = vmatpush.xpose.msra.mxu0 0.0
    %1281 = vmatpush.xpose.msra.mxu0 0.0
    %1282 = vmatpush.xpose.msra.mxu0 0.0
    %1283 = vmatpush.xpose.msra.mxu0 0.0
    %1284 = vmatpush.xpose.msra.mxu0 0.0
    %1285 = vmatpush.xpose.msra.mxu0 0.0
    %1286 = vmatpush.xpose.msra.mxu0 0.0
    %1287 = vmatpush.xpose.msra.mxu0 %v326
    %1288 = vmatpush.xpose.msra.mxu0 %v110
    %1289 = vmatmul.f32.gmra.mxu0 %v601
    %v1290 = vpop.f32.mrf.mxu0
    %v1291 = vadd.f32 %v1271, %v1290
    %1292 = vdwg.mxu0
    %1293 = vmatpush.xpose.msra.mxu0 0.0
    %1294 = vmatpush.xpose.msra.mxu0 0.0
    %1295 = vmatpush.xpose.msra.mxu0 0.0
    %1296 = vmatpush.xpose.msra.mxu0 0.0
    %1297 = vmatpush.xpose.msra.mxu0 0.0
    %1298 = vmatpush.xpose.msra.mxu0 0.0
    %1299 = vmatpush.xpose.msra.mxu0 0.0
    %1300 = vmatpush.xpose.msra.mxu0 0.0
    %1301 = vmatpush.xpose.msra.mxu0 0.0
    %1302 = vmatpush.xpose.msra.mxu0 0.0
    %1303 = vmatpush.xpose.msra.mxu0 0.0
    %1304 = vmatpush.xpose.msra.mxu0 0.0
    %1305 = vmatpush.xpose.msra.mxu0 0.0
    %1306 = vmatpush.xpose.msra.mxu0 0.0
    %1307 = vmatpush.xpose.msra.mxu0 %v327
    %1308 = vmatpush.xpose.msra.mxu0 %v111
    %1309 = vmatmul.f32.gmra.mxu0 %v602
    %v1310 = vpop.f32.mrf.mxu0
    %v1311 = vadd.f32 %v1291, %v1310
    %1312 = vdwg.mxu0
    %1313 = vmatpush.xpose.msra.mxu0 0.0
    %1314 = vmatpush.xpose.msra.mxu0 0.0
    %1315 = vmatpush.xpose.msra.mxu0 0.0
    %1316 = vmatpush.xpose.msra.mxu0 0.0
    %1317 = vmatpush.xpose.msra.mxu0 0.0
    %1318 = vmatpush.xpose.msra.mxu0 0.0
    %1319 = vmatpush.xpose.msra.mxu0 0.0
    %1320 = vmatpush.xpose.msra.mxu0 0.0
    %1321 = vmatpush.xpose.msra.mxu0 0.0
    %1322 = vmatpush.xpose.msra.mxu0 0.0
    %1323 = vmatpush.xpose.msra.mxu0 0.0
    %1324 = vmatpush.xpose.msra.mxu0 0.0
    %1325 = vmatpush.xpose.msra.mxu0 0.0
    %1326 = vmatpush.xpose.msra.mxu0 0.0
    %1327 = vmatpush.xpose.msra.mxu0 %v328
    %1328 = vmatpush.xpose.msra.mxu0 %v112
    %1329 = vmatmul.f32.gmra.mxu0 %v603
    %v1330 = vpop.f32.mrf.mxu0
    %v1331 = vadd.f32 %v1311, %v1330
    %1332 = vdwg.mxu0
    %1333 = vmatpush.xpose.msra.mxu0 0.0
    %1334 = vmatpush.xpose.msra.mxu0 0.0
    %1335 = vmatpush.xpose.msra.mxu0 0.0
    %1336 = vmatpush.xpose.msra.mxu0 0.0
    %1337 = vmatpush.xpose.msra.mxu0 0.0
    %1338 = vmatpush.xpose.msra.mxu0 0.0
    %1339 = vmatpush.xpose.msra.mxu0 0.0
    %1340 = vmatpush.xpose.msra.mxu0 0.0
    %1341 = vmatpush.xpose.msra.mxu0 0.0
    %1342 = vmatpush.xpose.msra.mxu0 0.0
    %1343 = vmatpush.xpose.msra.mxu0 0.0
    %1344 = vmatpush.xpose.msra.mxu0 0.0
    %1345 = vmatpush.xpose.msra.mxu0 0.0
    %1346 = vmatpush.xpose.msra.mxu0 0.0
    %1347 = vmatpush.xpose.msra.mxu0 %v329
    %1348 = vmatpush.xpose.msra.mxu0 %v113
    %1349 = vmatmul.f32.gmra.mxu0 %v604
    %v1350 = vpop.f32.mrf.mxu0
    %v1351 = vadd.f32 %v1331, %v1350
    %1352 = vdwg.mxu0
    %1353 = vmatpush.xpose.msra.mxu0 0.0
    %1354 = vmatpush.xpose.msra.mxu0 0.0
    %1355 = vmatpush.xpose.msra.mxu0 0.0
    %1356 = vmatpush.xpose.msra.mxu0 0.0
    %1357 = vmatpush.xpose.msra.mxu0 0.0
    %1358 = vmatpush.xpose.msra.mxu0 0.0
    %1359 = vmatpush.xpose.msra.mxu0 0.0
    %1360 = vmatpush.xpose.msra.mxu0 0.0
    %1361 = vmatpush.xpose.msra.mxu0 0.0
    %1362 = vmatpush.xpose.msra.mxu0 0.0
    %1363 = vmatpush.xpose.msra.mxu0 0.0
    %1364 = vmatpush.xpose.msra.mxu0 0.0
    %1365 = vmatpush.xpose.msra.mxu0 0.0
    %1366 = vmatpush.xpose.msra.mxu0 0.0
    %1367 = vmatpush.xpose.msra.mxu0 %v330
    %1368 = vmatpush.xpose.msra.mxu0 %v114
    %1369 = vmatmul.f32.gmra.mxu0 %v605
    %v1370 = vpop.f32.mrf.mxu0
    %v1371 = vadd.f32 %v1351, %v1370
    %1372 = vdwg.mxu0
    %1373 = vmatpush.xpose.msra.mxu0 0.0
    %1374 = vmatpush.xpose.msra.mxu0 0.0
    %1375 = vmatpush.xpose.msra.mxu0 0.0
    %1376 = vmatpush.xpose.msra.mxu0 0.0
    %1377 = vmatpush.xpose.msra.mxu0 0.0
    %1378 = vmatpush.xpose.msra.mxu0 0.0
    %1379 = vmatpush.xpose.msra.mxu0 0.0
    %1380 = vmatpush.xpose.msra.mxu0 0.0
    %1381 = vmatpush.xpose.msra.mxu0 0.0
    %1382 = vmatpush.xpose.msra.mxu0 0.0
    %1383 = vmatpush.xpose.msra.mxu0 0.0
    %1384 = vmatpush.xpose.msra.mxu0 0.0
    %1385 = vmatpush.xpose.msra.mxu0 0.0
    %1386 = vmatpush.xpose.msra.mxu0 0.0
    %1387 = vmatpush.xpose.msra.mxu0 %v331
    %1388 = vmatpush.xpose.msra.mxu0 %v115
    %1389 = vmatmul.f32.gmra.mxu0 %v606
    %v1390 = vpop.f32.mrf.mxu0
    %v1391 = vadd.f32 %v1371, %v1390
    %1392 = vdwg.mxu0
    %1393 = vmatpush.xpose.msra.mxu0 0.0
    %1394 = vmatpush.xpose.msra.mxu0 0.0
    %1395 = vmatpush.xpose.msra.mxu0 0.0
    %1396 = vmatpush.xpose.msra.mxu0 0.0
    %1397 = vmatpush.xpose.msra.mxu0 0.0
    %1398 = vmatpush.xpose.msra.mxu0 0.0
    %1399 = vmatpush.xpose.msra.mxu0 0.0
    %1400 = vmatpush.xpose.msra.mxu0 0.0
    %1401 = vmatpush.xpose.msra.mxu0 0.0
    %1402 = vmatpush.xpose.msra.mxu0 0.0
    %1403 = vmatpush.xpose.msra.mxu0 0.0
    %1404 = vmatpush.xpose.msra.mxu0 0.0
    %1405 = vmatpush.xpose.msra.mxu0 0.0
    %1406 = vmatpush.xpose.msra.mxu0 0.0
    %1407 = vmatpush.xpose.msra.mxu0 %v332
    %1408 = vmatpush.xpose.msra.mxu0 %v116
    %1409 = vmatmul.f32.gmra.mxu0 %v609
    %v1410 = vpop.f32.mrf.mxu0
    %v1411 = vadd.f32 %v1391, %v1410
    %1412 = vdwg.mxu0
    %1413 = vmatpush.xpose.msra.mxu0 0.0
    %1414 = vmatpush.xpose.msra.mxu0 0.0
    %1415 = vmatpush.xpose.msra.mxu0 0.0
    %1416 = vmatpush.xpose.msra.mxu0 0.0
    %1417 = vmatpush.xpose.msra.mxu0 0.0
    %1418 = vmatpush.xpose.msra.mxu0 0.0
    %1419 = vmatpush.xpose.msra.mxu0 0.0
    %1420 = vmatpush.xpose.msra.mxu0 0.0
    %1421 = vmatpush.xpose.msra.mxu0 0.0
    %1422 = vmatpush.xpose.msra.mxu0 0.0
    %1423 = vmatpush.xpose.msra.mxu0 0.0
    %1424 = vmatpush.xpose.msra.mxu0 0.0
    %1425 = vmatpush.xpose.msra.mxu0 0.0
    %1426 = vmatpush.xpose.msra.mxu0 0.0
    %1427 = vmatpush.xpose.msra.mxu0 %v333
    %1428 = vmatpush.xpose.msra.mxu0 %v117
    %1429 = vmatmul.f32.gmra.mxu0 %v610
    %v1430 = vpop.f32.mrf.mxu0
    %v1431 = vadd.f32 %v1411, %v1430
    %1432 = vdwg.mxu0
    %1433 = vmatpush.xpose.msra.mxu0 0.0
    %1434 = vmatpush.xpose.msra.mxu0 0.0
    %1435 = vmatpush.xpose.msra.mxu0 0.0
    %1436 = vmatpush.xpose.msra.mxu0 0.0
    %1437 = vmatpush.xpose.msra.mxu0 0.0
    %1438 = vmatpush.xpose.msra.mxu0 0.0
    %1439 = vmatpush.xpose.msra.mxu0 0.0
    %1440 = vmatpush.xpose.msra.mxu0 0.0
    %1441 = vmatpush.xpose.msra.mxu0 0.0
    %1442 = vmatpush.xpose.msra.mxu0 0.0
    %1443 = vmatpush.xpose.msra.mxu0 0.0
    %1444 = vmatpush.xpose.msra.mxu0 0.0
    %1445 = vmatpush.xpose.msra.mxu0 0.0
    %1446 = vmatpush.xpose.msra.mxu0 0.0
    %1447 = vmatpush.xpose.msra.mxu0 %v334
    %1448 = vmatpush.xpose.msra.mxu0 %v118
    %1449 = vmatmul.f32.gmra.mxu0 %v611
    %v1450 = vpop.f32.mrf.mxu0
    %v1451 = vadd.f32 %v1431, %v1450
    %1452 = vdwg.mxu0
    %1453 = vmatpush.xpose.msra.mxu0 0.0
    %1454 = vmatpush.xpose.msra.mxu0 0.0
    %1455 = vmatpush.xpose.msra.mxu0 0.0
    %1456 = vmatpush.xpose.msra.mxu0 0.0
    %1457 = vmatpush.xpose.msra.mxu0 0.0
    %1458 = vmatpush.xpose.msra.mxu0 0.0
    %1459 = vmatpush.xpose.msra.mxu0 0.0
    %1460 = vmatpush.xpose.msra.mxu0 0.0
    %1461 = vmatpush.xpose.msra.mxu0 0.0
    %1462 = vmatpush.xpose.msra.mxu0 0.0
    %1463 = vmatpush.xpose.msra.mxu0 0.0
    %1464 = vmatpush.xpose.msra.mxu0 0.0
    %1465 = vmatpush.xpose.msra.mxu0 0.0
    %1466 = vmatpush.xpose.msra.mxu0 0.0
    %1467 = vmatpush.xpose.msra.mxu0 %v335
    %1468 = vmatpush.xpose.msra.mxu0 %v119
    %1469 = vmatmul.f32.gmra.mxu0 %v612
    %v1470 = vpop.f32.mrf.mxu0
    %v1471 = vadd.f32 %v1451, %v1470
    %1472 = vdwg.mxu0
    %1473 = vmatpush.xpose.msra.mxu0 0.0
    %1474 = vmatpush.xpose.msra.mxu0 0.0
    %1475 = vmatpush.xpose.msra.mxu0 0.0
    %1476 = vmatpush.xpose.msra.mxu0 0.0
    %1477 = vmatpush.xpose.msra.mxu0 0.0
    %1478 = vmatpush.xpose.msra.mxu0 0.0
    %1479 = vmatpush.xpose.msra.mxu0 0.0
    %1480 = vmatpush.xpose.msra.mxu0 0.0
    %1481 = vmatpush.xpose.msra.mxu0 0.0
    %1482 = vmatpush.xpose.msra.mxu0 0.0
    %1483 = vmatpush.xpose.msra.mxu0 0.0
    %1484 = vmatpush.xpose.msra.mxu0 0.0
    %1485 = vmatpush.xpose.msra.mxu0 0.0
    %1486 = vmatpush.xpose.msra.mxu0 0.0
    %1487 = vmatpush.xpose.msra.mxu0 %v336
    %1488 = vmatpush.xpose.msra.mxu0 %v120
    %1489 = vmatmul.f32.gmra.mxu0 %v613
    %v1490 = vpop.f32.mrf.mxu0
    %v1491 = vadd.f32 %v1471, %v1490
    %1492 = vdwg.mxu0
    %1493 = vmatpush.xpose.msra.mxu0 0.0
    %1494 = vmatpush.xpose.msra.mxu0 0.0
    %1495 = vmatpush.xpose.msra.mxu0 0.0
    %1496 = vmatpush.xpose.msra.mxu0 0.0
    %1497 = vmatpush.xpose.msra.mxu0 0.0
    %1498 = vmatpush.xpose.msra.mxu0 0.0
    %1499 = vmatpush.xpose.msra.mxu0 0.0
    %1500 = vmatpush.xpose.msra.mxu0 0.0
    %1501 = vmatpush.xpose.msra.mxu0 0.0
    %1502 = vmatpush.xpose.msra.mxu0 0.0
    %1503 = vmatpush.xpose.msra.mxu0 0.0
    %1504 = vmatpush.xpose.msra.mxu0 0.0
    %1505 = vmatpush.xpose.msra.mxu0 0.0
    %1506 = vmatpush.xpose.msra.mxu0 0.0
    %1507 = vmatpush.xpose.msra.mxu0 %v337
    %1508 = vmatpush.xpose.msra.mxu0 %v121
    %1509 = vmatmul.f32.gmra.mxu0 %v614
    %v1510 = vpop.f32.mrf.mxu0
    %v1511 = vadd.f32 %v1491, %v1510
    %1512 = vdwg.mxu0
    %1513 = vmatpush.xpose.msra.mxu0 0.0
    %1514 = vmatpush.xpose.msra.mxu0 0.0
    %1515 = vmatpush.xpose.msra.mxu0 0.0
    %1516 = vmatpush.xpose.msra.mxu0 0.0
    %1517 = vmatpush.xpose.msra.mxu0 0.0
    %1518 = vmatpush.xpose.msra.mxu0 0.0
    %1519 = vmatpush.xpose.msra.mxu0 0.0
    %1520 = vmatpush.xpose.msra.mxu0 0.0
    %1521 = vmatpush.xpose.msra.mxu0 0.0
    %1522 = vmatpush.xpose.msra.mxu0 0.0
    %1523 = vmatpush.xpose.msra.mxu0 0.0
    %1524 = vmatpush.xpose.msra.mxu0 0.0
    %1525 = vmatpush.xpose.msra.mxu0 0.0
    %1526 = vmatpush.xpose.msra.mxu0 0.0
    %1527 = vmatpush.xpose.msra.mxu0 %v338
    %1528 = vmatpush.xpose.msra.mxu0 %v122
    %1529 = vmatmul.f32.gmra.mxu0 %v615
    %v1530 = vpop.f32.mrf.mxu0
    %v1531 = vadd.f32 %v1511, %v1530
    %1532 = vdwg.mxu0
    %1533 = vmatpush.xpose.msra.mxu0 0.0
    %1534 = vmatpush.xpose.msra.mxu0 0.0
    %1535 = vmatpush.xpose.msra.mxu0 0.0
    %1536 = vmatpush.xpose.msra.mxu0 0.0
    %1537 = vmatpush.xpose.msra.mxu0 0.0
    %1538 = vmatpush.xpose.msra.mxu0 0.0
    %1539 = vmatpush.xpose.msra.mxu0 0.0
    %1540 = vmatpush.xpose.msra.mxu0 0.0
    %1541 = vmatpush.xpose.msra.mxu0 0.0
    %1542 = vmatpush.xpose.msra.mxu0 0.0
    %1543 = vmatpush.xpose.msra.mxu0 0.0
    %1544 = vmatpush.xpose.msra.mxu0 0.0
    %1545 = vmatpush.xpose.msra.mxu0 0.0
    %1546 = vmatpush.xpose.msra.mxu0 0.0
    %1547 = vmatpush.xpose.msra.mxu0 %v339
    %1548 = vmatpush.xpose.msra.mxu0 %v123
    %1549 = vmatmul.f32.gmra.mxu0 %v616
    %v1550 = vpop.f32.mrf.mxu0
    %v1551 = vadd.f32 %v1531, %v1550
    %1552 = vdwg.mxu0
    %1553 = vmatpush.xpose.msra.mxu0 0.0
    %1554 = vmatpush.xpose.msra.mxu0 0.0
    %1555 = vmatpush.xpose.msra.mxu0 0.0
    %1556 = vmatpush.xpose.msra.mxu0 0.0
    %1557 = vmatpush.xpose.msra.mxu0 0.0
    %1558 = vmatpush.xpose.msra.mxu0 0.0
    %1559 = vmatpush.xpose.msra.mxu0 0.0
    %1560 = vmatpush.xpose.msra.mxu0 0.0
    %1561 = vmatpush.xpose.msra.mxu0 0.0
    %1562 = vmatpush.xpose.msra.mxu0 0.0
    %1563 = vmatpush.xpose.msra.mxu0 0.0
    %1564 = vmatpush.xpose.msra.mxu0 0.0
    %1565 = vmatpush.xpose.msra.mxu0 0.0
    %1566 = vmatpush.xpose.msra.mxu0 0.0
    %1567 = vmatpush.xpose.msra.mxu0 %v340
    %1568 = vmatpush.xpose.msra.mxu0 %v124
    %1569 = vmatmul.f32.gmra.mxu0 %v619
    %v1570 = vpop.f32.mrf.mxu0
    %v1571 = vadd.f32 %v1551, %v1570
    %1572 = vdwg.mxu0
    %1573 = vmatpush.xpose.msra.mxu0 0.0
    %1574 = vmatpush.xpose.msra.mxu0 0.0
    %1575 = vmatpush.xpose.msra.mxu0 0.0
    %1576 = vmatpush.xpose.msra.mxu0 0.0
    %1577 = vmatpush.xpose.msra.mxu0 0.0
    %1578 = vmatpush.xpose.msra.mxu0 0.0
    %1579 = vmatpush.xpose.msra.mxu0 0.0
    %1580 = vmatpush.xpose.msra.mxu0 0.0
    %1581 = vmatpush.xpose.msra.mxu0 0.0
    %1582 = vmatpush.xpose.msra.mxu0 0.0
    %1583 = vmatpush.xpose.msra.mxu0 0.0
    %1584 = vmatpush.xpose.msra.mxu0 0.0
    %1585 = vmatpush.xpose.msra.mxu0 0.0
    %1586 = vmatpush.xpose.msra.mxu0 0.0
    %1587 = vmatpush.xpose.msra.mxu0 %v341
    %1588 = vmatpush.xpose.msra.mxu0 %v125
    %1589 = vmatmul.f32.gmra.mxu0 %v620
    %v1590 = vpop.f32.mrf.mxu0
    %v1591 = vadd.f32 %v1571, %v1590
    %1592 = vdwg.mxu0
    %1593 = vmatpush.xpose.msra.mxu0 0.0
    %1594 = vmatpush.xpose.msra.mxu0 0.0
    %1595 = vmatpush.xpose.msra.mxu0 0.0
    %1596 = vmatpush.xpose.msra.mxu0 0.0
    %1597 = vmatpush.xpose.msra.mxu0 0.0
    %1598 = vmatpush.xpose.msra.mxu0 0.0
    %1599 = vmatpush.xpose.msra.mxu0 0.0
    %1600 = vmatpush.xpose.msra.mxu0 0.0
    %1601 = vmatpush.xpose.msra.mxu0 0.0
    %1602 = vmatpush.xpose.msra.mxu0 0.0
    %1603 = vmatpush.xpose.msra.mxu0 0.0
    %1604 = vmatpush.xpose.msra.mxu0 0.0
    %1605 = vmatpush.xpose.msra.mxu0 0.0
    %1606 = vmatpush.xpose.msra.mxu0 0.0
    %1607 = vmatpush.xpose.msra.mxu0 %v342
    %1608 = vmatpush.xpose.msra.mxu0 %v126
    %1609 = vmatmul.f32.gmra.mxu0 %v621
    %v1610 = vpop.f32.mrf.mxu0
    %v1611 = vadd.f32 %v1591, %v1610
    %1612 = vdwg.mxu0
    %1613 = vmatpush.xpose.msra.mxu0 0.0
    %1614 = vmatpush.xpose.msra.mxu0 0.0
    %1615 = vmatpush.xpose.msra.mxu0 0.0
    %1616 = vmatpush.xpose.msra.mxu0 0.0
    %1617 = vmatpush.xpose.msra.mxu0 0.0
    %1618 = vmatpush.xpose.msra.mxu0 0.0
    %1619 = vmatpush.xpose.msra.mxu0 0.0
    %1620 = vmatpush.xpose.msra.mxu0 0.0
    %1621 = vmatpush.xpose.msra.mxu0 0.0
    %1622 = vmatpush.xpose.msra.mxu0 0.0
    %1623 = vmatpush.xpose.msra.mxu0 0.0
    %1624 = vmatpush.xpose.msra.mxu0 0.0
    %1625 = vmatpush.xpose.msra.mxu0 0.0
    %1626 = vmatpush.xpose.msra.mxu0 0.0
    %1627 = vmatpush.xpose.msra.mxu0 %v343
    %1628 = vmatpush.xpose.msra.mxu0 %v127
    %1629 = vmatmul.f32.gmra.mxu0 %v622
    %v1630 = vpop.f32.mrf.mxu0
    %v1631 = vadd.f32 %v1611, %v1630
    %1632 = vdwg.mxu0
    %1633 = vmatpush.xpose.msra.mxu0 0.0
    %1634 = vmatpush.xpose.msra.mxu0 0.0
    %1635 = vmatpush.xpose.msra.mxu0 0.0
    %1636 = vmatpush.xpose.msra.mxu0 0.0
    %1637 = vmatpush.xpose.msra.mxu0 0.0
    %1638 = vmatpush.xpose.msra.mxu0 0.0
    %1639 = vmatpush.xpose.msra.mxu0 0.0
    %1640 = vmatpush.xpose.msra.mxu0 0.0
    %1641 = vmatpush.xpose.msra.mxu0 0.0
    %1642 = vmatpush.xpose.msra.mxu0 0.0
    %1643 = vmatpush.xpose.msra.mxu0 0.0
    %1644 = vmatpush.xpose.msra.mxu0 0.0
    %1645 = vmatpush.xpose.msra.mxu0 0.0
    %1646 = vmatpush.xpose.msra.mxu0 0.0
    %1647 = vmatpush.xpose.msra.mxu0 %v344
    %1648 = vmatpush.xpose.msra.mxu0 %v128
    %1649 = vmatmul.f32.gmra.mxu0 %v623
    %v1650 = vpop.f32.mrf.mxu0
    %v1651 = vadd.f32 %v1631, %v1650
    %1652 = vdwg.mxu0
    %1653 = vmatpush.xpose.msra.mxu0 0.0
    %1654 = vmatpush.xpose.msra.mxu0 0.0
    %1655 = vmatpush.xpose.msra.mxu0 0.0
    %1656 = vmatpush.xpose.msra.mxu0 0.0
    %1657 = vmatpush.xpose.msra.mxu0 0.0
    %1658 = vmatpush.xpose.msra.mxu0 0.0
    %1659 = vmatpush.xpose.msra.mxu0 0.0
    %1660 = vmatpush.xpose.msra.mxu0 0.0
    %1661 = vmatpush.xpose.msra.mxu0 0.0
    %1662 = vmatpush.xpose.msra.mxu0 0.0
    %1663 = vmatpush.xpose.msra.mxu0 0.0
    %1664 = vmatpush.xpose.msra.mxu0 0.0
    %1665 = vmatpush.xpose.msra.mxu0 0.0
    %1666 = vmatpush.xpose.msra.mxu0 0.0
    %1667 = vmatpush.xpose.msra.mxu0 %v345
    %1668 = vmatpush.xpose.msra.mxu0 %v129
    %1669 = vmatmul.f32.gmra.mxu0 %v624
    %v1670 = vpop.f32.mrf.mxu0
    %v1671 = vadd.f32 %v1651, %v1670
    %1672 = vdwg.mxu0
    %1673 = vmatpush.xpose.msra.mxu0 0.0
    %1674 = vmatpush.xpose.msra.mxu0 0.0
    %1675 = vmatpush.xpose.msra.mxu0 0.0
    %1676 = vmatpush.xpose.msra.mxu0 0.0
    %1677 = vmatpush.xpose.msra.mxu0 0.0
    %1678 = vmatpush.xpose.msra.mxu0 0.0
    %1679 = vmatpush.xpose.msra.mxu0 0.0
    %1680 = vmatpush.xpose.msra.mxu0 0.0
    %1681 = vmatpush.xpose.msra.mxu0 0.0
    %1682 = vmatpush.xpose.msra.mxu0 0.0
    %1683 = vmatpush.xpose.msra.mxu0 0.0
    %1684 = vmatpush.xpose.msra.mxu0 0.0
    %1685 = vmatpush.xpose.msra.mxu0 0.0
    %1686 = vmatpush.xpose.msra.mxu0 0.0
    %1687 = vmatpush.xpose.msra.mxu0 %v346
    %1688 = vmatpush.xpose.msra.mxu0 %v130
    %1689 = vmatmul.f32.gmra.mxu0 %v625
    %v1690 = vpop.f32.mrf.mxu0
    %v1691 = vadd.f32 %v1671, %v1690
    %1692 = vdwg.mxu0
    %1693 = vmatpush.xpose.msra.mxu0 0.0
    %1694 = vmatpush.xpose.msra.mxu0 0.0
    %1695 = vmatpush.xpose.msra.mxu0 0.0
    %1696 = vmatpush.xpose.msra.mxu0 0.0
    %1697 = vmatpush.xpose.msra.mxu0 0.0
    %1698 = vmatpush.xpose.msra.mxu0 0.0
    %1699 = vmatpush.xpose.msra.mxu0 0.0
    %1700 = vmatpush.xpose.msra.mxu0 0.0
    %1701 = vmatpush.xpose.msra.mxu0 0.0
    %1702 = vmatpush.xpose.msra.mxu0 0.0
    %1703 = vmatpush.xpose.msra.mxu0 0.0
    %1704 = vmatpush.xpose.msra.mxu0 0.0
    %1705 = vmatpush.xpose.msra.mxu0 0.0
    %1706 = vmatpush.xpose.msra.mxu0 0.0
    %1707 = vmatpush.xpose.msra.mxu0 %v347
    %1708 = vmatpush.xpose.msra.mxu0 %v131
    %1709 = vmatmul.f32.gmra.mxu0 %v626
    %v1710 = vpop.f32.mrf.mxu0
    %v1711 = vadd.f32 %v1691, %v1710
    %1712 = vdwg.mxu0
    %1713 = vmatpush.xpose.msra.mxu0 0.0
    %1714 = vmatpush.xpose.msra.mxu0 0.0
    %1715 = vmatpush.xpose.msra.mxu0 0.0
    %1716 = vmatpush.xpose.msra.mxu0 0.0
    %1717 = vmatpush.xpose.msra.mxu0 0.0
    %1718 = vmatpush.xpose.msra.mxu0 0.0
    %1719 = vmatpush.xpose.msra.mxu0 0.0
    %1720 = vmatpush.xpose.msra.mxu0 0.0
    %1721 = vmatpush.xpose.msra.mxu0 0.0
    %1722 = vmatpush.xpose.msra.mxu0 0.0
    %1723 = vmatpush.xpose.msra.mxu0 0.0
    %1724 = vmatpush.xpose.msra.mxu0 0.0
    %1725 = vmatpush.xpose.msra.mxu0 0.0
    %1726 = vmatpush.xpose.msra.mxu0 0.0
    %1727 = vmatpush.xpose.msra.mxu0 %v348
    %1728 = vmatpush.xpose.msra.mxu0 %v132
    %1729 = vmatmul.f32.gmra.mxu0 %v629
    %v1730 = vpop.f32.mrf.mxu0
    %v1731 = vadd.f32 %v1711, %v1730
    %1732 = vdwg.mxu0
    %1733 = vmatpush.xpose.msra.mxu0 0.0
    %1734 = vmatpush.xpose.msra.mxu0 0.0
    %1735 = vmatpush.xpose.msra.mxu0 0.0
    %1736 = vmatpush.xpose.msra.mxu0 0.0
    %1737 = vmatpush.xpose.msra.mxu0 0.0
    %1738 = vmatpush.xpose.msra.mxu0 0.0
    %1739 = vmatpush.xpose.msra.mxu0 0.0
    %1740 = vmatpush.xpose.msra.mxu0 0.0
    %1741 = vmatpush.xpose.msra.mxu0 0.0
    %1742 = vmatpush.xpose.msra.mxu0 0.0
    %1743 = vmatpush.xpose.msra.mxu0 0.0
    %1744 = vmatpush.xpose.msra.mxu0 0.0
    %1745 = vmatpush.xpose.msra.mxu0 0.0
    %1746 = vmatpush.xpose.msra.mxu0 0.0
    %1747 = vmatpush.xpose.msra.mxu0 %v349
    %1748 = vmatpush.xpose.msra.mxu0 %v133
    %1749 = vmatmul.f32.gmra.mxu0 %v630
    %v1750 = vpop.f32.mrf.mxu0
    %v1751 = vadd.f32 %v1731, %v1750
    %1752 = vdwg.mxu0
    %1753 = vmatpush.xpose.msra.mxu0 0.0
    %1754 = vmatpush.xpose.msra.mxu0 0.0
    %1755 = vmatpush.xpose.msra.mxu0 0.0
    %1756 = vmatpush.xpose.msra.mxu0 0.0
    %1757 = vmatpush.xpose.msra.mxu0 0.0
    %1758 = vmatpush.xpose.msra.mxu0 0.0
    %1759 = vmatpush.xpose.msra.mxu0 0.0
    %1760 = vmatpush.xpose.msra.mxu0 0.0
    %1761 = vmatpush.xpose.msra.mxu0 0.0
    %1762 = vmatpush.xpose.msra.mxu0 0.0
    %1763 = vmatpush.xpose.msra.mxu0 0.0
    %1764 = vmatpush.xpose.msra.mxu0 0.0
    %1765 = vmatpush.xpose.msra.mxu0 0.0
    %1766 = vmatpush.xpose.msra.mxu0 0.0
    %1767 = vmatpush.xpose.msra.mxu0 %v350
    %1768 = vmatpush.xpose.msra.mxu0 %v134
    %1769 = vmatmul.f32.gmra.mxu0 %v631
    %v1770 = vpop.f32.mrf.mxu0
    %v1771 = vadd.f32 %v1751, %v1770
    %1772 = vdwg.mxu0
    %1773 = vmatpush.xpose.msra.mxu0 0.0
    %1774 = vmatpush.xpose.msra.mxu0 0.0
    %1775 = vmatpush.xpose.msra.mxu0 0.0
    %1776 = vmatpush.xpose.msra.mxu0 0.0
    %1777 = vmatpush.xpose.msra.mxu0 0.0
    %1778 = vmatpush.xpose.msra.mxu0 0.0
    %1779 = vmatpush.xpose.msra.mxu0 0.0
    %1780 = vmatpush.xpose.msra.mxu0 0.0
    %1781 = vmatpush.xpose.msra.mxu0 0.0
    %1782 = vmatpush.xpose.msra.mxu0 0.0
    %1783 = vmatpush.xpose.msra.mxu0 0.0
    %1784 = vmatpush.xpose.msra.mxu0 0.0
    %1785 = vmatpush.xpose.msra.mxu0 0.0
    %1786 = vmatpush.xpose.msra.mxu0 0.0
    %1787 = vmatpush.xpose.msra.mxu0 %v351
    %1788 = vmatpush.xpose.msra.mxu0 %v135
    %1789 = vmatmul.f32.gmra.mxu0 %v632
    %v1790 = vpop.f32.mrf.mxu0
    %v1791 = vadd.f32 %v1771, %v1790
    %1792 = vdwg.mxu0
    %1793 = vmatpush.xpose.msra.mxu0 0.0
    %1794 = vmatpush.xpose.msra.mxu0 0.0
    %1795 = vmatpush.xpose.msra.mxu0 0.0
    %1796 = vmatpush.xpose.msra.mxu0 0.0
    %1797 = vmatpush.xpose.msra.mxu0 0.0
    %1798 = vmatpush.xpose.msra.mxu0 0.0
    %1799 = vmatpush.xpose.msra.mxu0 0.0
    %1800 = vmatpush.xpose.msra.mxu0 0.0
    %1801 = vmatpush.xpose.msra.mxu0 0.0
    %1802 = vmatpush.xpose.msra.mxu0 0.0
    %1803 = vmatpush.xpose.msra.mxu0 0.0
    %1804 = vmatpush.xpose.msra.mxu0 0.0
    %1805 = vmatpush.xpose.msra.mxu0 0.0
    %1806 = vmatpush.xpose.msra.mxu0 0.0
    %1807 = vmatpush.xpose.msra.mxu0 %v352
    %1808 = vmatpush.xpose.msra.mxu0 %v136
    %1809 = vmatmul.f32.gmra.mxu0 %v633
    %v1810 = vpop.f32.mrf.mxu0
    %v1811 = vadd.f32 %v1791, %v1810
    %1812 = vdwg.mxu0
    %1813 = vmatpush.xpose.msra.mxu0 0.0
    %1814 = vmatpush.xpose.msra.mxu0 0.0
    %1815 = vmatpush.xpose.msra.mxu0 0.0
    %1816 = vmatpush.xpose.msra.mxu0 0.0
    %1817 = vmatpush.xpose.msra.mxu0 0.0
    %1818 = vmatpush.xpose.msra.mxu0 0.0
    %1819 = vmatpush.xpose.msra.mxu0 0.0
    %1820 = vmatpush.xpose.msra.mxu0 0.0
    %1821 = vmatpush.xpose.msra.mxu0 0.0
    %1822 = vmatpush.xpose.msra.mxu0 0.0
    %1823 = vmatpush.xpose.msra.mxu0 0.0
    %1824 = vmatpush.xpose.msra.mxu0 0.0
    %1825 = vmatpush.xpose.msra.mxu0 0.0
    %1826 = vmatpush.xpose.msra.mxu0 0.0
    %1827 = vmatpush.xpose.msra.mxu0 %v353
    %1828 = vmatpush.xpose.msra.mxu0 %v137
    %1829 = vmatmul.f32.gmra.mxu0 %v634
    %v1830 = vpop.f32.mrf.mxu0
    %v1831 = vadd.f32 %v1811, %v1830
    %1832 = vdwg.mxu0
    %1833 = vmatpush.xpose.msra.mxu0 0.0
    %1834 = vmatpush.xpose.msra.mxu0 0.0
    %1835 = vmatpush.xpose.msra.mxu0 0.0
    %1836 = vmatpush.xpose.msra.mxu0 0.0
    %1837 = vmatpush.xpose.msra.mxu0 0.0
    %1838 = vmatpush.xpose.msra.mxu0 0.0
    %1839 = vmatpush.xpose.msra.mxu0 0.0
    %1840 = vmatpush.xpose.msra.mxu0 0.0
    %1841 = vmatpush.xpose.msra.mxu0 0.0
    %1842 = vmatpush.xpose.msra.mxu0 0.0
    %1843 = vmatpush.xpose.msra.mxu0 0.0
    %1844 = vmatpush.xpose.msra.mxu0 0.0
    %1845 = vmatpush.xpose.msra.mxu0 0.0
    %1846 = vmatpush.xpose.msra.mxu0 0.0
    %1847 = vmatpush.xpose.msra.mxu0 %v354
    %1848 = vmatpush.xpose.msra.mxu0 %v138
    %1849 = vmatmul.f32.gmra.mxu0 %v635
    %v1850 = vpop.f32.mrf.mxu0
    %v1851 = vadd.f32 %v1831, %v1850
    %1852 = vdwg.mxu0
    %1853 = vmatpush.xpose.msra.mxu0 0.0
    %1854 = vmatpush.xpose.msra.mxu0 0.0
    %1855 = vmatpush.xpose.msra.mxu0 0.0
    %1856 = vmatpush.xpose.msra.mxu0 0.0
    %1857 = vmatpush.xpose.msra.mxu0 0.0
    %1858 = vmatpush.xpose.msra.mxu0 0.0
    %1859 = vmatpush.xpose.msra.mxu0 0.0
    %1860 = vmatpush.xpose.msra.mxu0 0.0
    %1861 = vmatpush.xpose.msra.mxu0 0.0
    %1862 = vmatpush.xpose.msra.mxu0 0.0
    %1863 = vmatpush.xpose.msra.mxu0 0.0
    %1864 = vmatpush.xpose.msra.mxu0 0.0
    %1865 = vmatpush.xpose.msra.mxu0 0.0
    %1866 = vmatpush.xpose.msra.mxu0 0.0
    %1867 = vmatpush.xpose.msra.mxu0 %v355
    %1868 = vmatpush.xpose.msra.mxu0 %v139
    %1869 = vmatmul.f32.gmra.mxu0 %v636
    %v1870 = vpop.f32.mrf.mxu0
    %v1871 = vadd.f32 %v1851, %v1870
    %1872 = vdwg.mxu0
    %1873 = vmatpush.xpose.msra.mxu0 0.0
    %1874 = vmatpush.xpose.msra.mxu0 0.0
    %1875 = vmatpush.xpose.msra.mxu0 0.0
    %1876 = vmatpush.xpose.msra.mxu0 0.0
    %1877 = vmatpush.xpose.msra.mxu0 0.0
    %1878 = vmatpush.xpose.msra.mxu0 0.0
    %1879 = vmatpush.xpose.msra.mxu0 0.0
    %1880 = vmatpush.xpose.msra.mxu0 0.0
    %1881 = vmatpush.xpose.msra.mxu0 0.0
    %1882 = vmatpush.xpose.msra.mxu0 0.0
    %1883 = vmatpush.xpose.msra.mxu0 0.0
    %1884 = vmatpush.xpose.msra.mxu0 0.0
    %1885 = vmatpush.xpose.msra.mxu0 0.0
    %1886 = vmatpush.xpose.msra.mxu0 0.0
    %1887 = vmatpush.xpose.msra.mxu0 %v356
    %1888 = vmatpush.xpose.msra.mxu0 %v140
    %1889 = vmatmul.f32.gmra.mxu0 %v639
    %v1890 = vpop.f32.mrf.mxu0
    %v1891 = vadd.f32 %v1871, %v1890
    %1892 = vdwg.mxu0
    %1893 = vmatpush.xpose.msra.mxu0 0.0
    %1894 = vmatpush.xpose.msra.mxu0 0.0
    %1895 = vmatpush.xpose.msra.mxu0 0.0
    %1896 = vmatpush.xpose.msra.mxu0 0.0
    %1897 = vmatpush.xpose.msra.mxu0 0.0
    %1898 = vmatpush.xpose.msra.mxu0 0.0
    %1899 = vmatpush.xpose.msra.mxu0 0.0
    %1900 = vmatpush.xpose.msra.mxu0 0.0
    %1901 = vmatpush.xpose.msra.mxu0 0.0
    %1902 = vmatpush.xpose.msra.mxu0 0.0
    %1903 = vmatpush.xpose.msra.mxu0 0.0
    %1904 = vmatpush.xpose.msra.mxu0 0.0
    %1905 = vmatpush.xpose.msra.mxu0 0.0
    %1906 = vmatpush.xpose.msra.mxu0 0.0
    %1907 = vmatpush.xpose.msra.mxu0 %v357
    %1908 = vmatpush.xpose.msra.mxu0 %v141
    %1909 = vmatmul.f32.gmra.mxu0 %v640
    %v1910 = vpop.f32.mrf.mxu0
    %v1911 = vadd.f32 %v1891, %v1910
    %1912 = vdwg.mxu0
    %1913 = vmatpush.xpose.msra.mxu0 0.0
    %1914 = vmatpush.xpose.msra.mxu0 0.0
    %1915 = vmatpush.xpose.msra.mxu0 0.0
    %1916 = vmatpush.xpose.msra.mxu0 0.0
    %1917 = vmatpush.xpose.msra.mxu0 0.0
    %1918 = vmatpush.xpose.msra.mxu0 0.0
    %1919 = vmatpush.xpose.msra.mxu0 0.0
    %1920 = vmatpush.xpose.msra.mxu0 0.0
    %1921 = vmatpush.xpose.msra.mxu0 0.0
    %1922 = vmatpush.xpose.msra.mxu0 0.0
    %1923 = vmatpush.xpose.msra.mxu0 0.0
    %1924 = vmatpush.xpose.msra.mxu0 0.0
    %1925 = vmatpush.xpose.msra.mxu0 0.0
    %1926 = vmatpush.xpose.msra.mxu0 0.0
    %1927 = vmatpush.xpose.msra.mxu0 %v358
    %1928 = vmatpush.xpose.msra.mxu0 %v142
    %1929 = vmatmul.f32.gmra.mxu0 %v641
    %v1930 = vpop.f32.mrf.mxu0
    %v1931 = vadd.f32 %v1911, %v1930
    %1932 = vdwg.mxu0
    %1933 = vmatpush.xpose.msra.mxu0 0.0
    %1934 = vmatpush.xpose.msra.mxu0 0.0
    %1935 = vmatpush.xpose.msra.mxu0 0.0
    %1936 = vmatpush.xpose.msra.mxu0 0.0
    %1937 = vmatpush.xpose.msra.mxu0 0.0
    %1938 = vmatpush.xpose.msra.mxu0 0.0
    %1939 = vmatpush.xpose.msra.mxu0 0.0
    %1940 = vmatpush.xpose.msra.mxu0 0.0
    %1941 = vmatpush.xpose.msra.mxu0 0.0
    %1942 = vmatpush.xpose.msra.mxu0 0.0
    %1943 = vmatpush.xpose.msra.mxu0 0.0
    %1944 = vmatpush.xpose.msra.mxu0 0.0
    %1945 = vmatpush.xpose.msra.mxu0 0.0
    %1946 = vmatpush.xpose.msra.mxu0 0.0
    %1947 = vmatpush.xpose.msra.mxu0 %v359
    %1948 = vmatpush.xpose.msra.mxu0 %v143
    %1949 = vmatmul.f32.gmra.mxu0 %v642
    %v1950 = vpop.f32.mrf.mxu0
    %v1951 = vadd.f32 %v1931, %v1950
    %1952 = vdwg.mxu0
    %1953 = vmatpush.xpose.msra.mxu0 0.0
    %1954 = vmatpush.xpose.msra.mxu0 0.0
    %1955 = vmatpush.xpose.msra.mxu0 0.0
    %1956 = vmatpush.xpose.msra.mxu0 0.0
    %1957 = vmatpush.xpose.msra.mxu0 0.0
    %1958 = vmatpush.xpose.msra.mxu0 0.0
    %1959 = vmatpush.xpose.msra.mxu0 0.0
    %1960 = vmatpush.xpose.msra.mxu0 0.0
    %1961 = vmatpush.xpose.msra.mxu0 0.0
    %1962 = vmatpush.xpose.msra.mxu0 0.0
    %1963 = vmatpush.xpose.msra.mxu0 0.0
    %1964 = vmatpush.xpose.msra.mxu0 0.0
    %1965 = vmatpush.xpose.msra.mxu0 0.0
    %1966 = vmatpush.xpose.msra.mxu0 0.0
    %1967 = vmatpush.xpose.msra.mxu0 %v360
    %1968 = vmatpush.xpose.msra.mxu0 %v144
    %1969 = vmatmul.f32.gmra.mxu0 %v643
    %v1970 = vpop.f32.mrf.mxu0
    %v1971 = vadd.f32 %v1951, %v1970
    %1972 = vdwg.mxu0
    %1973 = vmatpush.xpose.msra.mxu0 0.0
    %1974 = vmatpush.xpose.msra.mxu0 0.0
    %1975 = vmatpush.xpose.msra.mxu0 0.0
    %1976 = vmatpush.xpose.msra.mxu0 0.0
    %1977 = vmatpush.xpose.msra.mxu0 0.0
    %1978 = vmatpush.xpose.msra.mxu0 0.0
    %1979 = vmatpush.xpose.msra.mxu0 0.0
    %1980 = vmatpush.xpose.msra.mxu0 0.0
    %1981 = vmatpush.xpose.msra.mxu0 0.0
    %1982 = vmatpush.xpose.msra.mxu0 0.0
    %1983 = vmatpush.xpose.msra.mxu0 0.0
    %1984 = vmatpush.xpose.msra.mxu0 0.0
    %1985 = vmatpush.xpose.msra.mxu0 0.0
    %1986 = vmatpush.xpose.msra.mxu0 0.0
    %1987 = vmatpush.xpose.msra.mxu0 %v361
    %1988 = vmatpush.xpose.msra.mxu0 %v145
    %1989 = vmatmul.f32.gmra.mxu0 %v644
    %v1990 = vpop.f32.mrf.mxu0
    %v1991 = vadd.f32 %v1971, %v1990
    %1992 = vdwg.mxu0
    %1993 = vmatpush.xpose.msra.mxu0 0.0
    %1994 = vmatpush.xpose.msra.mxu0 0.0
    %1995 = vmatpush.xpose.msra.mxu0 0.0
    %1996 = vmatpush.xpose.msra.mxu0 0.0
    %1997 = vmatpush.xpose.msra.mxu0 0.0
    %1998 = vmatpush.xpose.msra.mxu0 0.0
    %1999 = vmatpush.xpose.msra.mxu0 0.0
    %2000 = vmatpush.xpose.msra.mxu0 0.0
    %2001 = vmatpush.xpose.msra.mxu0 0.0
    %2002 = vmatpush.xpose.msra.mxu0 0.0
    %2003 = vmatpush.xpose.msra.mxu0 0.0
    %2004 = vmatpush.xpose.msra.mxu0 0.0
    %2005 = vmatpush.xpose.msra.mxu0 0.0
    %2006 = vmatpush.xpose.msra.mxu0 0.0
    %2007 = vmatpush.xpose.msra.mxu0 %v362
    %2008 = vmatpush.xpose.msra.mxu0 %v146
    %2009 = vmatmul.f32.gmra.mxu0 %v645
    %v2010 = vpop.f32.mrf.mxu0
    %v2011 = vadd.f32 %v1991, %v2010
    %2012 = vdwg.mxu0
    %2013 = vmatpush.xpose.msra.mxu0 0.0
    %2014 = vmatpush.xpose.msra.mxu0 0.0
    %2015 = vmatpush.xpose.msra.mxu0 0.0
    %2016 = vmatpush.xpose.msra.mxu0 0.0
    %2017 = vmatpush.xpose.msra.mxu0 0.0
    %2018 = vmatpush.xpose.msra.mxu0 0.0
    %2019 = vmatpush.xpose.msra.mxu0 0.0
    %2020 = vmatpush.xpose.msra.mxu0 0.0
    %2021 = vmatpush.xpose.msra.mxu0 0.0
    %2022 = vmatpush.xpose.msra.mxu0 0.0
    %2023 = vmatpush.xpose.msra.mxu0 0.0
    %2024 = vmatpush.xpose.msra.mxu0 0.0
    %2025 = vmatpush.xpose.msra.mxu0 0.0
    %2026 = vmatpush.xpose.msra.mxu0 0.0
    %2027 = vmatpush.xpose.msra.mxu0 %v363
    %2028 = vmatpush.xpose.msra.mxu0 %v147
    %2029 = vmatmul.f32.gmra.mxu0 %v646
    %v2030 = vpop.f32.mrf.mxu0
    %v2031 = vadd.f32 %v2011, %v2030
    %2032 = vdwg.mxu0
    %2033 = vmatpush.xpose.msra.mxu0 0.0
    %2034 = vmatpush.xpose.msra.mxu0 0.0
    %2035 = vmatpush.xpose.msra.mxu0 0.0
    %2036 = vmatpush.xpose.msra.mxu0 0.0
    %2037 = vmatpush.xpose.msra.mxu0 0.0
    %2038 = vmatpush.xpose.msra.mxu0 0.0
    %2039 = vmatpush.xpose.msra.mxu0 0.0
    %2040 = vmatpush.xpose.msra.mxu0 0.0
    %2041 = vmatpush.xpose.msra.mxu0 0.0
    %2042 = vmatpush.xpose.msra.mxu0 0.0
    %2043 = vmatpush.xpose.msra.mxu0 0.0
    %2044 = vmatpush.xpose.msra.mxu0 0.0
    %2045 = vmatpush.xpose.msra.mxu0 0.0
    %2046 = vmatpush.xpose.msra.mxu0 0.0
    %2047 = vmatpush.xpose.msra.mxu0 %v364
    %2048 = vmatpush.xpose.msra.mxu0 %v148
    %2049 = vmatmul.f32.gmra.mxu0 %v649
    %v2050 = vpop.f32.mrf.mxu0
    %v2051 = vadd.f32 %v2031, %v2050
    %2052 = vdwg.mxu0
    %2053 = vmatpush.xpose.msra.mxu0 0.0
    %2054 = vmatpush.xpose.msra.mxu0 0.0
    %2055 = vmatpush.xpose.msra.mxu0 0.0
    %2056 = vmatpush.xpose.msra.mxu0 0.0
    %2057 = vmatpush.xpose.msra.mxu0 0.0
    %2058 = vmatpush.xpose.msra.mxu0 0.0
    %2059 = vmatpush.xpose.msra.mxu0 0.0
    %2060 = vmatpush.xpose.msra.mxu0 0.0
    %2061 = vmatpush.xpose.msra.mxu0 0.0
    %2062 = vmatpush.xpose.msra.mxu0 0.0
    %2063 = vmatpush.xpose.msra.mxu0 0.0
    %2064 = vmatpush.xpose.msra.mxu0 0.0
    %2065 = vmatpush.xpose.msra.mxu0 0.0
    %2066 = vmatpush.xpose.msra.mxu0 0.0
    %2067 = vmatpush.xpose.msra.mxu0 %v365
    %2068 = vmatpush.xpose.msra.mxu0 %v149
    %2069 = vmatmul.f32.gmra.mxu0 %v650
    %v2070 = vpop.f32.mrf.mxu0
    %v2071 = vadd.f32 %v2051, %v2070
    %2072 = vdwg.mxu0
    %2073 = vmatpush.xpose.msra.mxu0 0.0
    %2074 = vmatpush.xpose.msra.mxu0 0.0
    %2075 = vmatpush.xpose.msra.mxu0 0.0
    %2076 = vmatpush.xpose.msra.mxu0 0.0
    %2077 = vmatpush.xpose.msra.mxu0 0.0
    %2078 = vmatpush.xpose.msra.mxu0 0.0
    %2079 = vmatpush.xpose.msra.mxu0 0.0
    %2080 = vmatpush.xpose.msra.mxu0 0.0
    %2081 = vmatpush.xpose.msra.mxu0 0.0
    %2082 = vmatpush.xpose.msra.mxu0 0.0
    %2083 = vmatpush.xpose.msra.mxu0 0.0
    %2084 = vmatpush.xpose.msra.mxu0 0.0
    %2085 = vmatpush.xpose.msra.mxu0 0.0
    %2086 = vmatpush.xpose.msra.mxu0 0.0
    %2087 = vmatpush.xpose.msra.mxu0 %v366
    %2088 = vmatpush.xpose.msra.mxu0 %v150
    %2089 = vmatmul.f32.gmra.mxu0 %v651
    %v2090 = vpop.f32.mrf.mxu0
    %v2091 = vadd.f32 %v2071, %v2090
    %2092 = vdwg.mxu0
    %2093 = vmatpush.xpose.msra.mxu0 0.0
    %2094 = vmatpush.xpose.msra.mxu0 0.0
    %2095 = vmatpush.xpose.msra.mxu0 0.0
    %2096 = vmatpush.xpose.msra.mxu0 0.0
    %2097 = vmatpush.xpose.msra.mxu0 0.0
    %2098 = vmatpush.xpose.msra.mxu0 0.0
    %2099 = vmatpush.xpose.msra.mxu0 0.0
    %2100 = vmatpush.xpose.msra.mxu0 0.0
    %2101 = vmatpush.xpose.msra.mxu0 0.0
    %2102 = vmatpush.xpose.msra.mxu0 0.0
    %2103 = vmatpush.xpose.msra.mxu0 0.0
    %2104 = vmatpush.xpose.msra.mxu0 0.0
    %2105 = vmatpush.xpose.msra.mxu0 0.0
    %2106 = vmatpush.xpose.msra.mxu0 0.0
    %2107 = vmatpush.xpose.msra.mxu0 %v367
    %2108 = vmatpush.xpose.msra.mxu0 %v151
    %2109 = vmatmul.f32.gmra.mxu0 %v652
    %v2110 = vpop.f32.mrf.mxu0
    %v2111 = vadd.f32 %v2091, %v2110
    %2112 = vdwg.mxu0
    %2113 = vmatpush.xpose.msra.mxu0 0.0
    %2114 = vmatpush.xpose.msra.mxu0 0.0
    %2115 = vmatpush.xpose.msra.mxu0 0.0
    %2116 = vmatpush.xpose.msra.mxu0 0.0
    %2117 = vmatpush.xpose.msra.mxu0 0.0
    %2118 = vmatpush.xpose.msra.mxu0 0.0
    %2119 = vmatpush.xpose.msra.mxu0 0.0
    %2120 = vmatpush.xpose.msra.mxu0 0.0
    %2121 = vmatpush.xpose.msra.mxu0 0.0
    %2122 = vmatpush.xpose.msra.mxu0 0.0
    %2123 = vmatpush.xpose.msra.mxu0 0.0
    %2124 = vmatpush.xpose.msra.mxu0 0.0
    %2125 = vmatpush.xpose.msra.mxu0 0.0
    %2126 = vmatpush.xpose.msra.mxu0 0.0
    %2127 = vmatpush.xpose.msra.mxu0 %v368
    %2128 = vmatpush.xpose.msra.mxu0 %v152
    %2129 = vmatmul.f32.gmra.mxu0 %v653
    %v2130 = vpop.f32.mrf.mxu0
    %v2131 = vadd.f32 %v2111, %v2130
    %2132 = vdwg.mxu0
    %2133 = vmatpush.xpose.msra.mxu0 0.0
    %2134 = vmatpush.xpose.msra.mxu0 0.0
    %2135 = vmatpush.xpose.msra.mxu0 0.0
    %2136 = vmatpush.xpose.msra.mxu0 0.0
    %2137 = vmatpush.xpose.msra.mxu0 0.0
    %2138 = vmatpush.xpose.msra.mxu0 0.0
    %2139 = vmatpush.xpose.msra.mxu0 0.0
    %2140 = vmatpush.xpose.msra.mxu0 0.0
    %2141 = vmatpush.xpose.msra.mxu0 0.0
    %2142 = vmatpush.xpose.msra.mxu0 0.0
    %2143 = vmatpush.xpose.msra.mxu0 0.0
    %2144 = vmatpush.xpose.msra.mxu0 0.0
    %2145 = vmatpush.xpose.msra.mxu0 0.0
    %2146 = vmatpush.xpose.msra.mxu0 0.0
    %2147 = vmatpush.xpose.msra.mxu0 %v369
    %2148 = vmatpush.xpose.msra.mxu0 %v153
    %2149 = vmatmul.f32.gmra.mxu0 %v654
    %v2150 = vpop.f32.mrf.mxu0
    %v2151 = vadd.f32 %v2131, %v2150
    %2152 = vdwg.mxu0
    %2153 = vmatpush.xpose.msra.mxu0 0.0
    %2154 = vmatpush.xpose.msra.mxu0 0.0
    %2155 = vmatpush.xpose.msra.mxu0 0.0
    %2156 = vmatpush.xpose.msra.mxu0 0.0
    %2157 = vmatpush.xpose.msra.mxu0 0.0
    %2158 = vmatpush.xpose.msra.mxu0 0.0
    %2159 = vmatpush.xpose.msra.mxu0 0.0
    %2160 = vmatpush.xpose.msra.mxu0 0.0
    %2161 = vmatpush.xpose.msra.mxu0 0.0
    %2162 = vmatpush.xpose.msra.mxu0 0.0
    %2163 = vmatpush.xpose.msra.mxu0 0.0
    %2164 = vmatpush.xpose.msra.mxu0 0.0
    %2165 = vmatpush.xpose.msra.mxu0 0.0
    %2166 = vmatpush.xpose.msra.mxu0 0.0
    %2167 = vmatpush.xpose.msra.mxu0 %v370
    %2168 = vmatpush.xpose.msra.mxu0 %v154
    %2169 = vmatmul.f32.gmra.mxu0 %v655
    %v2170 = vpop.f32.mrf.mxu0
    %v2171 = vadd.f32 %v2151, %v2170
    %2172 = vdwg.mxu0
    %2173 = vmatpush.xpose.msra.mxu0 0.0
    %2174 = vmatpush.xpose.msra.mxu0 0.0
    %2175 = vmatpush.xpose.msra.mxu0 0.0
    %2176 = vmatpush.xpose.msra.mxu0 0.0
    %2177 = vmatpush.xpose.msra.mxu0 0.0
    %2178 = vmatpush.xpose.msra.mxu0 0.0
    %2179 = vmatpush.xpose.msra.mxu0 0.0
    %2180 = vmatpush.xpose.msra.mxu0 0.0
    %2181 = vmatpush.xpose.msra.mxu0 0.0
    %2182 = vmatpush.xpose.msra.mxu0 0.0
    %2183 = vmatpush.xpose.msra.mxu0 0.0
    %2184 = vmatpush.xpose.msra.mxu0 0.0
    %2185 = vmatpush.xpose.msra.mxu0 0.0
    %2186 = vmatpush.xpose.msra.mxu0 0.0
    %2187 = vmatpush.xpose.msra.mxu0 %v371
    %2188 = vmatpush.xpose.msra.mxu0 %v155
    %2189 = vmatmul.f32.gmra.mxu0 %v656
    %v2190 = vpop.f32.mrf.mxu0
    %v2191 = vadd.f32 %v2171, %v2190
    %2192 = vdwg.mxu0
    %2193 = vmatpush.xpose.msra.mxu0 0.0
    %2194 = vmatpush.xpose.msra.mxu0 0.0
    %2195 = vmatpush.xpose.msra.mxu0 0.0
    %2196 = vmatpush.xpose.msra.mxu0 0.0
    %2197 = vmatpush.xpose.msra.mxu0 0.0
    %2198 = vmatpush.xpose.msra.mxu0 0.0
    %2199 = vmatpush.xpose.msra.mxu0 0.0
    %2200 = vmatpush.xpose.msra.mxu0 0.0
    %2201 = vmatpush.xpose.msra.mxu0 0.0
    %2202 = vmatpush.xpose.msra.mxu0 0.0
    %2203 = vmatpush.xpose.msra.mxu0 0.0
    %2204 = vmatpush.xpose.msra.mxu0 0.0
    %2205 = vmatpush.xpose.msra.mxu0 0.0
    %2206 = vmatpush.xpose.msra.mxu0 0.0
    %2207 = vmatpush.xpose.msra.mxu0 %v372
    %2208 = vmatpush.xpose.msra.mxu0 %v156
    %2209 = vmatmul.f32.gmra.mxu0 %v659
    %v2210 = vpop.f32.mrf.mxu0
    %v2211 = vadd.f32 %v2191, %v2210
    %2212 = vdwg.mxu0
    %2213 = vmatpush.xpose.msra.mxu0 0.0
    %2214 = vmatpush.xpose.msra.mxu0 0.0
    %2215 = vmatpush.xpose.msra.mxu0 0.0
    %2216 = vmatpush.xpose.msra.mxu0 0.0
    %2217 = vmatpush.xpose.msra.mxu0 0.0
    %2218 = vmatpush.xpose.msra.mxu0 0.0
    %2219 = vmatpush.xpose.msra.mxu0 0.0
    %2220 = vmatpush.xpose.msra.mxu0 0.0
    %2221 = vmatpush.xpose.msra.mxu0 0.0
    %2222 = vmatpush.xpose.msra.mxu0 0.0
    %2223 = vmatpush.xpose.msra.mxu0 0.0
    %2224 = vmatpush.xpose.msra.mxu0 0.0
    %2225 = vmatpush.xpose.msra.mxu0 0.0
    %2226 = vmatpush.xpose.msra.mxu0 0.0
    %2227 = vmatpush.xpose.msra.mxu0 %v373
    %2228 = vmatpush.xpose.msra.mxu0 %v157
    %2229 = vmatmul.f32.gmra.mxu0 %v660
    %v2230 = vpop.f32.mrf.mxu0
    %v2231 = vadd.f32 %v2211, %v2230
    %2232 = vdwg.mxu0
    %2233 = vmatpush.xpose.msra.mxu0 0.0
    %2234 = vmatpush.xpose.msra.mxu0 0.0
    %2235 = vmatpush.xpose.msra.mxu0 0.0
    %2236 = vmatpush.xpose.msra.mxu0 0.0
    %2237 = vmatpush.xpose.msra.mxu0 0.0
    %2238 = vmatpush.xpose.msra.mxu0 0.0
    %2239 = vmatpush.xpose.msra.mxu0 0.0
    %2240 = vmatpush.xpose.msra.mxu0 0.0
    %2241 = vmatpush.xpose.msra.mxu0 0.0
    %2242 = vmatpush.xpose.msra.mxu0 0.0
    %2243 = vmatpush.xpose.msra.mxu0 0.0
    %2244 = vmatpush.xpose.msra.mxu0 0.0
    %2245 = vmatpush.xpose.msra.mxu0 0.0
    %2246 = vmatpush.xpose.msra.mxu0 0.0
    %2247 = vmatpush.xpose.msra.mxu0 %v374
    %2248 = vmatpush.xpose.msra.mxu0 %v158
    %2249 = vmatmul.f32.gmra.mxu0 %v661
    %v2250 = vpop.f32.mrf.mxu0
    %v2251 = vadd.f32 %v2231, %v2250
    %2252 = vdwg.mxu0
    %2253 = vmatpush.xpose.msra.mxu0 0.0
    %2254 = vmatpush.xpose.msra.mxu0 0.0
    %2255 = vmatpush.xpose.msra.mxu0 0.0
    %2256 = vmatpush.xpose.msra.mxu0 0.0
    %2257 = vmatpush.xpose.msra.mxu0 0.0
    %2258 = vmatpush.xpose.msra.mxu0 0.0
    %2259 = vmatpush.xpose.msra.mxu0 0.0
    %2260 = vmatpush.xpose.msra.mxu0 0.0
    %2261 = vmatpush.xpose.msra.mxu0 0.0
    %2262 = vmatpush.xpose.msra.mxu0 0.0
    %2263 = vmatpush.xpose.msra.mxu0 0.0
    %2264 = vmatpush.xpose.msra.mxu0 0.0
    %2265 = vmatpush.xpose.msra.mxu0 0.0
    %2266 = vmatpush.xpose.msra.mxu0 0.0
    %2267 = vmatpush.xpose.msra.mxu0 %v375
    %2268 = vmatpush.xpose.msra.mxu0 %v159
    %2269 = vmatmul.f32.gmra.mxu0 %v662
    %v2270 = vpop.f32.mrf.mxu0
    %v2271 = vadd.f32 %v2251, %v2270
    %2272 = vdwg.mxu0
    %2273 = vmatpush.xpose.msra.mxu0 0.0
    %2274 = vmatpush.xpose.msra.mxu0 0.0
    %2275 = vmatpush.xpose.msra.mxu0 0.0
    %2276 = vmatpush.xpose.msra.mxu0 0.0
    %2277 = vmatpush.xpose.msra.mxu0 0.0
    %2278 = vmatpush.xpose.msra.mxu0 0.0
    %2279 = vmatpush.xpose.msra.mxu0 0.0
    %2280 = vmatpush.xpose.msra.mxu0 0.0
    %2281 = vmatpush.xpose.msra.mxu0 0.0
    %2282 = vmatpush.xpose.msra.mxu0 0.0
    %2283 = vmatpush.xpose.msra.mxu0 0.0
    %2284 = vmatpush.xpose.msra.mxu0 0.0
    %2285 = vmatpush.xpose.msra.mxu0 0.0
    %2286 = vmatpush.xpose.msra.mxu0 0.0
    %2287 = vmatpush.xpose.msra.mxu0 %v376
    %2288 = vmatpush.xpose.msra.mxu0 %v160
    %2289 = vmatmul.f32.gmra.mxu0 %v663
    %v2290 = vpop.f32.mrf.mxu0
    %v2291 = vadd.f32 %v2271, %v2290
    %2292 = vdwg.mxu0
    %2293 = vmatpush.xpose.msra.mxu0 0.0
    %2294 = vmatpush.xpose.msra.mxu0 0.0
    %2295 = vmatpush.xpose.msra.mxu0 0.0
    %2296 = vmatpush.xpose.msra.mxu0 0.0
    %2297 = vmatpush.xpose.msra.mxu0 0.0
    %2298 = vmatpush.xpose.msra.mxu0 0.0
    %2299 = vmatpush.xpose.msra.mxu0 0.0
    %2300 = vmatpush.xpose.msra.mxu0 0.0
    %2301 = vmatpush.xpose.msra.mxu0 0.0
    %2302 = vmatpush.xpose.msra.mxu0 0.0
    %2303 = vmatpush.xpose.msra.mxu0 0.0
    %2304 = vmatpush.xpose.msra.mxu0 0.0
    %2305 = vmatpush.xpose.msra.mxu0 0.0
    %2306 = vmatpush.xpose.msra.mxu0 0.0
    %2307 = vmatpush.xpose.msra.mxu0 %v377
    %2308 = vmatpush.xpose.msra.mxu0 %v161
    %2309 = vmatmul.f32.gmra.mxu0 %v664
    %v2310 = vpop.f32.mrf.mxu0
    %v2311 = vadd.f32 %v2291, %v2310
    %2312 = vdwg.mxu0
    %2313 = vmatpush.xpose.msra.mxu0 0.0
    %2314 = vmatpush.xpose.msra.mxu0 0.0
    %2315 = vmatpush.xpose.msra.mxu0 0.0
    %2316 = vmatpush.xpose.msra.mxu0 0.0
    %2317 = vmatpush.xpose.msra.mxu0 0.0
    %2318 = vmatpush.xpose.msra.mxu0 0.0
    %2319 = vmatpush.xpose.msra.mxu0 0.0
    %2320 = vmatpush.xpose.msra.mxu0 0.0
    %2321 = vmatpush.xpose.msra.mxu0 0.0
    %2322 = vmatpush.xpose.msra.mxu0 0.0
    %2323 = vmatpush.xpose.msra.mxu0 0.0
    %2324 = vmatpush.xpose.msra.mxu0 0.0
    %2325 = vmatpush.xpose.msra.mxu0 0.0
    %2326 = vmatpush.xpose.msra.mxu0 0.0
    %2327 = vmatpush.xpose.msra.mxu0 %v378
    %2328 = vmatpush.xpose.msra.mxu0 %v162
    %2329 = vmatmul.f32.gmra.mxu0 %v665
    %v2330 = vpop.f32.mrf.mxu0
    %v2331 = vadd.f32 %v2311, %v2330
    %2332 = vdwg.mxu0
    %2333 = vmatpush.xpose.msra.mxu0 0.0
    %2334 = vmatpush.xpose.msra.mxu0 0.0
    %2335 = vmatpush.xpose.msra.mxu0 0.0
    %2336 = vmatpush.xpose.msra.mxu0 0.0
    %2337 = vmatpush.xpose.msra.mxu0 0.0
    %2338 = vmatpush.xpose.msra.mxu0 0.0
    %2339 = vmatpush.xpose.msra.mxu0 0.0
    %2340 = vmatpush.xpose.msra.mxu0 0.0
    %2341 = vmatpush.xpose.msra.mxu0 0.0
    %2342 = vmatpush.xpose.msra.mxu0 0.0
    %2343 = vmatpush.xpose.msra.mxu0 0.0
    %2344 = vmatpush.xpose.msra.mxu0 0.0
    %2345 = vmatpush.xpose.msra.mxu0 0.0
    %2346 = vmatpush.xpose.msra.mxu0 0.0
    %2347 = vmatpush.xpose.msra.mxu0 %v379
    %2348 = vmatpush.xpose.msra.mxu0 %v163
    %2349 = vmatmul.f32.gmra.mxu0 %v666
    %v2350 = vpop.f32.mrf.mxu0
    %v2351 = vadd.f32 %v2331, %v2350
    %2352 = vdwg.mxu0
    %2353 = vmatpush.xpose.msra.mxu0 0.0
    %2354 = vmatpush.xpose.msra.mxu0 0.0
    %2355 = vmatpush.xpose.msra.mxu0 0.0
    %2356 = vmatpush.xpose.msra.mxu0 0.0
    %2357 = vmatpush.xpose.msra.mxu0 0.0
    %2358 = vmatpush.xpose.msra.mxu0 0.0
    %2359 = vmatpush.xpose.msra.mxu0 0.0
    %2360 = vmatpush.xpose.msra.mxu0 0.0
    %2361 = vmatpush.xpose.msra.mxu0 0.0
    %2362 = vmatpush.xpose.msra.mxu0 0.0
    %2363 = vmatpush.xpose.msra.mxu0 0.0
    %2364 = vmatpush.xpose.msra.mxu0 0.0
    %2365 = vmatpush.xpose.msra.mxu0 0.0
    %2366 = vmatpush.xpose.msra.mxu0 0.0
    %2367 = vmatpush.xpose.msra.mxu0 %v380
    %2368 = vmatpush.xpose.msra.mxu0 %v164
    %2369 = vmatmul.f32.gmra.mxu0 %v669
    %v2370 = vpop.f32.mrf.mxu0
    %v2371 = vadd.f32 %v2351, %v2370
    %2372 = vdwg.mxu0
    %2373 = vmatpush.xpose.msra.mxu0 0.0
    %2374 = vmatpush.xpose.msra.mxu0 0.0
    %2375 = vmatpush.xpose.msra.mxu0 0.0
    %2376 = vmatpush.xpose.msra.mxu0 0.0
    %2377 = vmatpush.xpose.msra.mxu0 0.0
    %2378 = vmatpush.xpose.msra.mxu0 0.0
    %2379 = vmatpush.xpose.msra.mxu0 0.0
    %2380 = vmatpush.xpose.msra.mxu0 0.0
    %2381 = vmatpush.xpose.msra.mxu0 0.0
    %2382 = vmatpush.xpose.msra.mxu0 0.0
    %2383 = vmatpush.xpose.msra.mxu0 0.0
    %2384 = vmatpush.xpose.msra.mxu0 0.0
    %2385 = vmatpush.xpose.msra.mxu0 0.0
    %2386 = vmatpush.xpose.msra.mxu0 0.0
    %2387 = vmatpush.xpose.msra.mxu0 %v381
    %2388 = vmatpush.xpose.msra.mxu0 %v165
    %2389 = vmatmul.f32.gmra.mxu0 %v670
    %v2390 = vpop.f32.mrf.mxu0
    %v2391 = vadd.f32 %v2371, %v2390
    %2392 = vdwg.mxu0
    %2393 = vmatpush.xpose.msra.mxu0 0.0
    %2394 = vmatpush.xpose.msra.mxu0 0.0
    %2395 = vmatpush.xpose.msra.mxu0 0.0
    %2396 = vmatpush.xpose.msra.mxu0 0.0
    %2397 = vmatpush.xpose.msra.mxu0 0.0
    %2398 = vmatpush.xpose.msra.mxu0 0.0
    %2399 = vmatpush.xpose.msra.mxu0 0.0
    %2400 = vmatpush.xpose.msra.mxu0 0.0
    %2401 = vmatpush.xpose.msra.mxu0 0.0
    %2402 = vmatpush.xpose.msra.mxu0 0.0
    %2403 = vmatpush.xpose.msra.mxu0 0.0
    %2404 = vmatpush.xpose.msra.mxu0 0.0
    %2405 = vmatpush.xpose.msra.mxu0 0.0
    %2406 = vmatpush.xpose.msra.mxu0 0.0
    %2407 = vmatpush.xpose.msra.mxu0 %v382
    %2408 = vmatpush.xpose.msra.mxu0 %v166
    %2409 = vmatmul.f32.gmra.mxu0 %v671
    %v2410 = vpop.f32.mrf.mxu0
    %v2411 = vadd.f32 %v2391, %v2410
    %2412 = vdwg.mxu0
    %2413 = vmatpush.xpose.msra.mxu0 0.0
    %2414 = vmatpush.xpose.msra.mxu0 0.0
    %2415 = vmatpush.xpose.msra.mxu0 0.0
    %2416 = vmatpush.xpose.msra.mxu0 0.0
    %2417 = vmatpush.xpose.msra.mxu0 0.0
    %2418 = vmatpush.xpose.msra.mxu0 0.0
    %2419 = vmatpush.xpose.msra.mxu0 0.0
    %2420 = vmatpush.xpose.msra.mxu0 0.0
    %2421 = vmatpush.xpose.msra.mxu0 0.0
    %2422 = vmatpush.xpose.msra.mxu0 0.0
    %2423 = vmatpush.xpose.msra.mxu0 0.0
    %2424 = vmatpush.xpose.msra.mxu0 0.0
    %2425 = vmatpush.xpose.msra.mxu0 0.0
    %2426 = vmatpush.xpose.msra.mxu0 0.0
    %2427 = vmatpush.xpose.msra.mxu0 %v383
    %2428 = vmatpush.xpose.msra.mxu0 %v167
    %2429 = vmatmul.f32.gmra.mxu0 %v672
    %v2430 = vpop.f32.mrf.mxu0
    %v2431 = vadd.f32 %v2411, %v2430
    %2432 = vdwg.mxu0
    %2433 = vmatpush.xpose.msra.mxu0 0.0
    %2434 = vmatpush.xpose.msra.mxu0 0.0
    %2435 = vmatpush.xpose.msra.mxu0 0.0
    %2436 = vmatpush.xpose.msra.mxu0 0.0
    %2437 = vmatpush.xpose.msra.mxu0 0.0
    %2438 = vmatpush.xpose.msra.mxu0 0.0
    %2439 = vmatpush.xpose.msra.mxu0 0.0
    %2440 = vmatpush.xpose.msra.mxu0 0.0
    %2441 = vmatpush.xpose.msra.mxu0 0.0
    %2442 = vmatpush.xpose.msra.mxu0 0.0
    %2443 = vmatpush.xpose.msra.mxu0 0.0
    %2444 = vmatpush.xpose.msra.mxu0 0.0
    %2445 = vmatpush.xpose.msra.mxu0 0.0
    %2446 = vmatpush.xpose.msra.mxu0 0.0
    %2447 = vmatpush.xpose.msra.mxu0 %v384
    %2448 = vmatpush.xpose.msra.mxu0 %v168
    %2449 = vmatmul.f32.gmra.mxu0 %v673
    %v2450 = vpop.f32.mrf.mxu0
    %v2451 = vadd.f32 %v2431, %v2450
    %2452 = vdwg.mxu0
    %2453 = vmatpush.xpose.msra.mxu0 0.0
    %2454 = vmatpush.xpose.msra.mxu0 0.0
    %2455 = vmatpush.xpose.msra.mxu0 0.0
    %2456 = vmatpush.xpose.msra.mxu0 0.0
    %2457 = vmatpush.xpose.msra.mxu0 0.0
    %2458 = vmatpush.xpose.msra.mxu0 0.0
    %2459 = vmatpush.xpose.msra.mxu0 0.0
    %2460 = vmatpush.xpose.msra.mxu0 0.0
    %2461 = vmatpush.xpose.msra.mxu0 0.0
    %2462 = vmatpush.xpose.msra.mxu0 0.0
    %2463 = vmatpush.xpose.msra.mxu0 0.0
    %2464 = vmatpush.xpose.msra.mxu0 0.0
    %2465 = vmatpush.xpose.msra.mxu0 0.0
    %2466 = vmatpush.xpose.msra.mxu0 0.0
    %2467 = vmatpush.xpose.msra.mxu0 %v385
    %2468 = vmatpush.xpose.msra.mxu0 %v169
    %2469 = vmatmul.f32.gmra.mxu0 %v674
    %v2470 = vpop.f32.mrf.mxu0
    %v2471 = vadd.f32 %v2451, %v2470
    %2472 = vdwg.mxu0
    %2473 = vmatpush.xpose.msra.mxu0 0.0
    %2474 = vmatpush.xpose.msra.mxu0 0.0
    %2475 = vmatpush.xpose.msra.mxu0 0.0
    %2476 = vmatpush.xpose.msra.mxu0 0.0
    %2477 = vmatpush.xpose.msra.mxu0 0.0
    %2478 = vmatpush.xpose.msra.mxu0 0.0
    %2479 = vmatpush.xpose.msra.mxu0 0.0
    %2480 = vmatpush.xpose.msra.mxu0 0.0
    %2481 = vmatpush.xpose.msra.mxu0 0.0
    %2482 = vmatpush.xpose.msra.mxu0 0.0
    %2483 = vmatpush.xpose.msra.mxu0 0.0
    %2484 = vmatpush.xpose.msra.mxu0 0.0
    %2485 = vmatpush.xpose.msra.mxu0 0.0
    %2486 = vmatpush.xpose.msra.mxu0 0.0
    %2487 = vmatpush.xpose.msra.mxu0 %v386
    %2488 = vmatpush.xpose.msra.mxu0 %v170
    %2489 = vmatmul.f32.gmra.mxu0 %v675
    %v2490 = vpop.f32.mrf.mxu0
    %v2491 = vadd.f32 %v2471, %v2490
    %2492 = vdwg.mxu0
    %2493 = vmatpush.xpose.msra.mxu0 0.0
    %2494 = vmatpush.xpose.msra.mxu0 0.0
    %2495 = vmatpush.xpose.msra.mxu0 0.0
    %2496 = vmatpush.xpose.msra.mxu0 0.0
    %2497 = vmatpush.xpose.msra.mxu0 0.0
    %2498 = vmatpush.xpose.msra.mxu0 0.0
    %2499 = vmatpush.xpose.msra.mxu0 0.0
    %2500 = vmatpush.xpose.msra.mxu0 0.0
    %2501 = vmatpush.xpose.msra.mxu0 0.0
    %2502 = vmatpush.xpose.msra.mxu0 0.0
    %2503 = vmatpush.xpose.msra.mxu0 0.0
    %2504 = vmatpush.xpose.msra.mxu0 0.0
    %2505 = vmatpush.xpose.msra.mxu0 0.0
    %2506 = vmatpush.xpose.msra.mxu0 0.0
    %2507 = vmatpush.xpose.msra.mxu0 %v387
    %2508 = vmatpush.xpose.msra.mxu0 %v171
    %2509 = vmatmul.f32.gmra.mxu0 %v676
    %v2510 = vpop.f32.mrf.mxu0
    %v2511 = vadd.f32 %v2491, %v2510
    %2512 = vdwg.mxu0
    %2513 = vmatpush.xpose.msra.mxu0 0.0
    %2514 = vmatpush.xpose.msra.mxu0 0.0
    %2515 = vmatpush.xpose.msra.mxu0 0.0
    %2516 = vmatpush.xpose.msra.mxu0 0.0
    %2517 = vmatpush.xpose.msra.mxu0 0.0
    %2518 = vmatpush.xpose.msra.mxu0 0.0
    %2519 = vmatpush.xpose.msra.mxu0 0.0
    %2520 = vmatpush.xpose.msra.mxu0 0.0
    %2521 = vmatpush.xpose.msra.mxu0 0.0
    %2522 = vmatpush.xpose.msra.mxu0 0.0
    %2523 = vmatpush.xpose.msra.mxu0 0.0
    %2524 = vmatpush.xpose.msra.mxu0 0.0
    %2525 = vmatpush.xpose.msra.mxu0 0.0
    %2526 = vmatpush.xpose.msra.mxu0 0.0
    %2527 = vmatpush.xpose.msra.mxu0 %v388
    %2528 = vmatpush.xpose.msra.mxu0 %v172
    %2529 = vmatmul.f32.gmra.mxu0 %v679
    %v2530 = vpop.f32.mrf.mxu0
    %v2531 = vadd.f32 %v2511, %v2530
    %2532 = vdwg.mxu0
    %2533 = vmatpush.xpose.msra.mxu0 0.0
    %2534 = vmatpush.xpose.msra.mxu0 0.0
    %2535 = vmatpush.xpose.msra.mxu0 0.0
    %2536 = vmatpush.xpose.msra.mxu0 0.0
    %2537 = vmatpush.xpose.msra.mxu0 0.0
    %2538 = vmatpush.xpose.msra.mxu0 0.0
    %2539 = vmatpush.xpose.msra.mxu0 0.0
    %2540 = vmatpush.xpose.msra.mxu0 0.0
    %2541 = vmatpush.xpose.msra.mxu0 0.0
    %2542 = vmatpush.xpose.msra.mxu0 0.0
    %2543 = vmatpush.xpose.msra.mxu0 0.0
    %2544 = vmatpush.xpose.msra.mxu0 0.0
    %2545 = vmatpush.xpose.msra.mxu0 0.0
    %2546 = vmatpush.xpose.msra.mxu0 0.0
    %2547 = vmatpush.xpose.msra.mxu0 %v389
    %2548 = vmatpush.xpose.msra.mxu0 %v173
    %2549 = vmatmul.f32.gmra.mxu0 %v680
    %v2550 = vpop.f32.mrf.mxu0
    %v2551 = vadd.f32 %v2531, %v2550
    %2552 = vdwg.mxu0
    %2553 = vmatpush.xpose.msra.mxu0 0.0
    %2554 = vmatpush.xpose.msra.mxu0 0.0
    %2555 = vmatpush.xpose.msra.mxu0 0.0
    %2556 = vmatpush.xpose.msra.mxu0 0.0
    %2557 = vmatpush.xpose.msra.mxu0 0.0
    %2558 = vmatpush.xpose.msra.mxu0 0.0
    %2559 = vmatpush.xpose.msra.mxu0 0.0
    %2560 = vmatpush.xpose.msra.mxu0 0.0
    %2561 = vmatpush.xpose.msra.mxu0 0.0
    %2562 = vmatpush.xpose.msra.mxu0 0.0
    %2563 = vmatpush.xpose.msra.mxu0 0.0
    %2564 = vmatpush.xpose.msra.mxu0 0.0
    %2565 = vmatpush.xpose.msra.mxu0 0.0
    %2566 = vmatpush.xpose.msra.mxu0 0.0
    %2567 = vmatpush.xpose.msra.mxu0 %v390
    %2568 = vmatpush.xpose.msra.mxu0 %v174
    %2569 = vmatmul.f32.gmra.mxu0 %v681
    %v2570 = vpop.f32.mrf.mxu0
    %v2571 = vadd.f32 %v2551, %v2570
    %2572 = vdwg.mxu0
    %2573 = vmatpush.xpose.msra.mxu0 0.0
    %2574 = vmatpush.xpose.msra.mxu0 0.0
    %2575 = vmatpush.xpose.msra.mxu0 0.0
    %2576 = vmatpush.xpose.msra.mxu0 0.0
    %2577 = vmatpush.xpose.msra.mxu0 0.0
    %2578 = vmatpush.xpose.msra.mxu0 0.0
    %2579 = vmatpush.xpose.msra.mxu0 0.0
    %2580 = vmatpush.xpose.msra.mxu0 0.0
    %2581 = vmatpush.xpose.msra.mxu0 0.0
    %2582 = vmatpush.xpose.msra.mxu0 0.0
    %2583 = vmatpush.xpose.msra.mxu0 0.0
    %2584 = vmatpush.xpose.msra.mxu0 0.0
    %2585 = vmatpush.xpose.msra.mxu0 0.0
    %2586 = vmatpush.xpose.msra.mxu0 0.0
    %2587 = vmatpush.xpose.msra.mxu0 %v391
    %2588 = vmatpush.xpose.msra.mxu0 %v175
    %2589 = vmatmul.f32.gmra.mxu0 %v682
    %v2590 = vpop.f32.mrf.mxu0
    %v2591 = vadd.f32 %v2571, %v2590
    %2592 = vdwg.mxu0
    %2593 = vmatpush.xpose.msra.mxu0 0.0
    %2594 = vmatpush.xpose.msra.mxu0 0.0
    %2595 = vmatpush.xpose.msra.mxu0 0.0
    %2596 = vmatpush.xpose.msra.mxu0 0.0
    %2597 = vmatpush.xpose.msra.mxu0 0.0
    %2598 = vmatpush.xpose.msra.mxu0 0.0
    %2599 = vmatpush.xpose.msra.mxu0 0.0
    %2600 = vmatpush.xpose.msra.mxu0 0.0
    %2601 = vmatpush.xpose.msra.mxu0 0.0
    %2602 = vmatpush.xpose.msra.mxu0 0.0
    %2603 = vmatpush.xpose.msra.mxu0 0.0
    %2604 = vmatpush.xpose.msra.mxu0 0.0
    %2605 = vmatpush.xpose.msra.mxu0 0.0
    %2606 = vmatpush.xpose.msra.mxu0 0.0
    %2607 = vmatpush.xpose.msra.mxu0 %v392
    %2608 = vmatpush.xpose.msra.mxu0 %v176
    %2609 = vmatmul.f32.gmra.mxu0 %v683
    %v2610 = vpop.f32.mrf.mxu0
    %v2611 = vadd.f32 %v2591, %v2610
    %2612 = vdwg.mxu0
    %2613 = vmatpush.xpose.msra.mxu0 0.0
    %2614 = vmatpush.xpose.msra.mxu0 0.0
    %2615 = vmatpush.xpose.msra.mxu0 0.0
    %2616 = vmatpush.xpose.msra.mxu0 0.0
    %2617 = vmatpush.xpose.msra.mxu0 0.0
    %2618 = vmatpush.xpose.msra.mxu0 0.0
    %2619 = vmatpush.xpose.msra.mxu0 0.0
    %2620 = vmatpush.xpose.msra.mxu0 0.0
    %2621 = vmatpush.xpose.msra.mxu0 0.0
    %2622 = vmatpush.xpose.msra.mxu0 0.0
    %2623 = vmatpush.xpose.msra.mxu0 0.0
    %2624 = vmatpush.xpose.msra.mxu0 0.0
    %2625 = vmatpush.xpose.msra.mxu0 0.0
    %2626 = vmatpush.xpose.msra.mxu0 0.0
    %2627 = vmatpush.xpose.msra.mxu0 %v393
    %2628 = vmatpush.xpose.msra.mxu0 %v177
    %2629 = vmatmul.f32.gmra.mxu0 %v684
    %v2630 = vpop.f32.mrf.mxu0
    %v2631 = vadd.f32 %v2611, %v2630
    %2632 = vdwg.mxu0
    %2633 = vmatpush.xpose.msra.mxu0 0.0
    %2634 = vmatpush.xpose.msra.mxu0 0.0
    %2635 = vmatpush.xpose.msra.mxu0 0.0
    %2636 = vmatpush.xpose.msra.mxu0 0.0
    %2637 = vmatpush.xpose.msra.mxu0 0.0
    %2638 = vmatpush.xpose.msra.mxu0 0.0
    %2639 = vmatpush.xpose.msra.mxu0 0.0
    %2640 = vmatpush.xpose.msra.mxu0 0.0
    %2641 = vmatpush.xpose.msra.mxu0 0.0
    %2642 = vmatpush.xpose.msra.mxu0 0.0
    %2643 = vmatpush.xpose.msra.mxu0 0.0
    %2644 = vmatpush.xpose.msra.mxu0 0.0
    %2645 = vmatpush.xpose.msra.mxu0 0.0
    %2646 = vmatpush.xpose.msra.mxu0 0.0
    %2647 = vmatpush.xpose.msra.mxu0 %v394
    %2648 = vmatpush.xpose.msra.mxu0 %v178
    %2649 = vmatmul.f32.gmra.mxu0 %v685
    %v2650 = vpop.f32.mrf.mxu0
    %v2651 = vadd.f32 %v2631, %v2650
    %2652 = vdwg.mxu0
    %2653 = vmatpush.xpose.msra.mxu0 0.0
    %2654 = vmatpush.xpose.msra.mxu0 0.0
    %2655 = vmatpush.xpose.msra.mxu0 0.0
    %2656 = vmatpush.xpose.msra.mxu0 0.0
    %2657 = vmatpush.xpose.msra.mxu0 0.0
    %2658 = vmatpush.xpose.msra.mxu0 0.0
    %2659 = vmatpush.xpose.msra.mxu0 0.0
    %2660 = vmatpush.xpose.msra.mxu0 0.0
    %2661 = vmatpush.xpose.msra.mxu0 0.0
    %2662 = vmatpush.xpose.msra.mxu0 0.0
    %2663 = vmatpush.xpose.msra.mxu0 0.0
    %2664 = vmatpush.xpose.msra.mxu0 0.0
    %2665 = vmatpush.xpose.msra.mxu0 0.0
    %2666 = vmatpush.xpose.msra.mxu0 0.0
    %2667 = vmatpush.xpose.msra.mxu0 %v395
    %2668 = vmatpush.xpose.msra.mxu0 %v179
    %2669 = vmatmul.f32.gmra.mxu0 %v686
    %v2670 = vpop.f32.mrf.mxu0
    %v2671 = vadd.f32 %v2651, %v2670
    %2672 = vdwg.mxu0
    %2673 = vmatpush.xpose.msra.mxu0 0.0
    %2674 = vmatpush.xpose.msra.mxu0 0.0
    %2675 = vmatpush.xpose.msra.mxu0 0.0
    %2676 = vmatpush.xpose.msra.mxu0 0.0
    %2677 = vmatpush.xpose.msra.mxu0 0.0
    %2678 = vmatpush.xpose.msra.mxu0 0.0
    %2679 = vmatpush.xpose.msra.mxu0 0.0
    %2680 = vmatpush.xpose.msra.mxu0 0.0
    %2681 = vmatpush.xpose.msra.mxu0 0.0
    %2682 = vmatpush.xpose.msra.mxu0 0.0
    %2683 = vmatpush.xpose.msra.mxu0 0.0
    %2684 = vmatpush.xpose.msra.mxu0 0.0
    %2685 = vmatpush.xpose.msra.mxu0 0.0
    %2686 = vmatpush.xpose.msra.mxu0 0.0
    %2687 = vmatpush.xpose.msra.mxu0 %v396
    %2688 = vmatpush.xpose.msra.mxu0 %v180
    %2689 = vmatmul.f32.gmra.mxu0 %v689
    %v2690 = vpop.f32.mrf.mxu0
    %v2691 = vadd.f32 %v2671, %v2690
    %2692 = vdwg.mxu0
    %2693 = vmatpush.xpose.msra.mxu0 0.0
    %2694 = vmatpush.xpose.msra.mxu0 0.0
    %2695 = vmatpush.xpose.msra.mxu0 0.0
    %2696 = vmatpush.xpose.msra.mxu0 0.0
    %2697 = vmatpush.xpose.msra.mxu0 0.0
    %2698 = vmatpush.xpose.msra.mxu0 0.0
    %2699 = vmatpush.xpose.msra.mxu0 0.0
    %2700 = vmatpush.xpose.msra.mxu0 0.0
    %2701 = vmatpush.xpose.msra.mxu0 0.0
    %2702 = vmatpush.xpose.msra.mxu0 0.0
    %2703 = vmatpush.xpose.msra.mxu0 0.0
    %2704 = vmatpush.xpose.msra.mxu0 0.0
    %2705 = vmatpush.xpose.msra.mxu0 0.0
    %2706 = vmatpush.xpose.msra.mxu0 0.0
    %2707 = vmatpush.xpose.msra.mxu0 %v397
    %2708 = vmatpush.xpose.msra.mxu0 %v181
    %2709 = vmatmul.f32.gmra.mxu0 %v690
    %v2710 = vpop.f32.mrf.mxu0
    %v2711 = vadd.f32 %v2691, %v2710
    %2712 = vdwg.mxu0
    %2713 = vmatpush.xpose.msra.mxu0 0.0
    %2714 = vmatpush.xpose.msra.mxu0 0.0
    %2715 = vmatpush.xpose.msra.mxu0 0.0
    %2716 = vmatpush.xpose.msra.mxu0 0.0
    %2717 = vmatpush.xpose.msra.mxu0 0.0
    %2718 = vmatpush.xpose.msra.mxu0 0.0
    %2719 = vmatpush.xpose.msra.mxu0 0.0
    %2720 = vmatpush.xpose.msra.mxu0 0.0
    %2721 = vmatpush.xpose.msra.mxu0 0.0
    %2722 = vmatpush.xpose.msra.mxu0 0.0
    %2723 = vmatpush.xpose.msra.mxu0 0.0
    %2724 = vmatpush.xpose.msra.mxu0 0.0
    %2725 = vmatpush.xpose.msra.mxu0 0.0
    %2726 = vmatpush.xpose.msra.mxu0 0.0
    %2727 = vmatpush.xpose.msra.mxu0 %v398
    %2728 = vmatpush.xpose.msra.mxu0 %v182
    %2729 = vmatmul.f32.gmra.mxu0 %v691
    %v2730 = vpop.f32.mrf.mxu0
    %v2731 = vadd.f32 %v2711, %v2730
    %2732 = vdwg.mxu0
    %2733 = vmatpush.xpose.msra.mxu0 0.0
    %2734 = vmatpush.xpose.msra.mxu0 0.0
    %2735 = vmatpush.xpose.msra.mxu0 0.0
    %2736 = vmatpush.xpose.msra.mxu0 0.0
    %2737 = vmatpush.xpose.msra.mxu0 0.0
    %2738 = vmatpush.xpose.msra.mxu0 0.0
    %2739 = vmatpush.xpose.msra.mxu0 0.0
    %2740 = vmatpush.xpose.msra.mxu0 0.0
    %2741 = vmatpush.xpose.msra.mxu0 0.0
    %2742 = vmatpush.xpose.msra.mxu0 0.0
    %2743 = vmatpush.xpose.msra.mxu0 0.0
    %2744 = vmatpush.xpose.msra.mxu0 0.0
    %2745 = vmatpush.xpose.msra.mxu0 0.0
    %2746 = vmatpush.xpose.msra.mxu0 0.0
    %2747 = vmatpush.xpose.msra.mxu0 %v399
    %2748 = vmatpush.xpose.msra.mxu0 %v183
    %2749 = vmatmul.f32.gmra.mxu0 %v692
    %v2750 = vpop.f32.mrf.mxu0
    %v2751 = vadd.f32 %v2731, %v2750
    %2752 = vdwg.mxu0
    %2753 = vmatpush.xpose.msra.mxu0 0.0
    %2754 = vmatpush.xpose.msra.mxu0 0.0
    %2755 = vmatpush.xpose.msra.mxu0 0.0
    %2756 = vmatpush.xpose.msra.mxu0 0.0
    %2757 = vmatpush.xpose.msra.mxu0 0.0
    %2758 = vmatpush.xpose.msra.mxu0 0.0
    %2759 = vmatpush.xpose.msra.mxu0 0.0
    %2760 = vmatpush.xpose.msra.mxu0 0.0
    %2761 = vmatpush.xpose.msra.mxu0 0.0
    %2762 = vmatpush.xpose.msra.mxu0 0.0
    %2763 = vmatpush.xpose.msra.mxu0 0.0
    %2764 = vmatpush.xpose.msra.mxu0 0.0
    %2765 = vmatpush.xpose.msra.mxu0 0.0
    %2766 = vmatpush.xpose.msra.mxu0 0.0
    %2767 = vmatpush.xpose.msra.mxu0 %v400
    %2768 = vmatpush.xpose.msra.mxu0 %v184
    %2769 = vmatmul.f32.gmra.mxu0 %v693
    %v2770 = vpop.f32.mrf.mxu0
    %v2771 = vadd.f32 %v2751, %v2770
    %2772 = vdwg.mxu0
    %2773 = vmatpush.xpose.msra.mxu0 0.0
    %2774 = vmatpush.xpose.msra.mxu0 0.0
    %2775 = vmatpush.xpose.msra.mxu0 0.0
    %2776 = vmatpush.xpose.msra.mxu0 0.0
    %2777 = vmatpush.xpose.msra.mxu0 0.0
    %2778 = vmatpush.xpose.msra.mxu0 0.0
    %2779 = vmatpush.xpose.msra.mxu0 0.0
    %2780 = vmatpush.xpose.msra.mxu0 0.0
    %2781 = vmatpush.xpose.msra.mxu0 0.0
    %2782 = vmatpush.xpose.msra.mxu0 0.0
    %2783 = vmatpush.xpose.msra.mxu0 0.0
    %2784 = vmatpush.xpose.msra.mxu0 0.0
    %2785 = vmatpush.xpose.msra.mxu0 0.0
    %2786 = vmatpush.xpose.msra.mxu0 0.0
    %2787 = vmatpush.xpose.msra.mxu0 %v401
    %2788 = vmatpush.xpose.msra.mxu0 %v185
    %2789 = vmatmul.f32.gmra.mxu0 %v694
    %v2790 = vpop.f32.mrf.mxu0
    %v2791 = vadd.f32 %v2771, %v2790
    %2792 = vdwg.mxu0
    %2793 = vmatpush.xpose.msra.mxu0 0.0
    %2794 = vmatpush.xpose.msra.mxu0 0.0
    %2795 = vmatpush.xpose.msra.mxu0 0.0
    %2796 = vmatpush.xpose.msra.mxu0 0.0
    %2797 = vmatpush.xpose.msra.mxu0 0.0
    %2798 = vmatpush.xpose.msra.mxu0 0.0
    %2799 = vmatpush.xpose.msra.mxu0 0.0
    %2800 = vmatpush.xpose.msra.mxu0 0.0
    %2801 = vmatpush.xpose.msra.mxu0 0.0
    %2802 = vmatpush.xpose.msra.mxu0 0.0
    %2803 = vmatpush.xpose.msra.mxu0 0.0
    %2804 = vmatpush.xpose.msra.mxu0 0.0
    %2805 = vmatpush.xpose.msra.mxu0 0.0
    %2806 = vmatpush.xpose.msra.mxu0 0.0
    %2807 = vmatpush.xpose.msra.mxu0 %v402
    %2808 = vmatpush.xpose.msra.mxu0 %v186
    %2809 = vmatmul.f32.gmra.mxu0 %v695
    %v2810 = vpop.f32.mrf.mxu0
    %v2811 = vadd.f32 %v2791, %v2810
    %2812 = vdwg.mxu0
    %2813 = vmatpush.xpose.msra.mxu0 0.0
    %2814 = vmatpush.xpose.msra.mxu0 0.0
    %2815 = vmatpush.xpose.msra.mxu0 0.0
    %2816 = vmatpush.xpose.msra.mxu0 0.0
    %2817 = vmatpush.xpose.msra.mxu0 0.0
    %2818 = vmatpush.xpose.msra.mxu0 0.0
    %2819 = vmatpush.xpose.msra.mxu0 0.0
    %2820 = vmatpush.xpose.msra.mxu0 0.0
    %2821 = vmatpush.xpose.msra.mxu0 0.0
    %2822 = vmatpush.xpose.msra.mxu0 0.0
    %2823 = vmatpush.xpose.msra.mxu0 0.0
    %2824 = vmatpush.xpose.msra.mxu0 0.0
    %2825 = vmatpush.xpose.msra.mxu0 0.0
    %2826 = vmatpush.xpose.msra.mxu0 0.0
    %2827 = vmatpush.xpose.msra.mxu0 %v403
    %2828 = vmatpush.xpose.msra.mxu0 %v187
    %2829 = vmatmul.f32.gmra.mxu0 %v696
    %v2830 = vpop.f32.mrf.mxu0
    %v2831 = vadd.f32 %v2811, %v2830
    %2832 = vdwg.mxu0
    %2833 = vmatpush.xpose.msra.mxu0 0.0
    %2834 = vmatpush.xpose.msra.mxu0 0.0
    %2835 = vmatpush.xpose.msra.mxu0 0.0
    %2836 = vmatpush.xpose.msra.mxu0 0.0
    %2837 = vmatpush.xpose.msra.mxu0 0.0
    %2838 = vmatpush.xpose.msra.mxu0 0.0
    %2839 = vmatpush.xpose.msra.mxu0 0.0
    %2840 = vmatpush.xpose.msra.mxu0 0.0
    %2841 = vmatpush.xpose.msra.mxu0 0.0
    %2842 = vmatpush.xpose.msra.mxu0 0.0
    %2843 = vmatpush.xpose.msra.mxu0 0.0
    %2844 = vmatpush.xpose.msra.mxu0 0.0
    %2845 = vmatpush.xpose.msra.mxu0 0.0
    %2846 = vmatpush.xpose.msra.mxu0 0.0
    %2847 = vmatpush.xpose.msra.mxu0 %v404
    %2848 = vmatpush.xpose.msra.mxu0 %v188
    %2849 = vmatmul.f32.gmra.mxu0 %v699
    %v2850 = vpop.f32.mrf.mxu0
    %v2851 = vadd.f32 %v2831, %v2850
    %2852 = vdwg.mxu0
    %2853 = vmatpush.xpose.msra.mxu0 0.0
    %2854 = vmatpush.xpose.msra.mxu0 0.0
    %2855 = vmatpush.xpose.msra.mxu0 0.0
    %2856 = vmatpush.xpose.msra.mxu0 0.0
    %2857 = vmatpush.xpose.msra.mxu0 0.0
    %2858 = vmatpush.xpose.msra.mxu0 0.0
    %2859 = vmatpush.xpose.msra.mxu0 0.0
    %2860 = vmatpush.xpose.msra.mxu0 0.0
    %2861 = vmatpush.xpose.msra.mxu0 0.0
    %2862 = vmatpush.xpose.msra.mxu0 0.0
    %2863 = vmatpush.xpose.msra.mxu0 0.0
    %2864 = vmatpush.xpose.msra.mxu0 0.0
    %2865 = vmatpush.xpose.msra.mxu0 0.0
    %2866 = vmatpush.xpose.msra.mxu0 0.0
    %2867 = vmatpush.xpose.msra.mxu0 %v405
    %2868 = vmatpush.xpose.msra.mxu0 %v189
    %2869 = vmatmul.f32.gmra.mxu0 %v700
    %v2870 = vpop.f32.mrf.mxu0
    %v2871 = vadd.f32 %v2851, %v2870
    %2872 = vdwg.mxu0
    %2873 = vmatpush.xpose.msra.mxu0 0.0
    %2874 = vmatpush.xpose.msra.mxu0 0.0
    %2875 = vmatpush.xpose.msra.mxu0 0.0
    %2876 = vmatpush.xpose.msra.mxu0 0.0
    %2877 = vmatpush.xpose.msra.mxu0 0.0
    %2878 = vmatpush.xpose.msra.mxu0 0.0
    %2879 = vmatpush.xpose.msra.mxu0 0.0
    %2880 = vmatpush.xpose.msra.mxu0 0.0
    %2881 = vmatpush.xpose.msra.mxu0 0.0
    %2882 = vmatpush.xpose.msra.mxu0 0.0
    %2883 = vmatpush.xpose.msra.mxu0 0.0
    %2884 = vmatpush.xpose.msra.mxu0 0.0
    %2885 = vmatpush.xpose.msra.mxu0 0.0
    %2886 = vmatpush.xpose.msra.mxu0 0.0
    %2887 = vmatpush.xpose.msra.mxu0 %v406
    %2888 = vmatpush.xpose.msra.mxu0 %v190
    %2889 = vmatmul.f32.gmra.mxu0 %v701
    %v2890 = vpop.f32.mrf.mxu0
    %v2891 = vadd.f32 %v2871, %v2890
    %2892 = vdwg.mxu0
    %2893 = vmatpush.xpose.msra.mxu0 0.0
    %2894 = vmatpush.xpose.msra.mxu0 0.0
    %2895 = vmatpush.xpose.msra.mxu0 0.0
    %2896 = vmatpush.xpose.msra.mxu0 0.0
    %2897 = vmatpush.xpose.msra.mxu0 0.0
    %2898 = vmatpush.xpose.msra.mxu0 0.0
    %2899 = vmatpush.xpose.msra.mxu0 0.0
    %2900 = vmatpush.xpose.msra.mxu0 0.0
    %2901 = vmatpush.xpose.msra.mxu0 0.0
    %2902 = vmatpush.xpose.msra.mxu0 0.0
    %2903 = vmatpush.xpose.msra.mxu0 0.0
    %2904 = vmatpush.xpose.msra.mxu0 0.0
    %2905 = vmatpush.xpose.msra.mxu0 0.0
    %2906 = vmatpush.xpose.msra.mxu0 0.0
    %2907 = vmatpush.xpose.msra.mxu0 %v407
    %2908 = vmatpush.xpose.msra.mxu0 %v191
    %2909 = vmatmul.f32.gmra.mxu0 %v702
    %v2910 = vpop.f32.mrf.mxu0
    %v2911 = vadd.f32 %v2891, %v2910
    %2912 = vdwg.mxu0
    %2913 = vmatpush.xpose.msra.mxu0 0.0
    %2914 = vmatpush.xpose.msra.mxu0 0.0
    %2915 = vmatpush.xpose.msra.mxu0 0.0
    %2916 = vmatpush.xpose.msra.mxu0 0.0
    %2917 = vmatpush.xpose.msra.mxu0 0.0
    %2918 = vmatpush.xpose.msra.mxu0 0.0
    %2919 = vmatpush.xpose.msra.mxu0 0.0
    %2920 = vmatpush.xpose.msra.mxu0 0.0
    %2921 = vmatpush.xpose.msra.mxu0 0.0
    %2922 = vmatpush.xpose.msra.mxu0 0.0
    %2923 = vmatpush.xpose.msra.mxu0 0.0
    %2924 = vmatpush.xpose.msra.mxu0 0.0
    %2925 = vmatpush.xpose.msra.mxu0 0.0
    %2926 = vmatpush.xpose.msra.mxu0 0.0
    %2927 = vmatpush.xpose.msra.mxu0 %v408
    %2928 = vmatpush.xpose.msra.mxu0 %v192
    %2929 = vmatmul.f32.gmra.mxu0 %v703
    %v2930 = vpop.f32.mrf.mxu0
    %v2931 = vadd.f32 %v2911, %v2930
    %2932 = vdwg.mxu0
    %2933 = vmatpush.xpose.msra.mxu0 0.0
    %2934 = vmatpush.xpose.msra.mxu0 0.0
    %2935 = vmatpush.xpose.msra.mxu0 0.0
    %2936 = vmatpush.xpose.msra.mxu0 0.0
    %2937 = vmatpush.xpose.msra.mxu0 0.0
    %2938 = vmatpush.xpose.msra.mxu0 0.0
    %2939 = vmatpush.xpose.msra.mxu0 0.0
    %2940 = vmatpush.xpose.msra.mxu0 0.0
    %2941 = vmatpush.xpose.msra.mxu0 0.0
    %2942 = vmatpush.xpose.msra.mxu0 0.0
    %2943 = vmatpush.xpose.msra.mxu0 0.0
    %2944 = vmatpush.xpose.msra.mxu0 0.0
    %2945 = vmatpush.xpose.msra.mxu0 0.0
    %2946 = vmatpush.xpose.msra.mxu0 0.0
    %2947 = vmatpush.xpose.msra.mxu0 %v409
    %2948 = vmatpush.xpose.msra.mxu0 %v193
    %2949 = vmatmul.f32.gmra.mxu0 %v704
    %v2950 = vpop.f32.mrf.mxu0
    %v2951 = vadd.f32 %v2931, %v2950
    %2952 = vdwg.mxu0
    %2953 = vmatpush.xpose.msra.mxu0 0.0
    %2954 = vmatpush.xpose.msra.mxu0 0.0
    %2955 = vmatpush.xpose.msra.mxu0 0.0
    %2956 = vmatpush.xpose.msra.mxu0 0.0
    %2957 = vmatpush.xpose.msra.mxu0 0.0
    %2958 = vmatpush.xpose.msra.mxu0 0.0
    %2959 = vmatpush.xpose.msra.mxu0 0.0
    %2960 = vmatpush.xpose.msra.mxu0 0.0
    %2961 = vmatpush.xpose.msra.mxu0 0.0
    %2962 = vmatpush.xpose.msra.mxu0 0.0
    %2963 = vmatpush.xpose.msra.mxu0 0.0
    %2964 = vmatpush.xpose.msra.mxu0 0.0
    %2965 = vmatpush.xpose.msra.mxu0 0.0
    %2966 = vmatpush.xpose.msra.mxu0 0.0
    %2967 = vmatpush.xpose.msra.mxu0 %v410
    %2968 = vmatpush.xpose.msra.mxu0 %v194
    %2969 = vmatmul.f32.gmra.mxu0 %v705
    %v2970 = vpop.f32.mrf.mxu0
    %v2971 = vadd.f32 %v2951, %v2970
    %2972 = vdwg.mxu0
    %2973 = vmatpush.xpose.msra.mxu0 0.0
    %2974 = vmatpush.xpose.msra.mxu0 0.0
    %2975 = vmatpush.xpose.msra.mxu0 0.0
    %2976 = vmatpush.xpose.msra.mxu0 0.0
    %2977 = vmatpush.xpose.msra.mxu0 0.0
    %2978 = vmatpush.xpose.msra.mxu0 0.0
    %2979 = vmatpush.xpose.msra.mxu0 0.0
    %2980 = vmatpush.xpose.msra.mxu0 0.0
    %2981 = vmatpush.xpose.msra.mxu0 0.0
    %2982 = vmatpush.xpose.msra.mxu0 0.0
    %2983 = vmatpush.xpose.msra.mxu0 0.0
    %2984 = vmatpush.xpose.msra.mxu0 0.0
    %2985 = vmatpush.xpose.msra.mxu0 0.0
    %2986 = vmatpush.xpose.msra.mxu0 0.0
    %2987 = vmatpush.xpose.msra.mxu0 %v411
    %2988 = vmatpush.xpose.msra.mxu0 %v195
    %2989 = vmatmul.f32.gmra.mxu0 %v706
    %v2990 = vpop.f32.mrf.mxu0
    %v2991 = vadd.f32 %v2971, %v2990
    %2992 = vdwg.mxu0
    %2993 = vmatpush.xpose.msra.mxu0 0.0
    %2994 = vmatpush.xpose.msra.mxu0 0.0
    %2995 = vmatpush.xpose.msra.mxu0 0.0
    %2996 = vmatpush.xpose.msra.mxu0 0.0
    %2997 = vmatpush.xpose.msra.mxu0 0.0
    %2998 = vmatpush.xpose.msra.mxu0 0.0
    %2999 = vmatpush.xpose.msra.mxu0 0.0
    %3000 = vmatpush.xpose.msra.mxu0 0.0
    %3001 = vmatpush.xpose.msra.mxu0 0.0
    %3002 = vmatpush.xpose.msra.mxu0 0.0
    %3003 = vmatpush.xpose.msra.mxu0 0.0
    %3004 = vmatpush.xpose.msra.mxu0 0.0
    %3005 = vmatpush.xpose.msra.mxu0 0.0
    %3006 = vmatpush.xpose.msra.mxu0 0.0
    %3007 = vmatpush.xpose.msra.mxu0 %v412
    %3008 = vmatpush.xpose.msra.mxu0 %v196
    %3009 = vmatmul.f32.gmra.mxu0 %v709
    %v3010 = vpop.f32.mrf.mxu0
    %v3011 = vadd.f32 %v2991, %v3010
    %3012 = vdwg.mxu0
    %3013 = vmatpush.xpose.msra.mxu0 0.0
    %3014 = vmatpush.xpose.msra.mxu0 0.0
    %3015 = vmatpush.xpose.msra.mxu0 0.0
    %3016 = vmatpush.xpose.msra.mxu0 0.0
    %3017 = vmatpush.xpose.msra.mxu0 0.0
    %3018 = vmatpush.xpose.msra.mxu0 0.0
    %3019 = vmatpush.xpose.msra.mxu0 0.0
    %3020 = vmatpush.xpose.msra.mxu0 0.0
    %3021 = vmatpush.xpose.msra.mxu0 0.0
    %3022 = vmatpush.xpose.msra.mxu0 0.0
    %3023 = vmatpush.xpose.msra.mxu0 0.0
    %3024 = vmatpush.xpose.msra.mxu0 0.0
    %3025 = vmatpush.xpose.msra.mxu0 0.0
    %3026 = vmatpush.xpose.msra.mxu0 0.0
    %3027 = vmatpush.xpose.msra.mxu0 %v413
    %3028 = vmatpush.xpose.msra.mxu0 %v197
    %3029 = vmatmul.f32.gmra.mxu0 %v710
    %v3030 = vpop.f32.mrf.mxu0
    %v3031 = vadd.f32 %v3011, %v3030
    %3032 = vdwg.mxu0
    %3033 = vmatpush.xpose.msra.mxu0 0.0
    %3034 = vmatpush.xpose.msra.mxu0 0.0
    %3035 = vmatpush.xpose.msra.mxu0 0.0
    %3036 = vmatpush.xpose.msra.mxu0 0.0
    %3037 = vmatpush.xpose.msra.mxu0 0.0
    %3038 = vmatpush.xpose.msra.mxu0 0.0
    %3039 = vmatpush.xpose.msra.mxu0 0.0
    %3040 = vmatpush.xpose.msra.mxu0 0.0
    %3041 = vmatpush.xpose.msra.mxu0 0.0
    %3042 = vmatpush.xpose.msra.mxu0 0.0
    %3043 = vmatpush.xpose.msra.mxu0 0.0
    %3044 = vmatpush.xpose.msra.mxu0 0.0
    %3045 = vmatpush.xpose.msra.mxu0 0.0
    %3046 = vmatpush.xpose.msra.mxu0 0.0
    %3047 = vmatpush.xpose.msra.mxu0 %v414
    %3048 = vmatpush.xpose.msra.mxu0 %v198
    %3049 = vmatmul.f32.gmra.mxu0 %v711
    %v3050 = vpop.f32.mrf.mxu0
    %v3051 = vadd.f32 %v3031, %v3050
    %3052 = vdwg.mxu0
    %3053 = vmatpush.xpose.msra.mxu0 0.0
    %3054 = vmatpush.xpose.msra.mxu0 0.0
    %3055 = vmatpush.xpose.msra.mxu0 0.0
    %3056 = vmatpush.xpose.msra.mxu0 0.0
    %3057 = vmatpush.xpose.msra.mxu0 0.0
    %3058 = vmatpush.xpose.msra.mxu0 0.0
    %3059 = vmatpush.xpose.msra.mxu0 0.0
    %3060 = vmatpush.xpose.msra.mxu0 0.0
    %3061 = vmatpush.xpose.msra.mxu0 0.0
    %3062 = vmatpush.xpose.msra.mxu0 0.0
    %3063 = vmatpush.xpose.msra.mxu0 0.0
    %3064 = vmatpush.xpose.msra.mxu0 0.0
    %3065 = vmatpush.xpose.msra.mxu0 0.0
    %3066 = vmatpush.xpose.msra.mxu0 0.0
    %3067 = vmatpush.xpose.msra.mxu0 %v415
    %3068 = vmatpush.xpose.msra.mxu0 %v199
    %3069 = vmatmul.f32.gmra.mxu0 %v712
    %v3070 = vpop.f32.mrf.mxu0
    %v3071 = vadd.f32 %v3051, %v3070
    %3072 = vdwg.mxu0
    %3073 = vmatpush.xpose.msra.mxu0 0.0
    %3074 = vmatpush.xpose.msra.mxu0 0.0
    %3075 = vmatpush.xpose.msra.mxu0 0.0
    %3076 = vmatpush.xpose.msra.mxu0 0.0
    %3077 = vmatpush.xpose.msra.mxu0 0.0
    %3078 = vmatpush.xpose.msra.mxu0 0.0
    %3079 = vmatpush.xpose.msra.mxu0 0.0
    %3080 = vmatpush.xpose.msra.mxu0 0.0
    %3081 = vmatpush.xpose.msra.mxu0 0.0
    %3082 = vmatpush.xpose.msra.mxu0 0.0
    %3083 = vmatpush.xpose.msra.mxu0 0.0
    %3084 = vmatpush.xpose.msra.mxu0 0.0
    %3085 = vmatpush.xpose.msra.mxu0 0.0
    %3086 = vmatpush.xpose.msra.mxu0 0.0
    %3087 = vmatpush.xpose.msra.mxu0 %v416
    %3088 = vmatpush.xpose.msra.mxu0 %v200
    %3089 = vmatmul.f32.gmra.mxu0 %v713
    %v3090 = vpop.f32.mrf.mxu0
    %v3091 = vadd.f32 %v3071, %v3090
    %3092 = vdwg.mxu0
    %3093 = vmatpush.xpose.msra.mxu0 0.0
    %3094 = vmatpush.xpose.msra.mxu0 0.0
    %3095 = vmatpush.xpose.msra.mxu0 0.0
    %3096 = vmatpush.xpose.msra.mxu0 0.0
    %3097 = vmatpush.xpose.msra.mxu0 0.0
    %3098 = vmatpush.xpose.msra.mxu0 0.0
    %3099 = vmatpush.xpose.msra.mxu0 0.0
    %3100 = vmatpush.xpose.msra.mxu0 0.0
    %3101 = vmatpush.xpose.msra.mxu0 0.0
    %3102 = vmatpush.xpose.msra.mxu0 0.0
    %3103 = vmatpush.xpose.msra.mxu0 0.0
    %3104 = vmatpush.xpose.msra.mxu0 0.0
    %3105 = vmatpush.xpose.msra.mxu0 0.0
    %3106 = vmatpush.xpose.msra.mxu0 0.0
    %3107 = vmatpush.xpose.msra.mxu0 %v417
    %3108 = vmatpush.xpose.msra.mxu0 %v201
    %3109 = vmatmul.f32.gmra.mxu0 %v714
    %v3110 = vpop.f32.mrf.mxu0
    %v3111 = vadd.f32 %v3091, %v3110
    %3112 = vdwg.mxu0
    %3113 = vmatpush.xpose.msra.mxu0 0.0
    %3114 = vmatpush.xpose.msra.mxu0 0.0
    %3115 = vmatpush.xpose.msra.mxu0 0.0
    %3116 = vmatpush.xpose.msra.mxu0 0.0
    %3117 = vmatpush.xpose.msra.mxu0 0.0
    %3118 = vmatpush.xpose.msra.mxu0 0.0
    %3119 = vmatpush.xpose.msra.mxu0 0.0
    %3120 = vmatpush.xpose.msra.mxu0 0.0
    %3121 = vmatpush.xpose.msra.mxu0 0.0
    %3122 = vmatpush.xpose.msra.mxu0 0.0
    %3123 = vmatpush.xpose.msra.mxu0 0.0
    %3124 = vmatpush.xpose.msra.mxu0 0.0
    %3125 = vmatpush.xpose.msra.mxu0 0.0
    %3126 = vmatpush.xpose.msra.mxu0 0.0
    %3127 = vmatpush.xpose.msra.mxu0 %v418
    %3128 = vmatpush.xpose.msra.mxu0 %v202
    %3129 = vmatmul.f32.gmra.mxu0 %v715
    %v3130 = vpop.f32.mrf.mxu0
    %v3131 = vadd.f32 %v3111, %v3130
    %3132 = vdwg.mxu0
    %3133 = vmatpush.xpose.msra.mxu0 0.0
    %3134 = vmatpush.xpose.msra.mxu0 0.0
    %3135 = vmatpush.xpose.msra.mxu0 0.0
    %3136 = vmatpush.xpose.msra.mxu0 0.0
    %3137 = vmatpush.xpose.msra.mxu0 0.0
    %3138 = vmatpush.xpose.msra.mxu0 0.0
    %3139 = vmatpush.xpose.msra.mxu0 0.0
    %3140 = vmatpush.xpose.msra.mxu0 0.0
    %3141 = vmatpush.xpose.msra.mxu0 0.0
    %3142 = vmatpush.xpose.msra.mxu0 0.0
    %3143 = vmatpush.xpose.msra.mxu0 0.0
    %3144 = vmatpush.xpose.msra.mxu0 0.0
    %3145 = vmatpush.xpose.msra.mxu0 0.0
    %3146 = vmatpush.xpose.msra.mxu0 0.0
    %3147 = vmatpush.xpose.msra.mxu0 %v419
    %3148 = vmatpush.xpose.msra.mxu0 %v203
    %3149 = vmatmul.f32.gmra.mxu0 %v716
    %v3150 = vpop.f32.mrf.mxu0
    %v3151 = vadd.f32 %v3131, %v3150
    %3152 = vdwg.mxu0
    %3153 = vmatpush.xpose.msra.mxu0 0.0
    %3154 = vmatpush.xpose.msra.mxu0 0.0
    %3155 = vmatpush.xpose.msra.mxu0 0.0
    %3156 = vmatpush.xpose.msra.mxu0 0.0
    %3157 = vmatpush.xpose.msra.mxu0 0.0
    %3158 = vmatpush.xpose.msra.mxu0 0.0
    %3159 = vmatpush.xpose.msra.mxu0 0.0
    %3160 = vmatpush.xpose.msra.mxu0 0.0
    %3161 = vmatpush.xpose.msra.mxu0 0.0
    %3162 = vmatpush.xpose.msra.mxu0 0.0
    %3163 = vmatpush.xpose.msra.mxu0 0.0
    %3164 = vmatpush.xpose.msra.mxu0 0.0
    %3165 = vmatpush.xpose.msra.mxu0 0.0
    %3166 = vmatpush.xpose.msra.mxu0 0.0
    %3167 = vmatpush.xpose.msra.mxu0 %v420
    %3168 = vmatpush.xpose.msra.mxu0 %v204
    %3169 = vmatmul.f32.gmra.mxu0 %v719
    %v3170 = vpop.f32.mrf.mxu0
    %v3171 = vadd.f32 %v3151, %v3170
    %3172 = vdwg.mxu0
    %3173 = vmatpush.xpose.msra.mxu0 0.0
    %3174 = vmatpush.xpose.msra.mxu0 0.0
    %3175 = vmatpush.xpose.msra.mxu0 0.0
    %3176 = vmatpush.xpose.msra.mxu0 0.0
    %3177 = vmatpush.xpose.msra.mxu0 0.0
    %3178 = vmatpush.xpose.msra.mxu0 0.0
    %3179 = vmatpush.xpose.msra.mxu0 0.0
    %3180 = vmatpush.xpose.msra.mxu0 0.0
    %3181 = vmatpush.xpose.msra.mxu0 0.0
    %3182 = vmatpush.xpose.msra.mxu0 0.0
    %3183 = vmatpush.xpose.msra.mxu0 0.0
    %3184 = vmatpush.xpose.msra.mxu0 0.0
    %3185 = vmatpush.xpose.msra.mxu0 0.0
    %3186 = vmatpush.xpose.msra.mxu0 0.0
    %3187 = vmatpush.xpose.msra.mxu0 %v421
    %3188 = vmatpush.xpose.msra.mxu0 %v205
    %3189 = vmatmul.f32.gmra.mxu0 %v720
    %v3190 = vpop.f32.mrf.mxu0
    %v3191 = vadd.f32 %v3171, %v3190
    %3192 = vdwg.mxu0
    %3193 = vmatpush.xpose.msra.mxu0 0.0
    %3194 = vmatpush.xpose.msra.mxu0 0.0
    %3195 = vmatpush.xpose.msra.mxu0 0.0
    %3196 = vmatpush.xpose.msra.mxu0 0.0
    %3197 = vmatpush.xpose.msra.mxu0 0.0
    %3198 = vmatpush.xpose.msra.mxu0 0.0
    %3199 = vmatpush.xpose.msra.mxu0 0.0
    %3200 = vmatpush.xpose.msra.mxu0 0.0
    %3201 = vmatpush.xpose.msra.mxu0 0.0
    %3202 = vmatpush.xpose.msra.mxu0 0.0
    %3203 = vmatpush.xpose.msra.mxu0 0.0
    %3204 = vmatpush.xpose.msra.mxu0 0.0
    %3205 = vmatpush.xpose.msra.mxu0 0.0
    %3206 = vmatpush.xpose.msra.mxu0 0.0
    %3207 = vmatpush.xpose.msra.mxu0 %v422
    %3208 = vmatpush.xpose.msra.mxu0 %v206
    %3209 = vmatmul.f32.gmra.mxu0 %v721
    %v3210 = vpop.f32.mrf.mxu0
    %v3211 = vadd.f32 %v3191, %v3210
    %3212 = vdwg.mxu0
    %3213 = vmatpush.xpose.msra.mxu0 0.0
    %3214 = vmatpush.xpose.msra.mxu0 0.0
    %3215 = vmatpush.xpose.msra.mxu0 0.0
    %3216 = vmatpush.xpose.msra.mxu0 0.0
    %3217 = vmatpush.xpose.msra.mxu0 0.0
    %3218 = vmatpush.xpose.msra.mxu0 0.0
    %3219 = vmatpush.xpose.msra.mxu0 0.0
    %3220 = vmatpush.xpose.msra.mxu0 0.0
    %3221 = vmatpush.xpose.msra.mxu0 0.0
    %3222 = vmatpush.xpose.msra.mxu0 0.0
    %3223 = vmatpush.xpose.msra.mxu0 0.0
    %3224 = vmatpush.xpose.msra.mxu0 0.0
    %3225 = vmatpush.xpose.msra.mxu0 0.0
    %3226 = vmatpush.xpose.msra.mxu0 0.0
    %3227 = vmatpush.xpose.msra.mxu0 %v423
    %3228 = vmatpush.xpose.msra.mxu0 %v207
    %3229 = vmatmul.f32.gmra.mxu0 %v722
    %v3230 = vpop.f32.mrf.mxu0
    %v3231 = vadd.f32 %v3211, %v3230
    %3232 = vdwg.mxu0
    %3233 = vmatpush.xpose.msra.mxu0 0.0
    %3234 = vmatpush.xpose.msra.mxu0 0.0
    %3235 = vmatpush.xpose.msra.mxu0 0.0
    %3236 = vmatpush.xpose.msra.mxu0 0.0
    %3237 = vmatpush.xpose.msra.mxu0 0.0
    %3238 = vmatpush.xpose.msra.mxu0 0.0
    %3239 = vmatpush.xpose.msra.mxu0 0.0
    %3240 = vmatpush.xpose.msra.mxu0 0.0
    %3241 = vmatpush.xpose.msra.mxu0 0.0
    %3242 = vmatpush.xpose.msra.mxu0 0.0
    %3243 = vmatpush.xpose.msra.mxu0 0.0
    %3244 = vmatpush.xpose.msra.mxu0 0.0
    %3245 = vmatpush.xpose.msra.mxu0 0.0
    %3246 = vmatpush.xpose.msra.mxu0 0.0
    %3247 = vmatpush.xpose.msra.mxu0 %v424
    %3248 = vmatpush.xpose.msra.mxu0 %v208
    %3249 = vmatmul.f32.gmra.mxu0 %v723
    %v3250 = vpop.f32.mrf.mxu0
    %v3251 = vadd.f32 %v3231, %v3250
    %3252 = vdwg.mxu0
    %3253 = vmatpush.xpose.msra.mxu0 0.0
    %3254 = vmatpush.xpose.msra.mxu0 0.0
    %3255 = vmatpush.xpose.msra.mxu0 0.0
    %3256 = vmatpush.xpose.msra.mxu0 0.0
    %3257 = vmatpush.xpose.msra.mxu0 0.0
    %3258 = vmatpush.xpose.msra.mxu0 0.0
    %3259 = vmatpush.xpose.msra.mxu0 0.0
    %3260 = vmatpush.xpose.msra.mxu0 0.0
    %3261 = vmatpush.xpose.msra.mxu0 0.0
    %3262 = vmatpush.xpose.msra.mxu0 0.0
    %3263 = vmatpush.xpose.msra.mxu0 0.0
    %3264 = vmatpush.xpose.msra.mxu0 0.0
    %3265 = vmatpush.xpose.msra.mxu0 0.0
    %3266 = vmatpush.xpose.msra.mxu0 0.0
    %3267 = vmatpush.xpose.msra.mxu0 %v425
    %3268 = vmatpush.xpose.msra.mxu0 %v209
    %3269 = vmatmul.f32.gmra.mxu0 %v724
    %v3270 = vpop.f32.mrf.mxu0
    %v3271 = vadd.f32 %v3251, %v3270
    %3272 = vdwg.mxu0
    %3273 = vmatpush.xpose.msra.mxu0 0.0
    %3274 = vmatpush.xpose.msra.mxu0 0.0
    %3275 = vmatpush.xpose.msra.mxu0 0.0
    %3276 = vmatpush.xpose.msra.mxu0 0.0
    %3277 = vmatpush.xpose.msra.mxu0 0.0
    %3278 = vmatpush.xpose.msra.mxu0 0.0
    %3279 = vmatpush.xpose.msra.mxu0 0.0
    %3280 = vmatpush.xpose.msra.mxu0 0.0
    %3281 = vmatpush.xpose.msra.mxu0 0.0
    %3282 = vmatpush.xpose.msra.mxu0 0.0
    %3283 = vmatpush.xpose.msra.mxu0 0.0
    %3284 = vmatpush.xpose.msra.mxu0 0.0
    %3285 = vmatpush.xpose.msra.mxu0 0.0
    %3286 = vmatpush.xpose.msra.mxu0 0.0
    %3287 = vmatpush.xpose.msra.mxu0 %v426
    %3288 = vmatpush.xpose.msra.mxu0 %v210
    %3289 = vmatmul.f32.gmra.mxu0 %v725
    %v3290 = vpop.f32.mrf.mxu0
    %v3291 = vadd.f32 %v3271, %v3290
    %3292 = vdwg.mxu0
    %3293 = vmatpush.xpose.msra.mxu0 0.0
    %3294 = vmatpush.xpose.msra.mxu0 0.0
    %3295 = vmatpush.xpose.msra.mxu0 0.0
    %3296 = vmatpush.xpose.msra.mxu0 0.0
    %3297 = vmatpush.xpose.msra.mxu0 0.0
    %3298 = vmatpush.xpose.msra.mxu0 0.0
    %3299 = vmatpush.xpose.msra.mxu0 0.0
    %3300 = vmatpush.xpose.msra.mxu0 0.0
    %3301 = vmatpush.xpose.msra.mxu0 0.0
    %3302 = vmatpush.xpose.msra.mxu0 0.0
    %3303 = vmatpush.xpose.msra.mxu0 0.0
    %3304 = vmatpush.xpose.msra.mxu0 0.0
    %3305 = vmatpush.xpose.msra.mxu0 0.0
    %3306 = vmatpush.xpose.msra.mxu0 0.0
    %3307 = vmatpush.xpose.msra.mxu0 %v427
    %3308 = vmatpush.xpose.msra.mxu0 %v211
    %3309 = vmatmul.f32.gmra.mxu0 %v726
    %v3310 = vpop.f32.mrf.mxu0
    %v3311 = vadd.f32 %v3291, %v3310
    %3312 = vdwg.mxu0
    %3313 = vmatpush.xpose.msra.mxu0 0.0
    %3314 = vmatpush.xpose.msra.mxu0 0.0
    %3315 = vmatpush.xpose.msra.mxu0 0.0
    %3316 = vmatpush.xpose.msra.mxu0 0.0
    %3317 = vmatpush.xpose.msra.mxu0 0.0
    %3318 = vmatpush.xpose.msra.mxu0 0.0
    %3319 = vmatpush.xpose.msra.mxu0 0.0
    %3320 = vmatpush.xpose.msra.mxu0 0.0
    %3321 = vmatpush.xpose.msra.mxu0 0.0
    %3322 = vmatpush.xpose.msra.mxu0 0.0
    %3323 = vmatpush.xpose.msra.mxu0 0.0
    %3324 = vmatpush.xpose.msra.mxu0 0.0
    %3325 = vmatpush.xpose.msra.mxu0 0.0
    %3326 = vmatpush.xpose.msra.mxu0 0.0
    %3327 = vmatpush.xpose.msra.mxu0 %v428
    %3328 = vmatpush.xpose.msra.mxu0 %v212
    %3329 = vmatmul.f32.gmra.mxu0 %v729
    %v3330 = vpop.f32.mrf.mxu0
    %v3331 = vadd.f32 %v3311, %v3330
    %3332 = vdwg.mxu0
    %3333 = vmatpush.xpose.msra.mxu0 0.0
    %3334 = vmatpush.xpose.msra.mxu0 0.0
    %3335 = vmatpush.xpose.msra.mxu0 0.0
    %3336 = vmatpush.xpose.msra.mxu0 0.0
    %3337 = vmatpush.xpose.msra.mxu0 0.0
    %3338 = vmatpush.xpose.msra.mxu0 0.0
    %3339 = vmatpush.xpose.msra.mxu0 0.0
    %3340 = vmatpush.xpose.msra.mxu0 0.0
    %3341 = vmatpush.xpose.msra.mxu0 0.0
    %3342 = vmatpush.xpose.msra.mxu0 0.0
    %3343 = vmatpush.xpose.msra.mxu0 0.0
    %3344 = vmatpush.xpose.msra.mxu0 0.0
    %3345 = vmatpush.xpose.msra.mxu0 0.0
    %3346 = vmatpush.xpose.msra.mxu0 0.0
    %3347 = vmatpush.xpose.msra.mxu0 %v429
    %3348 = vmatpush.xpose.msra.mxu0 %v213
    %3349 = vmatmul.f32.gmra.mxu0 %v730
    %v3350 = vpop.f32.mrf.mxu0
    %v3351 = vadd.f32 %v3331, %v3350
    %3352 = vdwg.mxu0
    %3353 = vmatpush.xpose.msra.mxu0 0.0
    %3354 = vmatpush.xpose.msra.mxu0 0.0
    %3355 = vmatpush.xpose.msra.mxu0 0.0
    %3356 = vmatpush.xpose.msra.mxu0 0.0
    %3357 = vmatpush.xpose.msra.mxu0 0.0
    %3358 = vmatpush.xpose.msra.mxu0 0.0
    %3359 = vmatpush.xpose.msra.mxu0 0.0
    %3360 = vmatpush.xpose.msra.mxu0 0.0
    %3361 = vmatpush.xpose.msra.mxu0 0.0
    %3362 = vmatpush.xpose.msra.mxu0 0.0
    %3363 = vmatpush.xpose.msra.mxu0 0.0
    %3364 = vmatpush.xpose.msra.mxu0 0.0
    %3365 = vmatpush.xpose.msra.mxu0 0.0
    %3366 = vmatpush.xpose.msra.mxu0 0.0
    %3367 = vmatpush.xpose.msra.mxu0 %v430
    %3368 = vmatpush.xpose.msra.mxu0 %v214
    %3369 = vmatmul.f32.gmra.mxu0 %v731
    %v3370 = vpop.f32.mrf.mxu0
    %v3371 = vadd.f32 %v3351, %v3370
    %3372 = vdwg.mxu0
    %3373 = vmatpush.xpose.msra.mxu0 0.0
    %3374 = vmatpush.xpose.msra.mxu0 0.0
    %3375 = vmatpush.xpose.msra.mxu0 0.0
    %3376 = vmatpush.xpose.msra.mxu0 0.0
    %3377 = vmatpush.xpose.msra.mxu0 0.0
    %3378 = vmatpush.xpose.msra.mxu0 0.0
    %3379 = vmatpush.xpose.msra.mxu0 0.0
    %3380 = vmatpush.xpose.msra.mxu0 0.0
    %3381 = vmatpush.xpose.msra.mxu0 0.0
    %3382 = vmatpush.xpose.msra.mxu0 0.0
    %3383 = vmatpush.xpose.msra.mxu0 0.0
    %3384 = vmatpush.xpose.msra.mxu0 0.0
    %3385 = vmatpush.xpose.msra.mxu0 0.0
    %3386 = vmatpush.xpose.msra.mxu0 0.0
    %3387 = vmatpush.xpose.msra.mxu0 %v431
    %3388 = vmatpush.xpose.msra.mxu0 %v215
    %3389 = vmatmul.f32.gmra.mxu0 %v732
    %v3390 = vpop.f32.mrf.mxu0
    %v3391 = vadd.f32 %v3371, %v3390
    %3392 = vdwg.mxu0
    %3393 = vmatpush.xpose.msra.mxu0 0.0
    %3394 = vmatpush.xpose.msra.mxu0 0.0
    %3395 = vmatpush.xpose.msra.mxu0 0.0
    %3396 = vmatpush.xpose.msra.mxu0 0.0
    %3397 = vmatpush.xpose.msra.mxu0 0.0
    %3398 = vmatpush.xpose.msra.mxu0 0.0
    %3399 = vmatpush.xpose.msra.mxu0 0.0
    %3400 = vmatpush.xpose.msra.mxu0 0.0
    %3401 = vmatpush.xpose.msra.mxu0 0.0
    %3402 = vmatpush.xpose.msra.mxu0 0.0
    %3403 = vmatpush.xpose.msra.mxu0 0.0
    %3404 = vmatpush.xpose.msra.mxu0 0.0
    %3405 = vmatpush.xpose.msra.mxu0 0.0
    %3406 = vmatpush.xpose.msra.mxu0 0.0
    %3407 = vmatpush.xpose.msra.mxu0 %v432
    %3408 = vmatpush.xpose.msra.mxu0 %v216
    %3409 = vmatmul.f32.gmra.mxu0 %v733
    %v3410 = vpop.f32.mrf.mxu0
    %v3411 = vadd.f32 %v3391, %v3410
    %3412 = vdwg.mxu0
    %3413 = vmatpush.xpose.msra.mxu0 0.0
    %3414 = vmatpush.xpose.msra.mxu0 0.0
    %3415 = vmatpush.xpose.msra.mxu0 0.0
    %3416 = vmatpush.xpose.msra.mxu0 0.0
    %3417 = vmatpush.xpose.msra.mxu0 0.0
    %3418 = vmatpush.xpose.msra.mxu0 0.0
    %3419 = vmatpush.xpose.msra.mxu0 0.0
    %3420 = vmatpush.xpose.msra.mxu0 0.0
    %3421 = vmatpush.xpose.msra.mxu0 0.0
    %3422 = vmatpush.xpose.msra.mxu0 0.0
    %3423 = vmatpush.xpose.msra.mxu0 0.0
    %3424 = vmatpush.xpose.msra.mxu0 0.0
    %3425 = vmatpush.xpose.msra.mxu0 0.0
    %3426 = vmatpush.xpose.msra.mxu0 0.0
    %3427 = vmatpush.xpose.msra.mxu0 %v433
    %3428 = vmatpush.xpose.msra.mxu0 %v217
    %3429 = vmatmul.f32.gmra.mxu0 %v734
    %v3430 = vpop.f32.mrf.mxu0
    %v3431 = vadd.f32 %v3411, %v3430
    %3432 = vdwg.mxu0
    %3433 = vmatpush.xpose.msra.mxu0 0.0
    %3434 = vmatpush.xpose.msra.mxu0 0.0
    %3435 = vmatpush.xpose.msra.mxu0 0.0
    %3436 = vmatpush.xpose.msra.mxu0 0.0
    %3437 = vmatpush.xpose.msra.mxu0 0.0
    %3438 = vmatpush.xpose.msra.mxu0 0.0
    %3439 = vmatpush.xpose.msra.mxu0 0.0
    %3440 = vmatpush.xpose.msra.mxu0 0.0
    %3441 = vmatpush.xpose.msra.mxu0 0.0
    %3442 = vmatpush.xpose.msra.mxu0 0.0
    %3443 = vmatpush.xpose.msra.mxu0 0.0
    %3444 = vmatpush.xpose.msra.mxu0 0.0
    %3445 = vmatpush.xpose.msra.mxu0 0.0
    %3446 = vmatpush.xpose.msra.mxu0 0.0
    %3447 = vmatpush.xpose.msra.mxu0 %v434
    %3448 = vmatpush.xpose.msra.mxu0 %v218
    %3449 = vmatmul.f32.gmra.mxu0 %v735
    %v3450 = vpop.f32.mrf.mxu0
    %v3451 = vadd.f32 %v3431, %v3450
    %3452 = vdwg.mxu0
    %3453 = vmatpush.xpose.msra.mxu0 0.0
    %3454 = vmatpush.xpose.msra.mxu0 0.0
    %3455 = vmatpush.xpose.msra.mxu0 0.0
    %3456 = vmatpush.xpose.msra.mxu0 0.0
    %3457 = vmatpush.xpose.msra.mxu0 0.0
    %3458 = vmatpush.xpose.msra.mxu0 0.0
    %3459 = vmatpush.xpose.msra.mxu0 0.0
    %3460 = vmatpush.xpose.msra.mxu0 0.0
    %3461 = vmatpush.xpose.msra.mxu0 0.0
    %3462 = vmatpush.xpose.msra.mxu0 0.0
    %3463 = vmatpush.xpose.msra.mxu0 0.0
    %3464 = vmatpush.xpose.msra.mxu0 0.0
    %3465 = vmatpush.xpose.msra.mxu0 0.0
    %3466 = vmatpush.xpose.msra.mxu0 0.0
    %3467 = vmatpush.xpose.msra.mxu0 %v435
    %3468 = vmatpush.xpose.msra.mxu0 %v219
    %3469 = vmatmul.f32.gmra.mxu0 %v736
    %v3470 = vpop.f32.mrf.mxu0
    %v3471 = vadd.f32 %v3451, %v3470
    %3472 = vdwg.mxu0
    %3473 = vmatpush.xpose.msra.mxu0 0.0
    %3474 = vmatpush.xpose.msra.mxu0 0.0
    %3475 = vmatpush.xpose.msra.mxu0 0.0
    %3476 = vmatpush.xpose.msra.mxu0 0.0
    %3477 = vmatpush.xpose.msra.mxu0 0.0
    %3478 = vmatpush.xpose.msra.mxu0 0.0
    %3479 = vmatpush.xpose.msra.mxu0 0.0
    %3480 = vmatpush.xpose.msra.mxu0 0.0
    %3481 = vmatpush.xpose.msra.mxu0 0.0
    %3482 = vmatpush.xpose.msra.mxu0 0.0
    %3483 = vmatpush.xpose.msra.mxu0 0.0
    %3484 = vmatpush.xpose.msra.mxu0 0.0
    %3485 = vmatpush.xpose.msra.mxu0 0.0
    %3486 = vmatpush.xpose.msra.mxu0 0.0
    %3487 = vmatpush.xpose.msra.mxu0 %v436
    %3488 = vmatpush.xpose.msra.mxu0 %v220
    %3489 = vmatmul.f32.gmra.mxu0 %v739
    %v3490 = vpop.f32.mrf.mxu0
    %v3491 = vadd.f32 %v3471, %v3490
    %3492 = vdwg.mxu0
    %3493 = vmatpush.xpose.msra.mxu0 0.0
    %3494 = vmatpush.xpose.msra.mxu0 0.0
    %3495 = vmatpush.xpose.msra.mxu0 0.0
    %3496 = vmatpush.xpose.msra.mxu0 0.0
    %3497 = vmatpush.xpose.msra.mxu0 0.0
    %3498 = vmatpush.xpose.msra.mxu0 0.0
    %3499 = vmatpush.xpose.msra.mxu0 0.0
    %3500 = vmatpush.xpose.msra.mxu0 0.0
    %3501 = vmatpush.xpose.msra.mxu0 0.0
    %3502 = vmatpush.xpose.msra.mxu0 0.0
    %3503 = vmatpush.xpose.msra.mxu0 0.0
    %3504 = vmatpush.xpose.msra.mxu0 0.0
    %3505 = vmatpush.xpose.msra.mxu0 0.0
    %3506 = vmatpush.xpose.msra.mxu0 0.0
    %3507 = vmatpush.xpose.msra.mxu0 %v437
    %3508 = vmatpush.xpose.msra.mxu0 %v221
    %3509 = vmatmul.f32.gmra.mxu0 %v740
    %v3510 = vpop.f32.mrf.mxu0
    %v3511 = vadd.f32 %v3491, %v3510
    %3512 = vdwg.mxu0
    %3513 = vmatpush.xpose.msra.mxu0 0.0
    %3514 = vmatpush.xpose.msra.mxu0 0.0
    %3515 = vmatpush.xpose.msra.mxu0 0.0
    %3516 = vmatpush.xpose.msra.mxu0 0.0
    %3517 = vmatpush.xpose.msra.mxu0 0.0
    %3518 = vmatpush.xpose.msra.mxu0 0.0
    %3519 = vmatpush.xpose.msra.mxu0 0.0
    %3520 = vmatpush.xpose.msra.mxu0 0.0
    %3521 = vmatpush.xpose.msra.mxu0 0.0
    %3522 = vmatpush.xpose.msra.mxu0 0.0
    %3523 = vmatpush.xpose.msra.mxu0 0.0
    %3524 = vmatpush.xpose.msra.mxu0 0.0
    %3525 = vmatpush.xpose.msra.mxu0 0.0
    %3526 = vmatpush.xpose.msra.mxu0 0.0
    %3527 = vmatpush.xpose.msra.mxu0 %v438
    %3528 = vmatpush.xpose.msra.mxu0 %v222
    %3529 = vmatmul.f32.gmra.mxu0 %v741
    %v3530 = vpop.f32.mrf.mxu0
    %v3531 = vadd.f32 %v3511, %v3530
    %3532 = vdwg.mxu0
    %3533 = vmatpush.xpose.msra.mxu0 0.0
    %3534 = vmatpush.xpose.msra.mxu0 0.0
    %3535 = vmatpush.xpose.msra.mxu0 0.0
    %3536 = vmatpush.xpose.msra.mxu0 0.0
    %3537 = vmatpush.xpose.msra.mxu0 0.0
    %3538 = vmatpush.xpose.msra.mxu0 0.0
    %3539 = vmatpush.xpose.msra.mxu0 0.0
    %3540 = vmatpush.xpose.msra.mxu0 0.0
    %3541 = vmatpush.xpose.msra.mxu0 0.0
    %3542 = vmatpush.xpose.msra.mxu0 0.0
    %3543 = vmatpush.xpose.msra.mxu0 0.0
    %3544 = vmatpush.xpose.msra.mxu0 0.0
    %3545 = vmatpush.xpose.msra.mxu0 0.0
    %3546 = vmatpush.xpose.msra.mxu0 0.0
    %3547 = vmatpush.xpose.msra.mxu0 %v439
    %3548 = vmatpush.xpose.msra.mxu0 %v223
    %3549 = vmatmul.f32.gmra.mxu0 %v742
    %v3550 = vpop.f32.mrf.mxu0
    %v3551 = vadd.f32 %v3531, %v3550
    %3552 = vdwg.mxu0
    %3553 = vmatpush.xpose.msra.mxu0 0.0
    %3554 = vmatpush.xpose.msra.mxu0 0.0
    %3555 = vmatpush.xpose.msra.mxu0 0.0
    %3556 = vmatpush.xpose.msra.mxu0 0.0
    %3557 = vmatpush.xpose.msra.mxu0 0.0
    %3558 = vmatpush.xpose.msra.mxu0 0.0
    %3559 = vmatpush.xpose.msra.mxu0 0.0
    %3560 = vmatpush.xpose.msra.mxu0 0.0
    %3561 = vmatpush.xpose.msra.mxu0 0.0
    %3562 = vmatpush.xpose.msra.mxu0 0.0
    %3563 = vmatpush.xpose.msra.mxu0 0.0
    %3564 = vmatpush.xpose.msra.mxu0 0.0
    %3565 = vmatpush.xpose.msra.mxu0 0.0
    %3566 = vmatpush.xpose.msra.mxu0 0.0
    %3567 = vmatpush.xpose.msra.mxu0 %v440
    %3568 = vmatpush.xpose.msra.mxu0 %v224
    %3569 = vmatmul.f32.gmra.mxu0 %v743
    %v3570 = vpop.f32.mrf.mxu0
    %v3571 = vadd.f32 %v3551, %v3570
    %3572 = vdwg.mxu0
    %3573 = vmatpush.xpose.msra.mxu0 0.0
    %3574 = vmatpush.xpose.msra.mxu0 0.0
    %3575 = vmatpush.xpose.msra.mxu0 0.0
    %3576 = vmatpush.xpose.msra.mxu0 0.0
    %3577 = vmatpush.xpose.msra.mxu0 0.0
    %3578 = vmatpush.xpose.msra.mxu0 0.0
    %3579 = vmatpush.xpose.msra.mxu0 0.0
    %3580 = vmatpush.xpose.msra.mxu0 0.0
    %3581 = vmatpush.xpose.msra.mxu0 0.0
    %3582 = vmatpush.xpose.msra.mxu0 0.0
    %3583 = vmatpush.xpose.msra.mxu0 0.0
    %3584 = vmatpush.xpose.msra.mxu0 0.0
    %3585 = vmatpush.xpose.msra.mxu0 0.0
    %3586 = vmatpush.xpose.msra.mxu0 0.0
    %3587 = vmatpush.xpose.msra.mxu0 %v441
    %3588 = vmatpush.xpose.msra.mxu0 %v225
    %3589 = vmatmul.f32.gmra.mxu0 %v744
    %v3590 = vpop.f32.mrf.mxu0
    %v3591 = vadd.f32 %v3571, %v3590
    %3592 = vdwg.mxu0
    %3593 = vmatpush.xpose.msra.mxu0 0.0
    %3594 = vmatpush.xpose.msra.mxu0 0.0
    %3595 = vmatpush.xpose.msra.mxu0 0.0
    %3596 = vmatpush.xpose.msra.mxu0 0.0
    %3597 = vmatpush.xpose.msra.mxu0 0.0
    %3598 = vmatpush.xpose.msra.mxu0 0.0
    %3599 = vmatpush.xpose.msra.mxu0 0.0
    %3600 = vmatpush.xpose.msra.mxu0 0.0
    %3601 = vmatpush.xpose.msra.mxu0 0.0
    %3602 = vmatpush.xpose.msra.mxu0 0.0
    %3603 = vmatpush.xpose.msra.mxu0 0.0
    %3604 = vmatpush.xpose.msra.mxu0 0.0
    %3605 = vmatpush.xpose.msra.mxu0 0.0
    %3606 = vmatpush.xpose.msra.mxu0 0.0
    %3607 = vmatpush.xpose.msra.mxu0 %v442
    %3608 = vmatpush.xpose.msra.mxu0 %v226
    %3609 = vmatmul.f32.gmra.mxu0 %v745
    %v3610 = vpop.f32.mrf.mxu0
    %v3611 = vadd.f32 %v3591, %v3610
    %3612 = vdwg.mxu0
    %3613 = vmatpush.xpose.msra.mxu0 0.0
    %3614 = vmatpush.xpose.msra.mxu0 0.0
    %3615 = vmatpush.xpose.msra.mxu0 0.0
    %3616 = vmatpush.xpose.msra.mxu0 0.0
    %3617 = vmatpush.xpose.msra.mxu0 0.0
    %3618 = vmatpush.xpose.msra.mxu0 0.0
    %3619 = vmatpush.xpose.msra.mxu0 0.0
    %3620 = vmatpush.xpose.msra.mxu0 0.0
    %3621 = vmatpush.xpose.msra.mxu0 0.0
    %3622 = vmatpush.xpose.msra.mxu0 0.0
    %3623 = vmatpush.xpose.msra.mxu0 0.0
    %3624 = vmatpush.xpose.msra.mxu0 0.0
    %3625 = vmatpush.xpose.msra.mxu0 0.0
    %3626 = vmatpush.xpose.msra.mxu0 0.0
    %3627 = vmatpush.xpose.msra.mxu0 %v443
    %3628 = vmatpush.xpose.msra.mxu0 %v227
    %3629 = vmatmul.f32.gmra.mxu0 %v746
    %v3630 = vpop.f32.mrf.mxu0
    %v3631 = vadd.f32 %v3611, %v3630
    %3632 = vdwg.mxu0
    %3633 = vmatpush.xpose.msra.mxu0 0.0
    %3634 = vmatpush.xpose.msra.mxu0 0.0
    %3635 = vmatpush.xpose.msra.mxu0 0.0
    %3636 = vmatpush.xpose.msra.mxu0 0.0
    %3637 = vmatpush.xpose.msra.mxu0 0.0
    %3638 = vmatpush.xpose.msra.mxu0 0.0
    %3639 = vmatpush.xpose.msra.mxu0 0.0
    %3640 = vmatpush.xpose.msra.mxu0 0.0
    %3641 = vmatpush.xpose.msra.mxu0 0.0
    %3642 = vmatpush.xpose.msra.mxu0 0.0
    %3643 = vmatpush.xpose.msra.mxu0 0.0
    %3644 = vmatpush.xpose.msra.mxu0 0.0
    %3645 = vmatpush.xpose.msra.mxu0 0.0
    %3646 = vmatpush.xpose.msra.mxu0 0.0
    %3647 = vmatpush.xpose.msra.mxu0 %v444
    %3648 = vmatpush.xpose.msra.mxu0 %v228
    %3649 = vmatmul.f32.gmra.mxu0 %v749
    %v3650 = vpop.f32.mrf.mxu0
    %v3651 = vadd.f32 %v3631, %v3650
    %3652 = vdwg.mxu0
    %3653 = vmatpush.xpose.msra.mxu0 0.0
    %3654 = vmatpush.xpose.msra.mxu0 0.0
    %3655 = vmatpush.xpose.msra.mxu0 0.0
    %3656 = vmatpush.xpose.msra.mxu0 0.0
    %3657 = vmatpush.xpose.msra.mxu0 0.0
    %3658 = vmatpush.xpose.msra.mxu0 0.0
    %3659 = vmatpush.xpose.msra.mxu0 0.0
    %3660 = vmatpush.xpose.msra.mxu0 0.0
    %3661 = vmatpush.xpose.msra.mxu0 0.0
    %3662 = vmatpush.xpose.msra.mxu0 0.0
    %3663 = vmatpush.xpose.msra.mxu0 0.0
    %3664 = vmatpush.xpose.msra.mxu0 0.0
    %3665 = vmatpush.xpose.msra.mxu0 0.0
    %3666 = vmatpush.xpose.msra.mxu0 0.0
    %3667 = vmatpush.xpose.msra.mxu0 %v445
    %3668 = vmatpush.xpose.msra.mxu0 %v229
    %3669 = vmatmul.f32.gmra.mxu0 %v750
    %v3670 = vpop.f32.mrf.mxu0
    %v3671 = vadd.f32 %v3651, %v3670
    %3672 = vdwg.mxu0
    %3673 = vmatpush.xpose.msra.mxu0 0.0
    %3674 = vmatpush.xpose.msra.mxu0 0.0
    %3675 = vmatpush.xpose.msra.mxu0 0.0
    %3676 = vmatpush.xpose.msra.mxu0 0.0
    %3677 = vmatpush.xpose.msra.mxu0 0.0
    %3678 = vmatpush.xpose.msra.mxu0 0.0
    %3679 = vmatpush.xpose.msra.mxu0 0.0
    %3680 = vmatpush.xpose.msra.mxu0 0.0
    %3681 = vmatpush.xpose.msra.mxu0 0.0
    %3682 = vmatpush.xpose.msra.mxu0 0.0
    %3683 = vmatpush.xpose.msra.mxu0 0.0
    %3684 = vmatpush.xpose.msra.mxu0 0.0
    %3685 = vmatpush.xpose.msra.mxu0 0.0
    %3686 = vmatpush.xpose.msra.mxu0 0.0
    %3687 = vmatpush.xpose.msra.mxu0 %v446
    %3688 = vmatpush.xpose.msra.mxu0 %v230
    %3689 = vmatmul.f32.gmra.mxu0 %v751
    %v3690 = vpop.f32.mrf.mxu0
    %v3691 = vadd.f32 %v3671, %v3690
    %3692 = vdwg.mxu0
    %3693 = vmatpush.xpose.msra.mxu0 0.0
    %3694 = vmatpush.xpose.msra.mxu0 0.0
    %3695 = vmatpush.xpose.msra.mxu0 0.0
    %3696 = vmatpush.xpose.msra.mxu0 0.0
    %3697 = vmatpush.xpose.msra.mxu0 0.0
    %3698 = vmatpush.xpose.msra.mxu0 0.0
    %3699 = vmatpush.xpose.msra.mxu0 0.0
    %3700 = vmatpush.xpose.msra.mxu0 0.0
    %3701 = vmatpush.xpose.msra.mxu0 0.0
    %3702 = vmatpush.xpose.msra.mxu0 0.0
    %3703 = vmatpush.xpose.msra.mxu0 0.0
    %3704 = vmatpush.xpose.msra.mxu0 0.0
    %3705 = vmatpush.xpose.msra.mxu0 0.0
    %3706 = vmatpush.xpose.msra.mxu0 0.0
    %3707 = vmatpush.xpose.msra.mxu0 %v447
    %3708 = vmatpush.xpose.msra.mxu0 %v231
    %3709 = vmatmul.f32.gmra.mxu0 %v752
    %v3710 = vpop.f32.mrf.mxu0
    %v3711 = vadd.f32 %v3691, %v3710
    %3712 = vdwg.mxu0
    %3713 = vmatpush.xpose.msra.mxu0 0.0
    %3714 = vmatpush.xpose.msra.mxu0 0.0
    %3715 = vmatpush.xpose.msra.mxu0 0.0
    %3716 = vmatpush.xpose.msra.mxu0 0.0
    %3717 = vmatpush.xpose.msra.mxu0 0.0
    %3718 = vmatpush.xpose.msra.mxu0 0.0
    %3719 = vmatpush.xpose.msra.mxu0 0.0
    %3720 = vmatpush.xpose.msra.mxu0 0.0
    %3721 = vmatpush.xpose.msra.mxu0 0.0
    %3722 = vmatpush.xpose.msra.mxu0 0.0
    %3723 = vmatpush.xpose.msra.mxu0 0.0
    %3724 = vmatpush.xpose.msra.mxu0 0.0
    %3725 = vmatpush.xpose.msra.mxu0 0.0
    %3726 = vmatpush.xpose.msra.mxu0 0.0
    %3727 = vmatpush.xpose.msra.mxu0 %v448
    %3728 = vmatpush.xpose.msra.mxu0 %v232
    %3729 = vmatmul.f32.gmra.mxu0 %v753
    %v3730 = vpop.f32.mrf.mxu0
    %v3731 = vadd.f32 %v3711, %v3730
    %3732 = vdwg.mxu0
    %3733 = vmatpush.xpose.msra.mxu0 0.0
    %3734 = vmatpush.xpose.msra.mxu0 0.0
    %3735 = vmatpush.xpose.msra.mxu0 0.0
    %3736 = vmatpush.xpose.msra.mxu0 0.0
    %3737 = vmatpush.xpose.msra.mxu0 0.0
    %3738 = vmatpush.xpose.msra.mxu0 0.0
    %3739 = vmatpush.xpose.msra.mxu0 0.0
    %3740 = vmatpush.xpose.msra.mxu0 0.0
    %3741 = vmatpush.xpose.msra.mxu0 0.0
    %3742 = vmatpush.xpose.msra.mxu0 0.0
    %3743 = vmatpush.xpose.msra.mxu0 0.0
    %3744 = vmatpush.xpose.msra.mxu0 0.0
    %3745 = vmatpush.xpose.msra.mxu0 0.0
    %3746 = vmatpush.xpose.msra.mxu0 0.0
    %3747 = vmatpush.xpose.msra.mxu0 %v449
    %3748 = vmatpush.xpose.msra.mxu0 %v233
    %3749 = vmatmul.f32.gmra.mxu0 %v754
    %v3750 = vpop.f32.mrf.mxu0
    %v3751 = vadd.f32 %v3731, %v3750
    %3752 = vdwg.mxu0
    %3753 = vmatpush.xpose.msra.mxu0 0.0
    %3754 = vmatpush.xpose.msra.mxu0 0.0
    %3755 = vmatpush.xpose.msra.mxu0 0.0
    %3756 = vmatpush.xpose.msra.mxu0 0.0
    %3757 = vmatpush.xpose.msra.mxu0 0.0
    %3758 = vmatpush.xpose.msra.mxu0 0.0
    %3759 = vmatpush.xpose.msra.mxu0 0.0
    %3760 = vmatpush.xpose.msra.mxu0 0.0
    %3761 = vmatpush.xpose.msra.mxu0 0.0
    %3762 = vmatpush.xpose.msra.mxu0 0.0
    %3763 = vmatpush.xpose.msra.mxu0 0.0
    %3764 = vmatpush.xpose.msra.mxu0 0.0
    %3765 = vmatpush.xpose.msra.mxu0 0.0
    %3766 = vmatpush.xpose.msra.mxu0 0.0
    %3767 = vmatpush.xpose.msra.mxu0 %v450
    %3768 = vmatpush.xpose.msra.mxu0 %v234
    %3769 = vmatmul.f32.gmra.mxu0 %v755
    %v3770 = vpop.f32.mrf.mxu0
    %v3771 = vadd.f32 %v3751, %v3770
    %3772 = vdwg.mxu0
    %3773 = vmatpush.xpose.msra.mxu0 0.0
    %3774 = vmatpush.xpose.msra.mxu0 0.0
    %3775 = vmatpush.xpose.msra.mxu0 0.0
    %3776 = vmatpush.xpose.msra.mxu0 0.0
    %3777 = vmatpush.xpose.msra.mxu0 0.0
    %3778 = vmatpush.xpose.msra.mxu0 0.0
    %3779 = vmatpush.xpose.msra.mxu0 0.0
    %3780 = vmatpush.xpose.msra.mxu0 0.0
    %3781 = vmatpush.xpose.msra.mxu0 0.0
    %3782 = vmatpush.xpose.msra.mxu0 0.0
    %3783 = vmatpush.xpose.msra.mxu0 0.0
    %3784 = vmatpush.xpose.msra.mxu0 0.0
    %3785 = vmatpush.xpose.msra.mxu0 0.0
    %3786 = vmatpush.xpose.msra.mxu0 0.0
    %3787 = vmatpush.xpose.msra.mxu0 %v451
    %3788 = vmatpush.xpose.msra.mxu0 %v235
    %3789 = vmatmul.f32.gmra.mxu0 %v756
    %v3790 = vpop.f32.mrf.mxu0
    %v3791 = vadd.f32 %v3771, %v3790
    %3792 = vdwg.mxu0
    %3793 = vmatpush.xpose.msra.mxu0 0.0
    %3794 = vmatpush.xpose.msra.mxu0 0.0
    %3795 = vmatpush.xpose.msra.mxu0 0.0
    %3796 = vmatpush.xpose.msra.mxu0 0.0
    %3797 = vmatpush.xpose.msra.mxu0 0.0
    %3798 = vmatpush.xpose.msra.mxu0 0.0
    %3799 = vmatpush.xpose.msra.mxu0 0.0
    %3800 = vmatpush.xpose.msra.mxu0 0.0
    %3801 = vmatpush.xpose.msra.mxu0 0.0
    %3802 = vmatpush.xpose.msra.mxu0 0.0
    %3803 = vmatpush.xpose.msra.mxu0 0.0
    %3804 = vmatpush.xpose.msra.mxu0 0.0
    %3805 = vmatpush.xpose.msra.mxu0 0.0
    %3806 = vmatpush.xpose.msra.mxu0 0.0
    %3807 = vmatpush.xpose.msra.mxu0 %v452
    %3808 = vmatpush.xpose.msra.mxu0 %v236
    %3809 = vmatmul.f32.gmra.mxu0 %v759
    %v3810 = vpop.f32.mrf.mxu0
    %v3811 = vadd.f32 %v3791, %v3810
    %3812 = vdwg.mxu0
    %3813 = vmatpush.xpose.msra.mxu0 0.0
    %3814 = vmatpush.xpose.msra.mxu0 0.0
    %3815 = vmatpush.xpose.msra.mxu0 0.0
    %3816 = vmatpush.xpose.msra.mxu0 0.0
    %3817 = vmatpush.xpose.msra.mxu0 0.0
    %3818 = vmatpush.xpose.msra.mxu0 0.0
    %3819 = vmatpush.xpose.msra.mxu0 0.0
    %3820 = vmatpush.xpose.msra.mxu0 0.0
    %3821 = vmatpush.xpose.msra.mxu0 0.0
    %3822 = vmatpush.xpose.msra.mxu0 0.0
    %3823 = vmatpush.xpose.msra.mxu0 0.0
    %3824 = vmatpush.xpose.msra.mxu0 0.0
    %3825 = vmatpush.xpose.msra.mxu0 0.0
    %3826 = vmatpush.xpose.msra.mxu0 0.0
    %3827 = vmatpush.xpose.msra.mxu0 %v453
    %3828 = vmatpush.xpose.msra.mxu0 %v237
    %3829 = vmatmul.f32.gmra.mxu0 %v760
    %v3830 = vpop.f32.mrf.mxu0
    %v3831 = vadd.f32 %v3811, %v3830
    %3832 = vdwg.mxu0
    %3833 = vmatpush.xpose.msra.mxu0 0.0
    %3834 = vmatpush.xpose.msra.mxu0 0.0
    %3835 = vmatpush.xpose.msra.mxu0 0.0
    %3836 = vmatpush.xpose.msra.mxu0 0.0
    %3837 = vmatpush.xpose.msra.mxu0 0.0
    %3838 = vmatpush.xpose.msra.mxu0 0.0
    %3839 = vmatpush.xpose.msra.mxu0 0.0
    %3840 = vmatpush.xpose.msra.mxu0 0.0
    %3841 = vmatpush.xpose.msra.mxu0 0.0
    %3842 = vmatpush.xpose.msra.mxu0 0.0
    %3843 = vmatpush.xpose.msra.mxu0 0.0
    %3844 = vmatpush.xpose.msra.mxu0 0.0
    %3845 = vmatpush.xpose.msra.mxu0 0.0
    %3846 = vmatpush.xpose.msra.mxu0 0.0
    %3847 = vmatpush.xpose.msra.mxu0 %v454
    %3848 = vmatpush.xpose.msra.mxu0 %v238
    %3849 = vmatmul.f32.gmra.mxu0 %v761
    %v3850 = vpop.f32.mrf.mxu0
    %v3851 = vadd.f32 %v3831, %v3850
    %3852 = vdwg.mxu0
    %3853 = vmatpush.xpose.msra.mxu0 0.0
    %3854 = vmatpush.xpose.msra.mxu0 0.0
    %3855 = vmatpush.xpose.msra.mxu0 0.0
    %3856 = vmatpush.xpose.msra.mxu0 0.0
    %3857 = vmatpush.xpose.msra.mxu0 0.0
    %3858 = vmatpush.xpose.msra.mxu0 0.0
    %3859 = vmatpush.xpose.msra.mxu0 0.0
    %3860 = vmatpush.xpose.msra.mxu0 0.0
    %3861 = vmatpush.xpose.msra.mxu0 0.0
    %3862 = vmatpush.xpose.msra.mxu0 0.0
    %3863 = vmatpush.xpose.msra.mxu0 0.0
    %3864 = vmatpush.xpose.msra.mxu0 0.0
    %3865 = vmatpush.xpose.msra.mxu0 0.0
    %3866 = vmatpush.xpose.msra.mxu0 0.0
    %3867 = vmatpush.xpose.msra.mxu0 %v455
    %3868 = vmatpush.xpose.msra.mxu0 %v239
    %3869 = vmatmul.f32.gmra.mxu0 %v762
    %v3870 = vpop.f32.mrf.mxu0
    %v3871 = vadd.f32 %v3851, %v3870
    %3872 = vdwg.mxu0
    %3873 = vmatpush.xpose.msra.mxu0 0.0
    %3874 = vmatpush.xpose.msra.mxu0 0.0
    %3875 = vmatpush.xpose.msra.mxu0 0.0
    %3876 = vmatpush.xpose.msra.mxu0 0.0
    %3877 = vmatpush.xpose.msra.mxu0 0.0
    %3878 = vmatpush.xpose.msra.mxu0 0.0
    %3879 = vmatpush.xpose.msra.mxu0 0.0
    %3880 = vmatpush.xpose.msra.mxu0 0.0
    %3881 = vmatpush.xpose.msra.mxu0 0.0
    %3882 = vmatpush.xpose.msra.mxu0 0.0
    %3883 = vmatpush.xpose.msra.mxu0 0.0
    %3884 = vmatpush.xpose.msra.mxu0 0.0
    %3885 = vmatpush.xpose.msra.mxu0 0.0
    %3886 = vmatpush.xpose.msra.mxu0 0.0
    %3887 = vmatpush.xpose.msra.mxu0 %v456
    %3888 = vmatpush.xpose.msra.mxu0 %v240
    %3889 = vmatmul.f32.gmra.mxu0 %v763
    %v3890 = vpop.f32.mrf.mxu0
    %v3891 = vadd.f32 %v3871, %v3890
    %3892 = vdwg.mxu0
    %3893 = vmatpush.xpose.msra.mxu0 0.0
    %3894 = vmatpush.xpose.msra.mxu0 0.0
    %3895 = vmatpush.xpose.msra.mxu0 0.0
    %3896 = vmatpush.xpose.msra.mxu0 0.0
    %3897 = vmatpush.xpose.msra.mxu0 0.0
    %3898 = vmatpush.xpose.msra.mxu0 0.0
    %3899 = vmatpush.xpose.msra.mxu0 0.0
    %3900 = vmatpush.xpose.msra.mxu0 0.0
    %3901 = vmatpush.xpose.msra.mxu0 0.0
    %3902 = vmatpush.xpose.msra.mxu0 0.0
    %3903 = vmatpush.xpose.msra.mxu0 0.0
    %3904 = vmatpush.xpose.msra.mxu0 0.0
    %3905 = vmatpush.xpose.msra.mxu0 0.0
    %3906 = vmatpush.xpose.msra.mxu0 0.0
    %3907 = vmatpush.xpose.msra.mxu0 %v457
    %3908 = vmatpush.xpose.msra.mxu0 %v241
    %3909 = vmatmul.f32.gmra.mxu0 %v764
    %v3910 = vpop.f32.mrf.mxu0
    %v3911 = vadd.f32 %v3891, %v3910
    %3912 = vdwg.mxu0
    %3913 = vmatpush.xpose.msra.mxu0 0.0
    %3914 = vmatpush.xpose.msra.mxu0 0.0
    %3915 = vmatpush.xpose.msra.mxu0 0.0
    %3916 = vmatpush.xpose.msra.mxu0 0.0
    %3917 = vmatpush.xpose.msra.mxu0 0.0
    %3918 = vmatpush.xpose.msra.mxu0 0.0
    %3919 = vmatpush.xpose.msra.mxu0 0.0
    %3920 = vmatpush.xpose.msra.mxu0 0.0
    %3921 = vmatpush.xpose.msra.mxu0 0.0
    %3922 = vmatpush.xpose.msra.mxu0 0.0
    %3923 = vmatpush.xpose.msra.mxu0 0.0
    %3924 = vmatpush.xpose.msra.mxu0 0.0
    %3925 = vmatpush.xpose.msra.mxu0 0.0
    %3926 = vmatpush.xpose.msra.mxu0 0.0
    %3927 = vmatpush.xpose.msra.mxu0 %v458
    %3928 = vmatpush.xpose.msra.mxu0 %v242
    %3929 = vmatmul.f32.gmra.mxu0 %v765
    %v3930 = vpop.f32.mrf.mxu0
    %v3931 = vadd.f32 %v3911, %v3930
    %3932 = vdwg.mxu0
    %3933 = vmatpush.xpose.msra.mxu0 0.0
    %3934 = vmatpush.xpose.msra.mxu0 0.0
    %3935 = vmatpush.xpose.msra.mxu0 0.0
    %3936 = vmatpush.xpose.msra.mxu0 0.0
    %3937 = vmatpush.xpose.msra.mxu0 0.0
    %3938 = vmatpush.xpose.msra.mxu0 0.0
    %3939 = vmatpush.xpose.msra.mxu0 0.0
    %3940 = vmatpush.xpose.msra.mxu0 0.0
    %3941 = vmatpush.xpose.msra.mxu0 0.0
    %3942 = vmatpush.xpose.msra.mxu0 0.0
    %3943 = vmatpush.xpose.msra.mxu0 0.0
    %3944 = vmatpush.xpose.msra.mxu0 0.0
    %3945 = vmatpush.xpose.msra.mxu0 0.0
    %3946 = vmatpush.xpose.msra.mxu0 0.0
    %3947 = vmatpush.xpose.msra.mxu0 %v459
    %3948 = vmatpush.xpose.msra.mxu0 %v243
    %3949 = vmatmul.f32.gmra.mxu0 %v766
    %v3950 = vpop.f32.mrf.mxu0
    %v3951 = vadd.f32 %v3931, %v3950
    %3952 = vdwg.mxu0
    %3953 = vmatpush.xpose.msra.mxu0 0.0
    %3954 = vmatpush.xpose.msra.mxu0 0.0
    %3955 = vmatpush.xpose.msra.mxu0 0.0
    %3956 = vmatpush.xpose.msra.mxu0 0.0
    %3957 = vmatpush.xpose.msra.mxu0 0.0
    %3958 = vmatpush.xpose.msra.mxu0 0.0
    %3959 = vmatpush.xpose.msra.mxu0 0.0
    %3960 = vmatpush.xpose.msra.mxu0 0.0
    %3961 = vmatpush.xpose.msra.mxu0 0.0
    %3962 = vmatpush.xpose.msra.mxu0 0.0
    %3963 = vmatpush.xpose.msra.mxu0 0.0
    %3964 = vmatpush.xpose.msra.mxu0 0.0
    %3965 = vmatpush.xpose.msra.mxu0 0.0
    %3966 = vmatpush.xpose.msra.mxu0 0.0
    %3967 = vmatpush.xpose.msra.mxu0 %v460
    %3968 = vmatpush.xpose.msra.mxu0 %v244
    %3969 = vmatmul.f32.gmra.mxu0 %v769
    %v3970 = vpop.f32.mrf.mxu0
    %v3971 = vadd.f32 %v3951, %v3970
    %3972 = vdwg.mxu0
    %3973 = vmatpush.xpose.msra.mxu0 0.0
    %3974 = vmatpush.xpose.msra.mxu0 0.0
    %3975 = vmatpush.xpose.msra.mxu0 0.0
    %3976 = vmatpush.xpose.msra.mxu0 0.0
    %3977 = vmatpush.xpose.msra.mxu0 0.0
    %3978 = vmatpush.xpose.msra.mxu0 0.0
    %3979 = vmatpush.xpose.msra.mxu0 0.0
    %3980 = vmatpush.xpose.msra.mxu0 0.0
    %3981 = vmatpush.xpose.msra.mxu0 0.0
    %3982 = vmatpush.xpose.msra.mxu0 0.0
    %3983 = vmatpush.xpose.msra.mxu0 0.0
    %3984 = vmatpush.xpose.msra.mxu0 0.0
    %3985 = vmatpush.xpose.msra.mxu0 0.0
    %3986 = vmatpush.xpose.msra.mxu0 0.0
    %3987 = vmatpush.xpose.msra.mxu0 %v461
    %3988 = vmatpush.xpose.msra.mxu0 %v245
    %3989 = vmatmul.f32.gmra.mxu0 %v770
    %v3990 = vpop.f32.mrf.mxu0
    %v3991 = vadd.f32 %v3971, %v3990
    %3992 = vdwg.mxu0
    %3993 = vmatpush.xpose.msra.mxu0 0.0
    %3994 = vmatpush.xpose.msra.mxu0 0.0
    %3995 = vmatpush.xpose.msra.mxu0 0.0
    %3996 = vmatpush.xpose.msra.mxu0 0.0
    %3997 = vmatpush.xpose.msra.mxu0 0.0
    %3998 = vmatpush.xpose.msra.mxu0 0.0
    %3999 = vmatpush.xpose.msra.mxu0 0.0
    %4000 = vmatpush.xpose.msra.mxu0 0.0
    %4001 = vmatpush.xpose.msra.mxu0 0.0
    %4002 = vmatpush.xpose.msra.mxu0 0.0
    %4003 = vmatpush.xpose.msra.mxu0 0.0
    %4004 = vmatpush.xpose.msra.mxu0 0.0
    %4005 = vmatpush.xpose.msra.mxu0 0.0
    %4006 = vmatpush.xpose.msra.mxu0 0.0
    %4007 = vmatpush.xpose.msra.mxu0 %v462
    %4008 = vmatpush.xpose.msra.mxu0 %v246
    %4009 = vmatmul.f32.gmra.mxu0 %v771
    %v4010 = vpop.f32.mrf.mxu0
    %v4011 = vadd.f32 %v3991, %v4010
    %4012 = vdwg.mxu0
    %4013 = vmatpush.xpose.msra.mxu0 0.0
    %4014 = vmatpush.xpose.msra.mxu0 0.0
    %4015 = vmatpush.xpose.msra.mxu0 0.0
    %4016 = vmatpush.xpose.msra.mxu0 0.0
    %4017 = vmatpush.xpose.msra.mxu0 0.0
    %4018 = vmatpush.xpose.msra.mxu0 0.0
    %4019 = vmatpush.xpose.msra.mxu0 0.0
    %4020 = vmatpush.xpose.msra.mxu0 0.0
    %4021 = vmatpush.xpose.msra.mxu0 0.0
    %4022 = vmatpush.xpose.msra.mxu0 0.0
    %4023 = vmatpush.xpose.msra.mxu0 0.0
    %4024 = vmatpush.xpose.msra.mxu0 0.0
    %4025 = vmatpush.xpose.msra.mxu0 0.0
    %4026 = vmatpush.xpose.msra.mxu0 0.0
    %4027 = vmatpush.xpose.msra.mxu0 %v463
    %4028 = vmatpush.xpose.msra.mxu0 %v247
    %4029 = vmatmul.f32.gmra.mxu0 %v772
    %v4030 = vpop.f32.mrf.mxu0
    %v4031 = vadd.f32 %v4011, %v4030
    %4032 = vdwg.mxu0
    %4033 = vmatpush.xpose.msra.mxu0 0.0
    %4034 = vmatpush.xpose.msra.mxu0 0.0
    %4035 = vmatpush.xpose.msra.mxu0 0.0
    %4036 = vmatpush.xpose.msra.mxu0 0.0
    %4037 = vmatpush.xpose.msra.mxu0 0.0
    %4038 = vmatpush.xpose.msra.mxu0 0.0
    %4039 = vmatpush.xpose.msra.mxu0 0.0
    %4040 = vmatpush.xpose.msra.mxu0 0.0
    %4041 = vmatpush.xpose.msra.mxu0 0.0
    %4042 = vmatpush.xpose.msra.mxu0 0.0
    %4043 = vmatpush.xpose.msra.mxu0 0.0
    %4044 = vmatpush.xpose.msra.mxu0 0.0
    %4045 = vmatpush.xpose.msra.mxu0 0.0
    %4046 = vmatpush.xpose.msra.mxu0 0.0
    %4047 = vmatpush.xpose.msra.mxu0 %v464
    %4048 = vmatpush.xpose.msra.mxu0 %v248
    %4049 = vmatmul.f32.gmra.mxu0 %v773
    %v4050 = vpop.f32.mrf.mxu0
    %v4051 = vadd.f32 %v4031, %v4050
    %4052 = vdwg.mxu0
    %4053 = vmatpush.xpose.msra.mxu0 0.0
    %4054 = vmatpush.xpose.msra.mxu0 0.0
    %4055 = vmatpush.xpose.msra.mxu0 0.0
    %4056 = vmatpush.xpose.msra.mxu0 0.0
    %4057 = vmatpush.xpose.msra.mxu0 0.0
    %4058 = vmatpush.xpose.msra.mxu0 0.0
    %4059 = vmatpush.xpose.msra.mxu0 0.0
    %4060 = vmatpush.xpose.msra.mxu0 0.0
    %4061 = vmatpush.xpose.msra.mxu0 0.0
    %4062 = vmatpush.xpose.msra.mxu0 0.0
    %4063 = vmatpush.xpose.msra.mxu0 0.0
    %4064 = vmatpush.xpose.msra.mxu0 0.0
    %4065 = vmatpush.xpose.msra.mxu0 0.0
    %4066 = vmatpush.xpose.msra.mxu0 0.0
    %4067 = vmatpush.xpose.msra.mxu0 %v465
    %4068 = vmatpush.xpose.msra.mxu0 %v249
    %4069 = vmatmul.f32.gmra.mxu0 %v774
    %v4070 = vpop.f32.mrf.mxu0
    %v4071 = vadd.f32 %v4051, %v4070
    %4072 = vdwg.mxu0
    %4073 = vmatpush.xpose.msra.mxu0 0.0
    %4074 = vmatpush.xpose.msra.mxu0 0.0
    %4075 = vmatpush.xpose.msra.mxu0 0.0
    %4076 = vmatpush.xpose.msra.mxu0 0.0
    %4077 = vmatpush.xpose.msra.mxu0 0.0
    %4078 = vmatpush.xpose.msra.mxu0 0.0
    %4079 = vmatpush.xpose.msra.mxu0 0.0
    %4080 = vmatpush.xpose.msra.mxu0 0.0
    %4081 = vmatpush.xpose.msra.mxu0 0.0
    %4082 = vmatpush.xpose.msra.mxu0 0.0
    %4083 = vmatpush.xpose.msra.mxu0 0.0
    %4084 = vmatpush.xpose.msra.mxu0 0.0
    %4085 = vmatpush.xpose.msra.mxu0 0.0
    %4086 = vmatpush.xpose.msra.mxu0 0.0
    %4087 = vmatpush.xpose.msra.mxu0 %v466
    %4088 = vmatpush.xpose.msra.mxu0 %v250
    %4089 = vmatmul.f32.gmra.mxu0 %v775
    %v4090 = vpop.f32.mrf.mxu0
    %v4091 = vadd.f32 %v4071, %v4090
    %4092 = vdwg.mxu0
    %4093 = vmatpush.xpose.msra.mxu0 0.0
    %4094 = vmatpush.xpose.msra.mxu0 0.0
    %4095 = vmatpush.xpose.msra.mxu0 0.0
    %4096 = vmatpush.xpose.msra.mxu0 0.0
    %4097 = vmatpush.xpose.msra.mxu0 0.0
    %4098 = vmatpush.xpose.msra.mxu0 0.0
    %4099 = vmatpush.xpose.msra.mxu0 0.0
    %4100 = vmatpush.xpose.msra.mxu0 0.0
    %4101 = vmatpush.xpose.msra.mxu0 0.0
    %4102 = vmatpush.xpose.msra.mxu0 0.0
    %4103 = vmatpush.xpose.msra.mxu0 0.0
    %4104 = vmatpush.xpose.msra.mxu0 0.0
    %4105 = vmatpush.xpose.msra.mxu0 0.0
    %4106 = vmatpush.xpose.msra.mxu0 0.0
    %4107 = vmatpush.xpose.msra.mxu0 %v467
    %4108 = vmatpush.xpose.msra.mxu0 %v251
    %4109 = vmatmul.f32.gmra.mxu0 %v776
    %v4110 = vpop.f32.mrf.mxu0
    %v4111 = vadd.f32 %v4091, %v4110
    %4112 = vdwg.mxu0
    %4113 = vmatpush.xpose.msra.mxu0 0.0
    %4114 = vmatpush.xpose.msra.mxu0 0.0
    %4115 = vmatpush.xpose.msra.mxu0 0.0
    %4116 = vmatpush.xpose.msra.mxu0 0.0
    %4117 = vmatpush.xpose.msra.mxu0 0.0
    %4118 = vmatpush.xpose.msra.mxu0 0.0
    %4119 = vmatpush.xpose.msra.mxu0 0.0
    %4120 = vmatpush.xpose.msra.mxu0 0.0
    %4121 = vmatpush.xpose.msra.mxu0 0.0
    %4122 = vmatpush.xpose.msra.mxu0 0.0
    %4123 = vmatpush.xpose.msra.mxu0 0.0
    %4124 = vmatpush.xpose.msra.mxu0 0.0
    %4125 = vmatpush.xpose.msra.mxu0 0.0
    %4126 = vmatpush.xpose.msra.mxu0 0.0
    %4127 = vmatpush.xpose.msra.mxu0 %v468
    %4128 = vmatpush.xpose.msra.mxu0 %v252
    %4129 = vmatmul.f32.gmra.mxu0 %v779
    %v4130 = vpop.f32.mrf.mxu0
    %v4131 = vadd.f32 %v4111, %v4130
    %4132 = vdwg.mxu0
    %4133 = vmatpush.xpose.msra.mxu0 0.0
    %4134 = vmatpush.xpose.msra.mxu0 0.0
    %4135 = vmatpush.xpose.msra.mxu0 0.0
    %4136 = vmatpush.xpose.msra.mxu0 0.0
    %4137 = vmatpush.xpose.msra.mxu0 0.0
    %4138 = vmatpush.xpose.msra.mxu0 0.0
    %4139 = vmatpush.xpose.msra.mxu0 0.0
    %4140 = vmatpush.xpose.msra.mxu0 0.0
    %4141 = vmatpush.xpose.msra.mxu0 0.0
    %4142 = vmatpush.xpose.msra.mxu0 0.0
    %4143 = vmatpush.xpose.msra.mxu0 0.0
    %4144 = vmatpush.xpose.msra.mxu0 0.0
    %4145 = vmatpush.xpose.msra.mxu0 0.0
    %4146 = vmatpush.xpose.msra.mxu0 0.0
    %4147 = vmatpush.xpose.msra.mxu0 %v469
    %4148 = vmatpush.xpose.msra.mxu0 %v253
    %4149 = vmatmul.f32.gmra.mxu0 %v780
    %v4150 = vpop.f32.mrf.mxu0
    %v4151 = vadd.f32 %v4131, %v4150
    %4152 = vdwg.mxu0
    %4153 = vmatpush.xpose.msra.mxu0 0.0
    %4154 = vmatpush.xpose.msra.mxu0 0.0
    %4155 = vmatpush.xpose.msra.mxu0 0.0
    %4156 = vmatpush.xpose.msra.mxu0 0.0
    %4157 = vmatpush.xpose.msra.mxu0 0.0
    %4158 = vmatpush.xpose.msra.mxu0 0.0
    %4159 = vmatpush.xpose.msra.mxu0 0.0
    %4160 = vmatpush.xpose.msra.mxu0 0.0
    %4161 = vmatpush.xpose.msra.mxu0 0.0
    %4162 = vmatpush.xpose.msra.mxu0 0.0
    %4163 = vmatpush.xpose.msra.mxu0 0.0
    %4164 = vmatpush.xpose.msra.mxu0 0.0
    %4165 = vmatpush.xpose.msra.mxu0 0.0
    %4166 = vmatpush.xpose.msra.mxu0 0.0
    %4167 = vmatpush.xpose.msra.mxu0 %v470
    %4168 = vmatpush.xpose.msra.mxu0 %v254
    %4169 = vmatmul.f32.gmra.mxu0 %v781
    %v4170 = vpop.f32.mrf.mxu0
    %v4171 = vadd.f32 %v4151, %v4170
    %4172 = vdwg.mxu0
    %4173 = vmatpush.xpose.msra.mxu0 0.0
    %4174 = vmatpush.xpose.msra.mxu0 0.0
    %4175 = vmatpush.xpose.msra.mxu0 0.0
    %4176 = vmatpush.xpose.msra.mxu0 0.0
    %4177 = vmatpush.xpose.msra.mxu0 0.0
    %4178 = vmatpush.xpose.msra.mxu0 0.0
    %4179 = vmatpush.xpose.msra.mxu0 0.0
    %4180 = vmatpush.xpose.msra.mxu0 0.0
    %4181 = vmatpush.xpose.msra.mxu0 0.0
    %4182 = vmatpush.xpose.msra.mxu0 0.0
    %4183 = vmatpush.xpose.msra.mxu0 0.0
    %4184 = vmatpush.xpose.msra.mxu0 0.0
    %4185 = vmatpush.xpose.msra.mxu0 0.0
    %4186 = vmatpush.xpose.msra.mxu0 0.0
    %4187 = vmatpush.xpose.msra.mxu0 %v471
    %4188 = vmatpush.xpose.msra.mxu0 %v255
    %4189 = vmatmul.f32.gmra.mxu0 %v782
    %v4190 = vpop.f32.mrf.mxu0
    %v4191 = vadd.f32 %v4171, %v4190
    %4192 = vdwg.mxu0
    %4193 = vmatpush.xpose.msra.mxu0 0.0
    %4194 = vmatpush.xpose.msra.mxu0 0.0
    %4195 = vmatpush.xpose.msra.mxu0 0.0
    %4196 = vmatpush.xpose.msra.mxu0 0.0
    %4197 = vmatpush.xpose.msra.mxu0 0.0
    %4198 = vmatpush.xpose.msra.mxu0 0.0
    %4199 = vmatpush.xpose.msra.mxu0 0.0
    %4200 = vmatpush.xpose.msra.mxu0 0.0
    %4201 = vmatpush.xpose.msra.mxu0 0.0
    %4202 = vmatpush.xpose.msra.mxu0 0.0
    %4203 = vmatpush.xpose.msra.mxu0 0.0
    %4204 = vmatpush.xpose.msra.mxu0 0.0
    %4205 = vmatpush.xpose.msra.mxu0 0.0
    %4206 = vmatpush.xpose.msra.mxu0 0.0
    %4207 = vmatpush.xpose.msra.mxu0 %v472
    %4208 = vmatpush.xpose.msra.mxu0 %v256
    %4209 = vmatmul.f32.gmra.mxu0 %v783
    %v4210 = vpop.f32.mrf.mxu0
    %v4211 = vadd.f32 %v4191, %v4210
    %4212 = vdwg.mxu0
    %4213 = vmatpush.xpose.msra.mxu0 0.0
    %4214 = vmatpush.xpose.msra.mxu0 0.0
    %4215 = vmatpush.xpose.msra.mxu0 0.0
    %4216 = vmatpush.xpose.msra.mxu0 0.0
    %4217 = vmatpush.xpose.msra.mxu0 0.0
    %4218 = vmatpush.xpose.msra.mxu0 0.0
    %4219 = vmatpush.xpose.msra.mxu0 0.0
    %4220 = vmatpush.xpose.msra.mxu0 0.0
    %4221 = vmatpush.xpose.msra.mxu0 0.0
    %4222 = vmatpush.xpose.msra.mxu0 0.0
    %4223 = vmatpush.xpose.msra.mxu0 0.0
    %4224 = vmatpush.xpose.msra.mxu0 0.0
    %4225 = vmatpush.xpose.msra.mxu0 0.0
    %4226 = vmatpush.xpose.msra.mxu0 0.0
    %4227 = vmatpush.xpose.msra.mxu0 %v473
    %4228 = vmatpush.xpose.msra.mxu0 %v257
    %4229 = vmatmul.f32.gmra.mxu0 %v784
    %v4230 = vpop.f32.mrf.mxu0
    %v4231 = vadd.f32 %v4211, %v4230
    %4232 = vdwg.mxu0
    %4233 = vmatpush.xpose.msra.mxu0 0.0
    %4234 = vmatpush.xpose.msra.mxu0 0.0
    %4235 = vmatpush.xpose.msra.mxu0 0.0
    %4236 = vmatpush.xpose.msra.mxu0 0.0
    %4237 = vmatpush.xpose.msra.mxu0 0.0
    %4238 = vmatpush.xpose.msra.mxu0 0.0
    %4239 = vmatpush.xpose.msra.mxu0 0.0
    %4240 = vmatpush.xpose.msra.mxu0 0.0
    %4241 = vmatpush.xpose.msra.mxu0 0.0
    %4242 = vmatpush.xpose.msra.mxu0 0.0
    %4243 = vmatpush.xpose.msra.mxu0 0.0
    %4244 = vmatpush.xpose.msra.mxu0 0.0
    %4245 = vmatpush.xpose.msra.mxu0 0.0
    %4246 = vmatpush.xpose.msra.mxu0 0.0
    %4247 = vmatpush.xpose.msra.mxu0 %v474
    %4248 = vmatpush.xpose.msra.mxu0 %v258
    %4249 = vmatmul.f32.gmra.mxu0 %v785
    %v4250 = vpop.f32.mrf.mxu0
    %v4251 = vadd.f32 %v4231, %v4250
    %4252 = vdwg.mxu0
    %4253 = vmatpush.xpose.msra.mxu0 0.0
    %4254 = vmatpush.xpose.msra.mxu0 0.0
    %4255 = vmatpush.xpose.msra.mxu0 0.0
    %4256 = vmatpush.xpose.msra.mxu0 0.0
    %4257 = vmatpush.xpose.msra.mxu0 0.0
    %4258 = vmatpush.xpose.msra.mxu0 0.0
    %4259 = vmatpush.xpose.msra.mxu0 0.0
    %4260 = vmatpush.xpose.msra.mxu0 0.0
    %4261 = vmatpush.xpose.msra.mxu0 0.0
    %4262 = vmatpush.xpose.msra.mxu0 0.0
    %4263 = vmatpush.xpose.msra.mxu0 0.0
    %4264 = vmatpush.xpose.msra.mxu0 0.0
    %4265 = vmatpush.xpose.msra.mxu0 0.0
    %4266 = vmatpush.xpose.msra.mxu0 0.0
    %4267 = vmatpush.xpose.msra.mxu0 %v475
    %4268 = vmatpush.xpose.msra.mxu0 %v259
    %4269 = vmatmul.f32.gmra.mxu0 %v786
    %v4270 = vpop.f32.mrf.mxu0
    %v4271 = vadd.f32 %v4251, %v4270
    %4272 = vdwg.mxu0
    %4273 = vmatpush.xpose.msra.mxu0 0.0
    %4274 = vmatpush.xpose.msra.mxu0 0.0
    %4275 = vmatpush.xpose.msra.mxu0 0.0
    %4276 = vmatpush.xpose.msra.mxu0 0.0
    %4277 = vmatpush.xpose.msra.mxu0 0.0
    %4278 = vmatpush.xpose.msra.mxu0 0.0
    %4279 = vmatpush.xpose.msra.mxu0 0.0
    %4280 = vmatpush.xpose.msra.mxu0 0.0
    %4281 = vmatpush.xpose.msra.mxu0 0.0
    %4282 = vmatpush.xpose.msra.mxu0 0.0
    %4283 = vmatpush.xpose.msra.mxu0 0.0
    %4284 = vmatpush.xpose.msra.mxu0 0.0
    %4285 = vmatpush.xpose.msra.mxu0 0.0
    %4286 = vmatpush.xpose.msra.mxu0 0.0
    %4287 = vmatpush.xpose.msra.mxu0 %v476
    %4288 = vmatpush.xpose.msra.mxu0 %v260
    %4289 = vmatmul.f32.gmra.mxu0 %v789
    %v4290 = vpop.f32.mrf.mxu0
    %v4291 = vadd.f32 %v4271, %v4290
    %4292 = vdwg.mxu0
    %4293 = vmatpush.xpose.msra.mxu0 0.0
    %4294 = vmatpush.xpose.msra.mxu0 0.0
    %4295 = vmatpush.xpose.msra.mxu0 0.0
    %4296 = vmatpush.xpose.msra.mxu0 0.0
    %4297 = vmatpush.xpose.msra.mxu0 0.0
    %4298 = vmatpush.xpose.msra.mxu0 0.0
    %4299 = vmatpush.xpose.msra.mxu0 0.0
    %4300 = vmatpush.xpose.msra.mxu0 0.0
    %4301 = vmatpush.xpose.msra.mxu0 0.0
    %4302 = vmatpush.xpose.msra.mxu0 0.0
    %4303 = vmatpush.xpose.msra.mxu0 0.0
    %4304 = vmatpush.xpose.msra.mxu0 0.0
    %4305 = vmatpush.xpose.msra.mxu0 0.0
    %4306 = vmatpush.xpose.msra.mxu0 0.0
    %4307 = vmatpush.xpose.msra.mxu0 %v477
    %4308 = vmatpush.xpose.msra.mxu0 %v261
    %4309 = vmatmul.f32.gmra.mxu0 %v790
    %v4310 = vpop.f32.mrf.mxu0
    %v4311 = vadd.f32 %v4291, %v4310
    %4312 = vdwg.mxu0
    %4313 = vmatpush.xpose.msra.mxu0 0.0
    %4314 = vmatpush.xpose.msra.mxu0 0.0
    %4315 = vmatpush.xpose.msra.mxu0 0.0
    %4316 = vmatpush.xpose.msra.mxu0 0.0
    %4317 = vmatpush.xpose.msra.mxu0 0.0
    %4318 = vmatpush.xpose.msra.mxu0 0.0
    %4319 = vmatpush.xpose.msra.mxu0 0.0
    %4320 = vmatpush.xpose.msra.mxu0 0.0
    %4321 = vmatpush.xpose.msra.mxu0 0.0
    %4322 = vmatpush.xpose.msra.mxu0 0.0
    %4323 = vmatpush.xpose.msra.mxu0 0.0
    %4324 = vmatpush.xpose.msra.mxu0 0.0
    %4325 = vmatpush.xpose.msra.mxu0 0.0
    %4326 = vmatpush.xpose.msra.mxu0 0.0
    %4327 = vmatpush.xpose.msra.mxu0 %v478
    %4328 = vmatpush.xpose.msra.mxu0 %v262
    %4329 = vmatmul.f32.gmra.mxu0 %v791
    %v4330 = vpop.f32.mrf.mxu0
    %v4331 = vadd.f32 %v4311, %v4330
    %4332 = vdwg.mxu0
    %4333 = vmatpush.xpose.msra.mxu0 0.0
    %4334 = vmatpush.xpose.msra.mxu0 0.0
    %4335 = vmatpush.xpose.msra.mxu0 0.0
    %4336 = vmatpush.xpose.msra.mxu0 0.0
    %4337 = vmatpush.xpose.msra.mxu0 0.0
    %4338 = vmatpush.xpose.msra.mxu0 0.0
    %4339 = vmatpush.xpose.msra.mxu0 0.0
    %4340 = vmatpush.xpose.msra.mxu0 0.0
    %4341 = vmatpush.xpose.msra.mxu0 0.0
    %4342 = vmatpush.xpose.msra.mxu0 0.0
    %4343 = vmatpush.xpose.msra.mxu0 0.0
    %4344 = vmatpush.xpose.msra.mxu0 0.0
    %4345 = vmatpush.xpose.msra.mxu0 0.0
    %4346 = vmatpush.xpose.msra.mxu0 0.0
    %4347 = vmatpush.xpose.msra.mxu0 %v479
    %4348 = vmatpush.xpose.msra.mxu0 %v263
    %4349 = vmatmul.f32.gmra.mxu0 %v792
    %v4350 = vpop.f32.mrf.mxu0
    %v4351 = vadd.f32 %v4331, %v4350
    %4352 = vdwg.mxu0
    %4353 = vmatpush.xpose.msra.mxu0 0.0
    %4354 = vmatpush.xpose.msra.mxu0 0.0
    %4355 = vmatpush.xpose.msra.mxu0 0.0
    %4356 = vmatpush.xpose.msra.mxu0 0.0
    %4357 = vmatpush.xpose.msra.mxu0 0.0
    %4358 = vmatpush.xpose.msra.mxu0 0.0
    %4359 = vmatpush.xpose.msra.mxu0 0.0
    %4360 = vmatpush.xpose.msra.mxu0 0.0
    %4361 = vmatpush.xpose.msra.mxu0 0.0
    %4362 = vmatpush.xpose.msra.mxu0 0.0
    %4363 = vmatpush.xpose.msra.mxu0 0.0
    %4364 = vmatpush.xpose.msra.mxu0 0.0
    %4365 = vmatpush.xpose.msra.mxu0 0.0
    %4366 = vmatpush.xpose.msra.mxu0 0.0
    %4367 = vmatpush.xpose.msra.mxu0 %v480
    %4368 = vmatpush.xpose.msra.mxu0 %v264
    %4369 = vmatmul.f32.gmra.mxu0 %v793
    %v4370 = vpop.f32.mrf.mxu0
    %v4371 = vadd.f32 %v4351, %v4370
    %4372 = vdwg.mxu0
    %4373 = vmatpush.xpose.msra.mxu0 0.0
    %4374 = vmatpush.xpose.msra.mxu0 0.0
    %4375 = vmatpush.xpose.msra.mxu0 0.0
    %4376 = vmatpush.xpose.msra.mxu0 0.0
    %4377 = vmatpush.xpose.msra.mxu0 0.0
    %4378 = vmatpush.xpose.msra.mxu0 0.0
    %4379 = vmatpush.xpose.msra.mxu0 0.0
    %4380 = vmatpush.xpose.msra.mxu0 0.0
    %4381 = vmatpush.xpose.msra.mxu0 0.0
    %4382 = vmatpush.xpose.msra.mxu0 0.0
    %4383 = vmatpush.xpose.msra.mxu0 0.0
    %4384 = vmatpush.xpose.msra.mxu0 0.0
    %4385 = vmatpush.xpose.msra.mxu0 0.0
    %4386 = vmatpush.xpose.msra.mxu0 0.0
    %4387 = vmatpush.xpose.msra.mxu0 %v481
    %4388 = vmatpush.xpose.msra.mxu0 %v265
    %4389 = vmatmul.f32.gmra.mxu0 %v794
    %v4390 = vpop.f32.mrf.mxu0
    %v4391 = vadd.f32 %v4371, %v4390
    %4392 = vdwg.mxu0
    %4393 = vmatpush.xpose.msra.mxu0 0.0
    %4394 = vmatpush.xpose.msra.mxu0 0.0
    %4395 = vmatpush.xpose.msra.mxu0 0.0
    %4396 = vmatpush.xpose.msra.mxu0 0.0
    %4397 = vmatpush.xpose.msra.mxu0 0.0
    %4398 = vmatpush.xpose.msra.mxu0 0.0
    %4399 = vmatpush.xpose.msra.mxu0 0.0
    %4400 = vmatpush.xpose.msra.mxu0 0.0
    %4401 = vmatpush.xpose.msra.mxu0 0.0
    %4402 = vmatpush.xpose.msra.mxu0 0.0
    %4403 = vmatpush.xpose.msra.mxu0 0.0
    %4404 = vmatpush.xpose.msra.mxu0 0.0
    %4405 = vmatpush.xpose.msra.mxu0 0.0
    %4406 = vmatpush.xpose.msra.mxu0 0.0
    %4407 = vmatpush.xpose.msra.mxu0 %v482
    %4408 = vmatpush.xpose.msra.mxu0 %v266
    %4409 = vmatmul.f32.gmra.mxu0 %v795
    %v4410 = vpop.f32.mrf.mxu0
    %v4411 = vadd.f32 %v4391, %v4410
    %4412 = vdwg.mxu0
    %4413 = vmatpush.xpose.msra.mxu0 0.0
    %4414 = vmatpush.xpose.msra.mxu0 0.0
    %4415 = vmatpush.xpose.msra.mxu0 0.0
    %4416 = vmatpush.xpose.msra.mxu0 0.0
    %4417 = vmatpush.xpose.msra.mxu0 0.0
    %4418 = vmatpush.xpose.msra.mxu0 0.0
    %4419 = vmatpush.xpose.msra.mxu0 0.0
    %4420 = vmatpush.xpose.msra.mxu0 0.0
    %4421 = vmatpush.xpose.msra.mxu0 0.0
    %4422 = vmatpush.xpose.msra.mxu0 0.0
    %4423 = vmatpush.xpose.msra.mxu0 0.0
    %4424 = vmatpush.xpose.msra.mxu0 0.0
    %4425 = vmatpush.xpose.msra.mxu0 0.0
    %4426 = vmatpush.xpose.msra.mxu0 0.0
    %4427 = vmatpush.xpose.msra.mxu0 %v483
    %4428 = vmatpush.xpose.msra.mxu0 %v267
    %4429 = vmatmul.f32.gmra.mxu0 %v796
    %v4430 = vpop.f32.mrf.mxu0
    %v4431 = vadd.f32 %v4411, %v4430
    %4432 = vdwg.mxu0
    %4433 = vmatpush.xpose.msra.mxu0 0.0
    %4434 = vmatpush.xpose.msra.mxu0 0.0
    %4435 = vmatpush.xpose.msra.mxu0 0.0
    %4436 = vmatpush.xpose.msra.mxu0 0.0
    %4437 = vmatpush.xpose.msra.mxu0 0.0
    %4438 = vmatpush.xpose.msra.mxu0 0.0
    %4439 = vmatpush.xpose.msra.mxu0 0.0
    %4440 = vmatpush.xpose.msra.mxu0 0.0
    %4441 = vmatpush.xpose.msra.mxu0 0.0
    %4442 = vmatpush.xpose.msra.mxu0 0.0
    %4443 = vmatpush.xpose.msra.mxu0 0.0
    %4444 = vmatpush.xpose.msra.mxu0 0.0
    %4445 = vmatpush.xpose.msra.mxu0 0.0
    %4446 = vmatpush.xpose.msra.mxu0 0.0
    %4447 = vmatpush.xpose.msra.mxu0 %v484
    %4448 = vmatpush.xpose.msra.mxu0 %v268
    %4449 = vmatmul.f32.gmra.mxu0 %v799
    %v4450 = vpop.f32.mrf.mxu0
    %v4451 = vadd.f32 %v4431, %v4450
    %4452 = vdwg.mxu0
    %4453 = vmatpush.xpose.msra.mxu0 0.0
    %4454 = vmatpush.xpose.msra.mxu0 0.0
    %4455 = vmatpush.xpose.msra.mxu0 0.0
    %4456 = vmatpush.xpose.msra.mxu0 0.0
    %4457 = vmatpush.xpose.msra.mxu0 0.0
    %4458 = vmatpush.xpose.msra.mxu0 0.0
    %4459 = vmatpush.xpose.msra.mxu0 0.0
    %4460 = vmatpush.xpose.msra.mxu0 0.0
    %4461 = vmatpush.xpose.msra.mxu0 0.0
    %4462 = vmatpush.xpose.msra.mxu0 0.0
    %4463 = vmatpush.xpose.msra.mxu0 0.0
    %4464 = vmatpush.xpose.msra.mxu0 0.0
    %4465 = vmatpush.xpose.msra.mxu0 0.0
    %4466 = vmatpush.xpose.msra.mxu0 0.0
    %4467 = vmatpush.xpose.msra.mxu0 %v485
    %4468 = vmatpush.xpose.msra.mxu0 %v269
    %4469 = vmatmul.f32.gmra.mxu0 %v800
    %v4470 = vpop.f32.mrf.mxu0
    %v4471 = vadd.f32 %v4451, %v4470
    %4472 = vdwg.mxu0
    %4473 = vmatpush.xpose.msra.mxu0 0.0
    %4474 = vmatpush.xpose.msra.mxu0 0.0
    %4475 = vmatpush.xpose.msra.mxu0 0.0
    %4476 = vmatpush.xpose.msra.mxu0 0.0
    %4477 = vmatpush.xpose.msra.mxu0 0.0
    %4478 = vmatpush.xpose.msra.mxu0 0.0
    %4479 = vmatpush.xpose.msra.mxu0 0.0
    %4480 = vmatpush.xpose.msra.mxu0 0.0
    %4481 = vmatpush.xpose.msra.mxu0 0.0
    %4482 = vmatpush.xpose.msra.mxu0 0.0
    %4483 = vmatpush.xpose.msra.mxu0 0.0
    %4484 = vmatpush.xpose.msra.mxu0 0.0
    %4485 = vmatpush.xpose.msra.mxu0 0.0
    %4486 = vmatpush.xpose.msra.mxu0 0.0
    %4487 = vmatpush.xpose.msra.mxu0 %v486
    %4488 = vmatpush.xpose.msra.mxu0 %v270
    %4489 = vmatmul.f32.gmra.mxu0 %v801
    %v4490 = vpop.f32.mrf.mxu0
    %v4491 = vadd.f32 %v4471, %v4490
    %4492 = vdwg.mxu0
    %4493 = vmatpush.xpose.msra.mxu0 0.0
    %4494 = vmatpush.xpose.msra.mxu0 0.0
    %4495 = vmatpush.xpose.msra.mxu0 0.0
    %4496 = vmatpush.xpose.msra.mxu0 0.0
    %4497 = vmatpush.xpose.msra.mxu0 0.0
    %4498 = vmatpush.xpose.msra.mxu0 0.0
    %4499 = vmatpush.xpose.msra.mxu0 0.0
    %4500 = vmatpush.xpose.msra.mxu0 0.0
    %4501 = vmatpush.xpose.msra.mxu0 0.0
    %4502 = vmatpush.xpose.msra.mxu0 0.0
    %4503 = vmatpush.xpose.msra.mxu0 0.0
    %4504 = vmatpush.xpose.msra.mxu0 0.0
    %4505 = vmatpush.xpose.msra.mxu0 0.0
    %4506 = vmatpush.xpose.msra.mxu0 0.0
    %4507 = vmatpush.xpose.msra.mxu0 %v487
    %4508 = vmatpush.xpose.msra.mxu0 %v271
    %4509 = vmatmul.f32.gmra.mxu0 %v802
    %v4510 = vpop.f32.mrf.mxu0
    %v4511 = vadd.f32 %v4491, %v4510
    %4512 = vdwg.mxu0
    %4513 = vmatpush.xpose.msra.mxu0 0.0
    %4514 = vmatpush.xpose.msra.mxu0 0.0
    %4515 = vmatpush.xpose.msra.mxu0 0.0
    %4516 = vmatpush.xpose.msra.mxu0 0.0
    %4517 = vmatpush.xpose.msra.mxu0 0.0
    %4518 = vmatpush.xpose.msra.mxu0 0.0
    %4519 = vmatpush.xpose.msra.mxu0 0.0
    %4520 = vmatpush.xpose.msra.mxu0 0.0
    %4521 = vmatpush.xpose.msra.mxu0 0.0
    %4522 = vmatpush.xpose.msra.mxu0 0.0
    %4523 = vmatpush.xpose.msra.mxu0 0.0
    %4524 = vmatpush.xpose.msra.mxu0 0.0
    %4525 = vmatpush.xpose.msra.mxu0 0.0
    %4526 = vmatpush.xpose.msra.mxu0 0.0
    %4527 = vmatpush.xpose.msra.mxu0 %v488
    %4528 = vmatpush.xpose.msra.mxu0 %v272
    %4529 = vmatmul.f32.gmra.mxu0 %v803
    %v4530 = vpop.f32.mrf.mxu0
    %v4531 = vadd.f32 %v4511, %v4530
    %4532 = vdwg.mxu0
    %4533 = vmatpush.xpose.msra.mxu0 0.0
    %4534 = vmatpush.xpose.msra.mxu0 0.0
    %4535 = vmatpush.xpose.msra.mxu0 0.0
    %4536 = vmatpush.xpose.msra.mxu0 0.0
    %4537 = vmatpush.xpose.msra.mxu0 0.0
    %4538 = vmatpush.xpose.msra.mxu0 0.0
    %4539 = vmatpush.xpose.msra.mxu0 0.0
    %4540 = vmatpush.xpose.msra.mxu0 0.0
    %4541 = vmatpush.xpose.msra.mxu0 0.0
    %4542 = vmatpush.xpose.msra.mxu0 0.0
    %4543 = vmatpush.xpose.msra.mxu0 0.0
    %4544 = vmatpush.xpose.msra.mxu0 0.0
    %4545 = vmatpush.xpose.msra.mxu0 0.0
    %4546 = vmatpush.xpose.msra.mxu0 0.0
    %4547 = vmatpush.xpose.msra.mxu0 %v489
    %4548 = vmatpush.xpose.msra.mxu0 %v273
    %4549 = vmatmul.f32.gmra.mxu0 %v804
    %v4550 = vpop.f32.mrf.mxu0
    %v4551 = vadd.f32 %v4531, %v4550
    %4552 = vdwg.mxu0
    %4553 = vmatpush.xpose.msra.mxu0 0.0
    %4554 = vmatpush.xpose.msra.mxu0 0.0
    %4555 = vmatpush.xpose.msra.mxu0 0.0
    %4556 = vmatpush.xpose.msra.mxu0 0.0
    %4557 = vmatpush.xpose.msra.mxu0 0.0
    %4558 = vmatpush.xpose.msra.mxu0 0.0
    %4559 = vmatpush.xpose.msra.mxu0 0.0
    %4560 = vmatpush.xpose.msra.mxu0 0.0
    %4561 = vmatpush.xpose.msra.mxu0 0.0
    %4562 = vmatpush.xpose.msra.mxu0 0.0
    %4563 = vmatpush.xpose.msra.mxu0 0.0
    %4564 = vmatpush.xpose.msra.mxu0 0.0
    %4565 = vmatpush.xpose.msra.mxu0 0.0
    %4566 = vmatpush.xpose.msra.mxu0 0.0
    %4567 = vmatpush.xpose.msra.mxu0 %v490
    %4568 = vmatpush.xpose.msra.mxu0 %v274
    %4569 = vmatmul.f32.gmra.mxu0 %v805
    %v4570 = vpop.f32.mrf.mxu0
    %v4571 = vadd.f32 %v4551, %v4570
    %4572 = vdwg.mxu0
    %4573 = vmatpush.xpose.msra.mxu0 0.0
    %4574 = vmatpush.xpose.msra.mxu0 0.0
    %4575 = vmatpush.xpose.msra.mxu0 0.0
    %4576 = vmatpush.xpose.msra.mxu0 0.0
    %4577 = vmatpush.xpose.msra.mxu0 0.0
    %4578 = vmatpush.xpose.msra.mxu0 0.0
    %4579 = vmatpush.xpose.msra.mxu0 0.0
    %4580 = vmatpush.xpose.msra.mxu0 0.0
    %4581 = vmatpush.xpose.msra.mxu0 0.0
    %4582 = vmatpush.xpose.msra.mxu0 0.0
    %4583 = vmatpush.xpose.msra.mxu0 0.0
    %4584 = vmatpush.xpose.msra.mxu0 0.0
    %4585 = vmatpush.xpose.msra.mxu0 0.0
    %4586 = vmatpush.xpose.msra.mxu0 0.0
    %4587 = vmatpush.xpose.msra.mxu0 %v491
    %4588 = vmatpush.xpose.msra.mxu0 %v275
    %4589 = vmatmul.f32.gmra.mxu0 %v806
    %v4590 = vpop.f32.mrf.mxu0
    %v4591 = vadd.f32 %v4571, %v4590
    %4592 = vdwg.mxu0
    %4593 = vmatpush.xpose.msra.mxu0 0.0
    %4594 = vmatpush.xpose.msra.mxu0 0.0
    %4595 = vmatpush.xpose.msra.mxu0 0.0
    %4596 = vmatpush.xpose.msra.mxu0 0.0
    %4597 = vmatpush.xpose.msra.mxu0 0.0
    %4598 = vmatpush.xpose.msra.mxu0 0.0
    %4599 = vmatpush.xpose.msra.mxu0 0.0
    %4600 = vmatpush.xpose.msra.mxu0 0.0
    %4601 = vmatpush.xpose.msra.mxu0 0.0
    %4602 = vmatpush.xpose.msra.mxu0 0.0
    %4603 = vmatpush.xpose.msra.mxu0 0.0
    %4604 = vmatpush.xpose.msra.mxu0 0.0
    %4605 = vmatpush.xpose.msra.mxu0 0.0
    %4606 = vmatpush.xpose.msra.mxu0 0.0
    %4607 = vmatpush.xpose.msra.mxu0 %v492
    %4608 = vmatpush.xpose.msra.mxu0 %v276
    %4609 = vmatmul.f32.gmra.mxu0 %v809
    %v4610 = vpop.f32.mrf.mxu0
    %v4611 = vadd.f32 %v4591, %v4610
    %4612 = vdwg.mxu0
    %4613 = vmatpush.xpose.msra.mxu0 0.0
    %4614 = vmatpush.xpose.msra.mxu0 0.0
    %4615 = vmatpush.xpose.msra.mxu0 0.0
    %4616 = vmatpush.xpose.msra.mxu0 0.0
    %4617 = vmatpush.xpose.msra.mxu0 0.0
    %4618 = vmatpush.xpose.msra.mxu0 0.0
    %4619 = vmatpush.xpose.msra.mxu0 0.0
    %4620 = vmatpush.xpose.msra.mxu0 0.0
    %4621 = vmatpush.xpose.msra.mxu0 0.0
    %4622 = vmatpush.xpose.msra.mxu0 0.0
    %4623 = vmatpush.xpose.msra.mxu0 0.0
    %4624 = vmatpush.xpose.msra.mxu0 0.0
    %4625 = vmatpush.xpose.msra.mxu0 0.0
    %4626 = vmatpush.xpose.msra.mxu0 0.0
    %4627 = vmatpush.xpose.msra.mxu0 %v493
    %4628 = vmatpush.xpose.msra.mxu0 %v277
    %4629 = vmatmul.f32.gmra.mxu0 %v810
    %v4630 = vpop.f32.mrf.mxu0
    %v4631 = vadd.f32 %v4611, %v4630
    %4632 = vdwg.mxu0
    %4633 = vmatpush.xpose.msra.mxu0 0.0
    %4634 = vmatpush.xpose.msra.mxu0 0.0
    %4635 = vmatpush.xpose.msra.mxu0 0.0
    %4636 = vmatpush.xpose.msra.mxu0 0.0
    %4637 = vmatpush.xpose.msra.mxu0 0.0
    %4638 = vmatpush.xpose.msra.mxu0 0.0
    %4639 = vmatpush.xpose.msra.mxu0 0.0
    %4640 = vmatpush.xpose.msra.mxu0 0.0
    %4641 = vmatpush.xpose.msra.mxu0 0.0
    %4642 = vmatpush.xpose.msra.mxu0 0.0
    %4643 = vmatpush.xpose.msra.mxu0 0.0
    %4644 = vmatpush.xpose.msra.mxu0 0.0
    %4645 = vmatpush.xpose.msra.mxu0 0.0
    %4646 = vmatpush.xpose.msra.mxu0 0.0
    %4647 = vmatpush.xpose.msra.mxu0 %v494
    %4648 = vmatpush.xpose.msra.mxu0 %v278
    %4649 = vmatmul.f32.gmra.mxu0 %v811
    %v4650 = vpop.f32.mrf.mxu0
    %v4651 = vadd.f32 %v4631, %v4650
    %4652 = vdwg.mxu0
    %4653 = vmatpush.xpose.msra.mxu0 0.0
    %4654 = vmatpush.xpose.msra.mxu0 0.0
    %4655 = vmatpush.xpose.msra.mxu0 0.0
    %4656 = vmatpush.xpose.msra.mxu0 0.0
    %4657 = vmatpush.xpose.msra.mxu0 0.0
    %4658 = vmatpush.xpose.msra.mxu0 0.0
    %4659 = vmatpush.xpose.msra.mxu0 0.0
    %4660 = vmatpush.xpose.msra.mxu0 0.0
    %4661 = vmatpush.xpose.msra.mxu0 0.0
    %4662 = vmatpush.xpose.msra.mxu0 0.0
    %4663 = vmatpush.xpose.msra.mxu0 0.0
    %4664 = vmatpush.xpose.msra.mxu0 0.0
    %4665 = vmatpush.xpose.msra.mxu0 0.0
    %4666 = vmatpush.xpose.msra.mxu0 0.0
    %4667 = vmatpush.xpose.msra.mxu0 %v495
    %4668 = vmatpush.xpose.msra.mxu0 %v279
    %4669 = vmatmul.f32.gmra.mxu0 %v812
    %v4670 = vpop.f32.mrf.mxu0
    %v4671 = vadd.f32 %v4651, %v4670
    %4672 = vdwg.mxu0
    %4673 = vmatpush.xpose.msra.mxu0 0.0
    %4674 = vmatpush.xpose.msra.mxu0 0.0
    %4675 = vmatpush.xpose.msra.mxu0 0.0
    %4676 = vmatpush.xpose.msra.mxu0 0.0
    %4677 = vmatpush.xpose.msra.mxu0 0.0
    %4678 = vmatpush.xpose.msra.mxu0 0.0
    %4679 = vmatpush.xpose.msra.mxu0 0.0
    %4680 = vmatpush.xpose.msra.mxu0 0.0
    %4681 = vmatpush.xpose.msra.mxu0 0.0
    %4682 = vmatpush.xpose.msra.mxu0 0.0
    %4683 = vmatpush.xpose.msra.mxu0 0.0
    %4684 = vmatpush.xpose.msra.mxu0 0.0
    %4685 = vmatpush.xpose.msra.mxu0 0.0
    %4686 = vmatpush.xpose.msra.mxu0 0.0
    %4687 = vmatpush.xpose.msra.mxu0 %v496
    %4688 = vmatpush.xpose.msra.mxu0 %v280
    %4689 = vmatmul.f32.gmra.mxu0 %v813
    %v4690 = vpop.f32.mrf.mxu0
    %v4691 = vadd.f32 %v4671, %v4690
    %4692 = vdwg.mxu0
    %4693 = vmatpush.xpose.msra.mxu0 0.0
    %4694 = vmatpush.xpose.msra.mxu0 0.0
    %4695 = vmatpush.xpose.msra.mxu0 0.0
    %4696 = vmatpush.xpose.msra.mxu0 0.0
    %4697 = vmatpush.xpose.msra.mxu0 0.0
    %4698 = vmatpush.xpose.msra.mxu0 0.0
    %4699 = vmatpush.xpose.msra.mxu0 0.0
    %4700 = vmatpush.xpose.msra.mxu0 0.0
    %4701 = vmatpush.xpose.msra.mxu0 0.0
    %4702 = vmatpush.xpose.msra.mxu0 0.0
    %4703 = vmatpush.xpose.msra.mxu0 0.0
    %4704 = vmatpush.xpose.msra.mxu0 0.0
    %4705 = vmatpush.xpose.msra.mxu0 0.0
    %4706 = vmatpush.xpose.msra.mxu0 0.0
    %4707 = vmatpush.xpose.msra.mxu0 %v497
    %4708 = vmatpush.xpose.msra.mxu0 %v281
    %4709 = vmatmul.f32.gmra.mxu0 %v814
    %v4710 = vpop.f32.mrf.mxu0
    %v4711 = vadd.f32 %v4691, %v4710
    %4712 = vdwg.mxu0
    %4713 = vmatpush.xpose.msra.mxu0 0.0
    %4714 = vmatpush.xpose.msra.mxu0 0.0
    %4715 = vmatpush.xpose.msra.mxu0 0.0
    %4716 = vmatpush.xpose.msra.mxu0 0.0
    %4717 = vmatpush.xpose.msra.mxu0 0.0
    %4718 = vmatpush.xpose.msra.mxu0 0.0
    %4719 = vmatpush.xpose.msra.mxu0 0.0
    %4720 = vmatpush.xpose.msra.mxu0 0.0
    %4721 = vmatpush.xpose.msra.mxu0 0.0
    %4722 = vmatpush.xpose.msra.mxu0 0.0
    %4723 = vmatpush.xpose.msra.mxu0 0.0
    %4724 = vmatpush.xpose.msra.mxu0 0.0
    %4725 = vmatpush.xpose.msra.mxu0 0.0
    %4726 = vmatpush.xpose.msra.mxu0 0.0
    %4727 = vmatpush.xpose.msra.mxu0 %v498
    %4728 = vmatpush.xpose.msra.mxu0 %v282
    %4729 = vmatmul.f32.gmra.mxu0 %v815
    %v4730 = vpop.f32.mrf.mxu0
    %v4731 = vadd.f32 %v4711, %v4730
    %4732 = vdwg.mxu0
    %4733 = vmatpush.xpose.msra.mxu0 0.0
    %4734 = vmatpush.xpose.msra.mxu0 0.0
    %4735 = vmatpush.xpose.msra.mxu0 0.0
    %4736 = vmatpush.xpose.msra.mxu0 0.0
    %4737 = vmatpush.xpose.msra.mxu0 0.0
    %4738 = vmatpush.xpose.msra.mxu0 0.0
    %4739 = vmatpush.xpose.msra.mxu0 0.0
    %4740 = vmatpush.xpose.msra.mxu0 0.0
    %4741 = vmatpush.xpose.msra.mxu0 0.0
    %4742 = vmatpush.xpose.msra.mxu0 0.0
    %4743 = vmatpush.xpose.msra.mxu0 0.0
    %4744 = vmatpush.xpose.msra.mxu0 0.0
    %4745 = vmatpush.xpose.msra.mxu0 0.0
    %4746 = vmatpush.xpose.msra.mxu0 0.0
    %4747 = vmatpush.xpose.msra.mxu0 %v499
    %4748 = vmatpush.xpose.msra.mxu0 %v283
    %4749 = vmatmul.f32.gmra.mxu0 %v816
    %v4750 = vpop.f32.mrf.mxu0
    %v4751 = vadd.f32 %v4731, %v4750
    %4752 = vdwg.mxu0
    %4753 = vmatpush.xpose.msra.mxu0 0.0
    %4754 = vmatpush.xpose.msra.mxu0 0.0
    %4755 = vmatpush.xpose.msra.mxu0 0.0
    %4756 = vmatpush.xpose.msra.mxu0 0.0
    %4757 = vmatpush.xpose.msra.mxu0 0.0
    %4758 = vmatpush.xpose.msra.mxu0 0.0
    %4759 = vmatpush.xpose.msra.mxu0 0.0
    %4760 = vmatpush.xpose.msra.mxu0 0.0
    %4761 = vmatpush.xpose.msra.mxu0 0.0
    %4762 = vmatpush.xpose.msra.mxu0 0.0
    %4763 = vmatpush.xpose.msra.mxu0 0.0
    %4764 = vmatpush.xpose.msra.mxu0 0.0
    %4765 = vmatpush.xpose.msra.mxu0 0.0
    %4766 = vmatpush.xpose.msra.mxu0 0.0
    %4767 = vmatpush.xpose.msra.mxu0 %v500
    %4768 = vmatpush.xpose.msra.mxu0 %v284
    %4769 = vmatmul.f32.gmra.mxu0 %v819
    %v4770 = vpop.f32.mrf.mxu0
    %v4771 = vadd.f32 %v4751, %v4770
    %4772 = vdwg.mxu0
    %4773 = vmatpush.xpose.msra.mxu0 0.0
    %4774 = vmatpush.xpose.msra.mxu0 0.0
    %4775 = vmatpush.xpose.msra.mxu0 0.0
    %4776 = vmatpush.xpose.msra.mxu0 0.0
    %4777 = vmatpush.xpose.msra.mxu0 0.0
    %4778 = vmatpush.xpose.msra.mxu0 0.0
    %4779 = vmatpush.xpose.msra.mxu0 0.0
    %4780 = vmatpush.xpose.msra.mxu0 0.0
    %4781 = vmatpush.xpose.msra.mxu0 0.0
    %4782 = vmatpush.xpose.msra.mxu0 0.0
    %4783 = vmatpush.xpose.msra.mxu0 0.0
    %4784 = vmatpush.xpose.msra.mxu0 0.0
    %4785 = vmatpush.xpose.msra.mxu0 0.0
    %4786 = vmatpush.xpose.msra.mxu0 0.0
    %4787 = vmatpush.xpose.msra.mxu0 %v501
    %4788 = vmatpush.xpose.msra.mxu0 %v285
    %4789 = vmatmul.f32.gmra.mxu0 %v820
    %v4790 = vpop.f32.mrf.mxu0
    %v4791 = vadd.f32 %v4771, %v4790
    %4792 = vdwg.mxu0
    %4793 = vmatpush.xpose.msra.mxu0 0.0
    %4794 = vmatpush.xpose.msra.mxu0 0.0
    %4795 = vmatpush.xpose.msra.mxu0 0.0
    %4796 = vmatpush.xpose.msra.mxu0 0.0
    %4797 = vmatpush.xpose.msra.mxu0 0.0
    %4798 = vmatpush.xpose.msra.mxu0 0.0
    %4799 = vmatpush.xpose.msra.mxu0 0.0
    %4800 = vmatpush.xpose.msra.mxu0 0.0
    %4801 = vmatpush.xpose.msra.mxu0 0.0
    %4802 = vmatpush.xpose.msra.mxu0 0.0
    %4803 = vmatpush.xpose.msra.mxu0 0.0
    %4804 = vmatpush.xpose.msra.mxu0 0.0
    %4805 = vmatpush.xpose.msra.mxu0 0.0
    %4806 = vmatpush.xpose.msra.mxu0 0.0
    %4807 = vmatpush.xpose.msra.mxu0 %v502
    %4808 = vmatpush.xpose.msra.mxu0 %v286
    %4809 = vmatmul.f32.gmra.mxu0 %v821
    %v4810 = vpop.f32.mrf.mxu0
    %v4811 = vadd.f32 %v4791, %v4810
    %4812 = vdwg.mxu0
    %4813 = vmatpush.xpose.msra.mxu0 0.0
    %4814 = vmatpush.xpose.msra.mxu0 0.0
    %4815 = vmatpush.xpose.msra.mxu0 0.0
    %4816 = vmatpush.xpose.msra.mxu0 0.0
    %4817 = vmatpush.xpose.msra.mxu0 0.0
    %4818 = vmatpush.xpose.msra.mxu0 0.0
    %4819 = vmatpush.xpose.msra.mxu0 0.0
    %4820 = vmatpush.xpose.msra.mxu0 0.0
    %4821 = vmatpush.xpose.msra.mxu0 0.0
    %4822 = vmatpush.xpose.msra.mxu0 0.0
    %4823 = vmatpush.xpose.msra.mxu0 0.0
    %4824 = vmatpush.xpose.msra.mxu0 0.0
    %4825 = vmatpush.xpose.msra.mxu0 0.0
    %4826 = vmatpush.xpose.msra.mxu0 0.0
    %4827 = vmatpush.xpose.msra.mxu0 %v503
    %4828 = vmatpush.xpose.msra.mxu0 %v287
    %4829 = vmatmul.f32.gmra.mxu0 %v822
    %v4830 = vpop.f32.mrf.mxu0
    %v4831 = vadd.f32 %v4811, %v4830
    %4832 = vdwg.mxu0
    %4833 = vmatpush.xpose.msra.mxu0 0.0
    %4834 = vmatpush.xpose.msra.mxu0 0.0
    %4835 = vmatpush.xpose.msra.mxu0 0.0
    %4836 = vmatpush.xpose.msra.mxu0 0.0
    %4837 = vmatpush.xpose.msra.mxu0 0.0
    %4838 = vmatpush.xpose.msra.mxu0 0.0
    %4839 = vmatpush.xpose.msra.mxu0 0.0
    %4840 = vmatpush.xpose.msra.mxu0 0.0
    %4841 = vmatpush.xpose.msra.mxu0 0.0
    %4842 = vmatpush.xpose.msra.mxu0 0.0
    %4843 = vmatpush.xpose.msra.mxu0 0.0
    %4844 = vmatpush.xpose.msra.mxu0 0.0
    %4845 = vmatpush.xpose.msra.mxu0 0.0
    %4846 = vmatpush.xpose.msra.mxu0 0.0
    %4847 = vmatpush.xpose.msra.mxu0 %v504
    %4848 = vmatpush.xpose.msra.mxu0 %v288
    %4849 = vmatmul.f32.gmra.mxu0 %v823
    %v4850 = vpop.f32.mrf.mxu0
    %v4851 = vadd.f32 %v4831, %v4850
    %4852 = vdwg.mxu0
    %4853 = vmatpush.xpose.msra.mxu0 0.0
    %4854 = vmatpush.xpose.msra.mxu0 0.0
    %4855 = vmatpush.xpose.msra.mxu0 0.0
    %4856 = vmatpush.xpose.msra.mxu0 0.0
    %4857 = vmatpush.xpose.msra.mxu0 0.0
    %4858 = vmatpush.xpose.msra.mxu0 0.0
    %4859 = vmatpush.xpose.msra.mxu0 0.0
    %4860 = vmatpush.xpose.msra.mxu0 0.0
    %4861 = vmatpush.xpose.msra.mxu0 0.0
    %4862 = vmatpush.xpose.msra.mxu0 0.0
    %4863 = vmatpush.xpose.msra.mxu0 0.0
    %4864 = vmatpush.xpose.msra.mxu0 0.0
    %4865 = vmatpush.xpose.msra.mxu0 0.0
    %4866 = vmatpush.xpose.msra.mxu0 0.0
    %4867 = vmatpush.xpose.msra.mxu0 %v505
    %4868 = vmatpush.xpose.msra.mxu0 %v289
    %4869 = vmatmul.f32.gmra.mxu0 %v824
    %v4870 = vpop.f32.mrf.mxu0
    %v4871 = vadd.f32 %v4851, %v4870
    %4872 = vdwg.mxu0
    %4873 = vmatpush.xpose.msra.mxu0 0.0
    %4874 = vmatpush.xpose.msra.mxu0 0.0
    %4875 = vmatpush.xpose.msra.mxu0 0.0
    %4876 = vmatpush.xpose.msra.mxu0 0.0
    %4877 = vmatpush.xpose.msra.mxu0 0.0
    %4878 = vmatpush.xpose.msra.mxu0 0.0
    %4879 = vmatpush.xpose.msra.mxu0 0.0
    %4880 = vmatpush.xpose.msra.mxu0 0.0
    %4881 = vmatpush.xpose.msra.mxu0 0.0
    %4882 = vmatpush.xpose.msra.mxu0 0.0
    %4883 = vmatpush.xpose.msra.mxu0 0.0
    %4884 = vmatpush.xpose.msra.mxu0 0.0
    %4885 = vmatpush.xpose.msra.mxu0 0.0
    %4886 = vmatpush.xpose.msra.mxu0 0.0
    %4887 = vmatpush.xpose.msra.mxu0 %v506
    %4888 = vmatpush.xpose.msra.mxu0 %v290
    %4889 = vmatmul.f32.gmra.mxu0 %v825
    %v4890 = vpop.f32.mrf.mxu0
    %v4891 = vadd.f32 %v4871, %v4890
    %4892 = vdwg.mxu0
    %4893 = vmatpush.xpose.msra.mxu0 0.0
    %4894 = vmatpush.xpose.msra.mxu0 0.0
    %4895 = vmatpush.xpose.msra.mxu0 0.0
    %4896 = vmatpush.xpose.msra.mxu0 0.0
    %4897 = vmatpush.xpose.msra.mxu0 0.0
    %4898 = vmatpush.xpose.msra.mxu0 0.0
    %4899 = vmatpush.xpose.msra.mxu0 0.0
    %4900 = vmatpush.xpose.msra.mxu0 0.0
    %4901 = vmatpush.xpose.msra.mxu0 0.0
    %4902 = vmatpush.xpose.msra.mxu0 0.0
    %4903 = vmatpush.xpose.msra.mxu0 0.0
    %4904 = vmatpush.xpose.msra.mxu0 0.0
    %4905 = vmatpush.xpose.msra.mxu0 0.0
    %4906 = vmatpush.xpose.msra.mxu0 0.0
    %4907 = vmatpush.xpose.msra.mxu0 %v507
    %4908 = vmatpush.xpose.msra.mxu0 %v291
    %4909 = vmatmul.f32.gmra.mxu0 %v826
    %v4910 = vpop.f32.mrf.mxu0
    %v4911 = vadd.f32 %v4891, %v4910
    %4912 = vdwg.mxu0
    %4913 = vmatpush.xpose.msra.mxu0 0.0
    %4914 = vmatpush.xpose.msra.mxu0 0.0
    %4915 = vmatpush.xpose.msra.mxu0 0.0
    %4916 = vmatpush.xpose.msra.mxu0 0.0
    %4917 = vmatpush.xpose.msra.mxu0 0.0
    %4918 = vmatpush.xpose.msra.mxu0 0.0
    %4919 = vmatpush.xpose.msra.mxu0 0.0
    %4920 = vmatpush.xpose.msra.mxu0 0.0
    %4921 = vmatpush.xpose.msra.mxu0 0.0
    %4922 = vmatpush.xpose.msra.mxu0 0.0
    %4923 = vmatpush.xpose.msra.mxu0 0.0
    %4924 = vmatpush.xpose.msra.mxu0 0.0
    %4925 = vmatpush.xpose.msra.mxu0 0.0
    %4926 = vmatpush.xpose.msra.mxu0 0.0
    %4927 = vmatpush.xpose.msra.mxu0 %v508
    %4928 = vmatpush.xpose.msra.mxu0 %v292
    %4929 = vmatmul.f32.gmra.mxu0 %v829
    %v4930 = vpop.f32.mrf.mxu0
    %v4931 = vadd.f32 %v4911, %v4930
    %4932 = vdwg.mxu0
    %4933 = vmatpush.xpose.msra.mxu0 0.0
    %4934 = vmatpush.xpose.msra.mxu0 0.0
    %4935 = vmatpush.xpose.msra.mxu0 0.0
    %4936 = vmatpush.xpose.msra.mxu0 0.0
    %4937 = vmatpush.xpose.msra.mxu0 0.0
    %4938 = vmatpush.xpose.msra.mxu0 0.0
    %4939 = vmatpush.xpose.msra.mxu0 0.0
    %4940 = vmatpush.xpose.msra.mxu0 0.0
    %4941 = vmatpush.xpose.msra.mxu0 0.0
    %4942 = vmatpush.xpose.msra.mxu0 0.0
    %4943 = vmatpush.xpose.msra.mxu0 0.0
    %4944 = vmatpush.xpose.msra.mxu0 0.0
    %4945 = vmatpush.xpose.msra.mxu0 0.0
    %4946 = vmatpush.xpose.msra.mxu0 0.0
    %4947 = vmatpush.xpose.msra.mxu0 %v509
    %4948 = vmatpush.xpose.msra.mxu0 %v293
    %4949 = vmatmul.f32.gmra.mxu0 %v830
    %v4950 = vpop.f32.mrf.mxu0
    %v4951 = vadd.f32 %v4931, %v4950
    %4952 = vdwg.mxu0
    %4953 = vmatpush.xpose.msra.mxu0 0.0
    %4954 = vmatpush.xpose.msra.mxu0 0.0
    %4955 = vmatpush.xpose.msra.mxu0 0.0
    %4956 = vmatpush.xpose.msra.mxu0 0.0
    %4957 = vmatpush.xpose.msra.mxu0 0.0
    %4958 = vmatpush.xpose.msra.mxu0 0.0
    %4959 = vmatpush.xpose.msra.mxu0 0.0
    %4960 = vmatpush.xpose.msra.mxu0 0.0
    %4961 = vmatpush.xpose.msra.mxu0 0.0
    %4962 = vmatpush.xpose.msra.mxu0 0.0
    %4963 = vmatpush.xpose.msra.mxu0 0.0
    %4964 = vmatpush.xpose.msra.mxu0 0.0
    %4965 = vmatpush.xpose.msra.mxu0 0.0
    %4966 = vmatpush.xpose.msra.mxu0 0.0
    %4967 = vmatpush.xpose.msra.mxu0 %v510
    %4968 = vmatpush.xpose.msra.mxu0 %v294
    %4969 = vmatmul.f32.gmra.mxu0 %v831
    %v4970 = vpop.f32.mrf.mxu0
    %v4971 = vadd.f32 %v4951, %v4970
    %4972 = vdwg.mxu0
    %4973 = vmatpush.xpose.msra.mxu0 0.0
    %4974 = vmatpush.xpose.msra.mxu0 0.0
    %4975 = vmatpush.xpose.msra.mxu0 0.0
    %4976 = vmatpush.xpose.msra.mxu0 0.0
    %4977 = vmatpush.xpose.msra.mxu0 0.0
    %4978 = vmatpush.xpose.msra.mxu0 0.0
    %4979 = vmatpush.xpose.msra.mxu0 0.0
    %4980 = vmatpush.xpose.msra.mxu0 0.0
    %4981 = vmatpush.xpose.msra.mxu0 0.0
    %4982 = vmatpush.xpose.msra.mxu0 0.0
    %4983 = vmatpush.xpose.msra.mxu0 0.0
    %4984 = vmatpush.xpose.msra.mxu0 0.0
    %4985 = vmatpush.xpose.msra.mxu0 0.0
    %4986 = vmatpush.xpose.msra.mxu0 0.0
    %4987 = vmatpush.xpose.msra.mxu0 %v511
    %4988 = vmatpush.xpose.msra.mxu0 %v295
    %4989 = vmatmul.f32.gmra.mxu0 %v832
    %v4990 = vpop.f32.mrf.mxu0
    %v4991 = vadd.f32 %v4971, %v4990
    %4992 = vdwg.mxu0
    %4993 = vmatpush.xpose.msra.mxu0 0.0
    %4994 = vmatpush.xpose.msra.mxu0 0.0
    %4995 = vmatpush.xpose.msra.mxu0 0.0
    %4996 = vmatpush.xpose.msra.mxu0 0.0
    %4997 = vmatpush.xpose.msra.mxu0 0.0
    %4998 = vmatpush.xpose.msra.mxu0 0.0
    %4999 = vmatpush.xpose.msra.mxu0 0.0
    %5000 = vmatpush.xpose.msra.mxu0 0.0
    %5001 = vmatpush.xpose.msra.mxu0 0.0
    %5002 = vmatpush.xpose.msra.mxu0 0.0
    %5003 = vmatpush.xpose.msra.mxu0 0.0
    %5004 = vmatpush.xpose.msra.mxu0 0.0
    %5005 = vmatpush.xpose.msra.mxu0 0.0
    %5006 = vmatpush.xpose.msra.mxu0 0.0
    %5007 = vmatpush.xpose.msra.mxu0 %v512
    %5008 = vmatpush.xpose.msra.mxu0 %v296
    %5009 = vmatmul.f32.gmra.mxu0 %v833
    %v5010 = vpop.f32.mrf.mxu0
    %v5011 = vadd.f32 %v4991, %v5010
    %5012 = vdwg.mxu0
    %5013 = vmatpush.xpose.msra.mxu0 0.0
    %5014 = vmatpush.xpose.msra.mxu0 0.0
    %5015 = vmatpush.xpose.msra.mxu0 0.0
    %5016 = vmatpush.xpose.msra.mxu0 0.0
    %5017 = vmatpush.xpose.msra.mxu0 0.0
    %5018 = vmatpush.xpose.msra.mxu0 0.0
    %5019 = vmatpush.xpose.msra.mxu0 0.0
    %5020 = vmatpush.xpose.msra.mxu0 0.0
    %5021 = vmatpush.xpose.msra.mxu0 0.0
    %5022 = vmatpush.xpose.msra.mxu0 0.0
    %5023 = vmatpush.xpose.msra.mxu0 0.0
    %5024 = vmatpush.xpose.msra.mxu0 0.0
    %5025 = vmatpush.xpose.msra.mxu0 0.0
    %5026 = vmatpush.xpose.msra.mxu0 0.0
    %5027 = vmatpush.xpose.msra.mxu0 %v513
    %5028 = vmatpush.xpose.msra.mxu0 %v297
    %5029 = vmatmul.f32.gmra.mxu0 %v834
    %v5030 = vpop.f32.mrf.mxu0
    %v5031 = vadd.f32 %v5011, %v5030
    %5032 = vdwg.mxu0
    %5033 = vmatpush.xpose.msra.mxu0 0.0
    %5034 = vmatpush.xpose.msra.mxu0 0.0
    %5035 = vmatpush.xpose.msra.mxu0 0.0
    %5036 = vmatpush.xpose.msra.mxu0 0.0
    %5037 = vmatpush.xpose.msra.mxu0 0.0
    %5038 = vmatpush.xpose.msra.mxu0 0.0
    %5039 = vmatpush.xpose.msra.mxu0 0.0
    %5040 = vmatpush.xpose.msra.mxu0 0.0
    %5041 = vmatpush.xpose.msra.mxu0 0.0
    %5042 = vmatpush.xpose.msra.mxu0 0.0
    %5043 = vmatpush.xpose.msra.mxu0 0.0
    %5044 = vmatpush.xpose.msra.mxu0 0.0
    %5045 = vmatpush.xpose.msra.mxu0 0.0
    %5046 = vmatpush.xpose.msra.mxu0 0.0
    %5047 = vmatpush.xpose.msra.mxu0 %v514
    %5048 = vmatpush.xpose.msra.mxu0 %v298
    %5049 = vmatmul.f32.gmra.mxu0 %v835
    %v5050 = vpop.f32.mrf.mxu0
    %v5051 = vadd.f32 %v5031, %v5050
    %5052 = vdwg.mxu0
    %5053 = vmatpush.xpose.msra.mxu0 0.0
    %5054 = vmatpush.xpose.msra.mxu0 0.0
    %5055 = vmatpush.xpose.msra.mxu0 0.0
    %5056 = vmatpush.xpose.msra.mxu0 0.0
    %5057 = vmatpush.xpose.msra.mxu0 0.0
    %5058 = vmatpush.xpose.msra.mxu0 0.0
    %5059 = vmatpush.xpose.msra.mxu0 0.0
    %5060 = vmatpush.xpose.msra.mxu0 0.0
    %5061 = vmatpush.xpose.msra.mxu0 0.0
    %5062 = vmatpush.xpose.msra.mxu0 0.0
    %5063 = vmatpush.xpose.msra.mxu0 0.0
    %5064 = vmatpush.xpose.msra.mxu0 0.0
    %5065 = vmatpush.xpose.msra.mxu0 0.0
    %5066 = vmatpush.xpose.msra.mxu0 0.0
    %5067 = vmatpush.xpose.msra.mxu0 %v515
    %5068 = vmatpush.xpose.msra.mxu0 %v299
    %5069 = vmatmul.f32.gmra.mxu0 %v836
    %v5070 = vpop.f32.mrf.mxu0
    %v5071 = vadd.f32 %v5051, %v5070
    %5072 = vdwg.mxu0
    %5073 = vmatpush.xpose.msra.mxu0 0.0
    %5074 = vmatpush.xpose.msra.mxu0 0.0
    %5075 = vmatpush.xpose.msra.mxu0 0.0
    %5076 = vmatpush.xpose.msra.mxu0 0.0
    %5077 = vmatpush.xpose.msra.mxu0 0.0
    %5078 = vmatpush.xpose.msra.mxu0 0.0
    %5079 = vmatpush.xpose.msra.mxu0 0.0
    %5080 = vmatpush.xpose.msra.mxu0 0.0
    %5081 = vmatpush.xpose.msra.mxu0 0.0
    %5082 = vmatpush.xpose.msra.mxu0 0.0
    %5083 = vmatpush.xpose.msra.mxu0 0.0
    %5084 = vmatpush.xpose.msra.mxu0 0.0
    %5085 = vmatpush.xpose.msra.mxu0 0.0
    %5086 = vmatpush.xpose.msra.mxu0 0.0
    %5087 = vmatpush.xpose.msra.mxu0 %v516
    %5088 = vmatpush.xpose.msra.mxu0 %v300
    %5089 = vmatmul.f32.gmra.mxu0 %v839
    %v5090 = vpop.f32.mrf.mxu0
    %v5091 = vadd.f32 %v5071, %v5090
    %5092 = vdwg.mxu0
    %5093 = vmatpush.xpose.msra.mxu0 0.0
    %5094 = vmatpush.xpose.msra.mxu0 0.0
    %5095 = vmatpush.xpose.msra.mxu0 0.0
    %5096 = vmatpush.xpose.msra.mxu0 0.0
    %5097 = vmatpush.xpose.msra.mxu0 0.0
    %5098 = vmatpush.xpose.msra.mxu0 0.0
    %5099 = vmatpush.xpose.msra.mxu0 0.0
    %5100 = vmatpush.xpose.msra.mxu0 0.0
    %5101 = vmatpush.xpose.msra.mxu0 0.0
    %5102 = vmatpush.xpose.msra.mxu0 0.0
    %5103 = vmatpush.xpose.msra.mxu0 0.0
    %5104 = vmatpush.xpose.msra.mxu0 0.0
    %5105 = vmatpush.xpose.msra.mxu0 0.0
    %5106 = vmatpush.xpose.msra.mxu0 0.0
    %5107 = vmatpush.xpose.msra.mxu0 %v517
    %5108 = vmatpush.xpose.msra.mxu0 %v301
    %5109 = vmatmul.f32.gmra.mxu0 %v840
    %v5110 = vpop.f32.mrf.mxu0
    %v5111 = vadd.f32 %v5091, %v5110
    %5112 = vdwg.mxu0
    %5113 = vmatpush.xpose.msra.mxu0 0.0
    %5114 = vmatpush.xpose.msra.mxu0 0.0
    %5115 = vmatpush.xpose.msra.mxu0 0.0
    %5116 = vmatpush.xpose.msra.mxu0 0.0
    %5117 = vmatpush.xpose.msra.mxu0 0.0
    %5118 = vmatpush.xpose.msra.mxu0 0.0
    %5119 = vmatpush.xpose.msra.mxu0 0.0
    %5120 = vmatpush.xpose.msra.mxu0 0.0
    %5121 = vmatpush.xpose.msra.mxu0 0.0
    %5122 = vmatpush.xpose.msra.mxu0 0.0
    %5123 = vmatpush.xpose.msra.mxu0 0.0
    %5124 = vmatpush.xpose.msra.mxu0 0.0
    %5125 = vmatpush.xpose.msra.mxu0 0.0
    %5126 = vmatpush.xpose.msra.mxu0 0.0
    %5127 = vmatpush.xpose.msra.mxu0 %v518
    %5128 = vmatpush.xpose.msra.mxu0 %v302
    %5129 = vmatmul.f32.gmra.mxu0 %v841
    %v5130 = vpop.f32.mrf.mxu0
    %v5131 = vadd.f32 %v5111, %v5130
    %5132 = vdwg.mxu0
    %5133 = vmatpush.xpose.msra.mxu0 0.0
    %5134 = vmatpush.xpose.msra.mxu0 0.0
    %5135 = vmatpush.xpose.msra.mxu0 0.0
    %5136 = vmatpush.xpose.msra.mxu0 0.0
    %5137 = vmatpush.xpose.msra.mxu0 0.0
    %5138 = vmatpush.xpose.msra.mxu0 0.0
    %5139 = vmatpush.xpose.msra.mxu0 0.0
    %5140 = vmatpush.xpose.msra.mxu0 0.0
    %5141 = vmatpush.xpose.msra.mxu0 0.0
    %5142 = vmatpush.xpose.msra.mxu0 0.0
    %5143 = vmatpush.xpose.msra.mxu0 0.0
    %5144 = vmatpush.xpose.msra.mxu0 0.0
    %5145 = vmatpush.xpose.msra.mxu0 0.0
    %5146 = vmatpush.xpose.msra.mxu0 0.0
    %5147 = vmatpush.xpose.msra.mxu0 %v519
    %5148 = vmatpush.xpose.msra.mxu0 %v303
    %5149 = vmatmul.f32.gmra.mxu0 %v842
    %v5150 = vpop.f32.mrf.mxu0
    %v5151 = vadd.f32 %v5131, %v5150
    %5152 = vdwg.mxu0
    %5153 = vmatpush.xpose.msra.mxu0 0.0
    %5154 = vmatpush.xpose.msra.mxu0 0.0
    %5155 = vmatpush.xpose.msra.mxu0 0.0
    %5156 = vmatpush.xpose.msra.mxu0 0.0
    %5157 = vmatpush.xpose.msra.mxu0 0.0
    %5158 = vmatpush.xpose.msra.mxu0 0.0
    %5159 = vmatpush.xpose.msra.mxu0 0.0
    %5160 = vmatpush.xpose.msra.mxu0 0.0
    %5161 = vmatpush.xpose.msra.mxu0 0.0
    %5162 = vmatpush.xpose.msra.mxu0 0.0
    %5163 = vmatpush.xpose.msra.mxu0 0.0
    %5164 = vmatpush.xpose.msra.mxu0 0.0
    %5165 = vmatpush.xpose.msra.mxu0 0.0
    %5166 = vmatpush.xpose.msra.mxu0 0.0
    %5167 = vmatpush.xpose.msra.mxu0 %v520
    %5168 = vmatpush.xpose.msra.mxu0 %v304
    %5169 = vmatmul.f32.gmra.mxu0 %v843
    %v5170 = vpop.f32.mrf.mxu0
    %v5171 = vadd.f32 %v5151, %v5170
    %5172 = vdwg.mxu0
    %5173 = vmatpush.xpose.msra.mxu0 0.0
    %5174 = vmatpush.xpose.msra.mxu0 0.0
    %5175 = vmatpush.xpose.msra.mxu0 0.0
    %5176 = vmatpush.xpose.msra.mxu0 0.0
    %5177 = vmatpush.xpose.msra.mxu0 0.0
    %5178 = vmatpush.xpose.msra.mxu0 0.0
    %5179 = vmatpush.xpose.msra.mxu0 0.0
    %5180 = vmatpush.xpose.msra.mxu0 0.0
    %5181 = vmatpush.xpose.msra.mxu0 0.0
    %5182 = vmatpush.xpose.msra.mxu0 0.0
    %5183 = vmatpush.xpose.msra.mxu0 0.0
    %5184 = vmatpush.xpose.msra.mxu0 0.0
    %5185 = vmatpush.xpose.msra.mxu0 0.0
    %5186 = vmatpush.xpose.msra.mxu0 0.0
    %5187 = vmatpush.xpose.msra.mxu0 %v521
    %5188 = vmatpush.xpose.msra.mxu0 %v305
    %5189 = vmatmul.f32.gmra.mxu0 %v844
    %v5190 = vpop.f32.mrf.mxu0
    %v5191 = vadd.f32 %v5171, %v5190
    %5192 = vdwg.mxu0
    %5193 = vmatpush.xpose.msra.mxu0 0.0
    %5194 = vmatpush.xpose.msra.mxu0 0.0
    %5195 = vmatpush.xpose.msra.mxu0 0.0
    %5196 = vmatpush.xpose.msra.mxu0 0.0
    %5197 = vmatpush.xpose.msra.mxu0 0.0
    %5198 = vmatpush.xpose.msra.mxu0 0.0
    %5199 = vmatpush.xpose.msra.mxu0 0.0
    %5200 = vmatpush.xpose.msra.mxu0 0.0
    %5201 = vmatpush.xpose.msra.mxu0 0.0
    %5202 = vmatpush.xpose.msra.mxu0 0.0
    %5203 = vmatpush.xpose.msra.mxu0 0.0
    %5204 = vmatpush.xpose.msra.mxu0 0.0
    %5205 = vmatpush.xpose.msra.mxu0 0.0
    %5206 = vmatpush.xpose.msra.mxu0 0.0
    %5207 = vmatpush.xpose.msra.mxu0 %v522
    %5208 = vmatpush.xpose.msra.mxu0 %v306
    %5209 = vmatmul.f32.gmra.mxu0 %v845
    %v5210 = vpop.f32.mrf.mxu0
    %v5211 = vadd.f32 %v5191, %v5210
    %5212 = vdwg.mxu0
    %5213 = vmatpush.xpose.msra.mxu0 0.0
    %5214 = vmatpush.xpose.msra.mxu0 0.0
    %5215 = vmatpush.xpose.msra.mxu0 0.0
    %5216 = vmatpush.xpose.msra.mxu0 0.0
    %5217 = vmatpush.xpose.msra.mxu0 0.0
    %5218 = vmatpush.xpose.msra.mxu0 0.0
    %5219 = vmatpush.xpose.msra.mxu0 0.0
    %5220 = vmatpush.xpose.msra.mxu0 0.0
    %5221 = vmatpush.xpose.msra.mxu0 0.0
    %5222 = vmatpush.xpose.msra.mxu0 0.0
    %5223 = vmatpush.xpose.msra.mxu0 0.0
    %5224 = vmatpush.xpose.msra.mxu0 0.0
    %5225 = vmatpush.xpose.msra.mxu0 0.0
    %5226 = vmatpush.xpose.msra.mxu0 0.0
    %5227 = vmatpush.xpose.msra.mxu0 %v523
    %5228 = vmatpush.xpose.msra.mxu0 %v307
    %5229 = vmatmul.f32.gmra.mxu0 %v846
    %v5230 = vpop.f32.mrf.mxu0
    %v5231 = vadd.f32 %v5211, %v5230
    %5232 = vdwg.mxu0
    %5233 = vmatpush.xpose.msra.mxu0 0.0
    %5234 = vmatpush.xpose.msra.mxu0 0.0
    %5235 = vmatpush.xpose.msra.mxu0 0.0
    %5236 = vmatpush.xpose.msra.mxu0 0.0
    %5237 = vmatpush.xpose.msra.mxu0 0.0
    %5238 = vmatpush.xpose.msra.mxu0 0.0
    %5239 = vmatpush.xpose.msra.mxu0 0.0
    %5240 = vmatpush.xpose.msra.mxu0 0.0
    %5241 = vmatpush.xpose.msra.mxu0 0.0
    %5242 = vmatpush.xpose.msra.mxu0 0.0
    %5243 = vmatpush.xpose.msra.mxu0 0.0
    %5244 = vmatpush.xpose.msra.mxu0 0.0
    %5245 = vmatpush.xpose.msra.mxu0 0.0
    %5246 = vmatpush.xpose.msra.mxu0 0.0
    %5247 = vmatpush.xpose.msra.mxu0 %v524
    %5248 = vmatpush.xpose.msra.mxu0 %v308
    %5249 = vmatmul.f32.gmra.mxu0 %v849
    %v5250 = vpop.f32.mrf.mxu0
    %v5251 = vadd.f32 %v5231, %v5250
    %5252 = vdwg.mxu0
    %5253 = vmatpush.xpose.msra.mxu0 0.0
    %5254 = vmatpush.xpose.msra.mxu0 0.0
    %5255 = vmatpush.xpose.msra.mxu0 0.0
    %5256 = vmatpush.xpose.msra.mxu0 0.0
    %5257 = vmatpush.xpose.msra.mxu0 0.0
    %5258 = vmatpush.xpose.msra.mxu0 0.0
    %5259 = vmatpush.xpose.msra.mxu0 0.0
    %5260 = vmatpush.xpose.msra.mxu0 0.0
    %5261 = vmatpush.xpose.msra.mxu0 0.0
    %5262 = vmatpush.xpose.msra.mxu0 0.0
    %5263 = vmatpush.xpose.msra.mxu0 0.0
    %5264 = vmatpush.xpose.msra.mxu0 0.0
    %5265 = vmatpush.xpose.msra.mxu0 0.0
    %5266 = vmatpush.xpose.msra.mxu0 0.0
    %5267 = vmatpush.xpose.msra.mxu0 %v525
    %5268 = vmatpush.xpose.msra.mxu0 %v309
    %5269 = vmatmul.f32.gmra.mxu0 %v850
    %v5270 = vpop.f32.mrf.mxu0
    %v5271 = vadd.f32 %v5251, %v5270
    %5272 = vdwg.mxu0
    %5273 = vmatpush.xpose.msra.mxu0 0.0
    %5274 = vmatpush.xpose.msra.mxu0 0.0
    %5275 = vmatpush.xpose.msra.mxu0 0.0
    %5276 = vmatpush.xpose.msra.mxu0 0.0
    %5277 = vmatpush.xpose.msra.mxu0 0.0
    %5278 = vmatpush.xpose.msra.mxu0 0.0
    %5279 = vmatpush.xpose.msra.mxu0 0.0
    %5280 = vmatpush.xpose.msra.mxu0 0.0
    %5281 = vmatpush.xpose.msra.mxu0 0.0
    %5282 = vmatpush.xpose.msra.mxu0 0.0
    %5283 = vmatpush.xpose.msra.mxu0 0.0
    %5284 = vmatpush.xpose.msra.mxu0 0.0
    %5285 = vmatpush.xpose.msra.mxu0 0.0
    %5286 = vmatpush.xpose.msra.mxu0 0.0
    %5287 = vmatpush.xpose.msra.mxu0 %v526
    %5288 = vmatpush.xpose.msra.mxu0 %v310
    %5289 = vmatmul.f32.gmra.mxu0 %v851
    %v5290 = vpop.f32.mrf.mxu0
    %v5291 = vadd.f32 %v5271, %v5290
    %5292 = vdwg.mxu0
    %5293 = vmatpush.xpose.msra.mxu0 0.0
    %5294 = vmatpush.xpose.msra.mxu0 0.0
    %5295 = vmatpush.xpose.msra.mxu0 0.0
    %5296 = vmatpush.xpose.msra.mxu0 0.0
    %5297 = vmatpush.xpose.msra.mxu0 0.0
    %5298 = vmatpush.xpose.msra.mxu0 0.0
    %5299 = vmatpush.xpose.msra.mxu0 0.0
    %5300 = vmatpush.xpose.msra.mxu0 0.0
    %5301 = vmatpush.xpose.msra.mxu0 0.0
    %5302 = vmatpush.xpose.msra.mxu0 0.0
    %5303 = vmatpush.xpose.msra.mxu0 0.0
    %5304 = vmatpush.xpose.msra.mxu0 0.0
    %5305 = vmatpush.xpose.msra.mxu0 0.0
    %5306 = vmatpush.xpose.msra.mxu0 0.0
    %5307 = vmatpush.xpose.msra.mxu0 %v527
    %5308 = vmatpush.xpose.msra.mxu0 %v311
    %5309 = vmatmul.f32.gmra.mxu0 %v852
    %v5310 = vpop.f32.mrf.mxu0
    %v5311 = vadd.f32 %v5291, %v5310
    %5312 = vdwg.mxu0
    %5313 = vmatpush.xpose.msra.mxu0 0.0
    %5314 = vmatpush.xpose.msra.mxu0 0.0
    %5315 = vmatpush.xpose.msra.mxu0 0.0
    %5316 = vmatpush.xpose.msra.mxu0 0.0
    %5317 = vmatpush.xpose.msra.mxu0 0.0
    %5318 = vmatpush.xpose.msra.mxu0 0.0
    %5319 = vmatpush.xpose.msra.mxu0 0.0
    %5320 = vmatpush.xpose.msra.mxu0 0.0
    %5321 = vmatpush.xpose.msra.mxu0 0.0
    %5322 = vmatpush.xpose.msra.mxu0 0.0
    %5323 = vmatpush.xpose.msra.mxu0 0.0
    %5324 = vmatpush.xpose.msra.mxu0 0.0
    %5325 = vmatpush.xpose.msra.mxu0 0.0
    %5326 = vmatpush.xpose.msra.mxu0 0.0
    %5327 = vmatpush.xpose.msra.mxu0 %v528
    %5328 = vmatpush.xpose.msra.mxu0 %v312
    %5329 = vmatmul.f32.gmra.mxu0 %v853
    %v5330 = vpop.f32.mrf.mxu0
    %v5331 = vadd.f32 %v5311, %v5330
    %5332 = vdwg.mxu0
    %5333 = vmatpush.xpose.msra.mxu0 0.0
    %5334 = vmatpush.xpose.msra.mxu0 0.0
    %5335 = vmatpush.xpose.msra.mxu0 0.0
    %5336 = vmatpush.xpose.msra.mxu0 0.0
    %5337 = vmatpush.xpose.msra.mxu0 0.0
    %5338 = vmatpush.xpose.msra.mxu0 0.0
    %5339 = vmatpush.xpose.msra.mxu0 0.0
    %5340 = vmatpush.xpose.msra.mxu0 0.0
    %5341 = vmatpush.xpose.msra.mxu0 0.0
    %5342 = vmatpush.xpose.msra.mxu0 0.0
    %5343 = vmatpush.xpose.msra.mxu0 0.0
    %5344 = vmatpush.xpose.msra.mxu0 0.0
    %5345 = vmatpush.xpose.msra.mxu0 0.0
    %5346 = vmatpush.xpose.msra.mxu0 0.0
    %5347 = vmatpush.xpose.msra.mxu0 %v529
    %5348 = vmatpush.xpose.msra.mxu0 %v313
    %5349 = vmatmul.f32.gmra.mxu0 %v854
    %v5350 = vpop.f32.mrf.mxu0
    %v5351 = vadd.f32 %v5331, %v5350
    %5352 = vdwg.mxu0
    %5353 = vmatpush.xpose.msra.mxu0 0.0
    %5354 = vmatpush.xpose.msra.mxu0 0.0
    %5355 = vmatpush.xpose.msra.mxu0 0.0
    %5356 = vmatpush.xpose.msra.mxu0 0.0
    %5357 = vmatpush.xpose.msra.mxu0 0.0
    %5358 = vmatpush.xpose.msra.mxu0 0.0
    %5359 = vmatpush.xpose.msra.mxu0 0.0
    %5360 = vmatpush.xpose.msra.mxu0 0.0
    %5361 = vmatpush.xpose.msra.mxu0 0.0
    %5362 = vmatpush.xpose.msra.mxu0 0.0
    %5363 = vmatpush.xpose.msra.mxu0 0.0
    %5364 = vmatpush.xpose.msra.mxu0 0.0
    %5365 = vmatpush.xpose.msra.mxu0 0.0
    %5366 = vmatpush.xpose.msra.mxu0 0.0
    %5367 = vmatpush.xpose.msra.mxu0 %v530
    %5368 = vmatpush.xpose.msra.mxu0 %v314
    %5369 = vmatmul.f32.gmra.mxu0 %v855
    %v5370 = vpop.f32.mrf.mxu0
    %v5371 = vadd.f32 %v5351, %v5370
    %5372 = vdwg.mxu0
    %5373 = vmatpush.xpose.msra.mxu0 0.0
    %5374 = vmatpush.xpose.msra.mxu0 0.0
    %5375 = vmatpush.xpose.msra.mxu0 0.0
    %5376 = vmatpush.xpose.msra.mxu0 0.0
    %5377 = vmatpush.xpose.msra.mxu0 0.0
    %5378 = vmatpush.xpose.msra.mxu0 0.0
    %5379 = vmatpush.xpose.msra.mxu0 0.0
    %5380 = vmatpush.xpose.msra.mxu0 0.0
    %5381 = vmatpush.xpose.msra.mxu0 0.0
    %5382 = vmatpush.xpose.msra.mxu0 0.0
    %5383 = vmatpush.xpose.msra.mxu0 0.0
    %5384 = vmatpush.xpose.msra.mxu0 0.0
    %5385 = vmatpush.xpose.msra.mxu0 0.0
    %5386 = vmatpush.xpose.msra.mxu0 0.0
    %5387 = vmatpush.xpose.msra.mxu0 %v531
    %5388 = vmatpush.xpose.msra.mxu0 %v315
    %5389 = vmatmul.f32.gmra.mxu0 %v856
    %v5390 = vpop.f32.mrf.mxu0
    %v5391 = vadd.f32 %v5371, %v5390
    %5392 = vdwg.mxu0
    %v5394 = vperm.slane %v45, 0
    %v5396 = vadd.f32 %v5394, %v5391
    %v5397 = vlaneseq
    %v5398 = vand.u32 %v5397, 127
    %vm5399 = vcmask 74752
    %v5400 = vsel %vm5399, %v5396, -inf
    %5401 = vmax.xlane.f32.xlu0 %v5400
    %v5402 = vpop.xlane.xlu0 %5401
    %vm5403 = vcmp.eq.f32.partialorder %v5396, %v5402
    %v5404 = vsel %vm5403, %v5398, 10
    %v5405 = vsel %vm5399, %v5404, 2147483647
    %v5406 = vand.u32 %v5405, 65535
    %v5407 = vshra.s32 %v5405, 16
    %v5408 = vcvt.s32.f32 %v5406
    %v5409 = vcvt.s32.f32 %v5407
    %5410 = vmin.xlane.f32.xlu0 %v5409
    %v5411 = vpop.xlane.xlu0 %5410
    %vm5412 = vcmp.eq.f32.partialorder %v5409, %v5411
    %v5413 = vsel %vm5412, %v5408, inf
    %5414 = vmin.xlane.f32.xlu0 %v5413
    %v5415 = vpop.xlane.xlu0 %5414
    %v5416 = vcvt.f32.s32 %v5415
    %v5417 = vcvt.f32.s32 %v5411
    %v5418 = vshll.u32 %v5417, 16
    %v5419 = vadd.s32 %v5418, %v5416
    %vm5420 = vcmp.eq.s32.totalorder %v5398, %v5419
    %v5421 = vsel %vm5420, 1, 0
    %v5422 = vcvt.s32.f32 %v5421
    %v5423 = vsel %vm5399, %v5422, -inf
    %v5424 = vrot.slane %v5423, 4
    %v5425 = vmax.f32 %v5423, %v5424
    %v5426 = vrot.slane %v5425, 2
    %v5427 = vmax.f32 %v5425, %v5426
    %v5428 = vrot.slane %v5427, 1
    %v5429 = vmax.f32 %v5427, %v5428
    %5430 = vst.msk [vmem:[#allocation7] sm:$0x3] %vm5399, %v5429
    // Predicated region
    $region22: #{multichannel_forward.3} parent=1 // pred_check
      _
    $region23: #{multichannel_forward.3} parent=1 // pred_check_branch
      %5432 = sbr.rel (0) target = $region25
    $region24: #{multichannel_forward.3} parent=1 // pred_region
      %5434 = vsyncadd [#allocation4], 0
      %s5436 = sshll.u32 [#allocation7], 4
      %s5437 = int_to_ptr.vmem [resolvable:$true] %s5436
      %s5438 = sshll.u32 %s3, 4
      %s5439 = int_to_ptr.hbm [resolvable:$true] %s5438
      %5441 = dma.vmem_to_hbm [thread:$0]  %s5437, 32, %s5439, [#allocation4]
    $region25: #{multichannel_forward.3} parent=1 // pred_fallthru
      _
    // Predicated region
    $region26: #{multichannel_forward.3} parent=1 // pred_check
      _
    $region27: #{multichannel_forward.3} parent=1 // pred_check_branch
      %5443 = sbr.rel (0) target = $region29
    $region28: #{multichannel_forward.3} parent=1 // pred_region
      %5445 = dma.done [#allocation4], 32
    $region29: #{multichannel_forward.3} parent=1 // pred_fallthru
      _
    %5446 = vsyncpa [#allocation3], 1
    %5447 = vsyncpa [#allocation6], 1
    %5448 = vsyncpa [#allocation4], 1

</llo_original>
